<compile_context>
chip_gen: v7x
topology: tpu7x:2x2x1
jax: 0.10.0
libtpu: 0.0.40
codegen_flags: <defaults>
</compile_context>

<pallas_src>
import jax
import jax.numpy as jnp
from jax.experimental import pallas as pl
from jax.experimental.pallas import tpu as pltpu

N_CLASSES = 45
FEAT_DIM = 1280
HIDDEN = 512
NEG_SLOPE = 0.01  # F.leaky_relu default
LANE = 128

# Live-VMEM budget for tile selection: v7x has only 64 MiB physical VMEM,
# so target <= ~44 MiB of buffers (v5e/v6e have 128 MiB and are never tighter).
_VMEM_BUDGET_BYTES = 44 << 20
# Above this size the replicated fused weight is stored in bf16.
_WEIGHT_BF16_THRESHOLD_BYTES = 16 << 20


def _head_kernel(x_ref, w_ref, b_ref, out_ref):
    # x_ref: [tb, C*HW] f32 — native flattened-NCHW layout, fully lane-dense.
    x = x_ref[...]
    # LeakyReLU: max(x, 0.01*x) is exact for 0 < slope < 1 (vmul + vmax, VPU).
    y = jnp.maximum(x, NEG_SLOPE * x)
    # TODO(synk): Dropout(0.2) is identity in eval mode; training-mode
    # stochastic masking is intentionally not emulated here.
    w = w_ref[...]
    if w.dtype != y.dtype:          # bf16 weight path (large HW only)
        y = y.astype(w.dtype)
    # Pool + both Linears fused into one MXU contraction (K = C*HW), f32 acc.
    o = jnp.dot(y, w, preferred_element_type=jnp.float32)
    out_ref[...] = (o + b_ref[...]).astype(out_ref.dtype)


def fuse_classifier_params(w1, b1, w2, b2, hw):
    """One-time prep: fold Linear(1280,512)∘Linear(512,45), the 1/HW pooling
    scale, the class-dim pad to 128 lanes, and the HW row replication.

    Returns (w_exp [C*HW, 128], b_pad [1, 128])."""
    n_pad = pl.cdiv(N_CLASSES, LANE) * LANE
    # Exact fold: no nonlinearity between the two Linears, dropout is identity.
    w_fused = (w1 @ w2) * (1.0 / hw)          # [1280, 45], pool scale folded in
    b_fused = b1 @ w2 + b2                    # [1, 45]
    w_fused = jnp.pad(w_fused, ((0, 0), (0, n_pad - N_CLASSES)))
    b_pad = jnp.pad(b_fused, ((0, 0), (0, n_pad - N_CLASSES)))
    # Replicate each channel row HW times so row index c*HW + hw matches the
    # flattened-NCHW activation layout; the matmul then performs the pool.
    w_exp = jnp.repeat(w_fused, hw, axis=0)   # [C*HW, 128]
    if w_exp.size * 4 > _WEIGHT_BF16_THRESHOLD_BYTES:
        w_exp = w_exp.astype(jnp.bfloat16)    # keep it VMEM-resident everywhere
    return w_exp, b_pad


def _pick_batch_tile(B, flat_k, w_bytes):
    """Largest batch tile (multiple of 8, <= 64) whose double-buffered
    activation blocks + weights fit the v7x-safe VMEM budget, while keeping
    >= 2 grid steps so both v7x TensorCores get work."""
    if B <= 8:
        return B  # block dim == full array dim is always legal
    for tb in (64, 56, 48, 40, 32, 24, 16, 8):
        if tb > B or pl.cdiv(B, tb) < 2:
            continue
        est = 2 * tb * flat_k * 4 + 2 * w_bytes + 2 * tb * LANE * 4
        if est <= _VMEM_BUDGET_BYTES:
            return tb
    return 8


def mobilenet_head(x_nchw, w_exp, b_pad):
    """x_nchw: [B, 1280, H, W] f32; w_exp/b_pad from fuse_classifier_params.
    Returns [B, n_classes] f32."""
    B, C, H, W = x_nchw.shape
    assert C == FEAT_DIM, "classifier expects 1280 input channels"
    flat_k = C * H * W
    assert flat_k % LANE == 0          # 1280 = 10*128, always true
    assert w_exp.shape == (flat_k, b_pad.shape[1])
    n_pad = w_exp.shape[1]

    # Free reshape of contiguous NCHW -> [B, C*HW]; no transpose / HBM pass.
    x_flat = x_nchw.reshape(B, flat_k)

    w_bytes = int(w_exp.size) * jnp.dtype(w_exp.dtype).itemsize
    tb = _pick_batch_tile(B, flat_k, w_bytes)
    grid = (pl.cdiv(B, tb),)

    # Real (lane-dense) footprint: 2 buffered activation blocks + 2x weights
    # (constant index_map, still double-buffered by the pipeline) + outputs.
    vmem_est = (2 * tb * flat_k * 4 + 2 * w_bytes
                + 2 * tb * n_pad * 4 + 2 * n_pad * 4 + (1 << 20))
    vmem_limit = int(min(vmem_est + (8 << 20), 60 << 20))  # v7x-safe cap

    out = pl.pallas_call(
        _head_kernel,
        out_shape=jax.ShapeDtypeStruct((B, n_pad), jnp.float32),
        grid_spec=pltpu.PrefetchScalarGridSpec(
            num_scalar_prefetch=0,
            grid=grid,
            in_specs=[
                # Streaming activation tile, pipelined over the batch grid.
                # (If xprof still shows exposed DMA waits at large tb, add
                #  pipeline_mode=pl.Buffered(3) here — activations only.)
                pl.BlockSpec((tb, flat_k), lambda b: (b, 0)),
                # Fused weights / bias: constant index_map -> VMEM-resident.
                pl.BlockSpec((flat_k, n_pad), lambda b: (0, 0)),
                pl.BlockSpec((1, n_pad), lambda b: (0, 0)),
            ],
            out_specs=pl.BlockSpec((tb, n_pad), lambda b: (b, 0)),
        ),
        compiler_params=pltpu.CompilerParams(
            dimension_semantics=("parallel",),  # megacore sharding on v7x
            vmem_limit_bytes=vmem_limit,
        ),
    )(x_flat, w_exp, b_pad)

    return out[:, :N_CLASSES]


def init_params(key):
    """Deterministic synthetic parameters (shapes match the PyTorch module).

    PyTorch Linear stores weight as [out, in]; we store the transpose [in, out]
    so the kernel can do `x @ W`.  Biases are zero, matching
    nn.init.constant_(bias, 0) in the reference module."""
    k1, k2 = jax.random.split(key)
    w1 = jax.random.normal(k1, (FEAT_DIM, HIDDEN), jnp.float32) * 0.02
    b1 = jnp.zeros((1, HIDDEN), jnp.float32)
    w2 = jax.random.normal(k2, (HIDDEN, N_CLASSES), jnp.float32) * 0.02
    b2 = jnp.zeros((1, N_CLASSES), jnp.float32)
    return w1, b1, w2, b2


def _reference(x_nchw, w1, b1, w2, b2):
    y = jnp.where(x_nchw >= 0, x_nchw, NEG_SLOPE * x_nchw)
    pooled = jnp.mean(y, axis=(2, 3))          # [B, C]
    h = pooled @ w1 + b1
    return h @ w2 + b2


if __name__ == "__main__":
    key = jax.random.PRNGKey(0)
    kx, kp = jax.random.split(key)
    # Small spatial extent; channels must be 1280 for the classifier.
    B, H, W = 2, 4, 4
    x = jax.random.normal(kx, (B, FEAT_DIM, H, W), jnp.float32)
    w1, b1, w2, b2 = init_params(kp)

    # One-time weight prep (hoisted out of the per-call path).
    w_exp, b_pad = fuse_classifier_params(w1, b1, w2, b2, H * W)

    out = mobilenet_head(x, w_exp, b_pad)
    out = jax.block_until_ready(out)

    ref = _reference(x, w1, b1, w2, b2)
    assert out.shape == (B, N_CLASSES)
    assert jnp.allclose(out, ref, atol=1e-3, rtol=1e-3), "mismatch vs reference"
    print("KERNEL_OK")
</pallas_src>

<mosaic_0001>
module attributes {stable_mosaic.version = 11 : i64} {
  func.func @_head_kernel(%arg0: i32, %arg1: memref<2x20480xf32, #tpu.memory_space<vmem>>, %arg2: memref<20480x128xf32, #tpu.memory_space<vmem>>, %arg3: memref<1x128xf32, #tpu.memory_space<vmem>>, %arg4: memref<2x128xf32, #tpu.memory_space<vmem>>) attributes {dimension_semantics = [#tpu.dimension_semantics<parallel>], iteration_bounds = array<i64: 1>, scalar_prefetch = 0 : i64, scratch_operands = 0 : i64, tpu.core_type = #tpu.core_type<tc>, window_params = [{transform_indices = @transform_0, window_bounds = array<i64: 2, 20480>}, {pipeline_mode = #tpu.pipeline_mode<synchronous>, transform_indices = @transform_1, window_bounds = array<i64: 20480, 128>}, {pipeline_mode = #tpu.pipeline_mode<synchronous>, transform_indices = @transform_2, window_bounds = array<i64: 1, 128>}, {transform_indices = @transform_3, window_bounds = array<i64: 2, 128>}]} {
    %c0 = arith.constant 0 : index
    %c0_0 = arith.constant 0 : index
    %0 = vector.load %arg1[%c0, %c0_0] : memref<2x20480xf32, #tpu.memory_space<vmem>>, vector<2x20480xf32>
    %cst = arith.constant 0.00999999977 : f32
    %1 = vector.broadcast %cst : f32 to vector<2x20480xf32>
    %2 = arith.mulf %1, %0 : vector<2x20480xf32>
    %3 = arith.maximumf %0, %2 : vector<2x20480xf32>
    %c0_1 = arith.constant 0 : index
    %c0_2 = arith.constant 0 : index
    %4 = vector.load %arg2[%c0_1, %c0_2] : memref<20480x128xf32, #tpu.memory_space<vmem>>, vector<20480x128xf32>
    %cst_3 = arith.constant dense<0.000000e+00> : vector<2x128xf32>
    %5 = tpu.matmul %3, %4, %cst_3 {dimension_numbers = #tpu.dot_dimension_numbers<[1], [0], [0], [1], [0, 0, 1, 1], [], []>} : vector<2x20480xf32>, vector<20480x128xf32>, vector<2x128xf32> -> vector<2x128xf32>
    %c0_4 = arith.constant 0 : index
    %c0_5 = arith.constant 0 : index
    %6 = vector.load %arg3[%c0_4, %c0_5] : memref<1x128xf32, #tpu.memory_space<vmem>>, vector<1x128xf32>
    %7 = vector.broadcast %6 : vector<1x128xf32> to vector<2x128xf32>
    %8 = arith.addf %5, %7 : vector<2x128xf32>
    %c0_6 = arith.constant 0 : index
    %c0_7 = arith.constant 0 : index
    %9 = vector.load %arg4[%c0_6, %c0_7] : memref<2x128xf32, #tpu.memory_space<vmem>>, vector<2x128xf32>
    tpu.vector_store %arg4[%c0_6, %c0_7], %8 {strides = array<i32>} : memref<2x128xf32, #tpu.memory_space<vmem>>, vector<2x128xf32>,
    return
  }
  func.func @transform_0(%arg0: i32) -> (i32, i32) {
    %c0_i32 = arith.constant 0 : i32
    %c0_i32_0 = arith.constant 0 : i32
    return %arg0, %c0_i32 : i32, i32
  }
  func.func @transform_1(%arg0: i32) -> (i32, i32) {
    %c0_i32 = arith.constant 0 : i32
    %c0_i32_0 = arith.constant 0 : i32
    %c0_i32_1 = arith.constant 0 : i32
    return %c0_i32, %c0_i32_0 : i32, i32
  }
  func.func @transform_2(%arg0: i32) -> (i32, i32) {
    %c0_i32 = arith.constant 0 : i32
    %c0_i32_0 = arith.constant 0 : i32
    %c0_i32_1 = arith.constant 0 : i32
    return %c0_i32, %c0_i32_0 : i32, i32
  }
  func.func @transform_3(%arg0: i32) -> (i32, i32) {
    %c0_i32 = arith.constant 0 : i32
    %c0_i32_0 = arith.constant 0 : i32
    return %arg0, %c0_i32 : i32, i32
  }
}

</mosaic_0001>

<llo_original>
// kernel: tpu_custom_call.1
$region0: #{tpu_custom_call.1}
  #allocation0 [shape = 'u32[]', space=smem, size = 0x4, offset = 0x4, fixed_abs, tag = 'smem constant byte address 0x4 - core index']
  #allocation1 [shape = 'u32[144,128]{1,0:T(1,128)}', space=vmem, size = 0x12000, scoped, tag = 'internal scratch']
  %s0 = inlined_call_operand.hbm [shape: f32[2,20480], index: 0, kind: input, shape index: {}]
  %s1 = inlined_call_operand.hbm [shape: f32[20480,128], index: 1, kind: input, shape index: {}]
  %s2 = inlined_call_operand.hbm [shape: f32[1,128], index: 2, kind: input, shape index: {}]
  %s3 = inlined_call_operand.hbm [shape: f32[2,128], index: 3, kind: output, shape index: {}]
  %s4 = sld [smem:[#allocation0]]
  $region34: #{tpu_custom_call.1} parent=0
    _
  %s6 = ssub.s32 1, %s4
  %s7 = scalar_select 0, %s6, %s4
  $region1: #{tpu_custom_call.1} parent=0
    #allocation2 [shape = 'u8[163840]{0}', space=vmem, size = 0x28000, scoped, tag = 'input window, operand 0, single buffered']
    #allocation3 [shape = 's32[1]{0}', space=sflag, size = 0x4, scoped, tag = 'scoped memory for tpu_custom_call.1']
    #allocation4 [shape = 's32[1]{0}', space=sflag, size = 0x4, scoped, tag = 'scoped memory for tpu_custom_call.1']
    #allocation5 [shape = 'u8[10485760]{0}', space=vmem, size = 0xa00000, scoped, tag = 'input window, operand 1, single buffered']
    #allocation6 [shape = 's32[1]{0}', space=sflag, size = 0x4, scoped, tag = 'scoped memory for tpu_custom_call.1']
    #allocation7 [shape = 'u8[512]{0}', space=vmem, size = 0x400, scoped, tag = 'input window, operand 2, single buffered']
    #allocation8 [shape = 'u8[1024]{0}', space=vmem, size = 0x400, scoped, tag = 'output window, operand 0, single buffered']
    %8 = vsyncpa [#allocation3], 0
    %9 = vsyncpa [#allocation6], 0
    %10 = vsyncpa [#allocation4], 0
    // Predicated region
    $region2: #{tpu_custom_call.1} parent=1 // pred_check
      _
    $region3: #{tpu_custom_call.1} parent=1 // pred_check_branch
      %12 = sbr.rel (0) target = $region5
    $region4: #{tpu_custom_call.1} parent=1 // pred_region
      %s14 = ssub.s32 5120, 5120
      %15 = vsyncadd [#allocation3], %s14
      %s17 = sshll.u32 [#allocation2], 4
      %s18 = int_to_ptr.vmem [resolvable:$true] %s17
      %20 = dma.hbm_to_vmem [thread:$0]  %s0, 5120, %s18, [#allocation3]
    $region5: #{tpu_custom_call.1} parent=1 // pred_fallthru
      _
    // Predicated region
    $region6: #{tpu_custom_call.1} parent=1 // pred_check
      _
    $region7: #{tpu_custom_call.1} parent=1 // pred_check_branch
      %22 = sbr.rel (0) target = $region9
    $region8: #{tpu_custom_call.1} parent=1 // pred_region
      %s24 = ssub.s32 327680, 327680
      %25 = vsyncadd [#allocation6], %s24
      %s26 = sshll.u32 [#allocation5], 4
      %s27 = int_to_ptr.vmem [resolvable:$true] %s26
      %32 = dma.hbm_to_vmem [thread:$0]  %s1, 327680, %s27, [#allocation6], 128, 128, 8
    $region9: #{tpu_custom_call.1} parent=1 // pred_fallthru
      _
    // Predicated region
    $region10: #{tpu_custom_call.1} parent=1 // pred_check
      _
    $region11: #{tpu_custom_call.1} parent=1 // pred_check_branch
      %34 = sbr.rel (0) target = $region13
    $region12: #{tpu_custom_call.1} parent=1 // pred_region
      %s36 = ssub.s32 16, 16
      %37 = vsyncadd [#allocation6], %s36
      %s39 = sshll.u32 [#allocation7], 4
      %s40 = int_to_ptr.vmem [resolvable:$true] %s39
      %42 = dma.hbm_to_vmem [thread:$0]  %s2, 16, %s40, [#allocation6]
    $region13: #{tpu_custom_call.1} parent=1 // pred_fallthru
      _
    // Predicated region
    $region14: #{tpu_custom_call.1} parent=1 // pred_check
      _
    $region15: #{tpu_custom_call.1} parent=1 // pred_check_branch
      %44 = sbr.rel (0) target = $region17
    $region16: #{tpu_custom_call.1} parent=1 // pred_region
      %45 = dma.done [#allocation3], 5120
    $region17: #{tpu_custom_call.1} parent=1 // pred_fallthru
      _
    // Predicated region
    $region18: #{tpu_custom_call.1} parent=1 // pred_check
      _
    $region19: #{tpu_custom_call.1} parent=1 // pred_check_branch
      %47 = sbr.rel (0) target = $region21
    $region20: #{tpu_custom_call.1} parent=1 // pred_region
      %48 = dma.done [#allocation6], 327680
    $region21: #{tpu_custom_call.1} parent=1 // pred_fallthru
      _
    // Predicated region
    $region22: #{tpu_custom_call.1} parent=1 // pred_check
      _
    $region23: #{tpu_custom_call.1} parent=1 // pred_check_branch
      %50 = sbr.rel (0) target = $region25
    $region24: #{tpu_custom_call.1} parent=1 // pred_region
      %51 = dma.done [#allocation6], 16
    $region25: #{tpu_custom_call.1} parent=1 // pred_fallthru
      _
    %v52 = vld [vmem:[#allocation2] sm:$0xff]
    %v53 = vld [vmem:[#allocation2 + $0x8] sm:$0xff]
    %v54 = vld [vmem:[#allocation2 + $0x10] sm:$0xff]
    %v55 = vld [vmem:[#allocation2 + $0x18] sm:$0xff]
    %v56 = vld [vmem:[#allocation2 + $0x20] sm:$0xff]
    %v57 = vld [vmem:[#allocation2 + $0x28] sm:$0xff]
    %v58 = vld [vmem:[#allocation2 + $0x30] sm:$0xff]
    %v59 = vld [vmem:[#allocation2 + $0x38] sm:$0xff]
    %v60 = vld [vmem:[#allocation2 + $0x40] sm:$0xff]
    %v61 = vld [vmem:[#allocation2 + $0x48] sm:$0xff]
    %v62 = vld [vmem:[#allocation2 + $0x50] sm:$0xff]
    %v63 = vld [vmem:[#allocation2 + $0x58] sm:$0xff]
    %v64 = vld [vmem:[#allocation2 + $0x60] sm:$0xff]
    %v65 = vld [vmem:[#allocation2 + $0x68] sm:$0xff]
    %v66 = vld [vmem:[#allocation2 + $0x70] sm:$0xff]
    %v67 = vld [vmem:[#allocation2 + $0x78] sm:$0xff]
    %v68 = vld [vmem:[#allocation2 + $0x80] sm:$0xff]
    %v69 = vld [vmem:[#allocation2 + $0x88] sm:$0xff]
    %v70 = vld [vmem:[#allocation2 + $0x90] sm:$0xff]
    %v71 = vld [vmem:[#allocation2 + $0x98] sm:$0xff]
    %v72 = vld [vmem:[#allocation2 + $0xa0] sm:$0xff]
    %v73 = vld [vmem:[#allocation2 + $0xa8] sm:$0xff]
    %v74 = vld [vmem:[#allocation2 + $0xb0] sm:$0xff]
    %v75 = vld [vmem:[#allocation2 + $0xb8] sm:$0xff]
    %v76 = vld [vmem:[#allocation2 + $0xc0] sm:$0xff]
    %v77 = vld [vmem:[#allocation2 + $0xc8] sm:$0xff]
    %v78 = vld [vmem:[#allocation2 + $0xd0] sm:$0xff]
    %v79 = vld [vmem:[#allocation2 + $0xd8] sm:$0xff]
    %v80 = vld [vmem:[#allocation2 + $0xe0] sm:$0xff]
    %v81 = vld [vmem:[#allocation2 + $0xe8] sm:$0xff]
    %v82 = vld [vmem:[#allocation2 + $0xf0] sm:$0xff]
    %v83 = vld [vmem:[#allocation2 + $0xf8] sm:$0xff]
    %v84 = vld [vmem:[#allocation2 + $0x100] sm:$0xff]
    %v85 = vld [vmem:[#allocation2 + $0x108] sm:$0xff]
    %v86 = vld [vmem:[#allocation2 + $0x110] sm:$0xff]
    %v87 = vld [vmem:[#allocation2 + $0x118] sm:$0xff]
    %v88 = vld [vmem:[#allocation2 + $0x120] sm:$0xff]
    %v89 = vld [vmem:[#allocation2 + $0x128] sm:$0xff]
    %v90 = vld [vmem:[#allocation2 + $0x130] sm:$0xff]
    %v91 = vld [vmem:[#allocation2 + $0x138] sm:$0xff]
    %v92 = vmul.f32 %v52, 0.01
    %v93 = vmul.f32 %v53, 0.01
    %v94 = vmul.f32 %v54, 0.01
    %v95 = vmul.f32 %v55, 0.01
    %v96 = vmul.f32 %v56, 0.01
    %v97 = vmul.f32 %v57, 0.01
    %v98 = vmul.f32 %v58, 0.01
    %v99 = vmul.f32 %v59, 0.01
    %v100 = vmul.f32 %v60, 0.01
    %v101 = vmul.f32 %v61, 0.01
    %v102 = vmul.f32 %v62, 0.01
    %v103 = vmul.f32 %v63, 0.01
    %v104 = vmul.f32 %v64, 0.01
    %v105 = vmul.f32 %v65, 0.01
    %v106 = vmul.f32 %v66, 0.01
    %v107 = vmul.f32 %v67, 0.01
    %v108 = vmul.f32 %v68, 0.01
    %v109 = vmul.f32 %v69, 0.01
    %v110 = vmul.f32 %v70, 0.01
    %v111 = vmul.f32 %v71, 0.01
    %v112 = vmul.f32 %v72, 0.01
    %v113 = vmul.f32 %v73, 0.01
    %v114 = vmul.f32 %v74, 0.01
    %v115 = vmul.f32 %v75, 0.01
    %v116 = vmul.f32 %v76, 0.01
    %v117 = vmul.f32 %v77, 0.01
    %v118 = vmul.f32 %v78, 0.01
    %v119 = vmul.f32 %v79, 0.01
    %v120 = vmul.f32 %v80, 0.01
    %v121 = vmul.f32 %v81, 0.01
    %v122 = vmul.f32 %v82, 0.01
    %v123 = vmul.f32 %v83, 0.01
    %v124 = vmul.f32 %v84, 0.01
    %v125 = vmul.f32 %v85, 0.01
    %v126 = vmul.f32 %v86, 0.01
    %v127 = vmul.f32 %v87, 0.01
    %v128 = vmul.f32 %v88, 0.01
    %v129 = vmul.f32 %v89, 0.01
    %v130 = vmul.f32 %v90, 0.01
    %v131 = vmul.f32 %v91, 0.01
    %v132 = vmax.f32 %v52, %v92
    %v133 = vmax.f32 %v53, %v93
    %v134 = vmax.f32 %v54, %v94
    %v135 = vmax.f32 %v55, %v95
    %v136 = vmax.f32 %v56, %v96
    %v137 = vmax.f32 %v57, %v97
    %v138 = vmax.f32 %v58, %v98
    %v139 = vmax.f32 %v59, %v99
    %v140 = vmax.f32 %v60, %v100
    %v141 = vmax.f32 %v61, %v101
    %v142 = vmax.f32 %v62, %v102
    %v143 = vmax.f32 %v63, %v103
    %v144 = vmax.f32 %v64, %v104
    %v145 = vmax.f32 %v65, %v105
    %v146 = vmax.f32 %v66, %v106
    %v147 = vmax.f32 %v67, %v107
    %v148 = vmax.f32 %v68, %v108
    %v149 = vmax.f32 %v69, %v109
    %v150 = vmax.f32 %v70, %v110
    %v151 = vmax.f32 %v71, %v111
    %v152 = vmax.f32 %v72, %v112
    %v153 = vmax.f32 %v73, %v113
    %v154 = vmax.f32 %v74, %v114
    %v155 = vmax.f32 %v75, %v115
    %v156 = vmax.f32 %v76, %v116
    %v157 = vmax.f32 %v77, %v117
    %v158 = vmax.f32 %v78, %v118
    %v159 = vmax.f32 %v79, %v119
    %v160 = vmax.f32 %v80, %v120
    %v161 = vmax.f32 %v81, %v121
    %v162 = vmax.f32 %v82, %v122
    %v163 = vmax.f32 %v83, %v123
    %v164 = vmax.f32 %v84, %v124
    %v165 = vmax.f32 %v85, %v125
    %v166 = vmax.f32 %v86, %v126
    %v167 = vmax.f32 %v87, %v127
    %v168 = vmax.f32 %v88, %v128
    %v169 = vmax.f32 %v89, %v129
    %v170 = vmax.f32 %v90, %v130
    %v171 = vmax.f32 %v91, %v131
    %v172 = vld [vmem:[#allocation5] sm:$0xff]
    %v173 = vld [vmem:[#allocation5 + $0x8] sm:$0xff]
    %v174 = vld [vmem:[#allocation5 + $0x10] sm:$0xff]
    %v175 = vld [vmem:[#allocation5 + $0x18] sm:$0xff]
    %v176 = vld [vmem:[#allocation5 + $0x20] sm:$0xff]
    %v177 = vld [vmem:[#allocation5 + $0x28] sm:$0xff]
    %v178 = vld [vmem:[#allocation5 + $0x30] sm:$0xff]
    %v179 = vld [vmem:[#allocation5 + $0x38] sm:$0xff]
    %v180 = vld [vmem:[#allocation5 + $0x40] sm:$0xff]
    %v181 = vld [vmem:[#allocation5 + $0x48] sm:$0xff]
    %v182 = vld [vmem:[#allocation5 + $0x50] sm:$0xff]
    %v183 = vld [vmem:[#allocation5 + $0x58] sm:$0xff]
    %v184 = vld [vmem:[#allocation5 + $0x60] sm:$0xff]
    %v185 = vld [vmem:[#allocation5 + $0x68] sm:$0xff]
    %v186 = vld [vmem:[#allocation5 + $0x70] sm:$0xff]
    %v187 = vld [vmem:[#allocation5 + $0x78] sm:$0xff]
    %v188 = vld [vmem:[#allocation5 + $0x80] sm:$0xff]
    %v189 = vld [vmem:[#allocation5 + $0x88] sm:$0xff]
    %v190 = vld [vmem:[#allocation5 + $0x90] sm:$0xff]
    %v191 = vld [vmem:[#allocation5 + $0x98] sm:$0xff]
    %v192 = vld [vmem:[#allocation5 + $0xa0] sm:$0xff]
    %v193 = vld [vmem:[#allocation5 + $0xa8] sm:$0xff]
    %v194 = vld [vmem:[#allocation5 + $0xb0] sm:$0xff]
    %v195 = vld [vmem:[#allocation5 + $0xb8] sm:$0xff]
    %v196 = vld [vmem:[#allocation5 + $0xc0] sm:$0xff]
    %v197 = vld [vmem:[#allocation5 + $0xc8] sm:$0xff]
    %v198 = vld [vmem:[#allocation5 + $0xd0] sm:$0xff]
    %v199 = vld [vmem:[#allocation5 + $0xd8] sm:$0xff]
    %v200 = vld [vmem:[#allocation5 + $0xe0] sm:$0xff]
    %v201 = vld [vmem:[#allocation5 + $0xe8] sm:$0xff]
    %v202 = vld [vmem:[#allocation5 + $0xf0] sm:$0xff]
    %v203 = vld [vmem:[#allocation5 + $0xf8] sm:$0xff]
    %v204 = vld [vmem:[#allocation5 + $0x100] sm:$0xff]
    %v205 = vld [vmem:[#allocation5 + $0x108] sm:$0xff]
    %v206 = vld [vmem:[#allocation5 + $0x110] sm:$0xff]
    %v207 = vld [vmem:[#allocation5 + $0x118] sm:$0xff]
    %v208 = vld [vmem:[#allocation5 + $0x120] sm:$0xff]
    %v209 = vld [vmem:[#allocation5 + $0x128] sm:$0xff]
    %v210 = vld [vmem:[#allocation5 + $0x130] sm:$0xff]
    %v211 = vld [vmem:[#allocation5 + $0x138] sm:$0xff]
    %v212 = vld [vmem:[#allocation5 + $0x140] sm:$0xff]
    %v213 = vld [vmem:[#allocation5 + $0x148] sm:$0xff]
    %v214 = vld [vmem:[#allocation5 + $0x150] sm:$0xff]
    %v215 = vld [vmem:[#allocation5 + $0x158] sm:$0xff]
    %v216 = vld [vmem:[#allocation5 + $0x160] sm:$0xff]
    %v217 = vld [vmem:[#allocation5 + $0x168] sm:$0xff]
    %v218 = vld [vmem:[#allocation5 + $0x170] sm:$0xff]
    %v219 = vld [vmem:[#allocation5 + $0x178] sm:$0xff]
    %v220 = vld [vmem:[#allocation5 + $0x180] sm:$0xff]
    %v221 = vld [vmem:[#allocation5 + $0x188] sm:$0xff]
    %v222 = vld [vmem:[#allocation5 + $0x190] sm:$0xff]
    %v223 = vld [vmem:[#allocation5 + $0x198] sm:$0xff]
    %v224 = vld [vmem:[#allocation5 + $0x1a0] sm:$0xff]
    %v225 = vld [vmem:[#allocation5 + $0x1a8] sm:$0xff]
    %v226 = vld [vmem:[#allocation5 + $0x1b0] sm:$0xff]
    %v227 = vld [vmem:[#allocation5 + $0x1b8] sm:$0xff]
    %v228 = vld [vmem:[#allocation5 + $0x1c0] sm:$0xff]
    %v229 = vld [vmem:[#allocation5 + $0x1c8] sm:$0xff]
    %v230 = vld [vmem:[#allocation5 + $0x1d0] sm:$0xff]
    %v231 = vld [vmem:[#allocation5 + $0x1d8] sm:$0xff]
    %v232 = vld [vmem:[#allocation5 + $0x1e0] sm:$0xff]
    %v233 = vld [vmem:[#allocation5 + $0x1e8] sm:$0xff]
    %v234 = vld [vmem:[#allocation5 + $0x1f0] sm:$0xff]
    %v235 = vld [vmem:[#allocation5 + $0x1f8] sm:$0xff]
    %v236 = vld [vmem:[#allocation5 + $0x200] sm:$0xff]
    %v237 = vld [vmem:[#allocation5 + $0x208] sm:$0xff]
    %v238 = vld [vmem:[#allocation5 + $0x210] sm:$0xff]
    %v239 = vld [vmem:[#allocation5 + $0x218] sm:$0xff]
    %v240 = vld [vmem:[#allocation5 + $0x220] sm:$0xff]
    %v241 = vld [vmem:[#allocation5 + $0x228] sm:$0xff]
    %v242 = vld [vmem:[#allocation5 + $0x230] sm:$0xff]
    %v243 = vld [vmem:[#allocation5 + $0x238] sm:$0xff]
    %v244 = vld [vmem:[#allocation5 + $0x240] sm:$0xff]
    %v245 = vld [vmem:[#allocation5 + $0x248] sm:$0xff]
    %v246 = vld [vmem:[#allocation5 + $0x250] sm:$0xff]
    %v247 = vld [vmem:[#allocation5 + $0x258] sm:$0xff]
    %v248 = vld [vmem:[#allocation5 + $0x260] sm:$0xff]
    %v249 = vld [vmem:[#allocation5 + $0x268] sm:$0xff]
    %v250 = vld [vmem:[#allocation5 + $0x270] sm:$0xff]
    %v251 = vld [vmem:[#allocation5 + $0x278] sm:$0xff]
    %v252 = vld [vmem:[#allocation5 + $0x280] sm:$0xff]
    %v253 = vld [vmem:[#allocation5 + $0x288] sm:$0xff]
    %v254 = vld [vmem:[#allocation5 + $0x290] sm:$0xff]
    %v255 = vld [vmem:[#allocation5 + $0x298] sm:$0xff]
    %v256 = vld [vmem:[#allocation5 + $0x2a0] sm:$0xff]
    %v257 = vld [vmem:[#allocation5 + $0x2a8] sm:$0xff]
    %v258 = vld [vmem:[#allocation5 + $0x2b0] sm:$0xff]
    %v259 = vld [vmem:[#allocation5 + $0x2b8] sm:$0xff]
    %v260 = vld [vmem:[#allocation5 + $0x2c0] sm:$0xff]
    %v261 = vld [vmem:[#allocation5 + $0x2c8] sm:$0xff]
    %v262 = vld [vmem:[#allocation5 + $0x2d0] sm:$0xff]
    %v263 = vld [vmem:[#allocation5 + $0x2d8] sm:$0xff]
    %v264 = vld [vmem:[#allocation5 + $0x2e0] sm:$0xff]
    %v265 = vld [vmem:[#allocation5 + $0x2e8] sm:$0xff]
    %v266 = vld [vmem:[#allocation5 + $0x2f0] sm:$0xff]
    %v267 = vld [vmem:[#allocation5 + $0x2f8] sm:$0xff]
    %v268 = vld [vmem:[#allocation5 + $0x300] sm:$0xff]
    %v269 = vld [vmem:[#allocation5 + $0x308] sm:$0xff]
    %v270 = vld [vmem:[#allocation5 + $0x310] sm:$0xff]
    %v271 = vld [vmem:[#allocation5 + $0x318] sm:$0xff]
    %v272 = vld [vmem:[#allocation5 + $0x320] sm:$0xff]
    %v273 = vld [vmem:[#allocation5 + $0x328] sm:$0xff]
    %v274 = vld [vmem:[#allocation5 + $0x330] sm:$0xff]
    %v275 = vld [vmem:[#allocation5 + $0x338] sm:$0xff]
    %v276 = vld [vmem:[#allocation5 + $0x340] sm:$0xff]
    %v277 = vld [vmem:[#allocation5 + $0x348] sm:$0xff]
    %v278 = vld [vmem:[#allocation5 + $0x350] sm:$0xff]
    %v279 = vld [vmem:[#allocation5 + $0x358] sm:$0xff]
    %v280 = vld [vmem:[#allocation5 + $0x360] sm:$0xff]
    %v281 = vld [vmem:[#allocation5 + $0x368] sm:$0xff]
    %v282 = vld [vmem:[#allocation5 + $0x370] sm:$0xff]
    %v283 = vld [vmem:[#allocation5 + $0x378] sm:$0xff]
    %v284 = vld [vmem:[#allocation5 + $0x380] sm:$0xff]
    %v285 = vld [vmem:[#allocation5 + $0x388] sm:$0xff]
    %v286 = vld [vmem:[#allocation5 + $0x390] sm:$0xff]
    %v287 = vld [vmem:[#allocation5 + $0x398] sm:$0xff]
    %v288 = vld [vmem:[#allocation5 + $0x3a0] sm:$0xff]
    %v289 = vld [vmem:[#allocation5 + $0x3a8] sm:$0xff]
    %v290 = vld [vmem:[#allocation5 + $0x3b0] sm:$0xff]
    %v291 = vld [vmem:[#allocation5 + $0x3b8] sm:$0xff]
    %v292 = vld [vmem:[#allocation5 + $0x3c0] sm:$0xff]
    %v293 = vld [vmem:[#allocation5 + $0x3c8] sm:$0xff]
    %v294 = vld [vmem:[#allocation5 + $0x3d0] sm:$0xff]
    %v295 = vld [vmem:[#allocation5 + $0x3d8] sm:$0xff]
    %v296 = vld [vmem:[#allocation5 + $0x3e0] sm:$0xff]
    %v297 = vld [vmem:[#allocation5 + $0x3e8] sm:$0xff]
    %v298 = vld [vmem:[#allocation5 + $0x3f0] sm:$0xff]
    %v299 = vld [vmem:[#allocation5 + $0x3f8] sm:$0xff]
    %v300 = vld [vmem:[#allocation5 + $0x400] sm:$0xff]
    %v301 = vld [vmem:[#allocation5 + $0x408] sm:$0xff]
    %v302 = vld [vmem:[#allocation5 + $0x410] sm:$0xff]
    %v303 = vld [vmem:[#allocation5 + $0x418] sm:$0xff]
    %v304 = vld [vmem:[#allocation5 + $0x420] sm:$0xff]
    %v305 = vld [vmem:[#allocation5 + $0x428] sm:$0xff]
    %v306 = vld [vmem:[#allocation5 + $0x430] sm:$0xff]
    %v307 = vld [vmem:[#allocation5 + $0x438] sm:$0xff]
    %v308 = vld [vmem:[#allocation5 + $0x440] sm:$0xff]
    %v309 = vld [vmem:[#allocation5 + $0x448] sm:$0xff]
    %v310 = vld [vmem:[#allocation5 + $0x450] sm:$0xff]
    %v311 = vld [vmem:[#allocation5 + $0x458] sm:$0xff]
    %v312 = vld [vmem:[#allocation5 + $0x460] sm:$0xff]
    %v313 = vld [vmem:[#allocation5 + $0x468] sm:$0xff]
    %v314 = vld [vmem:[#allocation5 + $0x470] sm:$0xff]
    %v315 = vld [vmem:[#allocation5 + $0x478] sm:$0xff]
    %v316 = vld [vmem:[#allocation5 + $0x480] sm:$0xff]
    %v317 = vld [vmem:[#allocation5 + $0x488] sm:$0xff]
    %v318 = vld [vmem:[#allocation5 + $0x490] sm:$0xff]
    %v319 = vld [vmem:[#allocation5 + $0x498] sm:$0xff]
    %v320 = vld [vmem:[#allocation5 + $0x4a0] sm:$0xff]
    %v321 = vld [vmem:[#allocation5 + $0x4a8] sm:$0xff]
    %v322 = vld [vmem:[#allocation5 + $0x4b0] sm:$0xff]
    %v323 = vld [vmem:[#allocation5 + $0x4b8] sm:$0xff]
    %v324 = vld [vmem:[#allocation5 + $0x4c0] sm:$0xff]
    %v325 = vld [vmem:[#allocation5 + $0x4c8] sm:$0xff]
    %v326 = vld [vmem:[#allocation5 + $0x4d0] sm:$0xff]
    %v327 = vld [vmem:[#allocation5 + $0x4d8] sm:$0xff]
    %v328 = vld [vmem:[#allocation5 + $0x4e0] sm:$0xff]
    %v329 = vld [vmem:[#allocation5 + $0x4e8] sm:$0xff]
    %v330 = vld [vmem:[#allocation5 + $0x4f0] sm:$0xff]
    %v331 = vld [vmem:[#allocation5 + $0x4f8] sm:$0xff]
    %v332 = vld [vmem:[#allocation5 + $0x500] sm:$0xff]
    %v333 = vld [vmem:[#allocation5 + $0x508] sm:$0xff]
    %v334 = vld [vmem:[#allocation5 + $0x510] sm:$0xff]
    %v335 = vld [vmem:[#allocation5 + $0x518] sm:$0xff]
    %v336 = vld [vmem:[#allocation5 + $0x520] sm:$0xff]
    %v337 = vld [vmem:[#allocation5 + $0x528] sm:$0xff]
    %v338 = vld [vmem:[#allocation5 + $0x530] sm:$0xff]
    %v339 = vld [vmem:[#allocation5 + $0x538] sm:$0xff]
    %v340 = vld [vmem:[#allocation5 + $0x540] sm:$0xff]
    %v341 = vld [vmem:[#allocation5 + $0x548] sm:$0xff]
    %v342 = vld [vmem:[#allocation5 + $0x550] sm:$0xff]
    %v343 = vld [vmem:[#allocation5 + $0x558] sm:$0xff]
    %v344 = vld [vmem:[#allocation5 + $0x560] sm:$0xff]
    %v345 = vld [vmem:[#allocation5 + $0x568] sm:$0xff]
    %v346 = vld [vmem:[#allocation5 + $0x570] sm:$0xff]
    %v347 = vld [vmem:[#allocation5 + $0x578] sm:$0xff]
    %v348 = vld [vmem:[#allocation5 + $0x580] sm:$0xff]
    %v349 = vld [vmem:[#allocation5 + $0x588] sm:$0xff]
    %v350 = vld [vmem:[#allocation5 + $0x590] sm:$0xff]
    %v351 = vld [vmem:[#allocation5 + $0x598] sm:$0xff]
    %v352 = vld [vmem:[#allocation5 + $0x5a0] sm:$0xff]
    %v353 = vld [vmem:[#allocation5 + $0x5a8] sm:$0xff]
    %v354 = vld [vmem:[#allocation5 + $0x5b0] sm:$0xff]
    %v355 = vld [vmem:[#allocation5 + $0x5b8] sm:$0xff]
    %v356 = vld [vmem:[#allocation5 + $0x5c0] sm:$0xff]
    %v357 = vld [vmem:[#allocation5 + $0x5c8] sm:$0xff]
    %v358 = vld [vmem:[#allocation5 + $0x5d0] sm:$0xff]
    %v359 = vld [vmem:[#allocation5 + $0x5d8] sm:$0xff]
    %v360 = vld [vmem:[#allocation5 + $0x5e0] sm:$0xff]
    %v361 = vld [vmem:[#allocation5 + $0x5e8] sm:$0xff]
    %v362 = vld [vmem:[#allocation5 + $0x5f0] sm:$0xff]
    %v363 = vld [vmem:[#allocation5 + $0x5f8] sm:$0xff]
    %v364 = vld [vmem:[#allocation5 + $0x600] sm:$0xff]
    %v365 = vld [vmem:[#allocation5 + $0x608] sm:$0xff]
    %v366 = vld [vmem:[#allocation5 + $0x610] sm:$0xff]
    %v367 = vld [vmem:[#allocation5 + $0x618] sm:$0xff]
    %v368 = vld [vmem:[#allocation5 + $0x620] sm:$0xff]
    %v369 = vld [vmem:[#allocation5 + $0x628] sm:$0xff]
    %v370 = vld [vmem:[#allocation5 + $0x630] sm:$0xff]
    %v371 = vld [vmem:[#allocation5 + $0x638] sm:$0xff]
    %v372 = vld [vmem:[#allocation5 + $0x640] sm:$0xff]
    %v373 = vld [vmem:[#allocation5 + $0x648] sm:$0xff]
    %v374 = vld [vmem:[#allocation5 + $0x650] sm:$0xff]
    %v375 = vld [vmem:[#allocation5 + $0x658] sm:$0xff]
    %v376 = vld [vmem:[#allocation5 + $0x660] sm:$0xff]
    %v377 = vld [vmem:[#allocation5 + $0x668] sm:$0xff]
    %v378 = vld [vmem:[#allocation5 + $0x670] sm:$0xff]
    %v379 = vld [vmem:[#allocation5 + $0x678] sm:$0xff]
    %v380 = vld [vmem:[#allocation5 + $0x680] sm:$0xff]
    %v381 = vld [vmem:[#allocation5 + $0x688] sm:$0xff]
    %v382 = vld [vmem:[#allocation5 + $0x690] sm:$0xff]
    %v383 = vld [vmem:[#allocation5 + $0x698] sm:$0xff]
    %v384 = vld [vmem:[#allocation5 + $0x6a0] sm:$0xff]
    %v385 = vld [vmem:[#allocation5 + $0x6a8] sm:$0xff]
    %v386 = vld [vmem:[#allocation5 + $0x6b0] sm:$0xff]
    %v387 = vld [vmem:[#allocation5 + $0x6b8] sm:$0xff]
    %v388 = vld [vmem:[#allocation5 + $0x6c0] sm:$0xff]
    %v389 = vld [vmem:[#allocation5 + $0x6c8] sm:$0xff]
    %v390 = vld [vmem:[#allocation5 + $0x6d0] sm:$0xff]
    %v391 = vld [vmem:[#allocation5 + $0x6d8] sm:$0xff]
    %v392 = vld [vmem:[#allocation5 + $0x6e0] sm:$0xff]
    %v393 = vld [vmem:[#allocation5 + $0x6e8] sm:$0xff]
    %v394 = vld [vmem:[#allocation5 + $0x6f0] sm:$0xff]
    %v395 = vld [vmem:[#allocation5 + $0x6f8] sm:$0xff]
    %v396 = vld [vmem:[#allocation5 + $0x700] sm:$0xff]
    %v397 = vld [vmem:[#allocation5 + $0x708] sm:$0xff]
    %v398 = vld [vmem:[#allocation5 + $0x710] sm:$0xff]
    %v399 = vld [vmem:[#allocation5 + $0x718] sm:$0xff]
    %v400 = vld [vmem:[#allocation5 + $0x720] sm:$0xff]
    %v401 = vld [vmem:[#allocation5 + $0x728] sm:$0xff]
    %v402 = vld [vmem:[#allocation5 + $0x730] sm:$0xff]
    %v403 = vld [vmem:[#allocation5 + $0x738] sm:$0xff]
    %v404 = vld [vmem:[#allocation5 + $0x740] sm:$0xff]
    %v405 = vld [vmem:[#allocation5 + $0x748] sm:$0xff]
    %v406 = vld [vmem:[#allocation5 + $0x750] sm:$0xff]
    %v407 = vld [vmem:[#allocation5 + $0x758] sm:$0xff]
    %v408 = vld [vmem:[#allocation5 + $0x760] sm:$0xff]
    %v409 = vld [vmem:[#allocation5 + $0x768] sm:$0xff]
    %v410 = vld [vmem:[#allocation5 + $0x770] sm:$0xff]
    %v411 = vld [vmem:[#allocation5 + $0x778] sm:$0xff]
    %v412 = vld [vmem:[#allocation5 + $0x780] sm:$0xff]
    %v413 = vld [vmem:[#allocation5 + $0x788] sm:$0xff]
    %v414 = vld [vmem:[#allocation5 + $0x790] sm:$0xff]
    %v415 = vld [vmem:[#allocation5 + $0x798] sm:$0xff]
    %v416 = vld [vmem:[#allocation5 + $0x7a0] sm:$0xff]
    %v417 = vld [vmem:[#allocation5 + $0x7a8] sm:$0xff]
    %v418 = vld [vmem:[#allocation5 + $0x7b0] sm:$0xff]
    %v419 = vld [vmem:[#allocation5 + $0x7b8] sm:$0xff]
    %v420 = vld [vmem:[#allocation5 + $0x7c0] sm:$0xff]
    %v421 = vld [vmem:[#allocation5 + $0x7c8] sm:$0xff]
    %v422 = vld [vmem:[#allocation5 + $0x7d0] sm:$0xff]
    %v423 = vld [vmem:[#allocation5 + $0x7d8] sm:$0xff]
    %v424 = vld [vmem:[#allocation5 + $0x7e0] sm:$0xff]
    %v425 = vld [vmem:[#allocation5 + $0x7e8] sm:$0xff]
    %v426 = vld [vmem:[#allocation5 + $0x7f0] sm:$0xff]
    %v427 = vld [vmem:[#allocation5 + $0x7f8] sm:$0xff]
    %v428 = vld [vmem:[#allocation5 + $0x800] sm:$0xff]
    %v429 = vld [vmem:[#allocation5 + $0x808] sm:$0xff]
    %v430 = vld [vmem:[#allocation5 + $0x810] sm:$0xff]
    %v431 = vld [vmem:[#allocation5 + $0x818] sm:$0xff]
    %v432 = vld [vmem:[#allocation5 + $0x820] sm:$0xff]
    %v433 = vld [vmem:[#allocation5 + $0x828] sm:$0xff]
    %v434 = vld [vmem:[#allocation5 + $0x830] sm:$0xff]
    %v435 = vld [vmem:[#allocation5 + $0x838] sm:$0xff]
    %v436 = vld [vmem:[#allocation5 + $0x840] sm:$0xff]
    %v437 = vld [vmem:[#allocation5 + $0x848] sm:$0xff]
    %v438 = vld [vmem:[#allocation5 + $0x850] sm:$0xff]
    %v439 = vld [vmem:[#allocation5 + $0x858] sm:$0xff]
    %v440 = vld [vmem:[#allocation5 + $0x860] sm:$0xff]
    %v441 = vld [vmem:[#allocation5 + $0x868] sm:$0xff]
    %v442 = vld [vmem:[#allocation5 + $0x870] sm:$0xff]
    %v443 = vld [vmem:[#allocation5 + $0x878] sm:$0xff]
    %v444 = vld [vmem:[#allocation5 + $0x880] sm:$0xff]
    %v445 = vld [vmem:[#allocation5 + $0x888] sm:$0xff]
    %v446 = vld [vmem:[#allocation5 + $0x890] sm:$0xff]
    %v447 = vld [vmem:[#allocation5 + $0x898] sm:$0xff]
    %v448 = vld [vmem:[#allocation5 + $0x8a0] sm:$0xff]
    %v449 = vld [vmem:[#allocation5 + $0x8a8] sm:$0xff]
    %v450 = vld [vmem:[#allocation5 + $0x8b0] sm:$0xff]
    %v451 = vld [vmem:[#allocation5 + $0x8b8] sm:$0xff]
    %v452 = vld [vmem:[#allocation5 + $0x8c0] sm:$0xff]
    %v453 = vld [vmem:[#allocation5 + $0x8c8] sm:$0xff]
    %v454 = vld [vmem:[#allocation5 + $0x8d0] sm:$0xff]
    %v455 = vld [vmem:[#allocation5 + $0x8d8] sm:$0xff]
    %v456 = vld [vmem:[#allocation5 + $0x8e0] sm:$0xff]
    %v457 = vld [vmem:[#allocation5 + $0x8e8] sm:$0xff]
    %v458 = vld [vmem:[#allocation5 + $0x8f0] sm:$0xff]
    %v459 = vld [vmem:[#allocation5 + $0x8f8] sm:$0xff]
    %v460 = vld [vmem:[#allocation5 + $0x900] sm:$0xff]
    %v461 = vld [vmem:[#allocation5 + $0x908] sm:$0xff]
    %v462 = vld [vmem:[#allocation5 + $0x910] sm:$0xff]
    %v463 = vld [vmem:[#allocation5 + $0x918] sm:$0xff]
    %v464 = vld [vmem:[#allocation5 + $0x920] sm:$0xff]
    %v465 = vld [vmem:[#allocation5 + $0x928] sm:$0xff]
    %v466 = vld [vmem:[#allocation5 + $0x930] sm:$0xff]
    %v467 = vld [vmem:[#allocation5 + $0x938] sm:$0xff]
    %v468 = vld [vmem:[#allocation5 + $0x940] sm:$0xff]
    %v469 = vld [vmem:[#allocation5 + $0x948] sm:$0xff]
    %v470 = vld [vmem:[#allocation5 + $0x950] sm:$0xff]
    %v471 = vld [vmem:[#allocation5 + $0x958] sm:$0xff]
    %v472 = vld [vmem:[#allocation5 + $0x960] sm:$0xff]
    %v473 = vld [vmem:[#allocation5 + $0x968] sm:$0xff]
    %v474 = vld [vmem:[#allocation5 + $0x970] sm:$0xff]
    %v475 = vld [vmem:[#allocation5 + $0x978] sm:$0xff]
    %v476 = vld [vmem:[#allocation5 + $0x980] sm:$0xff]
    %v477 = vld [vmem:[#allocation5 + $0x988] sm:$0xff]
    %v478 = vld [vmem:[#allocation5 + $0x990] sm:$0xff]
    %v479 = vld [vmem:[#allocation5 + $0x998] sm:$0xff]
    %v480 = vld [vmem:[#allocation5 + $0x9a0] sm:$0xff]
    %v481 = vld [vmem:[#allocation5 + $0x9a8] sm:$0xff]
    %v482 = vld [vmem:[#allocation5 + $0x9b0] sm:$0xff]
    %v483 = vld [vmem:[#allocation5 + $0x9b8] sm:$0xff]
    %v484 = vld [vmem:[#allocation5 + $0x9c0] sm:$0xff]
    %v485 = vld [vmem:[#allocation5 + $0x9c8] sm:$0xff]
    %v486 = vld [vmem:[#allocation5 + $0x9d0] sm:$0xff]
    %v487 = vld [vmem:[#allocation5 + $0x9d8] sm:$0xff]
    %v488 = vld [vmem:[#allocation5 + $0x9e0] sm:$0xff]
    %v489 = vld [vmem:[#allocation5 + $0x9e8] sm:$0xff]
    %v490 = vld [vmem:[#allocation5 + $0x9f0] sm:$0xff]
    %v491 = vld [vmem:[#allocation5 + $0x9f8] sm:$0xff]
    %v492 = vld [vmem:[#allocation5 + $0xa00] sm:$0xff]
    %v493 = vld [vmem:[#allocation5 + $0xa08] sm:$0xff]
    %v494 = vld [vmem:[#allocation5 + $0xa10] sm:$0xff]
    %v495 = vld [vmem:[#allocation5 + $0xa18] sm:$0xff]
    %v496 = vld [vmem:[#allocation5 + $0xa20] sm:$0xff]
    %v497 = vld [vmem:[#allocation5 + $0xa28] sm:$0xff]
    %v498 = vld [vmem:[#allocation5 + $0xa30] sm:$0xff]
    %v499 = vld [vmem:[#allocation5 + $0xa38] sm:$0xff]
    %v500 = vld [vmem:[#allocation5 + $0xa40] sm:$0xff]
    %v501 = vld [vmem:[#allocation5 + $0xa48] sm:$0xff]
    %v502 = vld [vmem:[#allocation5 + $0xa50] sm:$0xff]
    %v503 = vld [vmem:[#allocation5 + $0xa58] sm:$0xff]
    %v504 = vld [vmem:[#allocation5 + $0xa60] sm:$0xff]
    %v505 = vld [vmem:[#allocation5 + $0xa68] sm:$0xff]
    %v506 = vld [vmem:[#allocation5 + $0xa70] sm:$0xff]
    %v507 = vld [vmem:[#allocation5 + $0xa78] sm:$0xff]
    %v508 = vld [vmem:[#allocation5 + $0xa80] sm:$0xff]
    %v509 = vld [vmem:[#allocation5 + $0xa88] sm:$0xff]
    %v510 = vld [vmem:[#allocation5 + $0xa90] sm:$0xff]
    %v511 = vld [vmem:[#allocation5 + $0xa98] sm:$0xff]
    %v512 = vld [vmem:[#allocation5 + $0xaa0] sm:$0xff]
    %v513 = vld [vmem:[#allocation5 + $0xaa8] sm:$0xff]
    %v514 = vld [vmem:[#allocation5 + $0xab0] sm:$0xff]
    %v515 = vld [vmem:[#allocation5 + $0xab8] sm:$0xff]
    %v516 = vld [vmem:[#allocation5 + $0xac0] sm:$0xff]
    %v517 = vld [vmem:[#allocation5 + $0xac8] sm:$0xff]
    %v518 = vld [vmem:[#allocation5 + $0xad0] sm:$0xff]
    %v519 = vld [vmem:[#allocation5 + $0xad8] sm:$0xff]
    %v520 = vld [vmem:[#allocation5 + $0xae0] sm:$0xff]
    %v521 = vld [vmem:[#allocation5 + $0xae8] sm:$0xff]
    %v522 = vld [vmem:[#allocation5 + $0xaf0] sm:$0xff]
    %v523 = vld [vmem:[#allocation5 + $0xaf8] sm:$0xff]
    %v524 = vld [vmem:[#allocation5 + $0xb00] sm:$0xff]
    %v525 = vld [vmem:[#allocation5 + $0xb08] sm:$0xff]
    %v526 = vld [vmem:[#allocation5 + $0xb10] sm:$0xff]
    %v527 = vld [vmem:[#allocation5 + $0xb18] sm:$0xff]
    %v528 = vld [vmem:[#allocation5 + $0xb20] sm:$0xff]
    %v529 = vld [vmem:[#allocation5 + $0xb28] sm:$0xff]
    %v530 = vld [vmem:[#allocation5 + $0xb30] sm:$0xff]
    %v531 = vld [vmem:[#allocation5 + $0xb38] sm:$0xff]
    %v532 = vld [vmem:[#allocation5 + $0xb40] sm:$0xff]
    %v533 = vld [vmem:[#allocation5 + $0xb48] sm:$0xff]
    %v534 = vld [vmem:[#allocation5 + $0xb50] sm:$0xff]
    %v535 = vld [vmem:[#allocation5 + $0xb58] sm:$0xff]
    %v536 = vld [vmem:[#allocation5 + $0xb60] sm:$0xff]
    %v537 = vld [vmem:[#allocation5 + $0xb68] sm:$0xff]
    %v538 = vld [vmem:[#allocation5 + $0xb70] sm:$0xff]
    %v539 = vld [vmem:[#allocation5 + $0xb78] sm:$0xff]
    %v540 = vld [vmem:[#allocation5 + $0xb80] sm:$0xff]
    %v541 = vld [vmem:[#allocation5 + $0xb88] sm:$0xff]
    %v542 = vld [vmem:[#allocation5 + $0xb90] sm:$0xff]
    %v543 = vld [vmem:[#allocation5 + $0xb98] sm:$0xff]
    %v544 = vld [vmem:[#allocation5 + $0xba0] sm:$0xff]
    %v545 = vld [vmem:[#allocation5 + $0xba8] sm:$0xff]
    %v546 = vld [vmem:[#allocation5 + $0xbb0] sm:$0xff]
    %v547 = vld [vmem:[#allocation5 + $0xbb8] sm:$0xff]
    %v548 = vld [vmem:[#allocation5 + $0xbc0] sm:$0xff]
    %v549 = vld [vmem:[#allocation5 + $0xbc8] sm:$0xff]
    %v550 = vld [vmem:[#allocation5 + $0xbd0] sm:$0xff]
    %v551 = vld [vmem:[#allocation5 + $0xbd8] sm:$0xff]
    %v552 = vld [vmem:[#allocation5 + $0xbe0] sm:$0xff]
    %v553 = vld [vmem:[#allocation5 + $0xbe8] sm:$0xff]
    %v554 = vld [vmem:[#allocation5 + $0xbf0] sm:$0xff]
    %v555 = vld [vmem:[#allocation5 + $0xbf8] sm:$0xff]
    %v556 = vld [vmem:[#allocation5 + $0xc00] sm:$0xff]
    %v557 = vld [vmem:[#allocation5 + $0xc08] sm:$0xff]
    %v558 = vld [vmem:[#allocation5 + $0xc10] sm:$0xff]
    %v559 = vld [vmem:[#allocation5 + $0xc18] sm:$0xff]
    %v560 = vld [vmem:[#allocation5 + $0xc20] sm:$0xff]
    %v561 = vld [vmem:[#allocation5 + $0xc28] sm:$0xff]
    %v562 = vld [vmem:[#allocation5 + $0xc30] sm:$0xff]
    %v563 = vld [vmem:[#allocation5 + $0xc38] sm:$0xff]
    %v564 = vld [vmem:[#allocation5 + $0xc40] sm:$0xff]
    %v565 = vld [vmem:[#allocation5 + $0xc48] sm:$0xff]
    %v566 = vld [vmem:[#allocation5 + $0xc50] sm:$0xff]
    %v567 = vld [vmem:[#allocation5 + $0xc58] sm:$0xff]
    %v568 = vld [vmem:[#allocation5 + $0xc60] sm:$0xff]
    %v569 = vld [vmem:[#allocation5 + $0xc68] sm:$0xff]
    %v570 = vld [vmem:[#allocation5 + $0xc70] sm:$0xff]
    %v571 = vld [vmem:[#allocation5 + $0xc78] sm:$0xff]
    %v572 = vld [vmem:[#allocation5 + $0xc80] sm:$0xff]
    %v573 = vld [vmem:[#allocation5 + $0xc88] sm:$0xff]
    %v574 = vld [vmem:[#allocation5 + $0xc90] sm:$0xff]
    %v575 = vld [vmem:[#allocation5 + $0xc98] sm:$0xff]
    %v576 = vld [vmem:[#allocation5 + $0xca0] sm:$0xff]
    %v577 = vld [vmem:[#allocation5 + $0xca8] sm:$0xff]
    %v578 = vld [vmem:[#allocation5 + $0xcb0] sm:$0xff]
    %v579 = vld [vmem:[#allocation5 + $0xcb8] sm:$0xff]
    %v580 = vld [vmem:[#allocation5 + $0xcc0] sm:$0xff]
    %v581 = vld [vmem:[#allocation5 + $0xcc8] sm:$0xff]
    %v582 = vld [vmem:[#allocation5 + $0xcd0] sm:$0xff]
    %v583 = vld [vmem:[#allocation5 + $0xcd8] sm:$0xff]
    %v584 = vld [vmem:[#allocation5 + $0xce0] sm:$0xff]
    %v585 = vld [vmem:[#allocation5 + $0xce8] sm:$0xff]
    %v586 = vld [vmem:[#allocation5 + $0xcf0] sm:$0xff]
    %v587 = vld [vmem:[#allocation5 + $0xcf8] sm:$0xff]
    %v588 = vld [vmem:[#allocation5 + $0xd00] sm:$0xff]
    %v589 = vld [vmem:[#allocation5 + $0xd08] sm:$0xff]
    %v590 = vld [vmem:[#allocation5 + $0xd10] sm:$0xff]
    %v591 = vld [vmem:[#allocation5 + $0xd18] sm:$0xff]
    %v592 = vld [vmem:[#allocation5 + $0xd20] sm:$0xff]
    %v593 = vld [vmem:[#allocation5 + $0xd28] sm:$0xff]
    %v594 = vld [vmem:[#allocation5 + $0xd30] sm:$0xff]
    %v595 = vld [vmem:[#allocation5 + $0xd38] sm:$0xff]
    %v596 = vld [vmem:[#allocation5 + $0xd40] sm:$0xff]
    %v597 = vld [vmem:[#allocation5 + $0xd48] sm:$0xff]
    %v598 = vld [vmem:[#allocation5 + $0xd50] sm:$0xff]
    %v599 = vld [vmem:[#allocation5 + $0xd58] sm:$0xff]
    %v600 = vld [vmem:[#allocation5 + $0xd60] sm:$0xff]
    %v601 = vld [vmem:[#allocation5 + $0xd68] sm:$0xff]
    %v602 = vld [vmem:[#allocation5 + $0xd70] sm:$0xff]
    %v603 = vld [vmem:[#allocation5 + $0xd78] sm:$0xff]
    %v604 = vld [vmem:[#allocation5 + $0xd80] sm:$0xff]
    %v605 = vld [vmem:[#allocation5 + $0xd88] sm:$0xff]
    %v606 = vld [vmem:[#allocation5 + $0xd90] sm:$0xff]
    %v607 = vld [vmem:[#allocation5 + $0xd98] sm:$0xff]
    %v608 = vld [vmem:[#allocation5 + $0xda0] sm:$0xff]
    %v609 = vld [vmem:[#allocation5 + $0xda8] sm:$0xff]
    %v610 = vld [vmem:[#allocation5 + $0xdb0] sm:$0xff]
    %v611 = vld [vmem:[#allocation5 + $0xdb8] sm:$0xff]
    %v612 = vld [vmem:[#allocation5 + $0xdc0] sm:$0xff]
    %v613 = vld [vmem:[#allocation5 + $0xdc8] sm:$0xff]
    %v614 = vld [vmem:[#allocation5 + $0xdd0] sm:$0xff]
    %v615 = vld [vmem:[#allocation5 + $0xdd8] sm:$0xff]
    %v616 = vld [vmem:[#allocation5 + $0xde0] sm:$0xff]
    %v617 = vld [vmem:[#allocation5 + $0xde8] sm:$0xff]
    %v618 = vld [vmem:[#allocation5 + $0xdf0] sm:$0xff]
    %v619 = vld [vmem:[#allocation5 + $0xdf8] sm:$0xff]
    %v620 = vld [vmem:[#allocation5 + $0xe00] sm:$0xff]
    %v621 = vld [vmem:[#allocation5 + $0xe08] sm:$0xff]
    %v622 = vld [vmem:[#allocation5 + $0xe10] sm:$0xff]
    %v623 = vld [vmem:[#allocation5 + $0xe18] sm:$0xff]
    %v624 = vld [vmem:[#allocation5 + $0xe20] sm:$0xff]
    %v625 = vld [vmem:[#allocation5 + $0xe28] sm:$0xff]
    %v626 = vld [vmem:[#allocation5 + $0xe30] sm:$0xff]
    %v627 = vld [vmem:[#allocation5 + $0xe38] sm:$0xff]
    %v628 = vld [vmem:[#allocation5 + $0xe40] sm:$0xff]
    %v629 = vld [vmem:[#allocation5 + $0xe48] sm:$0xff]
    %v630 = vld [vmem:[#allocation5 + $0xe50] sm:$0xff]
    %v631 = vld [vmem:[#allocation5 + $0xe58] sm:$0xff]
    %v632 = vld [vmem:[#allocation5 + $0xe60] sm:$0xff]
    %v633 = vld [vmem:[#allocation5 + $0xe68] sm:$0xff]
    %v634 = vld [vmem:[#allocation5 + $0xe70] sm:$0xff]
    %v635 = vld [vmem:[#allocation5 + $0xe78] sm:$0xff]
    %v636 = vld [vmem:[#allocation5 + $0xe80] sm:$0xff]
    %v637 = vld [vmem:[#allocation5 + $0xe88] sm:$0xff]
    %v638 = vld [vmem:[#allocation5 + $0xe90] sm:$0xff]
    %v639 = vld [vmem:[#allocation5 + $0xe98] sm:$0xff]
    %v640 = vld [vmem:[#allocation5 + $0xea0] sm:$0xff]
    %v641 = vld [vmem:[#allocation5 + $0xea8] sm:$0xff]
    %v642 = vld [vmem:[#allocation5 + $0xeb0] sm:$0xff]
    %v643 = vld [vmem:[#allocation5 + $0xeb8] sm:$0xff]
    %v644 = vld [vmem:[#allocation5 + $0xec0] sm:$0xff]
    %v645 = vld [vmem:[#allocation5 + $0xec8] sm:$0xff]
    %v646 = vld [vmem:[#allocation5 + $0xed0] sm:$0xff]
    %v647 = vld [vmem:[#allocation5 + $0xed8] sm:$0xff]
    %v648 = vld [vmem:[#allocation5 + $0xee0] sm:$0xff]
    %v649 = vld [vmem:[#allocation5 + $0xee8] sm:$0xff]
    %v650 = vld [vmem:[#allocation5 + $0xef0] sm:$0xff]
    %v651 = vld [vmem:[#allocation5 + $0xef8] sm:$0xff]
    %v652 = vld [vmem:[#allocation5 + $0xf00] sm:$0xff]
    %v653 = vld [vmem:[#allocation5 + $0xf08] sm:$0xff]
    %v654 = vld [vmem:[#allocation5 + $0xf10] sm:$0xff]
    %v655 = vld [vmem:[#allocation5 + $0xf18] sm:$0xff]
    %v656 = vld [vmem:[#allocation5 + $0xf20] sm:$0xff]
    %v657 = vld [vmem:[#allocation5 + $0xf28] sm:$0xff]
    %v658 = vld [vmem:[#allocation5 + $0xf30] sm:$0xff]
    %v659 = vld [vmem:[#allocation5 + $0xf38] sm:$0xff]
    %v660 = vld [vmem:[#allocation5 + $0xf40] sm:$0xff]
    %v661 = vld [vmem:[#allocation5 + $0xf48] sm:$0xff]
    %v662 = vld [vmem:[#allocation5 + $0xf50] sm:$0xff]
    %v663 = vld [vmem:[#allocation5 + $0xf58] sm:$0xff]
    %v664 = vld [vmem:[#allocation5 + $0xf60] sm:$0xff]
    %v665 = vld [vmem:[#allocation5 + $0xf68] sm:$0xff]
    %v666 = vld [vmem:[#allocation5 + $0xf70] sm:$0xff]
    %v667 = vld [vmem:[#allocation5 + $0xf78] sm:$0xff]
    %v668 = vld [vmem:[#allocation5 + $0xf80] sm:$0xff]
    %v669 = vld [vmem:[#allocation5 + $0xf88] sm:$0xff]
    %v670 = vld [vmem:[#allocation5 + $0xf90] sm:$0xff]
    %v671 = vld [vmem:[#allocation5 + $0xf98] sm:$0xff]
    %v672 = vld [vmem:[#allocation5 + $0xfa0] sm:$0xff]
    %v673 = vld [vmem:[#allocation5 + $0xfa8] sm:$0xff]
    %v674 = vld [vmem:[#allocation5 + $0xfb0] sm:$0xff]
    %v675 = vld [vmem:[#allocation5 + $0xfb8] sm:$0xff]
    %v676 = vld [vmem:[#allocation5 + $0xfc0] sm:$0xff]
    %v677 = vld [vmem:[#allocation5 + $0xfc8] sm:$0xff]
    %v678 = vld [vmem:[#allocation5 + $0xfd0] sm:$0xff]
    %v679 = vld [vmem:[#allocation5 + $0xfd8] sm:$0xff]
    %v680 = vld [vmem:[#allocation5 + $0xfe0] sm:$0xff]
    %v681 = vld [vmem:[#allocation5 + $0xfe8] sm:$0xff]
    %v682 = vld [vmem:[#allocation5 + $0xff0] sm:$0xff]
    %v683 = vld [vmem:[#allocation5 + $0xff8] sm:$0xff]
    %v684 = vld [vmem:[#allocation5 + $0x1000] sm:$0xff]
    %v685 = vld [vmem:[#allocation5 + $0x1008] sm:$0xff]
    %v686 = vld [vmem:[#allocation5 + $0x1010] sm:$0xff]
    %v687 = vld [vmem:[#allocation5 + $0x1018] sm:$0xff]
    %v688 = vld [vmem:[#allocation5 + $0x1020] sm:$0xff]
    %v689 = vld [vmem:[#allocation5 + $0x1028] sm:$0xff]
    %v690 = vld [vmem:[#allocation5 + $0x1030] sm:$0xff]
    %v691 = vld [vmem:[#allocation5 + $0x1038] sm:$0xff]
    %v692 = vld [vmem:[#allocation5 + $0x1040] sm:$0xff]
    %v693 = vld [vmem:[#allocation5 + $0x1048] sm:$0xff]
    %v694 = vld [vmem:[#allocation5 + $0x1050] sm:$0xff]
    %v695 = vld [vmem:[#allocation5 + $0x1058] sm:$0xff]
    %v696 = vld [vmem:[#allocation5 + $0x1060] sm:$0xff]
    %v697 = vld [vmem:[#allocation5 + $0x1068] sm:$0xff]
    %v698 = vld [vmem:[#allocation5 + $0x1070] sm:$0xff]
    %v699 = vld [vmem:[#allocation5 + $0x1078] sm:$0xff]
    %v700 = vld [vmem:[#allocation5 + $0x1080] sm:$0xff]
    %v701 = vld [vmem:[#allocation5 + $0x1088] sm:$0xff]
    %v702 = vld [vmem:[#allocation5 + $0x1090] sm:$0xff]
    %v703 = vld [vmem:[#allocation5 + $0x1098] sm:$0xff]
    %v704 = vld [vmem:[#allocation5 + $0x10a0] sm:$0xff]
    %v705 = vld [vmem:[#allocation5 + $0x10a8] sm:$0xff]
    %v706 = vld [vmem:[#allocation5 + $0x10b0] sm:$0xff]
    %v707 = vld [vmem:[#allocation5 + $0x10b8] sm:$0xff]
    %v708 = vld [vmem:[#allocation5 + $0x10c0] sm:$0xff]
    %v709 = vld [vmem:[#allocation5 + $0x10c8] sm:$0xff]
    %v710 = vld [vmem:[#allocation5 + $0x10d0] sm:$0xff]
    %v711 = vld [vmem:[#allocation5 + $0x10d8] sm:$0xff]
    %v712 = vld [vmem:[#allocation5 + $0x10e0] sm:$0xff]
    %v713 = vld [vmem:[#allocation5 + $0x10e8] sm:$0xff]
    %v714 = vld [vmem:[#allocation5 + $0x10f0] sm:$0xff]
    %v715 = vld [vmem:[#allocation5 + $0x10f8] sm:$0xff]
    %v716 = vld [vmem:[#allocation5 + $0x1100] sm:$0xff]
    %v717 = vld [vmem:[#allocation5 + $0x1108] sm:$0xff]
    %v718 = vld [vmem:[#allocation5 + $0x1110] sm:$0xff]
    %v719 = vld [vmem:[#allocation5 + $0x1118] sm:$0xff]
    %v720 = vld [vmem:[#allocation5 + $0x1120] sm:$0xff]
    %v721 = vld [vmem:[#allocation5 + $0x1128] sm:$0xff]
    %v722 = vld [vmem:[#allocation5 + $0x1130] sm:$0xff]
    %v723 = vld [vmem:[#allocation5 + $0x1138] sm:$0xff]
    %v724 = vld [vmem:[#allocation5 + $0x1140] sm:$0xff]
    %v725 = vld [vmem:[#allocation5 + $0x1148] sm:$0xff]
    %v726 = vld [vmem:[#allocation5 + $0x1150] sm:$0xff]
    %v727 = vld [vmem:[#allocation5 + $0x1158] sm:$0xff]
    %v728 = vld [vmem:[#allocation5 + $0x1160] sm:$0xff]
    %v729 = vld [vmem:[#allocation5 + $0x1168] sm:$0xff]
    %v730 = vld [vmem:[#allocation5 + $0x1170] sm:$0xff]
    %v731 = vld [vmem:[#allocation5 + $0x1178] sm:$0xff]
    %v732 = vld [vmem:[#allocation5 + $0x1180] sm:$0xff]
    %v733 = vld [vmem:[#allocation5 + $0x1188] sm:$0xff]
    %v734 = vld [vmem:[#allocation5 + $0x1190] sm:$0xff]
    %v735 = vld [vmem:[#allocation5 + $0x1198] sm:$0xff]
    %v736 = vld [vmem:[#allocation5 + $0x11a0] sm:$0xff]
    %v737 = vld [vmem:[#allocation5 + $0x11a8] sm:$0xff]
    %v738 = vld [vmem:[#allocation5 + $0x11b0] sm:$0xff]
    %v739 = vld [vmem:[#allocation5 + $0x11b8] sm:$0xff]
    %v740 = vld [vmem:[#allocation5 + $0x11c0] sm:$0xff]
    %v741 = vld [vmem:[#allocation5 + $0x11c8] sm:$0xff]
    %v742 = vld [vmem:[#allocation5 + $0x11d0] sm:$0xff]
    %v743 = vld [vmem:[#allocation5 + $0x11d8] sm:$0xff]
    %v744 = vld [vmem:[#allocation5 + $0x11e0] sm:$0xff]
    %v745 = vld [vmem:[#allocation5 + $0x11e8] sm:$0xff]
    %v746 = vld [vmem:[#allocation5 + $0x11f0] sm:$0xff]
    %v747 = vld [vmem:[#allocation5 + $0x11f8] sm:$0xff]
    %v748 = vld [vmem:[#allocation5 + $0x1200] sm:$0xff]
    %v749 = vld [vmem:[#allocation5 + $0x1208] sm:$0xff]
    %v750 = vld [vmem:[#allocation5 + $0x1210] sm:$0xff]
    %v751 = vld [vmem:[#allocation5 + $0x1218] sm:$0xff]
    %v752 = vld [vmem:[#allocation5 + $0x1220] sm:$0xff]
    %v753 = vld [vmem:[#allocation5 + $0x1228] sm:$0xff]
    %v754 = vld [vmem:[#allocation5 + $0x1230] sm:$0xff]
    %v755 = vld [vmem:[#allocation5 + $0x1238] sm:$0xff]
    %v756 = vld [vmem:[#allocation5 + $0x1240] sm:$0xff]
    %v757 = vld [vmem:[#allocation5 + $0x1248] sm:$0xff]
    %v758 = vld [vmem:[#allocation5 + $0x1250] sm:$0xff]
    %v759 = vld [vmem:[#allocation5 + $0x1258] sm:$0xff]
    %v760 = vld [vmem:[#allocation5 + $0x1260] sm:$0xff]
    %v761 = vld [vmem:[#allocation5 + $0x1268] sm:$0xff]
    %v762 = vld [vmem:[#allocation5 + $0x1270] sm:$0xff]
    %v763 = vld [vmem:[#allocation5 + $0x1278] sm:$0xff]
    %v764 = vld [vmem:[#allocation5 + $0x1280] sm:$0xff]
    %v765 = vld [vmem:[#allocation5 + $0x1288] sm:$0xff]
    %v766 = vld [vmem:[#allocation5 + $0x1290] sm:$0xff]
    %v767 = vld [vmem:[#allocation5 + $0x1298] sm:$0xff]
    %v768 = vld [vmem:[#allocation5 + $0x12a0] sm:$0xff]
    %v769 = vld [vmem:[#allocation5 + $0x12a8] sm:$0xff]
    %v770 = vld [vmem:[#allocation5 + $0x12b0] sm:$0xff]
    %v771 = vld [vmem:[#allocation5 + $0x12b8] sm:$0xff]
    %v772 = vld [vmem:[#allocation5 + $0x12c0] sm:$0xff]
    %v773 = vld [vmem:[#allocation5 + $0x12c8] sm:$0xff]
    %v774 = vld [vmem:[#allocation5 + $0x12d0] sm:$0xff]
    %v775 = vld [vmem:[#allocation5 + $0x12d8] sm:$0xff]
    %v776 = vld [vmem:[#allocation5 + $0x12e0] sm:$0xff]
    %v777 = vld [vmem:[#allocation5 + $0x12e8] sm:$0xff]
    %v778 = vld [vmem:[#allocation5 + $0x12f0] sm:$0xff]
    %v779 = vld [vmem:[#allocation5 + $0x12f8] sm:$0xff]
    %v780 = vld [vmem:[#allocation5 + $0x1300] sm:$0xff]
    %v781 = vld [vmem:[#allocation5 + $0x1308] sm:$0xff]
    %v782 = vld [vmem:[#allocation5 + $0x1310] sm:$0xff]
    %v783 = vld [vmem:[#allocation5 + $0x1318] sm:$0xff]
    %v784 = vld [vmem:[#allocation5 + $0x1320] sm:$0xff]
    %v785 = vld [vmem:[#allocation5 + $0x1328] sm:$0xff]
    %v786 = vld [vmem:[#allocation5 + $0x1330] sm:$0xff]
    %v787 = vld [vmem:[#allocation5 + $0x1338] sm:$0xff]
    %v788 = vld [vmem:[#allocation5 + $0x1340] sm:$0xff]
    %v789 = vld [vmem:[#allocation5 + $0x1348] sm:$0xff]
    %v790 = vld [vmem:[#allocation5 + $0x1350] sm:$0xff]
    %v791 = vld [vmem:[#allocation5 + $0x1358] sm:$0xff]
    %v792 = vld [vmem:[#allocation5 + $0x1360] sm:$0xff]
    %v793 = vld [vmem:[#allocation5 + $0x1368] sm:$0xff]
    %v794 = vld [vmem:[#allocation5 + $0x1370] sm:$0xff]
    %v795 = vld [vmem:[#allocation5 + $0x1378] sm:$0xff]
    %v796 = vld [vmem:[#allocation5 + $0x1380] sm:$0xff]
    %v797 = vld [vmem:[#allocation5 + $0x1388] sm:$0xff]
    %v798 = vld [vmem:[#allocation5 + $0x1390] sm:$0xff]
    %v799 = vld [vmem:[#allocation5 + $0x1398] sm:$0xff]
    %v800 = vld [vmem:[#allocation5 + $0x13a0] sm:$0xff]
    %v801 = vld [vmem:[#allocation5 + $0x13a8] sm:$0xff]
    %v802 = vld [vmem:[#allocation5 + $0x13b0] sm:$0xff]
    %v803 = vld [vmem:[#allocation5 + $0x13b8] sm:$0xff]
    %v804 = vld [vmem:[#allocation5 + $0x13c0] sm:$0xff]
    %v805 = vld [vmem:[#allocation5 + $0x13c8] sm:$0xff]
    %v806 = vld [vmem:[#allocation5 + $0x13d0] sm:$0xff]
    %v807 = vld [vmem:[#allocation5 + $0x13d8] sm:$0xff]
    %v808 = vld [vmem:[#allocation5 + $0x13e0] sm:$0xff]
    %v809 = vld [vmem:[#allocation5 + $0x13e8] sm:$0xff]
    %v810 = vld [vmem:[#allocation5 + $0x13f0] sm:$0xff]
    %v811 = vld [vmem:[#allocation5 + $0x13f8] sm:$0xff]
    %v812 = vld [vmem:[#allocation5 + $0x1400] sm:$0xff]
    %v813 = vld [vmem:[#allocation5 + $0x1408] sm:$0xff]
    %v814 = vld [vmem:[#allocation5 + $0x1410] sm:$0xff]
    %v815 = vld [vmem:[#allocation5 + $0x1418] sm:$0xff]
    %v816 = vld [vmem:[#allocation5 + $0x1420] sm:$0xff]
    %v817 = vld [vmem:[#allocation5 + $0x1428] sm:$0xff]
    %v818 = vld [vmem:[#allocation5 + $0x1430] sm:$0xff]
    %v819 = vld [vmem:[#allocation5 + $0x1438] sm:$0xff]
    %v820 = vld [vmem:[#allocation5 + $0x1440] sm:$0xff]
    %v821 = vld [vmem:[#allocation5 + $0x1448] sm:$0xff]
    %v822 = vld [vmem:[#allocation5 + $0x1450] sm:$0xff]
    %v823 = vld [vmem:[#allocation5 + $0x1458] sm:$0xff]
    %v824 = vld [vmem:[#allocation5 + $0x1460] sm:$0xff]
    %v825 = vld [vmem:[#allocation5 + $0x1468] sm:$0xff]
    %v826 = vld [vmem:[#allocation5 + $0x1470] sm:$0xff]
    %v827 = vld [vmem:[#allocation5 + $0x1478] sm:$0xff]
    %v828 = vld [vmem:[#allocation5 + $0x1480] sm:$0xff]
    %v829 = vld [vmem:[#allocation5 + $0x1488] sm:$0xff]
    %v830 = vld [vmem:[#allocation5 + $0x1490] sm:$0xff]
    %v831 = vld [vmem:[#allocation5 + $0x1498] sm:$0xff]
    %v832 = vld [vmem:[#allocation5 + $0x14a0] sm:$0xff]
    %v833 = vld [vmem:[#allocation5 + $0x14a8] sm:$0xff]
    %v834 = vld [vmem:[#allocation5 + $0x14b0] sm:$0xff]
    %v835 = vld [vmem:[#allocation5 + $0x14b8] sm:$0xff]
    %v836 = vld [vmem:[#allocation5 + $0x14c0] sm:$0xff]
    %v837 = vld [vmem:[#allocation5 + $0x14c8] sm:$0xff]
    %v838 = vld [vmem:[#allocation5 + $0x14d0] sm:$0xff]
    %v839 = vld [vmem:[#allocation5 + $0x14d8] sm:$0xff]
    %v840 = vld [vmem:[#allocation5 + $0x14e0] sm:$0xff]
    %v841 = vld [vmem:[#allocation5 + $0x14e8] sm:$0xff]
    %v842 = vld [vmem:[#allocation5 + $0x14f0] sm:$0xff]
    %v843 = vld [vmem:[#allocation5 + $0x14f8] sm:$0xff]
    %v844 = vld [vmem:[#allocation5 + $0x1500] sm:$0xff]
    %v845 = vld [vmem:[#allocation5 + $0x1508] sm:$0xff]
    %v846 = vld [vmem:[#allocation5 + $0x1510] sm:$0xff]
    %v847 = vld [vmem:[#allocation5 + $0x1518] sm:$0xff]
    %v848 = vld [vmem:[#allocation5 + $0x1520] sm:$0xff]
    %v849 = vld [vmem:[#allocation5 + $0x1528] sm:$0xff]
    %v850 = vld [vmem:[#allocation5 + $0x1530] sm:$0xff]
    %v851 = vld [vmem:[#allocation5 + $0x1538] sm:$0xff]
    %v852 = vld [vmem:[#allocation5 + $0x1540] sm:$0xff]
    %v853 = vld [vmem:[#allocation5 + $0x1548] sm:$0xff]
    %v854 = vld [vmem:[#allocation5 + $0x1550] sm:$0xff]
    %v855 = vld [vmem:[#allocation5 + $0x1558] sm:$0xff]
    %v856 = vld [vmem:[#allocation5 + $0x1560] sm:$0xff]
    %v857 = vld [vmem:[#allocation5 + $0x1568] sm:$0xff]
    %v858 = vld [vmem:[#allocation5 + $0x1570] sm:$0xff]
    %v859 = vld [vmem:[#allocation5 + $0x1578] sm:$0xff]
    %v860 = vld [vmem:[#allocation5 + $0x1580] sm:$0xff]
    %v861 = vld [vmem:[#allocation5 + $0x1588] sm:$0xff]
    %v862 = vld [vmem:[#allocation5 + $0x1590] sm:$0xff]
    %v863 = vld [vmem:[#allocation5 + $0x1598] sm:$0xff]
    %v864 = vld [vmem:[#allocation5 + $0x15a0] sm:$0xff]
    %v865 = vld [vmem:[#allocation5 + $0x15a8] sm:$0xff]
    %v866 = vld [vmem:[#allocation5 + $0x15b0] sm:$0xff]
    %v867 = vld [vmem:[#allocation5 + $0x15b8] sm:$0xff]
    %v868 = vld [vmem:[#allocation5 + $0x15c0] sm:$0xff]
    %v869 = vld [vmem:[#allocation5 + $0x15c8] sm:$0xff]
    %v870 = vld [vmem:[#allocation5 + $0x15d0] sm:$0xff]
    %v871 = vld [vmem:[#allocation5 + $0x15d8] sm:$0xff]
    %v872 = vld [vmem:[#allocation5 + $0x15e0] sm:$0xff]
    %v873 = vld [vmem:[#allocation5 + $0x15e8] sm:$0xff]
    %v874 = vld [vmem:[#allocation5 + $0x15f0] sm:$0xff]
    %v875 = vld [vmem:[#allocation5 + $0x15f8] sm:$0xff]
    %v876 = vld [vmem:[#allocation5 + $0x1600] sm:$0xff]
    %v877 = vld [vmem:[#allocation5 + $0x1608] sm:$0xff]
    %v878 = vld [vmem:[#allocation5 + $0x1610] sm:$0xff]
    %v879 = vld [vmem:[#allocation5 + $0x1618] sm:$0xff]
    %v880 = vld [vmem:[#allocation5 + $0x1620] sm:$0xff]
    %v881 = vld [vmem:[#allocation5 + $0x1628] sm:$0xff]
    %v882 = vld [vmem:[#allocation5 + $0x1630] sm:$0xff]
    %v883 = vld [vmem:[#allocation5 + $0x1638] sm:$0xff]
    %v884 = vld [vmem:[#allocation5 + $0x1640] sm:$0xff]
    %v885 = vld [vmem:[#allocation5 + $0x1648] sm:$0xff]
    %v886 = vld [vmem:[#allocation5 + $0x1650] sm:$0xff]
    %v887 = vld [vmem:[#allocation5 + $0x1658] sm:$0xff]
    %v888 = vld [vmem:[#allocation5 + $0x1660] sm:$0xff]
    %v889 = vld [vmem:[#allocation5 + $0x1668] sm:$0xff]
    %v890 = vld [vmem:[#allocation5 + $0x1670] sm:$0xff]
    %v891 = vld [vmem:[#allocation5 + $0x1678] sm:$0xff]
    %v892 = vld [vmem:[#allocation5 + $0x1680] sm:$0xff]
    %v893 = vld [vmem:[#allocation5 + $0x1688] sm:$0xff]
    %v894 = vld [vmem:[#allocation5 + $0x1690] sm:$0xff]
    %v895 = vld [vmem:[#allocation5 + $0x1698] sm:$0xff]
    %v896 = vld [vmem:[#allocation5 + $0x16a0] sm:$0xff]
    %v897 = vld [vmem:[#allocation5 + $0x16a8] sm:$0xff]
    %v898 = vld [vmem:[#allocation5 + $0x16b0] sm:$0xff]
    %v899 = vld [vmem:[#allocation5 + $0x16b8] sm:$0xff]
    %v900 = vld [vmem:[#allocation5 + $0x16c0] sm:$0xff]
    %v901 = vld [vmem:[#allocation5 + $0x16c8] sm:$0xff]
    %v902 = vld [vmem:[#allocation5 + $0x16d0] sm:$0xff]
    %v903 = vld [vmem:[#allocation5 + $0x16d8] sm:$0xff]
    %v904 = vld [vmem:[#allocation5 + $0x16e0] sm:$0xff]
    %v905 = vld [vmem:[#allocation5 + $0x16e8] sm:$0xff]
    %v906 = vld [vmem:[#allocation5 + $0x16f0] sm:$0xff]
    %v907 = vld [vmem:[#allocation5 + $0x16f8] sm:$0xff]
    %v908 = vld [vmem:[#allocation5 + $0x1700] sm:$0xff]
    %v909 = vld [vmem:[#allocation5 + $0x1708] sm:$0xff]
    %v910 = vld [vmem:[#allocation5 + $0x1710] sm:$0xff]
    %v911 = vld [vmem:[#allocation5 + $0x1718] sm:$0xff]
    %v912 = vld [vmem:[#allocation5 + $0x1720] sm:$0xff]
    %v913 = vld [vmem:[#allocation5 + $0x1728] sm:$0xff]
    %v914 = vld [vmem:[#allocation5 + $0x1730] sm:$0xff]
    %v915 = vld [vmem:[#allocation5 + $0x1738] sm:$0xff]
    %v916 = vld [vmem:[#allocation5 + $0x1740] sm:$0xff]
    %v917 = vld [vmem:[#allocation5 + $0x1748] sm:$0xff]
    %v918 = vld [vmem:[#allocation5 + $0x1750] sm:$0xff]
    %v919 = vld [vmem:[#allocation5 + $0x1758] sm:$0xff]
    %v920 = vld [vmem:[#allocation5 + $0x1760] sm:$0xff]
    %v921 = vld [vmem:[#allocation5 + $0x1768] sm:$0xff]
    %v922 = vld [vmem:[#allocation5 + $0x1770] sm:$0xff]
    %v923 = vld [vmem:[#allocation5 + $0x1778] sm:$0xff]
    %v924 = vld [vmem:[#allocation5 + $0x1780] sm:$0xff]
    %v925 = vld [vmem:[#allocation5 + $0x1788] sm:$0xff]
    %v926 = vld [vmem:[#allocation5 + $0x1790] sm:$0xff]
    %v927 = vld [vmem:[#allocation5 + $0x1798] sm:$0xff]
    %v928 = vld [vmem:[#allocation5 + $0x17a0] sm:$0xff]
    %v929 = vld [vmem:[#allocation5 + $0x17a8] sm:$0xff]
    %v930 = vld [vmem:[#allocation5 + $0x17b0] sm:$0xff]
    %v931 = vld [vmem:[#allocation5 + $0x17b8] sm:$0xff]
    %v932 = vld [vmem:[#allocation5 + $0x17c0] sm:$0xff]
    %v933 = vld [vmem:[#allocation5 + $0x17c8] sm:$0xff]
    %v934 = vld [vmem:[#allocation5 + $0x17d0] sm:$0xff]
    %v935 = vld [vmem:[#allocation5 + $0x17d8] sm:$0xff]
    %v936 = vld [vmem:[#allocation5 + $0x17e0] sm:$0xff]
    %v937 = vld [vmem:[#allocation5 + $0x17e8] sm:$0xff]
    %v938 = vld [vmem:[#allocation5 + $0x17f0] sm:$0xff]
    %v939 = vld [vmem:[#allocation5 + $0x17f8] sm:$0xff]
    %v940 = vld [vmem:[#allocation5 + $0x1800] sm:$0xff]
    %v941 = vld [vmem:[#allocation5 + $0x1808] sm:$0xff]
    %v942 = vld [vmem:[#allocation5 + $0x1810] sm:$0xff]
    %v943 = vld [vmem:[#allocation5 + $0x1818] sm:$0xff]
    %v944 = vld [vmem:[#allocation5 + $0x1820] sm:$0xff]
    %v945 = vld [vmem:[#allocation5 + $0x1828] sm:$0xff]
    %v946 = vld [vmem:[#allocation5 + $0x1830] sm:$0xff]
    %v947 = vld [vmem:[#allocation5 + $0x1838] sm:$0xff]
    %v948 = vld [vmem:[#allocation5 + $0x1840] sm:$0xff]
    %v949 = vld [vmem:[#allocation5 + $0x1848] sm:$0xff]
    %v950 = vld [vmem:[#allocation5 + $0x1850] sm:$0xff]
    %v951 = vld [vmem:[#allocation5 + $0x1858] sm:$0xff]
    %v952 = vld [vmem:[#allocation5 + $0x1860] sm:$0xff]
    %v953 = vld [vmem:[#allocation5 + $0x1868] sm:$0xff]
    %v954 = vld [vmem:[#allocation5 + $0x1870] sm:$0xff]
    %v955 = vld [vmem:[#allocation5 + $0x1878] sm:$0xff]
    %v956 = vld [vmem:[#allocation5 + $0x1880] sm:$0xff]
    %v957 = vld [vmem:[#allocation5 + $0x1888] sm:$0xff]
    %v958 = vld [vmem:[#allocation5 + $0x1890] sm:$0xff]
    %v959 = vld [vmem:[#allocation5 + $0x1898] sm:$0xff]
    %v960 = vld [vmem:[#allocation5 + $0x18a0] sm:$0xff]
    %v961 = vld [vmem:[#allocation5 + $0x18a8] sm:$0xff]
    %v962 = vld [vmem:[#allocation5 + $0x18b0] sm:$0xff]
    %v963 = vld [vmem:[#allocation5 + $0x18b8] sm:$0xff]
    %v964 = vld [vmem:[#allocation5 + $0x18c0] sm:$0xff]
    %v965 = vld [vmem:[#allocation5 + $0x18c8] sm:$0xff]
    %v966 = vld [vmem:[#allocation5 + $0x18d0] sm:$0xff]
    %v967 = vld [vmem:[#allocation5 + $0x18d8] sm:$0xff]
    %v968 = vld [vmem:[#allocation5 + $0x18e0] sm:$0xff]
    %v969 = vld [vmem:[#allocation5 + $0x18e8] sm:$0xff]
    %v970 = vld [vmem:[#allocation5 + $0x18f0] sm:$0xff]
    %v971 = vld [vmem:[#allocation5 + $0x18f8] sm:$0xff]
    %v972 = vld [vmem:[#allocation5 + $0x1900] sm:$0xff]
    %v973 = vld [vmem:[#allocation5 + $0x1908] sm:$0xff]
    %v974 = vld [vmem:[#allocation5 + $0x1910] sm:$0xff]
    %v975 = vld [vmem:[#allocation5 + $0x1918] sm:$0xff]
    %v976 = vld [vmem:[#allocation5 + $0x1920] sm:$0xff]
    %v977 = vld [vmem:[#allocation5 + $0x1928] sm:$0xff]
    %v978 = vld [vmem:[#allocation5 + $0x1930] sm:$0xff]
    %v979 = vld [vmem:[#allocation5 + $0x1938] sm:$0xff]
    %v980 = vld [vmem:[#allocation5 + $0x1940] sm:$0xff]
    %v981 = vld [vmem:[#allocation5 + $0x1948] sm:$0xff]
    %v982 = vld [vmem:[#allocation5 + $0x1950] sm:$0xff]
    %v983 = vld [vmem:[#allocation5 + $0x1958] sm:$0xff]
    %v984 = vld [vmem:[#allocation5 + $0x1960] sm:$0xff]
    %v985 = vld [vmem:[#allocation5 + $0x1968] sm:$0xff]
    %v986 = vld [vmem:[#allocation5 + $0x1970] sm:$0xff]
    %v987 = vld [vmem:[#allocation5 + $0x1978] sm:$0xff]
    %v988 = vld [vmem:[#allocation5 + $0x1980] sm:$0xff]
    %v989 = vld [vmem:[#allocation5 + $0x1988] sm:$0xff]
    %v990 = vld [vmem:[#allocation5 + $0x1990] sm:$0xff]
    %v991 = vld [vmem:[#allocation5 + $0x1998] sm:$0xff]
    %v992 = vld [vmem:[#allocation5 + $0x19a0] sm:$0xff]
    %v993 = vld [vmem:[#allocation5 + $0x19a8] sm:$0xff]
    %v994 = vld [vmem:[#allocation5 + $0x19b0] sm:$0xff]
    %v995 = vld [vmem:[#allocation5 + $0x19b8] sm:$0xff]
    %v996 = vld [vmem:[#allocation5 + $0x19c0] sm:$0xff]
    %v997 = vld [vmem:[#allocation5 + $0x19c8] sm:$0xff]
    %v998 = vld [vmem:[#allocation5 + $0x19d0] sm:$0xff]
    %v999 = vld [vmem:[#allocation5 + $0x19d8] sm:$0xff]
    %v1000 = vld [vmem:[#allocation5 + $0x19e0] sm:$0xff]
    %v1001 = vld [vmem:[#allocation5 + $0x19e8] sm:$0xff]
    %v1002 = vld [vmem:[#allocation5 + $0x19f0] sm:$0xff]
    %v1003 = vld [vmem:[#allocation5 + $0x19f8] sm:$0xff]
    %v1004 = vld [vmem:[#allocation5 + $0x1a00] sm:$0xff]
    %v1005 = vld [vmem:[#allocation5 + $0x1a08] sm:$0xff]
    %v1006 = vld [vmem:[#allocation5 + $0x1a10] sm:$0xff]
    %v1007 = vld [vmem:[#allocation5 + $0x1a18] sm:$0xff]
    %v1008 = vld [vmem:[#allocation5 + $0x1a20] sm:$0xff]
    %v1009 = vld [vmem:[#allocation5 + $0x1a28] sm:$0xff]
    %v1010 = vld [vmem:[#allocation5 + $0x1a30] sm:$0xff]
    %v1011 = vld [vmem:[#allocation5 + $0x1a38] sm:$0xff]
    %v1012 = vld [vmem:[#allocation5 + $0x1a40] sm:$0xff]
    %v1013 = vld [vmem:[#allocation5 + $0x1a48] sm:$0xff]
    %v1014 = vld [vmem:[#allocation5 + $0x1a50] sm:$0xff]
    %v1015 = vld [vmem:[#allocation5 + $0x1a58] sm:$0xff]
    %v1016 = vld [vmem:[#allocation5 + $0x1a60] sm:$0xff]
    %v1017 = vld [vmem:[#allocation5 + $0x1a68] sm:$0xff]
    %v1018 = vld [vmem:[#allocation5 + $0x1a70] sm:$0xff]
    %v1019 = vld [vmem:[#allocation5 + $0x1a78] sm:$0xff]
    %v1020 = vld [vmem:[#allocation5 + $0x1a80] sm:$0xff]
    %v1021 = vld [vmem:[#allocation5 + $0x1a88] sm:$0xff]
    %v1022 = vld [vmem:[#allocation5 + $0x1a90] sm:$0xff]
    %v1023 = vld [vmem:[#allocation5 + $0x1a98] sm:$0xff]
    %v1024 = vld [vmem:[#allocation5 + $0x1aa0] sm:$0xff]
    %v1025 = vld [vmem:[#allocation5 + $0x1aa8] sm:$0xff]
    %v1026 = vld [vmem:[#allocation5 + $0x1ab0] sm:$0xff]
    %v1027 = vld [vmem:[#allocation5 + $0x1ab8] sm:$0xff]
    %v1028 = vld [vmem:[#allocation5 + $0x1ac0] sm:$0xff]
    %v1029 = vld [vmem:[#allocation5 + $0x1ac8] sm:$0xff]
    %v1030 = vld [vmem:[#allocation5 + $0x1ad0] sm:$0xff]
    %v1031 = vld [vmem:[#allocation5 + $0x1ad8] sm:$0xff]
    %v1032 = vld [vmem:[#allocation5 + $0x1ae0] sm:$0xff]
    %v1033 = vld [vmem:[#allocation5 + $0x1ae8] sm:$0xff]
    %v1034 = vld [vmem:[#allocation5 + $0x1af0] sm:$0xff]
    %v1035 = vld [vmem:[#allocation5 + $0x1af8] sm:$0xff]
    %v1036 = vld [vmem:[#allocation5 + $0x1b00] sm:$0xff]
    %v1037 = vld [vmem:[#allocation5 + $0x1b08] sm:$0xff]
    %v1038 = vld [vmem:[#allocation5 + $0x1b10] sm:$0xff]
    %v1039 = vld [vmem:[#allocation5 + $0x1b18] sm:$0xff]
    %v1040 = vld [vmem:[#allocation5 + $0x1b20] sm:$0xff]
    %v1041 = vld [vmem:[#allocation5 + $0x1b28] sm:$0xff]
    %v1042 = vld [vmem:[#allocation5 + $0x1b30] sm:$0xff]
    %v1043 = vld [vmem:[#allocation5 + $0x1b38] sm:$0xff]
    %v1044 = vld [vmem:[#allocation5 + $0x1b40] sm:$0xff]
    %v1045 = vld [vmem:[#allocation5 + $0x1b48] sm:$0xff]
    %v1046 = vld [vmem:[#allocation5 + $0x1b50] sm:$0xff]
    %v1047 = vld [vmem:[#allocation5 + $0x1b58] sm:$0xff]
    %v1048 = vld [vmem:[#allocation5 + $0x1b60] sm:$0xff]
    %v1049 = vld [vmem:[#allocation5 + $0x1b68] sm:$0xff]
    %v1050 = vld [vmem:[#allocation5 + $0x1b70] sm:$0xff]
    %v1051 = vld [vmem:[#allocation5 + $0x1b78] sm:$0xff]
    %v1052 = vld [vmem:[#allocation5 + $0x1b80] sm:$0xff]
    %v1053 = vld [vmem:[#allocation5 + $0x1b88] sm:$0xff]
    %v1054 = vld [vmem:[#allocation5 + $0x1b90] sm:$0xff]
    %v1055 = vld [vmem:[#allocation5 + $0x1b98] sm:$0xff]
    %v1056 = vld [vmem:[#allocation5 + $0x1ba0] sm:$0xff]
    %v1057 = vld [vmem:[#allocation5 + $0x1ba8] sm:$0xff]
    %v1058 = vld [vmem:[#allocation5 + $0x1bb0] sm:$0xff]
    %v1059 = vld [vmem:[#allocation5 + $0x1bb8] sm:$0xff]
    %v1060 = vld [vmem:[#allocation5 + $0x1bc0] sm:$0xff]
    %v1061 = vld [vmem:[#allocation5 + $0x1bc8] sm:$0xff]
    %v1062 = vld [vmem:[#allocation5 + $0x1bd0] sm:$0xff]
    %v1063 = vld [vmem:[#allocation5 + $0x1bd8] sm:$0xff]
    %v1064 = vld [vmem:[#allocation5 + $0x1be0] sm:$0xff]
    %v1065 = vld [vmem:[#allocation5 + $0x1be8] sm:$0xff]
    %v1066 = vld [vmem:[#allocation5 + $0x1bf0] sm:$0xff]
    %v1067 = vld [vmem:[#allocation5 + $0x1bf8] sm:$0xff]
    %v1068 = vld [vmem:[#allocation5 + $0x1c00] sm:$0xff]
    %v1069 = vld [vmem:[#allocation5 + $0x1c08] sm:$0xff]
    %v1070 = vld [vmem:[#allocation5 + $0x1c10] sm:$0xff]
    %v1071 = vld [vmem:[#allocation5 + $0x1c18] sm:$0xff]
    %v1072 = vld [vmem:[#allocation5 + $0x1c20] sm:$0xff]
    %v1073 = vld [vmem:[#allocation5 + $0x1c28] sm:$0xff]
    %v1074 = vld [vmem:[#allocation5 + $0x1c30] sm:$0xff]
    %v1075 = vld [vmem:[#allocation5 + $0x1c38] sm:$0xff]
    %v1076 = vld [vmem:[#allocation5 + $0x1c40] sm:$0xff]
    %v1077 = vld [vmem:[#allocation5 + $0x1c48] sm:$0xff]
    %v1078 = vld [vmem:[#allocation5 + $0x1c50] sm:$0xff]
    %v1079 = vld [vmem:[#allocation5 + $0x1c58] sm:$0xff]
    %v1080 = vld [vmem:[#allocation5 + $0x1c60] sm:$0xff]
    %v1081 = vld [vmem:[#allocation5 + $0x1c68] sm:$0xff]
    %v1082 = vld [vmem:[#allocation5 + $0x1c70] sm:$0xff]
    %v1083 = vld [vmem:[#allocation5 + $0x1c78] sm:$0xff]
    %v1084 = vld [vmem:[#allocation5 + $0x1c80] sm:$0xff]
    %v1085 = vld [vmem:[#allocation5 + $0x1c88] sm:$0xff]
    %v1086 = vld [vmem:[#allocation5 + $0x1c90] sm:$0xff]
    %v1087 = vld [vmem:[#allocation5 + $0x1c98] sm:$0xff]
    %v1088 = vld [vmem:[#allocation5 + $0x1ca0] sm:$0xff]
    %v1089 = vld [vmem:[#allocation5 + $0x1ca8] sm:$0xff]
    %v1090 = vld [vmem:[#allocation5 + $0x1cb0] sm:$0xff]
    %v1091 = vld [vmem:[#allocation5 + $0x1cb8] sm:$0xff]
    %v1092 = vld [vmem:[#allocation5 + $0x1cc0] sm:$0xff]
    %v1093 = vld [vmem:[#allocation5 + $0x1cc8] sm:$0xff]
    %v1094 = vld [vmem:[#allocation5 + $0x1cd0] sm:$0xff]
    %v1095 = vld [vmem:[#allocation5 + $0x1cd8] sm:$0xff]
    %v1096 = vld [vmem:[#allocation5 + $0x1ce0] sm:$0xff]
    %v1097 = vld [vmem:[#allocation5 + $0x1ce8] sm:$0xff]
    %v1098 = vld [vmem:[#allocation5 + $0x1cf0] sm:$0xff]
    %v1099 = vld [vmem:[#allocation5 + $0x1cf8] sm:$0xff]
    %v1100 = vld [vmem:[#allocation5 + $0x1d00] sm:$0xff]
    %v1101 = vld [vmem:[#allocation5 + $0x1d08] sm:$0xff]
    %v1102 = vld [vmem:[#allocation5 + $0x1d10] sm:$0xff]
    %v1103 = vld [vmem:[#allocation5 + $0x1d18] sm:$0xff]
    %v1104 = vld [vmem:[#allocation5 + $0x1d20] sm:$0xff]
    %v1105 = vld [vmem:[#allocation5 + $0x1d28] sm:$0xff]
    %v1106 = vld [vmem:[#allocation5 + $0x1d30] sm:$0xff]
    %v1107 = vld [vmem:[#allocation5 + $0x1d38] sm:$0xff]
    %v1108 = vld [vmem:[#allocation5 + $0x1d40] sm:$0xff]
    %v1109 = vld [vmem:[#allocation5 + $0x1d48] sm:$0xff]
    %v1110 = vld [vmem:[#allocation5 + $0x1d50] sm:$0xff]
    %v1111 = vld [vmem:[#allocation5 + $0x1d58] sm:$0xff]
    %v1112 = vld [vmem:[#allocation5 + $0x1d60] sm:$0xff]
    %v1113 = vld [vmem:[#allocation5 + $0x1d68] sm:$0xff]
    %v1114 = vld [vmem:[#allocation5 + $0x1d70] sm:$0xff]
    %v1115 = vld [vmem:[#allocation5 + $0x1d78] sm:$0xff]
    %v1116 = vld [vmem:[#allocation5 + $0x1d80] sm:$0xff]
    %v1117 = vld [vmem:[#allocation5 + $0x1d88] sm:$0xff]
    %v1118 = vld [vmem:[#allocation5 + $0x1d90] sm:$0xff]
    %v1119 = vld [vmem:[#allocation5 + $0x1d98] sm:$0xff]
    %v1120 = vld [vmem:[#allocation5 + $0x1da0] sm:$0xff]
    %v1121 = vld [vmem:[#allocation5 + $0x1da8] sm:$0xff]
    %v1122 = vld [vmem:[#allocation5 + $0x1db0] sm:$0xff]
    %v1123 = vld [vmem:[#allocation5 + $0x1db8] sm:$0xff]
    %v1124 = vld [vmem:[#allocation5 + $0x1dc0] sm:$0xff]
    %v1125 = vld [vmem:[#allocation5 + $0x1dc8] sm:$0xff]
    %v1126 = vld [vmem:[#allocation5 + $0x1dd0] sm:$0xff]
    %v1127 = vld [vmem:[#allocation5 + $0x1dd8] sm:$0xff]
    %v1128 = vld [vmem:[#allocation5 + $0x1de0] sm:$0xff]
    %v1129 = vld [vmem:[#allocation5 + $0x1de8] sm:$0xff]
    %v1130 = vld [vmem:[#allocation5 + $0x1df0] sm:$0xff]
    %v1131 = vld [vmem:[#allocation5 + $0x1df8] sm:$0xff]
    %v1132 = vld [vmem:[#allocation5 + $0x1e00] sm:$0xff]
    %v1133 = vld [vmem:[#allocation5 + $0x1e08] sm:$0xff]
    %v1134 = vld [vmem:[#allocation5 + $0x1e10] sm:$0xff]
    %v1135 = vld [vmem:[#allocation5 + $0x1e18] sm:$0xff]
    %v1136 = vld [vmem:[#allocation5 + $0x1e20] sm:$0xff]
    %v1137 = vld [vmem:[#allocation5 + $0x1e28] sm:$0xff]
    %v1138 = vld [vmem:[#allocation5 + $0x1e30] sm:$0xff]
    %v1139 = vld [vmem:[#allocation5 + $0x1e38] sm:$0xff]
    %v1140 = vld [vmem:[#allocation5 + $0x1e40] sm:$0xff]
    %v1141 = vld [vmem:[#allocation5 + $0x1e48] sm:$0xff]
    %v1142 = vld [vmem:[#allocation5 + $0x1e50] sm:$0xff]
    %v1143 = vld [vmem:[#allocation5 + $0x1e58] sm:$0xff]
    %v1144 = vld [vmem:[#allocation5 + $0x1e60] sm:$0xff]
    %v1145 = vld [vmem:[#allocation5 + $0x1e68] sm:$0xff]
    %v1146 = vld [vmem:[#allocation5 + $0x1e70] sm:$0xff]
    %v1147 = vld [vmem:[#allocation5 + $0x1e78] sm:$0xff]
    %v1148 = vld [vmem:[#allocation5 + $0x1e80] sm:$0xff]
    %v1149 = vld [vmem:[#allocation5 + $0x1e88] sm:$0xff]
    %v1150 = vld [vmem:[#allocation5 + $0x1e90] sm:$0xff]
    %v1151 = vld [vmem:[#allocation5 + $0x1e98] sm:$0xff]
    %v1152 = vld [vmem:[#allocation5 + $0x1ea0] sm:$0xff]
    %v1153 = vld [vmem:[#allocation5 + $0x1ea8] sm:$0xff]
    %v1154 = vld [vmem:[#allocation5 + $0x1eb0] sm:$0xff]
    %v1155 = vld [vmem:[#allocation5 + $0x1eb8] sm:$0xff]
    %v1156 = vld [vmem:[#allocation5 + $0x1ec0] sm:$0xff]
    %v1157 = vld [vmem:[#allocation5 + $0x1ec8] sm:$0xff]
    %v1158 = vld [vmem:[#allocation5 + $0x1ed0] sm:$0xff]
    %v1159 = vld [vmem:[#allocation5 + $0x1ed8] sm:$0xff]
    %v1160 = vld [vmem:[#allocation5 + $0x1ee0] sm:$0xff]
    %v1161 = vld [vmem:[#allocation5 + $0x1ee8] sm:$0xff]
    %v1162 = vld [vmem:[#allocation5 + $0x1ef0] sm:$0xff]
    %v1163 = vld [vmem:[#allocation5 + $0x1ef8] sm:$0xff]
    %v1164 = vld [vmem:[#allocation5 + $0x1f00] sm:$0xff]
    %v1165 = vld [vmem:[#allocation5 + $0x1f08] sm:$0xff]
    %v1166 = vld [vmem:[#allocation5 + $0x1f10] sm:$0xff]
    %v1167 = vld [vmem:[#allocation5 + $0x1f18] sm:$0xff]
    %v1168 = vld [vmem:[#allocation5 + $0x1f20] sm:$0xff]
    %v1169 = vld [vmem:[#allocation5 + $0x1f28] sm:$0xff]
    %v1170 = vld [vmem:[#allocation5 + $0x1f30] sm:$0xff]
    %v1171 = vld [vmem:[#allocation5 + $0x1f38] sm:$0xff]
    %v1172 = vld [vmem:[#allocation5 + $0x1f40] sm:$0xff]
    %v1173 = vld [vmem:[#allocation5 + $0x1f48] sm:$0xff]
    %v1174 = vld [vmem:[#allocation5 + $0x1f50] sm:$0xff]
    %v1175 = vld [vmem:[#allocation5 + $0x1f58] sm:$0xff]
    %v1176 = vld [vmem:[#allocation5 + $0x1f60] sm:$0xff]
    %v1177 = vld [vmem:[#allocation5 + $0x1f68] sm:$0xff]
    %v1178 = vld [vmem:[#allocation5 + $0x1f70] sm:$0xff]
    %v1179 = vld [vmem:[#allocation5 + $0x1f78] sm:$0xff]
    %v1180 = vld [vmem:[#allocation5 + $0x1f80] sm:$0xff]
    %v1181 = vld [vmem:[#allocation5 + $0x1f88] sm:$0xff]
    %v1182 = vld [vmem:[#allocation5 + $0x1f90] sm:$0xff]
    %v1183 = vld [vmem:[#allocation5 + $0x1f98] sm:$0xff]
    %v1184 = vld [vmem:[#allocation5 + $0x1fa0] sm:$0xff]
    %v1185 = vld [vmem:[#allocation5 + $0x1fa8] sm:$0xff]
    %v1186 = vld [vmem:[#allocation5 + $0x1fb0] sm:$0xff]
    %v1187 = vld [vmem:[#allocation5 + $0x1fb8] sm:$0xff]
    %v1188 = vld [vmem:[#allocation5 + $0x1fc0] sm:$0xff]
    %v1189 = vld [vmem:[#allocation5 + $0x1fc8] sm:$0xff]
    %v1190 = vld [vmem:[#allocation5 + $0x1fd0] sm:$0xff]
    %v1191 = vld [vmem:[#allocation5 + $0x1fd8] sm:$0xff]
    %v1192 = vld [vmem:[#allocation5 + $0x1fe0] sm:$0xff]
    %v1193 = vld [vmem:[#allocation5 + $0x1fe8] sm:$0xff]
    %v1194 = vld [vmem:[#allocation5 + $0x1ff0] sm:$0xff]
    %v1195 = vld [vmem:[#allocation5 + $0x1ff8] sm:$0xff]
    %v1196 = vld [vmem:[#allocation5 + $0x2000] sm:$0xff]
    %v1197 = vld [vmem:[#allocation5 + $0x2008] sm:$0xff]
    %v1198 = vld [vmem:[#allocation5 + $0x2010] sm:$0xff]
    %v1199 = vld [vmem:[#allocation5 + $0x2018] sm:$0xff]
    %v1200 = vld [vmem:[#allocation5 + $0x2020] sm:$0xff]
    %v1201 = vld [vmem:[#allocation5 + $0x2028] sm:$0xff]
    %v1202 = vld [vmem:[#allocation5 + $0x2030] sm:$0xff]
    %v1203 = vld [vmem:[#allocation5 + $0x2038] sm:$0xff]
    %v1204 = vld [vmem:[#allocation5 + $0x2040] sm:$0xff]
    %v1205 = vld [vmem:[#allocation5 + $0x2048] sm:$0xff]
    %v1206 = vld [vmem:[#allocation5 + $0x2050] sm:$0xff]
    %v1207 = vld [vmem:[#allocation5 + $0x2058] sm:$0xff]
    %v1208 = vld [vmem:[#allocation5 + $0x2060] sm:$0xff]
    %v1209 = vld [vmem:[#allocation5 + $0x2068] sm:$0xff]
    %v1210 = vld [vmem:[#allocation5 + $0x2070] sm:$0xff]
    %v1211 = vld [vmem:[#allocation5 + $0x2078] sm:$0xff]
    %v1212 = vld [vmem:[#allocation5 + $0x2080] sm:$0xff]
    %v1213 = vld [vmem:[#allocation5 + $0x2088] sm:$0xff]
    %v1214 = vld [vmem:[#allocation5 + $0x2090] sm:$0xff]
    %v1215 = vld [vmem:[#allocation5 + $0x2098] sm:$0xff]
    %v1216 = vld [vmem:[#allocation5 + $0x20a0] sm:$0xff]
    %v1217 = vld [vmem:[#allocation5 + $0x20a8] sm:$0xff]
    %v1218 = vld [vmem:[#allocation5 + $0x20b0] sm:$0xff]
    %v1219 = vld [vmem:[#allocation5 + $0x20b8] sm:$0xff]
    %v1220 = vld [vmem:[#allocation5 + $0x20c0] sm:$0xff]
    %v1221 = vld [vmem:[#allocation5 + $0x20c8] sm:$0xff]
    %v1222 = vld [vmem:[#allocation5 + $0x20d0] sm:$0xff]
    %v1223 = vld [vmem:[#allocation5 + $0x20d8] sm:$0xff]
    %v1224 = vld [vmem:[#allocation5 + $0x20e0] sm:$0xff]
    %v1225 = vld [vmem:[#allocation5 + $0x20e8] sm:$0xff]
    %v1226 = vld [vmem:[#allocation5 + $0x20f0] sm:$0xff]
    %v1227 = vld [vmem:[#allocation5 + $0x20f8] sm:$0xff]
    %v1228 = vld [vmem:[#allocation5 + $0x2100] sm:$0xff]
    %v1229 = vld [vmem:[#allocation5 + $0x2108] sm:$0xff]
    %v1230 = vld [vmem:[#allocation5 + $0x2110] sm:$0xff]
    %v1231 = vld [vmem:[#allocation5 + $0x2118] sm:$0xff]
    %v1232 = vld [vmem:[#allocation5 + $0x2120] sm:$0xff]
    %v1233 = vld [vmem:[#allocation5 + $0x2128] sm:$0xff]
    %v1234 = vld [vmem:[#allocation5 + $0x2130] sm:$0xff]
    %v1235 = vld [vmem:[#allocation5 + $0x2138] sm:$0xff]
    %v1236 = vld [vmem:[#allocation5 + $0x2140] sm:$0xff]
    %v1237 = vld [vmem:[#allocation5 + $0x2148] sm:$0xff]
    %v1238 = vld [vmem:[#allocation5 + $0x2150] sm:$0xff]
    %v1239 = vld [vmem:[#allocation5 + $0x2158] sm:$0xff]
    %v1240 = vld [vmem:[#allocation5 + $0x2160] sm:$0xff]
    %v1241 = vld [vmem:[#allocation5 + $0x2168] sm:$0xff]
    %v1242 = vld [vmem:[#allocation5 + $0x2170] sm:$0xff]
    %v1243 = vld [vmem:[#allocation5 + $0x2178] sm:$0xff]
    %v1244 = vld [vmem:[#allocation5 + $0x2180] sm:$0xff]
    %v1245 = vld [vmem:[#allocation5 + $0x2188] sm:$0xff]
    %v1246 = vld [vmem:[#allocation5 + $0x2190] sm:$0xff]
    %v1247 = vld [vmem:[#allocation5 + $0x2198] sm:$0xff]
    %v1248 = vld [vmem:[#allocation5 + $0x21a0] sm:$0xff]
    %v1249 = vld [vmem:[#allocation5 + $0x21a8] sm:$0xff]
    %v1250 = vld [vmem:[#allocation5 + $0x21b0] sm:$0xff]
    %v1251 = vld [vmem:[#allocation5 + $0x21b8] sm:$0xff]
    %v1252 = vld [vmem:[#allocation5 + $0x21c0] sm:$0xff]
    %v1253 = vld [vmem:[#allocation5 + $0x21c8] sm:$0xff]
    %v1254 = vld [vmem:[#allocation5 + $0x21d0] sm:$0xff]
    %v1255 = vld [vmem:[#allocation5 + $0x21d8] sm:$0xff]
    %v1256 = vld [vmem:[#allocation5 + $0x21e0] sm:$0xff]
    %v1257 = vld [vmem:[#allocation5 + $0x21e8] sm:$0xff]
    %v1258 = vld [vmem:[#allocation5 + $0x21f0] sm:$0xff]
    %v1259 = vld [vmem:[#allocation5 + $0x21f8] sm:$0xff]
    %v1260 = vld [vmem:[#allocation5 + $0x2200] sm:$0xff]
    %v1261 = vld [vmem:[#allocation5 + $0x2208] sm:$0xff]
    %v1262 = vld [vmem:[#allocation5 + $0x2210] sm:$0xff]
    %v1263 = vld [vmem:[#allocation5 + $0x2218] sm:$0xff]
    %v1264 = vld [vmem:[#allocation5 + $0x2220] sm:$0xff]
    %v1265 = vld [vmem:[#allocation5 + $0x2228] sm:$0xff]
    %v1266 = vld [vmem:[#allocation5 + $0x2230] sm:$0xff]
    %v1267 = vld [vmem:[#allocation5 + $0x2238] sm:$0xff]
    %v1268 = vld [vmem:[#allocation5 + $0x2240] sm:$0xff]
    %v1269 = vld [vmem:[#allocation5 + $0x2248] sm:$0xff]
    %v1270 = vld [vmem:[#allocation5 + $0x2250] sm:$0xff]
    %v1271 = vld [vmem:[#allocation5 + $0x2258] sm:$0xff]
    %v1272 = vld [vmem:[#allocation5 + $0x2260] sm:$0xff]
    %v1273 = vld [vmem:[#allocation5 + $0x2268] sm:$0xff]
    %v1274 = vld [vmem:[#allocation5 + $0x2270] sm:$0xff]
    %v1275 = vld [vmem:[#allocation5 + $0x2278] sm:$0xff]
    %v1276 = vld [vmem:[#allocation5 + $0x2280] sm:$0xff]
    %v1277 = vld [vmem:[#allocation5 + $0x2288] sm:$0xff]
    %v1278 = vld [vmem:[#allocation5 + $0x2290] sm:$0xff]
    %v1279 = vld [vmem:[#allocation5 + $0x2298] sm:$0xff]
    %v1280 = vld [vmem:[#allocation5 + $0x22a0] sm:$0xff]
    %v1281 = vld [vmem:[#allocation5 + $0x22a8] sm:$0xff]
    %v1282 = vld [vmem:[#allocation5 + $0x22b0] sm:$0xff]
    %v1283 = vld [vmem:[#allocation5 + $0x22b8] sm:$0xff]
    %v1284 = vld [vmem:[#allocation5 + $0x22c0] sm:$0xff]
    %v1285 = vld [vmem:[#allocation5 + $0x22c8] sm:$0xff]
    %v1286 = vld [vmem:[#allocation5 + $0x22d0] sm:$0xff]
    %v1287 = vld [vmem:[#allocation5 + $0x22d8] sm:$0xff]
    %v1288 = vld [vmem:[#allocation5 + $0x22e0] sm:$0xff]
    %v1289 = vld [vmem:[#allocation5 + $0x22e8] sm:$0xff]
    %v1290 = vld [vmem:[#allocation5 + $0x22f0] sm:$0xff]
    %v1291 = vld [vmem:[#allocation5 + $0x22f8] sm:$0xff]
    %v1292 = vld [vmem:[#allocation5 + $0x2300] sm:$0xff]
    %v1293 = vld [vmem:[#allocation5 + $0x2308] sm:$0xff]
    %v1294 = vld [vmem:[#allocation5 + $0x2310] sm:$0xff]
    %v1295 = vld [vmem:[#allocation5 + $0x2318] sm:$0xff]
    %v1296 = vld [vmem:[#allocation5 + $0x2320] sm:$0xff]
    %v1297 = vld [vmem:[#allocation5 + $0x2328] sm:$0xff]
    %v1298 = vld [vmem:[#allocation5 + $0x2330] sm:$0xff]
    %v1299 = vld [vmem:[#allocation5 + $0x2338] sm:$0xff]
    %v1300 = vld [vmem:[#allocation5 + $0x2340] sm:$0xff]
    %v1301 = vld [vmem:[#allocation5 + $0x2348] sm:$0xff]
    %v1302 = vld [vmem:[#allocation5 + $0x2350] sm:$0xff]
    %v1303 = vld [vmem:[#allocation5 + $0x2358] sm:$0xff]
    %v1304 = vld [vmem:[#allocation5 + $0x2360] sm:$0xff]
    %v1305 = vld [vmem:[#allocation5 + $0x2368] sm:$0xff]
    %v1306 = vld [vmem:[#allocation5 + $0x2370] sm:$0xff]
    %v1307 = vld [vmem:[#allocation5 + $0x2378] sm:$0xff]
    %v1308 = vld [vmem:[#allocation5 + $0x2380] sm:$0xff]
    %v1309 = vld [vmem:[#allocation5 + $0x2388] sm:$0xff]
    %v1310 = vld [vmem:[#allocation5 + $0x2390] sm:$0xff]
    %v1311 = vld [vmem:[#allocation5 + $0x2398] sm:$0xff]
    %v1312 = vld [vmem:[#allocation5 + $0x23a0] sm:$0xff]
    %v1313 = vld [vmem:[#allocation5 + $0x23a8] sm:$0xff]
    %v1314 = vld [vmem:[#allocation5 + $0x23b0] sm:$0xff]
    %v1315 = vld [vmem:[#allocation5 + $0x23b8] sm:$0xff]
    %v1316 = vld [vmem:[#allocation5 + $0x23c0] sm:$0xff]
    %v1317 = vld [vmem:[#allocation5 + $0x23c8] sm:$0xff]
    %v1318 = vld [vmem:[#allocation5 + $0x23d0] sm:$0xff]
    %v1319 = vld [vmem:[#allocation5 + $0x23d8] sm:$0xff]
    %v1320 = vld [vmem:[#allocation5 + $0x23e0] sm:$0xff]
    %v1321 = vld [vmem:[#allocation5 + $0x23e8] sm:$0xff]
    %v1322 = vld [vmem:[#allocation5 + $0x23f0] sm:$0xff]
    %v1323 = vld [vmem:[#allocation5 + $0x23f8] sm:$0xff]
    %v1324 = vld [vmem:[#allocation5 + $0x2400] sm:$0xff]
    %v1325 = vld [vmem:[#allocation5 + $0x2408] sm:$0xff]
    %v1326 = vld [vmem:[#allocation5 + $0x2410] sm:$0xff]
    %v1327 = vld [vmem:[#allocation5 + $0x2418] sm:$0xff]
    %v1328 = vld [vmem:[#allocation5 + $0x2420] sm:$0xff]
    %v1329 = vld [vmem:[#allocation5 + $0x2428] sm:$0xff]
    %v1330 = vld [vmem:[#allocation5 + $0x2430] sm:$0xff]
    %v1331 = vld [vmem:[#allocation5 + $0x2438] sm:$0xff]
    %v1332 = vld [vmem:[#allocation5 + $0x2440] sm:$0xff]
    %v1333 = vld [vmem:[#allocation5 + $0x2448] sm:$0xff]
    %v1334 = vld [vmem:[#allocation5 + $0x2450] sm:$0xff]
    %v1335 = vld [vmem:[#allocation5 + $0x2458] sm:$0xff]
    %v1336 = vld [vmem:[#allocation5 + $0x2460] sm:$0xff]
    %v1337 = vld [vmem:[#allocation5 + $0x2468] sm:$0xff]
    %v1338 = vld [vmem:[#allocation5 + $0x2470] sm:$0xff]
    %v1339 = vld [vmem:[#allocation5 + $0x2478] sm:$0xff]
    %v1340 = vld [vmem:[#allocation5 + $0x2480] sm:$0xff]
    %v1341 = vld [vmem:[#allocation5 + $0x2488] sm:$0xff]
    %v1342 = vld [vmem:[#allocation5 + $0x2490] sm:$0xff]
    %v1343 = vld [vmem:[#allocation5 + $0x2498] sm:$0xff]
    %v1344 = vld [vmem:[#allocation5 + $0x24a0] sm:$0xff]
    %v1345 = vld [vmem:[#allocation5 + $0x24a8] sm:$0xff]
    %v1346 = vld [vmem:[#allocation5 + $0x24b0] sm:$0xff]
    %v1347 = vld [vmem:[#allocation5 + $0x24b8] sm:$0xff]
    %v1348 = vld [vmem:[#allocation5 + $0x24c0] sm:$0xff]
    %v1349 = vld [vmem:[#allocation5 + $0x24c8] sm:$0xff]
    %v1350 = vld [vmem:[#allocation5 + $0x24d0] sm:$0xff]
    %v1351 = vld [vmem:[#allocation5 + $0x24d8] sm:$0xff]
    %v1352 = vld [vmem:[#allocation5 + $0x24e0] sm:$0xff]
    %v1353 = vld [vmem:[#allocation5 + $0x24e8] sm:$0xff]
    %v1354 = vld [vmem:[#allocation5 + $0x24f0] sm:$0xff]
    %v1355 = vld [vmem:[#allocation5 + $0x24f8] sm:$0xff]
    %v1356 = vld [vmem:[#allocation5 + $0x2500] sm:$0xff]
    %v1357 = vld [vmem:[#allocation5 + $0x2508] sm:$0xff]
    %v1358 = vld [vmem:[#allocation5 + $0x2510] sm:$0xff]
    %v1359 = vld [vmem:[#allocation5 + $0x2518] sm:$0xff]
    %v1360 = vld [vmem:[#allocation5 + $0x2520] sm:$0xff]
    %v1361 = vld [vmem:[#allocation5 + $0x2528] sm:$0xff]
    %v1362 = vld [vmem:[#allocation5 + $0x2530] sm:$0xff]
    %v1363 = vld [vmem:[#allocation5 + $0x2538] sm:$0xff]
    %v1364 = vld [vmem:[#allocation5 + $0x2540] sm:$0xff]
    %v1365 = vld [vmem:[#allocation5 + $0x2548] sm:$0xff]
    %v1366 = vld [vmem:[#allocation5 + $0x2550] sm:$0xff]
    %v1367 = vld [vmem:[#allocation5 + $0x2558] sm:$0xff]
    %v1368 = vld [vmem:[#allocation5 + $0x2560] sm:$0xff]
    %v1369 = vld [vmem:[#allocation5 + $0x2568] sm:$0xff]
    %v1370 = vld [vmem:[#allocation5 + $0x2570] sm:$0xff]
    %v1371 = vld [vmem:[#allocation5 + $0x2578] sm:$0xff]
    %v1372 = vld [vmem:[#allocation5 + $0x2580] sm:$0xff]
    %v1373 = vld [vmem:[#allocation5 + $0x2588] sm:$0xff]
    %v1374 = vld [vmem:[#allocation5 + $0x2590] sm:$0xff]
    %v1375 = vld [vmem:[#allocation5 + $0x2598] sm:$0xff]
    %v1376 = vld [vmem:[#allocation5 + $0x25a0] sm:$0xff]
    %v1377 = vld [vmem:[#allocation5 + $0x25a8] sm:$0xff]
    %v1378 = vld [vmem:[#allocation5 + $0x25b0] sm:$0xff]
    %v1379 = vld [vmem:[#allocation5 + $0x25b8] sm:$0xff]
    %v1380 = vld [vmem:[#allocation5 + $0x25c0] sm:$0xff]
    %v1381 = vld [vmem:[#allocation5 + $0x25c8] sm:$0xff]
    %v1382 = vld [vmem:[#allocation5 + $0x25d0] sm:$0xff]
    %v1383 = vld [vmem:[#allocation5 + $0x25d8] sm:$0xff]
    %v1384 = vld [vmem:[#allocation5 + $0x25e0] sm:$0xff]
    %v1385 = vld [vmem:[#allocation5 + $0x25e8] sm:$0xff]
    %v1386 = vld [vmem:[#allocation5 + $0x25f0] sm:$0xff]
    %v1387 = vld [vmem:[#allocation5 + $0x25f8] sm:$0xff]
    %v1388 = vld [vmem:[#allocation5 + $0x2600] sm:$0xff]
    %v1389 = vld [vmem:[#allocation5 + $0x2608] sm:$0xff]
    %v1390 = vld [vmem:[#allocation5 + $0x2610] sm:$0xff]
    %v1391 = vld [vmem:[#allocation5 + $0x2618] sm:$0xff]
    %v1392 = vld [vmem:[#allocation5 + $0x2620] sm:$0xff]
    %v1393 = vld [vmem:[#allocation5 + $0x2628] sm:$0xff]
    %v1394 = vld [vmem:[#allocation5 + $0x2630] sm:$0xff]
    %v1395 = vld [vmem:[#allocation5 + $0x2638] sm:$0xff]
    %v1396 = vld [vmem:[#allocation5 + $0x2640] sm:$0xff]
    %v1397 = vld [vmem:[#allocation5 + $0x2648] sm:$0xff]
    %v1398 = vld [vmem:[#allocation5 + $0x2650] sm:$0xff]
    %v1399 = vld [vmem:[#allocation5 + $0x2658] sm:$0xff]
    %v1400 = vld [vmem:[#allocation5 + $0x2660] sm:$0xff]
    %v1401 = vld [vmem:[#allocation5 + $0x2668] sm:$0xff]
    %v1402 = vld [vmem:[#allocation5 + $0x2670] sm:$0xff]
    %v1403 = vld [vmem:[#allocation5 + $0x2678] sm:$0xff]
    %v1404 = vld [vmem:[#allocation5 + $0x2680] sm:$0xff]
    %v1405 = vld [vmem:[#allocation5 + $0x2688] sm:$0xff]
    %v1406 = vld [vmem:[#allocation5 + $0x2690] sm:$0xff]
    %v1407 = vld [vmem:[#allocation5 + $0x2698] sm:$0xff]
    %v1408 = vld [vmem:[#allocation5 + $0x26a0] sm:$0xff]
    %v1409 = vld [vmem:[#allocation5 + $0x26a8] sm:$0xff]
    %v1410 = vld [vmem:[#allocation5 + $0x26b0] sm:$0xff]
    %v1411 = vld [vmem:[#allocation5 + $0x26b8] sm:$0xff]
    %v1412 = vld [vmem:[#allocation5 + $0x26c0] sm:$0xff]
    %v1413 = vld [vmem:[#allocation5 + $0x26c8] sm:$0xff]
    %v1414 = vld [vmem:[#allocation5 + $0x26d0] sm:$0xff]
    %v1415 = vld [vmem:[#allocation5 + $0x26d8] sm:$0xff]
    %v1416 = vld [vmem:[#allocation5 + $0x26e0] sm:$0xff]
    %v1417 = vld [vmem:[#allocation5 + $0x26e8] sm:$0xff]
    %v1418 = vld [vmem:[#allocation5 + $0x26f0] sm:$0xff]
    %v1419 = vld [vmem:[#allocation5 + $0x26f8] sm:$0xff]
    %v1420 = vld [vmem:[#allocation5 + $0x2700] sm:$0xff]
    %v1421 = vld [vmem:[#allocation5 + $0x2708] sm:$0xff]
    %v1422 = vld [vmem:[#allocation5 + $0x2710] sm:$0xff]
    %v1423 = vld [vmem:[#allocation5 + $0x2718] sm:$0xff]
    %v1424 = vld [vmem:[#allocation5 + $0x2720] sm:$0xff]
    %v1425 = vld [vmem:[#allocation5 + $0x2728] sm:$0xff]
    %v1426 = vld [vmem:[#allocation5 + $0x2730] sm:$0xff]
    %v1427 = vld [vmem:[#allocation5 + $0x2738] sm:$0xff]
    %v1428 = vld [vmem:[#allocation5 + $0x2740] sm:$0xff]
    %v1429 = vld [vmem:[#allocation5 + $0x2748] sm:$0xff]
    %v1430 = vld [vmem:[#allocation5 + $0x2750] sm:$0xff]
    %v1431 = vld [vmem:[#allocation5 + $0x2758] sm:$0xff]
    %v1432 = vld [vmem:[#allocation5 + $0x2760] sm:$0xff]
    %v1433 = vld [vmem:[#allocation5 + $0x2768] sm:$0xff]
    %v1434 = vld [vmem:[#allocation5 + $0x2770] sm:$0xff]
    %v1435 = vld [vmem:[#allocation5 + $0x2778] sm:$0xff]
    %v1436 = vld [vmem:[#allocation5 + $0x2780] sm:$0xff]
    %v1437 = vld [vmem:[#allocation5 + $0x2788] sm:$0xff]
    %v1438 = vld [vmem:[#allocation5 + $0x2790] sm:$0xff]
    %v1439 = vld [vmem:[#allocation5 + $0x2798] sm:$0xff]
    %v1440 = vld [vmem:[#allocation5 + $0x27a0] sm:$0xff]
    %v1441 = vld [vmem:[#allocation5 + $0x27a8] sm:$0xff]
    %v1442 = vld [vmem:[#allocation5 + $0x27b0] sm:$0xff]
    %v1443 = vld [vmem:[#allocation5 + $0x27b8] sm:$0xff]
    %v1444 = vld [vmem:[#allocation5 + $0x27c0] sm:$0xff]
    %v1445 = vld [vmem:[#allocation5 + $0x27c8] sm:$0xff]
    %v1446 = vld [vmem:[#allocation5 + $0x27d0] sm:$0xff]
    %v1447 = vld [vmem:[#allocation5 + $0x27d8] sm:$0xff]
    %v1448 = vld [vmem:[#allocation5 + $0x27e0] sm:$0xff]
    %v1449 = vld [vmem:[#allocation5 + $0x27e8] sm:$0xff]
    %v1450 = vld [vmem:[#allocation5 + $0x27f0] sm:$0xff]
    %v1451 = vld [vmem:[#allocation5 + $0x27f8] sm:$0xff]
    %v1452 = vld [vmem:[#allocation5 + $0x2800] sm:$0xff]
    %v1453 = vld [vmem:[#allocation5 + $0x2808] sm:$0xff]
    %v1454 = vld [vmem:[#allocation5 + $0x2810] sm:$0xff]
    %v1455 = vld [vmem:[#allocation5 + $0x2818] sm:$0xff]
    %v1456 = vld [vmem:[#allocation5 + $0x2820] sm:$0xff]
    %v1457 = vld [vmem:[#allocation5 + $0x2828] sm:$0xff]
    %v1458 = vld [vmem:[#allocation5 + $0x2830] sm:$0xff]
    %v1459 = vld [vmem:[#allocation5 + $0x2838] sm:$0xff]
    %v1460 = vld [vmem:[#allocation5 + $0x2840] sm:$0xff]
    %v1461 = vld [vmem:[#allocation5 + $0x2848] sm:$0xff]
    %v1462 = vld [vmem:[#allocation5 + $0x2850] sm:$0xff]
    %v1463 = vld [vmem:[#allocation5 + $0x2858] sm:$0xff]
    %v1464 = vld [vmem:[#allocation5 + $0x2860] sm:$0xff]
    %v1465 = vld [vmem:[#allocation5 + $0x2868] sm:$0xff]
    %v1466 = vld [vmem:[#allocation5 + $0x2870] sm:$0xff]
    %v1467 = vld [vmem:[#allocation5 + $0x2878] sm:$0xff]
    %v1468 = vld [vmem:[#allocation5 + $0x2880] sm:$0xff]
    %v1469 = vld [vmem:[#allocation5 + $0x2888] sm:$0xff]
    %v1470 = vld [vmem:[#allocation5 + $0x2890] sm:$0xff]
    %v1471 = vld [vmem:[#allocation5 + $0x2898] sm:$0xff]
    %v1472 = vld [vmem:[#allocation5 + $0x28a0] sm:$0xff]
    %v1473 = vld [vmem:[#allocation5 + $0x28a8] sm:$0xff]
    %v1474 = vld [vmem:[#allocation5 + $0x28b0] sm:$0xff]
    %v1475 = vld [vmem:[#allocation5 + $0x28b8] sm:$0xff]
    %v1476 = vld [vmem:[#allocation5 + $0x28c0] sm:$0xff]
    %v1477 = vld [vmem:[#allocation5 + $0x28c8] sm:$0xff]
    %v1478 = vld [vmem:[#allocation5 + $0x28d0] sm:$0xff]
    %v1479 = vld [vmem:[#allocation5 + $0x28d8] sm:$0xff]
    %v1480 = vld [vmem:[#allocation5 + $0x28e0] sm:$0xff]
    %v1481 = vld [vmem:[#allocation5 + $0x28e8] sm:$0xff]
    %v1482 = vld [vmem:[#allocation5 + $0x28f0] sm:$0xff]
    %v1483 = vld [vmem:[#allocation5 + $0x28f8] sm:$0xff]
    %v1484 = vld [vmem:[#allocation5 + $0x2900] sm:$0xff]
    %v1485 = vld [vmem:[#allocation5 + $0x2908] sm:$0xff]
    %v1486 = vld [vmem:[#allocation5 + $0x2910] sm:$0xff]
    %v1487 = vld [vmem:[#allocation5 + $0x2918] sm:$0xff]
    %v1488 = vld [vmem:[#allocation5 + $0x2920] sm:$0xff]
    %v1489 = vld [vmem:[#allocation5 + $0x2928] sm:$0xff]
    %v1490 = vld [vmem:[#allocation5 + $0x2930] sm:$0xff]
    %v1491 = vld [vmem:[#allocation5 + $0x2938] sm:$0xff]
    %v1492 = vld [vmem:[#allocation5 + $0x2940] sm:$0xff]
    %v1493 = vld [vmem:[#allocation5 + $0x2948] sm:$0xff]
    %v1494 = vld [vmem:[#allocation5 + $0x2950] sm:$0xff]
    %v1495 = vld [vmem:[#allocation5 + $0x2958] sm:$0xff]
    %v1496 = vld [vmem:[#allocation5 + $0x2960] sm:$0xff]
    %v1497 = vld [vmem:[#allocation5 + $0x2968] sm:$0xff]
    %v1498 = vld [vmem:[#allocation5 + $0x2970] sm:$0xff]
    %v1499 = vld [vmem:[#allocation5 + $0x2978] sm:$0xff]
    %v1500 = vld [vmem:[#allocation5 + $0x2980] sm:$0xff]
    %v1501 = vld [vmem:[#allocation5 + $0x2988] sm:$0xff]
    %v1502 = vld [vmem:[#allocation5 + $0x2990] sm:$0xff]
    %v1503 = vld [vmem:[#allocation5 + $0x2998] sm:$0xff]
    %v1504 = vld [vmem:[#allocation5 + $0x29a0] sm:$0xff]
    %v1505 = vld [vmem:[#allocation5 + $0x29a8] sm:$0xff]
    %v1506 = vld [vmem:[#allocation5 + $0x29b0] sm:$0xff]
    %v1507 = vld [vmem:[#allocation5 + $0x29b8] sm:$0xff]
    %v1508 = vld [vmem:[#allocation5 + $0x29c0] sm:$0xff]
    %v1509 = vld [vmem:[#allocation5 + $0x29c8] sm:$0xff]
    %v1510 = vld [vmem:[#allocation5 + $0x29d0] sm:$0xff]
    %v1511 = vld [vmem:[#allocation5 + $0x29d8] sm:$0xff]
    %v1512 = vld [vmem:[#allocation5 + $0x29e0] sm:$0xff]
    %v1513 = vld [vmem:[#allocation5 + $0x29e8] sm:$0xff]
    %v1514 = vld [vmem:[#allocation5 + $0x29f0] sm:$0xff]
    %v1515 = vld [vmem:[#allocation5 + $0x29f8] sm:$0xff]
    %v1516 = vld [vmem:[#allocation5 + $0x2a00] sm:$0xff]
    %v1517 = vld [vmem:[#allocation5 + $0x2a08] sm:$0xff]
    %v1518 = vld [vmem:[#allocation5 + $0x2a10] sm:$0xff]
    %v1519 = vld [vmem:[#allocation5 + $0x2a18] sm:$0xff]
    %v1520 = vld [vmem:[#allocation5 + $0x2a20] sm:$0xff]
    %v1521 = vld [vmem:[#allocation5 + $0x2a28] sm:$0xff]
    %v1522 = vld [vmem:[#allocation5 + $0x2a30] sm:$0xff]
    %v1523 = vld [vmem:[#allocation5 + $0x2a38] sm:$0xff]
    %v1524 = vld [vmem:[#allocation5 + $0x2a40] sm:$0xff]
    %v1525 = vld [vmem:[#allocation5 + $0x2a48] sm:$0xff]
    %v1526 = vld [vmem:[#allocation5 + $0x2a50] sm:$0xff]
    %v1527 = vld [vmem:[#allocation5 + $0x2a58] sm:$0xff]
    %v1528 = vld [vmem:[#allocation5 + $0x2a60] sm:$0xff]
    %v1529 = vld [vmem:[#allocation5 + $0x2a68] sm:$0xff]
    %v1530 = vld [vmem:[#allocation5 + $0x2a70] sm:$0xff]
    %v1531 = vld [vmem:[#allocation5 + $0x2a78] sm:$0xff]
    %v1532 = vld [vmem:[#allocation5 + $0x2a80] sm:$0xff]
    %v1533 = vld [vmem:[#allocation5 + $0x2a88] sm:$0xff]
    %v1534 = vld [vmem:[#allocation5 + $0x2a90] sm:$0xff]
    %v1535 = vld [vmem:[#allocation5 + $0x2a98] sm:$0xff]
    %v1536 = vld [vmem:[#allocation5 + $0x2aa0] sm:$0xff]
    %v1537 = vld [vmem:[#allocation5 + $0x2aa8] sm:$0xff]
    %v1538 = vld [vmem:[#allocation5 + $0x2ab0] sm:$0xff]
    %v1539 = vld [vmem:[#allocation5 + $0x2ab8] sm:$0xff]
    %v1540 = vld [vmem:[#allocation5 + $0x2ac0] sm:$0xff]
    %v1541 = vld [vmem:[#allocation5 + $0x2ac8] sm:$0xff]
    %v1542 = vld [vmem:[#allocation5 + $0x2ad0] sm:$0xff]
    %v1543 = vld [vmem:[#allocation5 + $0x2ad8] sm:$0xff]
    %v1544 = vld [vmem:[#allocation5 + $0x2ae0] sm:$0xff]
    %v1545 = vld [vmem:[#allocation5 + $0x2ae8] sm:$0xff]
    %v1546 = vld [vmem:[#allocation5 + $0x2af0] sm:$0xff]
    %v1547 = vld [vmem:[#allocation5 + $0x2af8] sm:$0xff]
    %v1548 = vld [vmem:[#allocation5 + $0x2b00] sm:$0xff]
    %v1549 = vld [vmem:[#allocation5 + $0x2b08] sm:$0xff]
    %v1550 = vld [vmem:[#allocation5 + $0x2b10] sm:$0xff]
    %v1551 = vld [vmem:[#allocation5 + $0x2b18] sm:$0xff]
    %v1552 = vld [vmem:[#allocation5 + $0x2b20] sm:$0xff]
    %v1553 = vld [vmem:[#allocation5 + $0x2b28] sm:$0xff]
    %v1554 = vld [vmem:[#allocation5 + $0x2b30] sm:$0xff]
    %v1555 = vld [vmem:[#allocation5 + $0x2b38] sm:$0xff]
    %v1556 = vld [vmem:[#allocation5 + $0x2b40] sm:$0xff]
    %v1557 = vld [vmem:[#allocation5 + $0x2b48] sm:$0xff]
    %v1558 = vld [vmem:[#allocation5 + $0x2b50] sm:$0xff]
    %v1559 = vld [vmem:[#allocation5 + $0x2b58] sm:$0xff]
    %v1560 = vld [vmem:[#allocation5 + $0x2b60] sm:$0xff]
    %v1561 = vld [vmem:[#allocation5 + $0x2b68] sm:$0xff]
    %v1562 = vld [vmem:[#allocation5 + $0x2b70] sm:$0xff]
    %v1563 = vld [vmem:[#allocation5 + $0x2b78] sm:$0xff]
    %v1564 = vld [vmem:[#allocation5 + $0x2b80] sm:$0xff]
    %v1565 = vld [vmem:[#allocation5 + $0x2b88] sm:$0xff]
    %v1566 = vld [vmem:[#allocation5 + $0x2b90] sm:$0xff]
    %v1567 = vld [vmem:[#allocation5 + $0x2b98] sm:$0xff]
    %v1568 = vld [vmem:[#allocation5 + $0x2ba0] sm:$0xff]
    %v1569 = vld [vmem:[#allocation5 + $0x2ba8] sm:$0xff]
    %v1570 = vld [vmem:[#allocation5 + $0x2bb0] sm:$0xff]
    %v1571 = vld [vmem:[#allocation5 + $0x2bb8] sm:$0xff]
    %v1572 = vld [vmem:[#allocation5 + $0x2bc0] sm:$0xff]
    %v1573 = vld [vmem:[#allocation5 + $0x2bc8] sm:$0xff]
    %v1574 = vld [vmem:[#allocation5 + $0x2bd0] sm:$0xff]
    %v1575 = vld [vmem:[#allocation5 + $0x2bd8] sm:$0xff]
    %v1576 = vld [vmem:[#allocation5 + $0x2be0] sm:$0xff]
    %v1577 = vld [vmem:[#allocation5 + $0x2be8] sm:$0xff]
    %v1578 = vld [vmem:[#allocation5 + $0x2bf0] sm:$0xff]
    %v1579 = vld [vmem:[#allocation5 + $0x2bf8] sm:$0xff]
    %v1580 = vld [vmem:[#allocation5 + $0x2c00] sm:$0xff]
    %v1581 = vld [vmem:[#allocation5 + $0x2c08] sm:$0xff]
    %v1582 = vld [vmem:[#allocation5 + $0x2c10] sm:$0xff]
    %v1583 = vld [vmem:[#allocation5 + $0x2c18] sm:$0xff]
    %v1584 = vld [vmem:[#allocation5 + $0x2c20] sm:$0xff]
    %v1585 = vld [vmem:[#allocation5 + $0x2c28] sm:$0xff]
    %v1586 = vld [vmem:[#allocation5 + $0x2c30] sm:$0xff]
    %v1587 = vld [vmem:[#allocation5 + $0x2c38] sm:$0xff]
    %v1588 = vld [vmem:[#allocation5 + $0x2c40] sm:$0xff]
    %v1589 = vld [vmem:[#allocation5 + $0x2c48] sm:$0xff]
    %v1590 = vld [vmem:[#allocation5 + $0x2c50] sm:$0xff]
    %v1591 = vld [vmem:[#allocation5 + $0x2c58] sm:$0xff]
    %v1592 = vld [vmem:[#allocation5 + $0x2c60] sm:$0xff]
    %v1593 = vld [vmem:[#allocation5 + $0x2c68] sm:$0xff]
    %v1594 = vld [vmem:[#allocation5 + $0x2c70] sm:$0xff]
    %v1595 = vld [vmem:[#allocation5 + $0x2c78] sm:$0xff]
    %v1596 = vld [vmem:[#allocation5 + $0x2c80] sm:$0xff]
    %v1597 = vld [vmem:[#allocation5 + $0x2c88] sm:$0xff]
    %v1598 = vld [vmem:[#allocation5 + $0x2c90] sm:$0xff]
    %v1599 = vld [vmem:[#allocation5 + $0x2c98] sm:$0xff]
    %v1600 = vld [vmem:[#allocation5 + $0x2ca0] sm:$0xff]
    %v1601 = vld [vmem:[#allocation5 + $0x2ca8] sm:$0xff]
    %v1602 = vld [vmem:[#allocation5 + $0x2cb0] sm:$0xff]
    %v1603 = vld [vmem:[#allocation5 + $0x2cb8] sm:$0xff]
    %v1604 = vld [vmem:[#allocation5 + $0x2cc0] sm:$0xff]
    %v1605 = vld [vmem:[#allocation5 + $0x2cc8] sm:$0xff]
    %v1606 = vld [vmem:[#allocation5 + $0x2cd0] sm:$0xff]
    %v1607 = vld [vmem:[#allocation5 + $0x2cd8] sm:$0xff]
    %v1608 = vld [vmem:[#allocation5 + $0x2ce0] sm:$0xff]
    %v1609 = vld [vmem:[#allocation5 + $0x2ce8] sm:$0xff]
    %v1610 = vld [vmem:[#allocation5 + $0x2cf0] sm:$0xff]
    %v1611 = vld [vmem:[#allocation5 + $0x2cf8] sm:$0xff]
    %v1612 = vld [vmem:[#allocation5 + $0x2d00] sm:$0xff]
    %v1613 = vld [vmem:[#allocation5 + $0x2d08] sm:$0xff]
    %v1614 = vld [vmem:[#allocation5 + $0x2d10] sm:$0xff]
    %v1615 = vld [vmem:[#allocation5 + $0x2d18] sm:$0xff]
    %v1616 = vld [vmem:[#allocation5 + $0x2d20] sm:$0xff]
    %v1617 = vld [vmem:[#allocation5 + $0x2d28] sm:$0xff]
    %v1618 = vld [vmem:[#allocation5 + $0x2d30] sm:$0xff]
    %v1619 = vld [vmem:[#allocation5 + $0x2d38] sm:$0xff]
    %v1620 = vld [vmem:[#allocation5 + $0x2d40] sm:$0xff]
    %v1621 = vld [vmem:[#allocation5 + $0x2d48] sm:$0xff]
    %v1622 = vld [vmem:[#allocation5 + $0x2d50] sm:$0xff]
    %v1623 = vld [vmem:[#allocation5 + $0x2d58] sm:$0xff]
    %v1624 = vld [vmem:[#allocation5 + $0x2d60] sm:$0xff]
    %v1625 = vld [vmem:[#allocation5 + $0x2d68] sm:$0xff]
    %v1626 = vld [vmem:[#allocation5 + $0x2d70] sm:$0xff]
    %v1627 = vld [vmem:[#allocation5 + $0x2d78] sm:$0xff]
    %v1628 = vld [vmem:[#allocation5 + $0x2d80] sm:$0xff]
    %v1629 = vld [vmem:[#allocation5 + $0x2d88] sm:$0xff]
    %v1630 = vld [vmem:[#allocation5 + $0x2d90] sm:$0xff]
    %v1631 = vld [vmem:[#allocation5 + $0x2d98] sm:$0xff]
    %v1632 = vld [vmem:[#allocation5 + $0x2da0] sm:$0xff]
    %v1633 = vld [vmem:[#allocation5 + $0x2da8] sm:$0xff]
    %v1634 = vld [vmem:[#allocation5 + $0x2db0] sm:$0xff]
    %v1635 = vld [vmem:[#allocation5 + $0x2db8] sm:$0xff]
    %v1636 = vld [vmem:[#allocation5 + $0x2dc0] sm:$0xff]
    %v1637 = vld [vmem:[#allocation5 + $0x2dc8] sm:$0xff]
    %v1638 = vld [vmem:[#allocation5 + $0x2dd0] sm:$0xff]
    %v1639 = vld [vmem:[#allocation5 + $0x2dd8] sm:$0xff]
    %v1640 = vld [vmem:[#allocation5 + $0x2de0] sm:$0xff]
    %v1641 = vld [vmem:[#allocation5 + $0x2de8] sm:$0xff]
    %v1642 = vld [vmem:[#allocation5 + $0x2df0] sm:$0xff]
    %v1643 = vld [vmem:[#allocation5 + $0x2df8] sm:$0xff]
    %v1644 = vld [vmem:[#allocation5 + $0x2e00] sm:$0xff]
    %v1645 = vld [vmem:[#allocation5 + $0x2e08] sm:$0xff]
    %v1646 = vld [vmem:[#allocation5 + $0x2e10] sm:$0xff]
    %v1647 = vld [vmem:[#allocation5 + $0x2e18] sm:$0xff]
    %v1648 = vld [vmem:[#allocation5 + $0x2e20] sm:$0xff]
    %v1649 = vld [vmem:[#allocation5 + $0x2e28] sm:$0xff]
    %v1650 = vld [vmem:[#allocation5 + $0x2e30] sm:$0xff]
    %v1651 = vld [vmem:[#allocation5 + $0x2e38] sm:$0xff]
    %v1652 = vld [vmem:[#allocation5 + $0x2e40] sm:$0xff]
    %v1653 = vld [vmem:[#allocation5 + $0x2e48] sm:$0xff]
    %v1654 = vld [vmem:[#allocation5 + $0x2e50] sm:$0xff]
    %v1655 = vld [vmem:[#allocation5 + $0x2e58] sm:$0xff]
    %v1656 = vld [vmem:[#allocation5 + $0x2e60] sm:$0xff]
    %v1657 = vld [vmem:[#allocation5 + $0x2e68] sm:$0xff]
    %v1658 = vld [vmem:[#allocation5 + $0x2e70] sm:$0xff]
    %v1659 = vld [vmem:[#allocation5 + $0x2e78] sm:$0xff]
    %v1660 = vld [vmem:[#allocation5 + $0x2e80] sm:$0xff]
    %v1661 = vld [vmem:[#allocation5 + $0x2e88] sm:$0xff]
    %v1662 = vld [vmem:[#allocation5 + $0x2e90] sm:$0xff]
    %v1663 = vld [vmem:[#allocation5 + $0x2e98] sm:$0xff]
    %v1664 = vld [vmem:[#allocation5 + $0x2ea0] sm:$0xff]
    %v1665 = vld [vmem:[#allocation5 + $0x2ea8] sm:$0xff]
    %v1666 = vld [vmem:[#allocation5 + $0x2eb0] sm:$0xff]
    %v1667 = vld [vmem:[#allocation5 + $0x2eb8] sm:$0xff]
    %v1668 = vld [vmem:[#allocation5 + $0x2ec0] sm:$0xff]
    %v1669 = vld [vmem:[#allocation5 + $0x2ec8] sm:$0xff]
    %v1670 = vld [vmem:[#allocation5 + $0x2ed0] sm:$0xff]
    %v1671 = vld [vmem:[#allocation5 + $0x2ed8] sm:$0xff]
    %v1672 = vld [vmem:[#allocation5 + $0x2ee0] sm:$0xff]
    %v1673 = vld [vmem:[#allocation5 + $0x2ee8] sm:$0xff]
    %v1674 = vld [vmem:[#allocation5 + $0x2ef0] sm:$0xff]
    %v1675 = vld [vmem:[#allocation5 + $0x2ef8] sm:$0xff]
    %v1676 = vld [vmem:[#allocation5 + $0x2f00] sm:$0xff]
    %v1677 = vld [vmem:[#allocation5 + $0x2f08] sm:$0xff]
    %v1678 = vld [vmem:[#allocation5 + $0x2f10] sm:$0xff]
    %v1679 = vld [vmem:[#allocation5 + $0x2f18] sm:$0xff]
    %v1680 = vld [vmem:[#allocation5 + $0x2f20] sm:$0xff]
    %v1681 = vld [vmem:[#allocation5 + $0x2f28] sm:$0xff]
    %v1682 = vld [vmem:[#allocation5 + $0x2f30] sm:$0xff]
    %v1683 = vld [vmem:[#allocation5 + $0x2f38] sm:$0xff]
    %v1684 = vld [vmem:[#allocation5 + $0x2f40] sm:$0xff]
    %v1685 = vld [vmem:[#allocation5 + $0x2f48] sm:$0xff]
    %v1686 = vld [vmem:[#allocation5 + $0x2f50] sm:$0xff]
    %v1687 = vld [vmem:[#allocation5 + $0x2f58] sm:$0xff]
    %v1688 = vld [vmem:[#allocation5 + $0x2f60] sm:$0xff]
    %v1689 = vld [vmem:[#allocation5 + $0x2f68] sm:$0xff]
    %v1690 = vld [vmem:[#allocation5 + $0x2f70] sm:$0xff]
    %v1691 = vld [vmem:[#allocation5 + $0x2f78] sm:$0xff]
    %v1692 = vld [vmem:[#allocation5 + $0x2f80] sm:$0xff]
    %v1693 = vld [vmem:[#allocation5 + $0x2f88] sm:$0xff]
    %v1694 = vld [vmem:[#allocation5 + $0x2f90] sm:$0xff]
    %v1695 = vld [vmem:[#allocation5 + $0x2f98] sm:$0xff]
    %v1696 = vld [vmem:[#allocation5 + $0x2fa0] sm:$0xff]
    %v1697 = vld [vmem:[#allocation5 + $0x2fa8] sm:$0xff]
    %v1698 = vld [vmem:[#allocation5 + $0x2fb0] sm:$0xff]
    %v1699 = vld [vmem:[#allocation5 + $0x2fb8] sm:$0xff]
    %v1700 = vld [vmem:[#allocation5 + $0x2fc0] sm:$0xff]
    %v1701 = vld [vmem:[#allocation5 + $0x2fc8] sm:$0xff]
    %v1702 = vld [vmem:[#allocation5 + $0x2fd0] sm:$0xff]
    %v1703 = vld [vmem:[#allocation5 + $0x2fd8] sm:$0xff]
    %v1704 = vld [vmem:[#allocation5 + $0x2fe0] sm:$0xff]
    %v1705 = vld [vmem:[#allocation5 + $0x2fe8] sm:$0xff]
    %v1706 = vld [vmem:[#allocation5 + $0x2ff0] sm:$0xff]
    %v1707 = vld [vmem:[#allocation5 + $0x2ff8] sm:$0xff]
    %v1708 = vld [vmem:[#allocation5 + $0x3000] sm:$0xff]
    %v1709 = vld [vmem:[#allocation5 + $0x3008] sm:$0xff]
    %v1710 = vld [vmem:[#allocation5 + $0x3010] sm:$0xff]
    %v1711 = vld [vmem:[#allocation5 + $0x3018] sm:$0xff]
    %v1712 = vld [vmem:[#allocation5 + $0x3020] sm:$0xff]
    %v1713 = vld [vmem:[#allocation5 + $0x3028] sm:$0xff]
    %v1714 = vld [vmem:[#allocation5 + $0x3030] sm:$0xff]
    %v1715 = vld [vmem:[#allocation5 + $0x3038] sm:$0xff]
    %v1716 = vld [vmem:[#allocation5 + $0x3040] sm:$0xff]
    %v1717 = vld [vmem:[#allocation5 + $0x3048] sm:$0xff]
    %v1718 = vld [vmem:[#allocation5 + $0x3050] sm:$0xff]
    %v1719 = vld [vmem:[#allocation5 + $0x3058] sm:$0xff]
    %v1720 = vld [vmem:[#allocation5 + $0x3060] sm:$0xff]
    %v1721 = vld [vmem:[#allocation5 + $0x3068] sm:$0xff]
    %v1722 = vld [vmem:[#allocation5 + $0x3070] sm:$0xff]
    %v1723 = vld [vmem:[#allocation5 + $0x3078] sm:$0xff]
    %v1724 = vld [vmem:[#allocation5 + $0x3080] sm:$0xff]
    %v1725 = vld [vmem:[#allocation5 + $0x3088] sm:$0xff]
    %v1726 = vld [vmem:[#allocation5 + $0x3090] sm:$0xff]
    %v1727 = vld [vmem:[#allocation5 + $0x3098] sm:$0xff]
    %v1728 = vld [vmem:[#allocation5 + $0x30a0] sm:$0xff]
    %v1729 = vld [vmem:[#allocation5 + $0x30a8] sm:$0xff]
    %v1730 = vld [vmem:[#allocation5 + $0x30b0] sm:$0xff]
    %v1731 = vld [vmem:[#allocation5 + $0x30b8] sm:$0xff]
    %v1732 = vld [vmem:[#allocation5 + $0x30c0] sm:$0xff]
    %v1733 = vld [vmem:[#allocation5 + $0x30c8] sm:$0xff]
    %v1734 = vld [vmem:[#allocation5 + $0x30d0] sm:$0xff]
    %v1735 = vld [vmem:[#allocation5 + $0x30d8] sm:$0xff]
    %v1736 = vld [vmem:[#allocation5 + $0x30e0] sm:$0xff]
    %v1737 = vld [vmem:[#allocation5 + $0x30e8] sm:$0xff]
    %v1738 = vld [vmem:[#allocation5 + $0x30f0] sm:$0xff]
    %v1739 = vld [vmem:[#allocation5 + $0x30f8] sm:$0xff]
    %v1740 = vld [vmem:[#allocation5 + $0x3100] sm:$0xff]
    %v1741 = vld [vmem:[#allocation5 + $0x3108] sm:$0xff]
    %v1742 = vld [vmem:[#allocation5 + $0x3110] sm:$0xff]
    %v1743 = vld [vmem:[#allocation5 + $0x3118] sm:$0xff]
    %v1744 = vld [vmem:[#allocation5 + $0x3120] sm:$0xff]
    %v1745 = vld [vmem:[#allocation5 + $0x3128] sm:$0xff]
    %v1746 = vld [vmem:[#allocation5 + $0x3130] sm:$0xff]
    %v1747 = vld [vmem:[#allocation5 + $0x3138] sm:$0xff]
    %v1748 = vld [vmem:[#allocation5 + $0x3140] sm:$0xff]
    %v1749 = vld [vmem:[#allocation5 + $0x3148] sm:$0xff]
    %v1750 = vld [vmem:[#allocation5 + $0x3150] sm:$0xff]
    %v1751 = vld [vmem:[#allocation5 + $0x3158] sm:$0xff]
    %v1752 = vld [vmem:[#allocation5 + $0x3160] sm:$0xff]
    %v1753 = vld [vmem:[#allocation5 + $0x3168] sm:$0xff]
    %v1754 = vld [vmem:[#allocation5 + $0x3170] sm:$0xff]
    %v1755 = vld [vmem:[#allocation5 + $0x3178] sm:$0xff]
    %v1756 = vld [vmem:[#allocation5 + $0x3180] sm:$0xff]
    %v1757 = vld [vmem:[#allocation5 + $0x3188] sm:$0xff]
    %v1758 = vld [vmem:[#allocation5 + $0x3190] sm:$0xff]
    %v1759 = vld [vmem:[#allocation5 + $0x3198] sm:$0xff]
    %v1760 = vld [vmem:[#allocation5 + $0x31a0] sm:$0xff]
    %v1761 = vld [vmem:[#allocation5 + $0x31a8] sm:$0xff]
    %v1762 = vld [vmem:[#allocation5 + $0x31b0] sm:$0xff]
    %v1763 = vld [vmem:[#allocation5 + $0x31b8] sm:$0xff]
    %v1764 = vld [vmem:[#allocation5 + $0x31c0] sm:$0xff]
    %v1765 = vld [vmem:[#allocation5 + $0x31c8] sm:$0xff]
    %v1766 = vld [vmem:[#allocation5 + $0x31d0] sm:$0xff]
    %v1767 = vld [vmem:[#allocation5 + $0x31d8] sm:$0xff]
    %v1768 = vld [vmem:[#allocation5 + $0x31e0] sm:$0xff]
    %v1769 = vld [vmem:[#allocation5 + $0x31e8] sm:$0xff]
    %v1770 = vld [vmem:[#allocation5 + $0x31f0] sm:$0xff]
    %v1771 = vld [vmem:[#allocation5 + $0x31f8] sm:$0xff]
    %v1772 = vld [vmem:[#allocation5 + $0x3200] sm:$0xff]
    %v1773 = vld [vmem:[#allocation5 + $0x3208] sm:$0xff]
    %v1774 = vld [vmem:[#allocation5 + $0x3210] sm:$0xff]
    %v1775 = vld [vmem:[#allocation5 + $0x3218] sm:$0xff]
    %v1776 = vld [vmem:[#allocation5 + $0x3220] sm:$0xff]
    %v1777 = vld [vmem:[#allocation5 + $0x3228] sm:$0xff]
    %v1778 = vld [vmem:[#allocation5 + $0x3230] sm:$0xff]
    %v1779 = vld [vmem:[#allocation5 + $0x3238] sm:$0xff]
    %v1780 = vld [vmem:[#allocation5 + $0x3240] sm:$0xff]
    %v1781 = vld [vmem:[#allocation5 + $0x3248] sm:$0xff]
    %v1782 = vld [vmem:[#allocation5 + $0x3250] sm:$0xff]
    %v1783 = vld [vmem:[#allocation5 + $0x3258] sm:$0xff]
    %v1784 = vld [vmem:[#allocation5 + $0x3260] sm:$0xff]
    %v1785 = vld [vmem:[#allocation5 + $0x3268] sm:$0xff]
    %v1786 = vld [vmem:[#allocation5 + $0x3270] sm:$0xff]
    %v1787 = vld [vmem:[#allocation5 + $0x3278] sm:$0xff]
    %v1788 = vld [vmem:[#allocation5 + $0x3280] sm:$0xff]
    %v1789 = vld [vmem:[#allocation5 + $0x3288] sm:$0xff]
    %v1790 = vld [vmem:[#allocation5 + $0x3290] sm:$0xff]
    %v1791 = vld [vmem:[#allocation5 + $0x3298] sm:$0xff]
    %v1792 = vld [vmem:[#allocation5 + $0x32a0] sm:$0xff]
    %v1793 = vld [vmem:[#allocation5 + $0x32a8] sm:$0xff]
    %v1794 = vld [vmem:[#allocation5 + $0x32b0] sm:$0xff]
    %v1795 = vld [vmem:[#allocation5 + $0x32b8] sm:$0xff]
    %v1796 = vld [vmem:[#allocation5 + $0x32c0] sm:$0xff]
    %v1797 = vld [vmem:[#allocation5 + $0x32c8] sm:$0xff]
    %v1798 = vld [vmem:[#allocation5 + $0x32d0] sm:$0xff]
    %v1799 = vld [vmem:[#allocation5 + $0x32d8] sm:$0xff]
    %v1800 = vld [vmem:[#allocation5 + $0x32e0] sm:$0xff]
    %v1801 = vld [vmem:[#allocation5 + $0x32e8] sm:$0xff]
    %v1802 = vld [vmem:[#allocation5 + $0x32f0] sm:$0xff]
    %v1803 = vld [vmem:[#allocation5 + $0x32f8] sm:$0xff]
    %v1804 = vld [vmem:[#allocation5 + $0x3300] sm:$0xff]
    %v1805 = vld [vmem:[#allocation5 + $0x3308] sm:$0xff]
    %v1806 = vld [vmem:[#allocation5 + $0x3310] sm:$0xff]
    %v1807 = vld [vmem:[#allocation5 + $0x3318] sm:$0xff]
    %v1808 = vld [vmem:[#allocation5 + $0x3320] sm:$0xff]
    %v1809 = vld [vmem:[#allocation5 + $0x3328] sm:$0xff]
    %v1810 = vld [vmem:[#allocation5 + $0x3330] sm:$0xff]
    %v1811 = vld [vmem:[#allocation5 + $0x3338] sm:$0xff]
    %v1812 = vld [vmem:[#allocation5 + $0x3340] sm:$0xff]
    %v1813 = vld [vmem:[#allocation5 + $0x3348] sm:$0xff]
    %v1814 = vld [vmem:[#allocation5 + $0x3350] sm:$0xff]
    %v1815 = vld [vmem:[#allocation5 + $0x3358] sm:$0xff]
    %v1816 = vld [vmem:[#allocation5 + $0x3360] sm:$0xff]
    %v1817 = vld [vmem:[#allocation5 + $0x3368] sm:$0xff]
    %v1818 = vld [vmem:[#allocation5 + $0x3370] sm:$0xff]
    %v1819 = vld [vmem:[#allocation5 + $0x3378] sm:$0xff]
    %v1820 = vld [vmem:[#allocation5 + $0x3380] sm:$0xff]
    %v1821 = vld [vmem:[#allocation5 + $0x3388] sm:$0xff]
    %v1822 = vld [vmem:[#allocation5 + $0x3390] sm:$0xff]
    %v1823 = vld [vmem:[#allocation5 + $0x3398] sm:$0xff]
    %v1824 = vld [vmem:[#allocation5 + $0x33a0] sm:$0xff]
    %v1825 = vld [vmem:[#allocation5 + $0x33a8] sm:$0xff]
    %v1826 = vld [vmem:[#allocation5 + $0x33b0] sm:$0xff]
    %v1827 = vld [vmem:[#allocation5 + $0x33b8] sm:$0xff]
    %v1828 = vld [vmem:[#allocation5 + $0x33c0] sm:$0xff]
    %v1829 = vld [vmem:[#allocation5 + $0x33c8] sm:$0xff]
    %v1830 = vld [vmem:[#allocation5 + $0x33d0] sm:$0xff]
    %v1831 = vld [vmem:[#allocation5 + $0x33d8] sm:$0xff]
    %v1832 = vld [vmem:[#allocation5 + $0x33e0] sm:$0xff]
    %v1833 = vld [vmem:[#allocation5 + $0x33e8] sm:$0xff]
    %v1834 = vld [vmem:[#allocation5 + $0x33f0] sm:$0xff]
    %v1835 = vld [vmem:[#allocation5 + $0x33f8] sm:$0xff]
    %v1836 = vld [vmem:[#allocation5 + $0x3400] sm:$0xff]
    %v1837 = vld [vmem:[#allocation5 + $0x3408] sm:$0xff]
    %v1838 = vld [vmem:[#allocation5 + $0x3410] sm:$0xff]
    %v1839 = vld [vmem:[#allocation5 + $0x3418] sm:$0xff]
    %v1840 = vld [vmem:[#allocation5 + $0x3420] sm:$0xff]
    %v1841 = vld [vmem:[#allocation5 + $0x3428] sm:$0xff]
    %v1842 = vld [vmem:[#allocation5 + $0x3430] sm:$0xff]
    %v1843 = vld [vmem:[#allocation5 + $0x3438] sm:$0xff]
    %v1844 = vld [vmem:[#allocation5 + $0x3440] sm:$0xff]
    %v1845 = vld [vmem:[#allocation5 + $0x3448] sm:$0xff]
    %v1846 = vld [vmem:[#allocation5 + $0x3450] sm:$0xff]
    %v1847 = vld [vmem:[#allocation5 + $0x3458] sm:$0xff]
    %v1848 = vld [vmem:[#allocation5 + $0x3460] sm:$0xff]
    %v1849 = vld [vmem:[#allocation5 + $0x3468] sm:$0xff]
    %v1850 = vld [vmem:[#allocation5 + $0x3470] sm:$0xff]
    %v1851 = vld [vmem:[#allocation5 + $0x3478] sm:$0xff]
    %v1852 = vld [vmem:[#allocation5 + $0x3480] sm:$0xff]
    %v1853 = vld [vmem:[#allocation5 + $0x3488] sm:$0xff]
    %v1854 = vld [vmem:[#allocation5 + $0x3490] sm:$0xff]
    %v1855 = vld [vmem:[#allocation5 + $0x3498] sm:$0xff]
    %v1856 = vld [vmem:[#allocation5 + $0x34a0] sm:$0xff]
    %v1857 = vld [vmem:[#allocation5 + $0x34a8] sm:$0xff]
    %v1858 = vld [vmem:[#allocation5 + $0x34b0] sm:$0xff]
    %v1859 = vld [vmem:[#allocation5 + $0x34b8] sm:$0xff]
    %v1860 = vld [vmem:[#allocation5 + $0x34c0] sm:$0xff]
    %v1861 = vld [vmem:[#allocation5 + $0x34c8] sm:$0xff]
    %v1862 = vld [vmem:[#allocation5 + $0x34d0] sm:$0xff]
    %v1863 = vld [vmem:[#allocation5 + $0x34d8] sm:$0xff]
    %v1864 = vld [vmem:[#allocation5 + $0x34e0] sm:$0xff]
    %v1865 = vld [vmem:[#allocation5 + $0x34e8] sm:$0xff]
    %v1866 = vld [vmem:[#allocation5 + $0x34f0] sm:$0xff]
    %v1867 = vld [vmem:[#allocation5 + $0x34f8] sm:$0xff]
    %v1868 = vld [vmem:[#allocation5 + $0x3500] sm:$0xff]
    %v1869 = vld [vmem:[#allocation5 + $0x3508] sm:$0xff]
    %v1870 = vld [vmem:[#allocation5 + $0x3510] sm:$0xff]
    %v1871 = vld [vmem:[#allocation5 + $0x3518] sm:$0xff]
    %v1872 = vld [vmem:[#allocation5 + $0x3520] sm:$0xff]
    %v1873 = vld [vmem:[#allocation5 + $0x3528] sm:$0xff]
    %v1874 = vld [vmem:[#allocation5 + $0x3530] sm:$0xff]
    %v1875 = vld [vmem:[#allocation5 + $0x3538] sm:$0xff]
    %v1876 = vld [vmem:[#allocation5 + $0x3540] sm:$0xff]
    %v1877 = vld [vmem:[#allocation5 + $0x3548] sm:$0xff]
    %v1878 = vld [vmem:[#allocation5 + $0x3550] sm:$0xff]
    %v1879 = vld [vmem:[#allocation5 + $0x3558] sm:$0xff]
    %v1880 = vld [vmem:[#allocation5 + $0x3560] sm:$0xff]
    %v1881 = vld [vmem:[#allocation5 + $0x3568] sm:$0xff]
    %v1882 = vld [vmem:[#allocation5 + $0x3570] sm:$0xff]
    %v1883 = vld [vmem:[#allocation5 + $0x3578] sm:$0xff]
    %v1884 = vld [vmem:[#allocation5 + $0x3580] sm:$0xff]
    %v1885 = vld [vmem:[#allocation5 + $0x3588] sm:$0xff]
    %v1886 = vld [vmem:[#allocation5 + $0x3590] sm:$0xff]
    %v1887 = vld [vmem:[#allocation5 + $0x3598] sm:$0xff]
    %v1888 = vld [vmem:[#allocation5 + $0x35a0] sm:$0xff]
    %v1889 = vld [vmem:[#allocation5 + $0x35a8] sm:$0xff]
    %v1890 = vld [vmem:[#allocation5 + $0x35b0] sm:$0xff]
    %v1891 = vld [vmem:[#allocation5 + $0x35b8] sm:$0xff]
    %v1892 = vld [vmem:[#allocation5 + $0x35c0] sm:$0xff]
    %v1893 = vld [vmem:[#allocation5 + $0x35c8] sm:$0xff]
    %v1894 = vld [vmem:[#allocation5 + $0x35d0] sm:$0xff]
    %v1895 = vld [vmem:[#allocation5 + $0x35d8] sm:$0xff]
    %v1896 = vld [vmem:[#allocation5 + $0x35e0] sm:$0xff]
    %v1897 = vld [vmem:[#allocation5 + $0x35e8] sm:$0xff]
    %v1898 = vld [vmem:[#allocation5 + $0x35f0] sm:$0xff]
    %v1899 = vld [vmem:[#allocation5 + $0x35f8] sm:$0xff]
    %v1900 = vld [vmem:[#allocation5 + $0x3600] sm:$0xff]
    %v1901 = vld [vmem:[#allocation5 + $0x3608] sm:$0xff]
    %v1902 = vld [vmem:[#allocation5 + $0x3610] sm:$0xff]
    %v1903 = vld [vmem:[#allocation5 + $0x3618] sm:$0xff]
    %v1904 = vld [vmem:[#allocation5 + $0x3620] sm:$0xff]
    %v1905 = vld [vmem:[#allocation5 + $0x3628] sm:$0xff]
    %v1906 = vld [vmem:[#allocation5 + $0x3630] sm:$0xff]
    %v1907 = vld [vmem:[#allocation5 + $0x3638] sm:$0xff]
    %v1908 = vld [vmem:[#allocation5 + $0x3640] sm:$0xff]
    %v1909 = vld [vmem:[#allocation5 + $0x3648] sm:$0xff]
    %v1910 = vld [vmem:[#allocation5 + $0x3650] sm:$0xff]
    %v1911 = vld [vmem:[#allocation5 + $0x3658] sm:$0xff]
    %v1912 = vld [vmem:[#allocation5 + $0x3660] sm:$0xff]
    %v1913 = vld [vmem:[#allocation5 + $0x3668] sm:$0xff]
    %v1914 = vld [vmem:[#allocation5 + $0x3670] sm:$0xff]
    %v1915 = vld [vmem:[#allocation5 + $0x3678] sm:$0xff]
    %v1916 = vld [vmem:[#allocation5 + $0x3680] sm:$0xff]
    %v1917 = vld [vmem:[#allocation5 + $0x3688] sm:$0xff]
    %v1918 = vld [vmem:[#allocation5 + $0x3690] sm:$0xff]
    %v1919 = vld [vmem:[#allocation5 + $0x3698] sm:$0xff]
    %v1920 = vld [vmem:[#allocation5 + $0x36a0] sm:$0xff]
    %v1921 = vld [vmem:[#allocation5 + $0x36a8] sm:$0xff]
    %v1922 = vld [vmem:[#allocation5 + $0x36b0] sm:$0xff]
    %v1923 = vld [vmem:[#allocation5 + $0x36b8] sm:$0xff]
    %v1924 = vld [vmem:[#allocation5 + $0x36c0] sm:$0xff]
    %v1925 = vld [vmem:[#allocation5 + $0x36c8] sm:$0xff]
    %v1926 = vld [vmem:[#allocation5 + $0x36d0] sm:$0xff]
    %v1927 = vld [vmem:[#allocation5 + $0x36d8] sm:$0xff]
    %v1928 = vld [vmem:[#allocation5 + $0x36e0] sm:$0xff]
    %v1929 = vld [vmem:[#allocation5 + $0x36e8] sm:$0xff]
    %v1930 = vld [vmem:[#allocation5 + $0x36f0] sm:$0xff]
    %v1931 = vld [vmem:[#allocation5 + $0x36f8] sm:$0xff]
    %v1932 = vld [vmem:[#allocation5 + $0x3700] sm:$0xff]
    %v1933 = vld [vmem:[#allocation5 + $0x3708] sm:$0xff]
    %v1934 = vld [vmem:[#allocation5 + $0x3710] sm:$0xff]
    %v1935 = vld [vmem:[#allocation5 + $0x3718] sm:$0xff]
    %v1936 = vld [vmem:[#allocation5 + $0x3720] sm:$0xff]
    %v1937 = vld [vmem:[#allocation5 + $0x3728] sm:$0xff]
    %v1938 = vld [vmem:[#allocation5 + $0x3730] sm:$0xff]
    %v1939 = vld [vmem:[#allocation5 + $0x3738] sm:$0xff]
    %v1940 = vld [vmem:[#allocation5 + $0x3740] sm:$0xff]
    %v1941 = vld [vmem:[#allocation5 + $0x3748] sm:$0xff]
    %v1942 = vld [vmem:[#allocation5 + $0x3750] sm:$0xff]
    %v1943 = vld [vmem:[#allocation5 + $0x3758] sm:$0xff]
    %v1944 = vld [vmem:[#allocation5 + $0x3760] sm:$0xff]
    %v1945 = vld [vmem:[#allocation5 + $0x3768] sm:$0xff]
    %v1946 = vld [vmem:[#allocation5 + $0x3770] sm:$0xff]
    %v1947 = vld [vmem:[#allocation5 + $0x3778] sm:$0xff]
    %v1948 = vld [vmem:[#allocation5 + $0x3780] sm:$0xff]
    %v1949 = vld [vmem:[#allocation5 + $0x3788] sm:$0xff]
    %v1950 = vld [vmem:[#allocation5 + $0x3790] sm:$0xff]
    %v1951 = vld [vmem:[#allocation5 + $0x3798] sm:$0xff]
    %v1952 = vld [vmem:[#allocation5 + $0x37a0] sm:$0xff]
    %v1953 = vld [vmem:[#allocation5 + $0x37a8] sm:$0xff]
    %v1954 = vld [vmem:[#allocation5 + $0x37b0] sm:$0xff]
    %v1955 = vld [vmem:[#allocation5 + $0x37b8] sm:$0xff]
    %v1956 = vld [vmem:[#allocation5 + $0x37c0] sm:$0xff]
    %v1957 = vld [vmem:[#allocation5 + $0x37c8] sm:$0xff]
    %v1958 = vld [vmem:[#allocation5 + $0x37d0] sm:$0xff]
    %v1959 = vld [vmem:[#allocation5 + $0x37d8] sm:$0xff]
    %v1960 = vld [vmem:[#allocation5 + $0x37e0] sm:$0xff]
    %v1961 = vld [vmem:[#allocation5 + $0x37e8] sm:$0xff]
    %v1962 = vld [vmem:[#allocation5 + $0x37f0] sm:$0xff]
    %v1963 = vld [vmem:[#allocation5 + $0x37f8] sm:$0xff]
    %v1964 = vld [vmem:[#allocation5 + $0x3800] sm:$0xff]
    %v1965 = vld [vmem:[#allocation5 + $0x3808] sm:$0xff]
    %v1966 = vld [vmem:[#allocation5 + $0x3810] sm:$0xff]
    %v1967 = vld [vmem:[#allocation5 + $0x3818] sm:$0xff]
    %v1968 = vld [vmem:[#allocation5 + $0x3820] sm:$0xff]
    %v1969 = vld [vmem:[#allocation5 + $0x3828] sm:$0xff]
    %v1970 = vld [vmem:[#allocation5 + $0x3830] sm:$0xff]
    %v1971 = vld [vmem:[#allocation5 + $0x3838] sm:$0xff]
    %v1972 = vld [vmem:[#allocation5 + $0x3840] sm:$0xff]
    %v1973 = vld [vmem:[#allocation5 + $0x3848] sm:$0xff]
    %v1974 = vld [vmem:[#allocation5 + $0x3850] sm:$0xff]
    %v1975 = vld [vmem:[#allocation5 + $0x3858] sm:$0xff]
    %v1976 = vld [vmem:[#allocation5 + $0x3860] sm:$0xff]
    %v1977 = vld [vmem:[#allocation5 + $0x3868] sm:$0xff]
    %v1978 = vld [vmem:[#allocation5 + $0x3870] sm:$0xff]
    %v1979 = vld [vmem:[#allocation5 + $0x3878] sm:$0xff]
    %v1980 = vld [vmem:[#allocation5 + $0x3880] sm:$0xff]
    %v1981 = vld [vmem:[#allocation5 + $0x3888] sm:$0xff]
    %v1982 = vld [vmem:[#allocation5 + $0x3890] sm:$0xff]
    %v1983 = vld [vmem:[#allocation5 + $0x3898] sm:$0xff]
    %v1984 = vld [vmem:[#allocation5 + $0x38a0] sm:$0xff]
    %v1985 = vld [vmem:[#allocation5 + $0x38a8] sm:$0xff]
    %v1986 = vld [vmem:[#allocation5 + $0x38b0] sm:$0xff]
    %v1987 = vld [vmem:[#allocation5 + $0x38b8] sm:$0xff]
    %v1988 = vld [vmem:[#allocation5 + $0x38c0] sm:$0xff]
    %v1989 = vld [vmem:[#allocation5 + $0x38c8] sm:$0xff]
    %v1990 = vld [vmem:[#allocation5 + $0x38d0] sm:$0xff]
    %v1991 = vld [vmem:[#allocation5 + $0x38d8] sm:$0xff]
    %v1992 = vld [vmem:[#allocation5 + $0x38e0] sm:$0xff]
    %v1993 = vld [vmem:[#allocation5 + $0x38e8] sm:$0xff]
    %v1994 = vld [vmem:[#allocation5 + $0x38f0] sm:$0xff]
    %v1995 = vld [vmem:[#allocation5 + $0x38f8] sm:$0xff]
    %v1996 = vld [vmem:[#allocation5 + $0x3900] sm:$0xff]
    %v1997 = vld [vmem:[#allocation5 + $0x3908] sm:$0xff]
    %v1998 = vld [vmem:[#allocation5 + $0x3910] sm:$0xff]
    %v1999 = vld [vmem:[#allocation5 + $0x3918] sm:$0xff]
    %v2000 = vld [vmem:[#allocation5 + $0x3920] sm:$0xff]
    %v2001 = vld [vmem:[#allocation5 + $0x3928] sm:$0xff]
    %v2002 = vld [vmem:[#allocation5 + $0x3930] sm:$0xff]
    %v2003 = vld [vmem:[#allocation5 + $0x3938] sm:$0xff]
    %v2004 = vld [vmem:[#allocation5 + $0x3940] sm:$0xff]
    %v2005 = vld [vmem:[#allocation5 + $0x3948] sm:$0xff]
    %v2006 = vld [vmem:[#allocation5 + $0x3950] sm:$0xff]
    %v2007 = vld [vmem:[#allocation5 + $0x3958] sm:$0xff]
    %v2008 = vld [vmem:[#allocation5 + $0x3960] sm:$0xff]
    %v2009 = vld [vmem:[#allocation5 + $0x3968] sm:$0xff]
    %v2010 = vld [vmem:[#allocation5 + $0x3970] sm:$0xff]
    %v2011 = vld [vmem:[#allocation5 + $0x3978] sm:$0xff]
    %v2012 = vld [vmem:[#allocation5 + $0x3980] sm:$0xff]
    %v2013 = vld [vmem:[#allocation5 + $0x3988] sm:$0xff]
    %v2014 = vld [vmem:[#allocation5 + $0x3990] sm:$0xff]
    %v2015 = vld [vmem:[#allocation5 + $0x3998] sm:$0xff]
    %v2016 = vld [vmem:[#allocation5 + $0x39a0] sm:$0xff]
    %v2017 = vld [vmem:[#allocation5 + $0x39a8] sm:$0xff]
    %v2018 = vld [vmem:[#allocation5 + $0x39b0] sm:$0xff]
    %v2019 = vld [vmem:[#allocation5 + $0x39b8] sm:$0xff]
    %v2020 = vld [vmem:[#allocation5 + $0x39c0] sm:$0xff]
    %v2021 = vld [vmem:[#allocation5 + $0x39c8] sm:$0xff]
    %v2022 = vld [vmem:[#allocation5 + $0x39d0] sm:$0xff]
    %v2023 = vld [vmem:[#allocation5 + $0x39d8] sm:$0xff]
    %v2024 = vld [vmem:[#allocation5 + $0x39e0] sm:$0xff]
    %v2025 = vld [vmem:[#allocation5 + $0x39e8] sm:$0xff]
    %v2026 = vld [vmem:[#allocation5 + $0x39f0] sm:$0xff]
    %v2027 = vld [vmem:[#allocation5 + $0x39f8] sm:$0xff]
    %v2028 = vld [vmem:[#allocation5 + $0x3a00] sm:$0xff]
    %v2029 = vld [vmem:[#allocation5 + $0x3a08] sm:$0xff]
    %v2030 = vld [vmem:[#allocation5 + $0x3a10] sm:$0xff]
    %v2031 = vld [vmem:[#allocation5 + $0x3a18] sm:$0xff]
    %v2032 = vld [vmem:[#allocation5 + $0x3a20] sm:$0xff]
    %v2033 = vld [vmem:[#allocation5 + $0x3a28] sm:$0xff]
    %v2034 = vld [vmem:[#allocation5 + $0x3a30] sm:$0xff]
    %v2035 = vld [vmem:[#allocation5 + $0x3a38] sm:$0xff]
    %v2036 = vld [vmem:[#allocation5 + $0x3a40] sm:$0xff]
    %v2037 = vld [vmem:[#allocation5 + $0x3a48] sm:$0xff]
    %v2038 = vld [vmem:[#allocation5 + $0x3a50] sm:$0xff]
    %v2039 = vld [vmem:[#allocation5 + $0x3a58] sm:$0xff]
    %v2040 = vld [vmem:[#allocation5 + $0x3a60] sm:$0xff]
    %v2041 = vld [vmem:[#allocation5 + $0x3a68] sm:$0xff]
    %v2042 = vld [vmem:[#allocation5 + $0x3a70] sm:$0xff]
    %v2043 = vld [vmem:[#allocation5 + $0x3a78] sm:$0xff]
    %v2044 = vld [vmem:[#allocation5 + $0x3a80] sm:$0xff]
    %v2045 = vld [vmem:[#allocation5 + $0x3a88] sm:$0xff]
    %v2046 = vld [vmem:[#allocation5 + $0x3a90] sm:$0xff]
    %v2047 = vld [vmem:[#allocation5 + $0x3a98] sm:$0xff]
    %v2048 = vld [vmem:[#allocation5 + $0x3aa0] sm:$0xff]
    %v2049 = vld [vmem:[#allocation5 + $0x3aa8] sm:$0xff]
    %v2050 = vld [vmem:[#allocation5 + $0x3ab0] sm:$0xff]
    %v2051 = vld [vmem:[#allocation5 + $0x3ab8] sm:$0xff]
    %v2052 = vld [vmem:[#allocation5 + $0x3ac0] sm:$0xff]
    %v2053 = vld [vmem:[#allocation5 + $0x3ac8] sm:$0xff]
    %v2054 = vld [vmem:[#allocation5 + $0x3ad0] sm:$0xff]
    %v2055 = vld [vmem:[#allocation5 + $0x3ad8] sm:$0xff]
    %v2056 = vld [vmem:[#allocation5 + $0x3ae0] sm:$0xff]
    %v2057 = vld [vmem:[#allocation5 + $0x3ae8] sm:$0xff]
    %v2058 = vld [vmem:[#allocation5 + $0x3af0] sm:$0xff]
    %v2059 = vld [vmem:[#allocation5 + $0x3af8] sm:$0xff]
    %v2060 = vld [vmem:[#allocation5 + $0x3b00] sm:$0xff]
    %v2061 = vld [vmem:[#allocation5 + $0x3b08] sm:$0xff]
    %v2062 = vld [vmem:[#allocation5 + $0x3b10] sm:$0xff]
    %v2063 = vld [vmem:[#allocation5 + $0x3b18] sm:$0xff]
    %v2064 = vld [vmem:[#allocation5 + $0x3b20] sm:$0xff]
    %v2065 = vld [vmem:[#allocation5 + $0x3b28] sm:$0xff]
    %v2066 = vld [vmem:[#allocation5 + $0x3b30] sm:$0xff]
    %v2067 = vld [vmem:[#allocation5 + $0x3b38] sm:$0xff]
    %v2068 = vld [vmem:[#allocation5 + $0x3b40] sm:$0xff]
    %v2069 = vld [vmem:[#allocation5 + $0x3b48] sm:$0xff]
    %v2070 = vld [vmem:[#allocation5 + $0x3b50] sm:$0xff]
    %v2071 = vld [vmem:[#allocation5 + $0x3b58] sm:$0xff]
    %v2072 = vld [vmem:[#allocation5 + $0x3b60] sm:$0xff]
    %v2073 = vld [vmem:[#allocation5 + $0x3b68] sm:$0xff]
    %v2074 = vld [vmem:[#allocation5 + $0x3b70] sm:$0xff]
    %v2075 = vld [vmem:[#allocation5 + $0x3b78] sm:$0xff]
    %v2076 = vld [vmem:[#allocation5 + $0x3b80] sm:$0xff]
    %v2077 = vld [vmem:[#allocation5 + $0x3b88] sm:$0xff]
    %v2078 = vld [vmem:[#allocation5 + $0x3b90] sm:$0xff]
    %v2079 = vld [vmem:[#allocation5 + $0x3b98] sm:$0xff]
    %v2080 = vld [vmem:[#allocation5 + $0x3ba0] sm:$0xff]
    %v2081 = vld [vmem:[#allocation5 + $0x3ba8] sm:$0xff]
    %v2082 = vld [vmem:[#allocation5 + $0x3bb0] sm:$0xff]
    %v2083 = vld [vmem:[#allocation5 + $0x3bb8] sm:$0xff]
    %v2084 = vld [vmem:[#allocation5 + $0x3bc0] sm:$0xff]
    %v2085 = vld [vmem:[#allocation5 + $0x3bc8] sm:$0xff]
    %v2086 = vld [vmem:[#allocation5 + $0x3bd0] sm:$0xff]
    %v2087 = vld [vmem:[#allocation5 + $0x3bd8] sm:$0xff]
    %v2088 = vld [vmem:[#allocation5 + $0x3be0] sm:$0xff]
    %v2089 = vld [vmem:[#allocation5 + $0x3be8] sm:$0xff]
    %v2090 = vld [vmem:[#allocation5 + $0x3bf0] sm:$0xff]
    %v2091 = vld [vmem:[#allocation5 + $0x3bf8] sm:$0xff]
    %v2092 = vld [vmem:[#allocation5 + $0x3c00] sm:$0xff]
    %v2093 = vld [vmem:[#allocation5 + $0x3c08] sm:$0xff]
    %v2094 = vld [vmem:[#allocation5 + $0x3c10] sm:$0xff]
    %v2095 = vld [vmem:[#allocation5 + $0x3c18] sm:$0xff]
    %v2096 = vld [vmem:[#allocation5 + $0x3c20] sm:$0xff]
    %v2097 = vld [vmem:[#allocation5 + $0x3c28] sm:$0xff]
    %v2098 = vld [vmem:[#allocation5 + $0x3c30] sm:$0xff]
    %v2099 = vld [vmem:[#allocation5 + $0x3c38] sm:$0xff]
    %v2100 = vld [vmem:[#allocation5 + $0x3c40] sm:$0xff]
    %v2101 = vld [vmem:[#allocation5 + $0x3c48] sm:$0xff]
    %v2102 = vld [vmem:[#allocation5 + $0x3c50] sm:$0xff]
    %v2103 = vld [vmem:[#allocation5 + $0x3c58] sm:$0xff]
    %v2104 = vld [vmem:[#allocation5 + $0x3c60] sm:$0xff]
    %v2105 = vld [vmem:[#allocation5 + $0x3c68] sm:$0xff]
    %v2106 = vld [vmem:[#allocation5 + $0x3c70] sm:$0xff]
    %v2107 = vld [vmem:[#allocation5 + $0x3c78] sm:$0xff]
    %v2108 = vld [vmem:[#allocation5 + $0x3c80] sm:$0xff]
    %v2109 = vld [vmem:[#allocation5 + $0x3c88] sm:$0xff]
    %v2110 = vld [vmem:[#allocation5 + $0x3c90] sm:$0xff]
    %v2111 = vld [vmem:[#allocation5 + $0x3c98] sm:$0xff]
    %v2112 = vld [vmem:[#allocation5 + $0x3ca0] sm:$0xff]
    %v2113 = vld [vmem:[#allocation5 + $0x3ca8] sm:$0xff]
    %v2114 = vld [vmem:[#allocation5 + $0x3cb0] sm:$0xff]
    %v2115 = vld [vmem:[#allocation5 + $0x3cb8] sm:$0xff]
    %v2116 = vld [vmem:[#allocation5 + $0x3cc0] sm:$0xff]
    %v2117 = vld [vmem:[#allocation5 + $0x3cc8] sm:$0xff]
    %v2118 = vld [vmem:[#allocation5 + $0x3cd0] sm:$0xff]
    %v2119 = vld [vmem:[#allocation5 + $0x3cd8] sm:$0xff]
    %v2120 = vld [vmem:[#allocation5 + $0x3ce0] sm:$0xff]
    %v2121 = vld [vmem:[#allocation5 + $0x3ce8] sm:$0xff]
    %v2122 = vld [vmem:[#allocation5 + $0x3cf0] sm:$0xff]
    %v2123 = vld [vmem:[#allocation5 + $0x3cf8] sm:$0xff]
    %v2124 = vld [vmem:[#allocation5 + $0x3d00] sm:$0xff]
    %v2125 = vld [vmem:[#allocation5 + $0x3d08] sm:$0xff]
    %v2126 = vld [vmem:[#allocation5 + $0x3d10] sm:$0xff]
    %v2127 = vld [vmem:[#allocation5 + $0x3d18] sm:$0xff]
    %v2128 = vld [vmem:[#allocation5 + $0x3d20] sm:$0xff]
    %v2129 = vld [vmem:[#allocation5 + $0x3d28] sm:$0xff]
    %v2130 = vld [vmem:[#allocation5 + $0x3d30] sm:$0xff]
    %v2131 = vld [vmem:[#allocation5 + $0x3d38] sm:$0xff]
    %v2132 = vld [vmem:[#allocation5 + $0x3d40] sm:$0xff]
    %v2133 = vld [vmem:[#allocation5 + $0x3d48] sm:$0xff]
    %v2134 = vld [vmem:[#allocation5 + $0x3d50] sm:$0xff]
    %v2135 = vld [vmem:[#allocation5 + $0x3d58] sm:$0xff]
    %v2136 = vld [vmem:[#allocation5 + $0x3d60] sm:$0xff]
    %v2137 = vld [vmem:[#allocation5 + $0x3d68] sm:$0xff]
    %v2138 = vld [vmem:[#allocation5 + $0x3d70] sm:$0xff]
    %v2139 = vld [vmem:[#allocation5 + $0x3d78] sm:$0xff]
    %v2140 = vld [vmem:[#allocation5 + $0x3d80] sm:$0xff]
    %v2141 = vld [vmem:[#allocation5 + $0x3d88] sm:$0xff]
    %v2142 = vld [vmem:[#allocation5 + $0x3d90] sm:$0xff]
    %v2143 = vld [vmem:[#allocation5 + $0x3d98] sm:$0xff]
    %v2144 = vld [vmem:[#allocation5 + $0x3da0] sm:$0xff]
    %v2145 = vld [vmem:[#allocation5 + $0x3da8] sm:$0xff]
    %v2146 = vld [vmem:[#allocation5 + $0x3db0] sm:$0xff]
    %v2147 = vld [vmem:[#allocation5 + $0x3db8] sm:$0xff]
    %v2148 = vld [vmem:[#allocation5 + $0x3dc0] sm:$0xff]
    %v2149 = vld [vmem:[#allocation5 + $0x3dc8] sm:$0xff]
    %v2150 = vld [vmem:[#allocation5 + $0x3dd0] sm:$0xff]
    %v2151 = vld [vmem:[#allocation5 + $0x3dd8] sm:$0xff]
    %v2152 = vld [vmem:[#allocation5 + $0x3de0] sm:$0xff]
    %v2153 = vld [vmem:[#allocation5 + $0x3de8] sm:$0xff]
    %v2154 = vld [vmem:[#allocation5 + $0x3df0] sm:$0xff]
    %v2155 = vld [vmem:[#allocation5 + $0x3df8] sm:$0xff]
    %v2156 = vld [vmem:[#allocation5 + $0x3e00] sm:$0xff]
    %v2157 = vld [vmem:[#allocation5 + $0x3e08] sm:$0xff]
    %v2158 = vld [vmem:[#allocation5 + $0x3e10] sm:$0xff]
    %v2159 = vld [vmem:[#allocation5 + $0x3e18] sm:$0xff]
    %v2160 = vld [vmem:[#allocation5 + $0x3e20] sm:$0xff]
    %v2161 = vld [vmem:[#allocation5 + $0x3e28] sm:$0xff]
    %v2162 = vld [vmem:[#allocation5 + $0x3e30] sm:$0xff]
    %v2163 = vld [vmem:[#allocation5 + $0x3e38] sm:$0xff]
    %v2164 = vld [vmem:[#allocation5 + $0x3e40] sm:$0xff]
    %v2165 = vld [vmem:[#allocation5 + $0x3e48] sm:$0xff]
    %v2166 = vld [vmem:[#allocation5 + $0x3e50] sm:$0xff]
    %v2167 = vld [vmem:[#allocation5 + $0x3e58] sm:$0xff]
    %v2168 = vld [vmem:[#allocation5 + $0x3e60] sm:$0xff]
    %v2169 = vld [vmem:[#allocation5 + $0x3e68] sm:$0xff]
    %v2170 = vld [vmem:[#allocation5 + $0x3e70] sm:$0xff]
    %v2171 = vld [vmem:[#allocation5 + $0x3e78] sm:$0xff]
    %v2172 = vld [vmem:[#allocation5 + $0x3e80] sm:$0xff]
    %v2173 = vld [vmem:[#allocation5 + $0x3e88] sm:$0xff]
    %v2174 = vld [vmem:[#allocation5 + $0x3e90] sm:$0xff]
    %v2175 = vld [vmem:[#allocation5 + $0x3e98] sm:$0xff]
    %v2176 = vld [vmem:[#allocation5 + $0x3ea0] sm:$0xff]
    %v2177 = vld [vmem:[#allocation5 + $0x3ea8] sm:$0xff]
    %v2178 = vld [vmem:[#allocation5 + $0x3eb0] sm:$0xff]
    %v2179 = vld [vmem:[#allocation5 + $0x3eb8] sm:$0xff]
    %v2180 = vld [vmem:[#allocation5 + $0x3ec0] sm:$0xff]
    %v2181 = vld [vmem:[#allocation5 + $0x3ec8] sm:$0xff]
    %v2182 = vld [vmem:[#allocation5 + $0x3ed0] sm:$0xff]
    %v2183 = vld [vmem:[#allocation5 + $0x3ed8] sm:$0xff]
    %v2184 = vld [vmem:[#allocation5 + $0x3ee0] sm:$0xff]
    %v2185 = vld [vmem:[#allocation5 + $0x3ee8] sm:$0xff]
    %v2186 = vld [vmem:[#allocation5 + $0x3ef0] sm:$0xff]
    %v2187 = vld [vmem:[#allocation5 + $0x3ef8] sm:$0xff]
    %v2188 = vld [vmem:[#allocation5 + $0x3f00] sm:$0xff]
    %v2189 = vld [vmem:[#allocation5 + $0x3f08] sm:$0xff]
    %v2190 = vld [vmem:[#allocation5 + $0x3f10] sm:$0xff]
    %v2191 = vld [vmem:[#allocation5 + $0x3f18] sm:$0xff]
    %v2192 = vld [vmem:[#allocation5 + $0x3f20] sm:$0xff]
    %v2193 = vld [vmem:[#allocation5 + $0x3f28] sm:$0xff]
    %v2194 = vld [vmem:[#allocation5 + $0x3f30] sm:$0xff]
    %v2195 = vld [vmem:[#allocation5 + $0x3f38] sm:$0xff]
    %v2196 = vld [vmem:[#allocation5 + $0x3f40] sm:$0xff]
    %v2197 = vld [vmem:[#allocation5 + $0x3f48] sm:$0xff]
    %v2198 = vld [vmem:[#allocation5 + $0x3f50] sm:$0xff]
    %v2199 = vld [vmem:[#allocation5 + $0x3f58] sm:$0xff]
    %v2200 = vld [vmem:[#allocation5 + $0x3f60] sm:$0xff]
    %v2201 = vld [vmem:[#allocation5 + $0x3f68] sm:$0xff]
    %v2202 = vld [vmem:[#allocation5 + $0x3f70] sm:$0xff]
    %v2203 = vld [vmem:[#allocation5 + $0x3f78] sm:$0xff]
    %v2204 = vld [vmem:[#allocation5 + $0x3f80] sm:$0xff]
    %v2205 = vld [vmem:[#allocation5 + $0x3f88] sm:$0xff]
    %v2206 = vld [vmem:[#allocation5 + $0x3f90] sm:$0xff]
    %v2207 = vld [vmem:[#allocation5 + $0x3f98] sm:$0xff]
    %v2208 = vld [vmem:[#allocation5 + $0x3fa0] sm:$0xff]
    %v2209 = vld [vmem:[#allocation5 + $0x3fa8] sm:$0xff]
    %v2210 = vld [vmem:[#allocation5 + $0x3fb0] sm:$0xff]
    %v2211 = vld [vmem:[#allocation5 + $0x3fb8] sm:$0xff]
    %v2212 = vld [vmem:[#allocation5 + $0x3fc0] sm:$0xff]
    %v2213 = vld [vmem:[#allocation5 + $0x3fc8] sm:$0xff]
    %v2214 = vld [vmem:[#allocation5 + $0x3fd0] sm:$0xff]
    %v2215 = vld [vmem:[#allocation5 + $0x3fd8] sm:$0xff]
    %v2216 = vld [vmem:[#allocation5 + $0x3fe0] sm:$0xff]
    %v2217 = vld [vmem:[#allocation5 + $0x3fe8] sm:$0xff]
    %v2218 = vld [vmem:[#allocation5 + $0x3ff0] sm:$0xff]
    %v2219 = vld [vmem:[#allocation5 + $0x3ff8] sm:$0xff]
    %v2220 = vld [vmem:[#allocation5 + $0x4000] sm:$0xff]
    %v2221 = vld [vmem:[#allocation5 + $0x4008] sm:$0xff]
    %v2222 = vld [vmem:[#allocation5 + $0x4010] sm:$0xff]
    %v2223 = vld [vmem:[#allocation5 + $0x4018] sm:$0xff]
    %v2224 = vld [vmem:[#allocation5 + $0x4020] sm:$0xff]
    %v2225 = vld [vmem:[#allocation5 + $0x4028] sm:$0xff]
    %v2226 = vld [vmem:[#allocation5 + $0x4030] sm:$0xff]
    %v2227 = vld [vmem:[#allocation5 + $0x4038] sm:$0xff]
    %v2228 = vld [vmem:[#allocation5 + $0x4040] sm:$0xff]
    %v2229 = vld [vmem:[#allocation5 + $0x4048] sm:$0xff]
    %v2230 = vld [vmem:[#allocation5 + $0x4050] sm:$0xff]
    %v2231 = vld [vmem:[#allocation5 + $0x4058] sm:$0xff]
    %v2232 = vld [vmem:[#allocation5 + $0x4060] sm:$0xff]
    %v2233 = vld [vmem:[#allocation5 + $0x4068] sm:$0xff]
    %v2234 = vld [vmem:[#allocation5 + $0x4070] sm:$0xff]
    %v2235 = vld [vmem:[#allocation5 + $0x4078] sm:$0xff]
    %v2236 = vld [vmem:[#allocation5 + $0x4080] sm:$0xff]
    %v2237 = vld [vmem:[#allocation5 + $0x4088] sm:$0xff]
    %v2238 = vld [vmem:[#allocation5 + $0x4090] sm:$0xff]
    %v2239 = vld [vmem:[#allocation5 + $0x4098] sm:$0xff]
    %v2240 = vld [vmem:[#allocation5 + $0x40a0] sm:$0xff]
    %v2241 = vld [vmem:[#allocation5 + $0x40a8] sm:$0xff]
    %v2242 = vld [vmem:[#allocation5 + $0x40b0] sm:$0xff]
    %v2243 = vld [vmem:[#allocation5 + $0x40b8] sm:$0xff]
    %v2244 = vld [vmem:[#allocation5 + $0x40c0] sm:$0xff]
    %v2245 = vld [vmem:[#allocation5 + $0x40c8] sm:$0xff]
    %v2246 = vld [vmem:[#allocation5 + $0x40d0] sm:$0xff]
    %v2247 = vld [vmem:[#allocation5 + $0x40d8] sm:$0xff]
    %v2248 = vld [vmem:[#allocation5 + $0x40e0] sm:$0xff]
    %v2249 = vld [vmem:[#allocation5 + $0x40e8] sm:$0xff]
    %v2250 = vld [vmem:[#allocation5 + $0x40f0] sm:$0xff]
    %v2251 = vld [vmem:[#allocation5 + $0x40f8] sm:$0xff]
    %v2252 = vld [vmem:[#allocation5 + $0x4100] sm:$0xff]
    %v2253 = vld [vmem:[#allocation5 + $0x4108] sm:$0xff]
    %v2254 = vld [vmem:[#allocation5 + $0x4110] sm:$0xff]
    %v2255 = vld [vmem:[#allocation5 + $0x4118] sm:$0xff]
    %v2256 = vld [vmem:[#allocation5 + $0x4120] sm:$0xff]
    %v2257 = vld [vmem:[#allocation5 + $0x4128] sm:$0xff]
    %v2258 = vld [vmem:[#allocation5 + $0x4130] sm:$0xff]
    %v2259 = vld [vmem:[#allocation5 + $0x4138] sm:$0xff]
    %v2260 = vld [vmem:[#allocation5 + $0x4140] sm:$0xff]
    %v2261 = vld [vmem:[#allocation5 + $0x4148] sm:$0xff]
    %v2262 = vld [vmem:[#allocation5 + $0x4150] sm:$0xff]
    %v2263 = vld [vmem:[#allocation5 + $0x4158] sm:$0xff]
    %v2264 = vld [vmem:[#allocation5 + $0x4160] sm:$0xff]
    %v2265 = vld [vmem:[#allocation5 + $0x4168] sm:$0xff]
    %v2266 = vld [vmem:[#allocation5 + $0x4170] sm:$0xff]
    %v2267 = vld [vmem:[#allocation5 + $0x4178] sm:$0xff]
    %v2268 = vld [vmem:[#allocation5 + $0x4180] sm:$0xff]
    %v2269 = vld [vmem:[#allocation5 + $0x4188] sm:$0xff]
    %v2270 = vld [vmem:[#allocation5 + $0x4190] sm:$0xff]
    %v2271 = vld [vmem:[#allocation5 + $0x4198] sm:$0xff]
    %v2272 = vld [vmem:[#allocation5 + $0x41a0] sm:$0xff]
    %v2273 = vld [vmem:[#allocation5 + $0x41a8] sm:$0xff]
    %v2274 = vld [vmem:[#allocation5 + $0x41b0] sm:$0xff]
    %v2275 = vld [vmem:[#allocation5 + $0x41b8] sm:$0xff]
    %v2276 = vld [vmem:[#allocation5 + $0x41c0] sm:$0xff]
    %v2277 = vld [vmem:[#allocation5 + $0x41c8] sm:$0xff]
    %v2278 = vld [vmem:[#allocation5 + $0x41d0] sm:$0xff]
    %v2279 = vld [vmem:[#allocation5 + $0x41d8] sm:$0xff]
    %v2280 = vld [vmem:[#allocation5 + $0x41e0] sm:$0xff]
    %v2281 = vld [vmem:[#allocation5 + $0x41e8] sm:$0xff]
    %v2282 = vld [vmem:[#allocation5 + $0x41f0] sm:$0xff]
    %v2283 = vld [vmem:[#allocation5 + $0x41f8] sm:$0xff]
    %v2284 = vld [vmem:[#allocation5 + $0x4200] sm:$0xff]
    %v2285 = vld [vmem:[#allocation5 + $0x4208] sm:$0xff]
    %v2286 = vld [vmem:[#allocation5 + $0x4210] sm:$0xff]
    %v2287 = vld [vmem:[#allocation5 + $0x4218] sm:$0xff]
    %v2288 = vld [vmem:[#allocation5 + $0x4220] sm:$0xff]
    %v2289 = vld [vmem:[#allocation5 + $0x4228] sm:$0xff]
    %v2290 = vld [vmem:[#allocation5 + $0x4230] sm:$0xff]
    %v2291 = vld [vmem:[#allocation5 + $0x4238] sm:$0xff]
    %v2292 = vld [vmem:[#allocation5 + $0x4240] sm:$0xff]
    %v2293 = vld [vmem:[#allocation5 + $0x4248] sm:$0xff]
    %v2294 = vld [vmem:[#allocation5 + $0x4250] sm:$0xff]
    %v2295 = vld [vmem:[#allocation5 + $0x4258] sm:$0xff]
    %v2296 = vld [vmem:[#allocation5 + $0x4260] sm:$0xff]
    %v2297 = vld [vmem:[#allocation5 + $0x4268] sm:$0xff]
    %v2298 = vld [vmem:[#allocation5 + $0x4270] sm:$0xff]
    %v2299 = vld [vmem:[#allocation5 + $0x4278] sm:$0xff]
    %v2300 = vld [vmem:[#allocation5 + $0x4280] sm:$0xff]
    %v2301 = vld [vmem:[#allocation5 + $0x4288] sm:$0xff]
    %v2302 = vld [vmem:[#allocation5 + $0x4290] sm:$0xff]
    %v2303 = vld [vmem:[#allocation5 + $0x4298] sm:$0xff]
    %v2304 = vld [vmem:[#allocation5 + $0x42a0] sm:$0xff]
    %v2305 = vld [vmem:[#allocation5 + $0x42a8] sm:$0xff]
    %v2306 = vld [vmem:[#allocation5 + $0x42b0] sm:$0xff]
    %v2307 = vld [vmem:[#allocation5 + $0x42b8] sm:$0xff]
    %v2308 = vld [vmem:[#allocation5 + $0x42c0] sm:$0xff]
    %v2309 = vld [vmem:[#allocation5 + $0x42c8] sm:$0xff]
    %v2310 = vld [vmem:[#allocation5 + $0x42d0] sm:$0xff]
    %v2311 = vld [vmem:[#allocation5 + $0x42d8] sm:$0xff]
    %v2312 = vld [vmem:[#allocation5 + $0x42e0] sm:$0xff]
    %v2313 = vld [vmem:[#allocation5 + $0x42e8] sm:$0xff]
    %v2314 = vld [vmem:[#allocation5 + $0x42f0] sm:$0xff]
    %v2315 = vld [vmem:[#allocation5 + $0x42f8] sm:$0xff]
    %v2316 = vld [vmem:[#allocation5 + $0x4300] sm:$0xff]
    %v2317 = vld [vmem:[#allocation5 + $0x4308] sm:$0xff]
    %v2318 = vld [vmem:[#allocation5 + $0x4310] sm:$0xff]
    %v2319 = vld [vmem:[#allocation5 + $0x4318] sm:$0xff]
    %v2320 = vld [vmem:[#allocation5 + $0x4320] sm:$0xff]
    %v2321 = vld [vmem:[#allocation5 + $0x4328] sm:$0xff]
    %v2322 = vld [vmem:[#allocation5 + $0x4330] sm:$0xff]
    %v2323 = vld [vmem:[#allocation5 + $0x4338] sm:$0xff]
    %v2324 = vld [vmem:[#allocation5 + $0x4340] sm:$0xff]
    %v2325 = vld [vmem:[#allocation5 + $0x4348] sm:$0xff]
    %v2326 = vld [vmem:[#allocation5 + $0x4350] sm:$0xff]
    %v2327 = vld [vmem:[#allocation5 + $0x4358] sm:$0xff]
    %v2328 = vld [vmem:[#allocation5 + $0x4360] sm:$0xff]
    %v2329 = vld [vmem:[#allocation5 + $0x4368] sm:$0xff]
    %v2330 = vld [vmem:[#allocation5 + $0x4370] sm:$0xff]
    %v2331 = vld [vmem:[#allocation5 + $0x4378] sm:$0xff]
    %v2332 = vld [vmem:[#allocation5 + $0x4380] sm:$0xff]
    %v2333 = vld [vmem:[#allocation5 + $0x4388] sm:$0xff]
    %v2334 = vld [vmem:[#allocation5 + $0x4390] sm:$0xff]
    %v2335 = vld [vmem:[#allocation5 + $0x4398] sm:$0xff]
    %v2336 = vld [vmem:[#allocation5 + $0x43a0] sm:$0xff]
    %v2337 = vld [vmem:[#allocation5 + $0x43a8] sm:$0xff]
    %v2338 = vld [vmem:[#allocation5 + $0x43b0] sm:$0xff]
    %v2339 = vld [vmem:[#allocation5 + $0x43b8] sm:$0xff]
    %v2340 = vld [vmem:[#allocation5 + $0x43c0] sm:$0xff]
    %v2341 = vld [vmem:[#allocation5 + $0x43c8] sm:$0xff]
    %v2342 = vld [vmem:[#allocation5 + $0x43d0] sm:$0xff]
    %v2343 = vld [vmem:[#allocation5 + $0x43d8] sm:$0xff]
    %v2344 = vld [vmem:[#allocation5 + $0x43e0] sm:$0xff]
    %v2345 = vld [vmem:[#allocation5 + $0x43e8] sm:$0xff]
    %v2346 = vld [vmem:[#allocation5 + $0x43f0] sm:$0xff]
    %v2347 = vld [vmem:[#allocation5 + $0x43f8] sm:$0xff]
    %v2348 = vld [vmem:[#allocation5 + $0x4400] sm:$0xff]
    %v2349 = vld [vmem:[#allocation5 + $0x4408] sm:$0xff]
    %v2350 = vld [vmem:[#allocation5 + $0x4410] sm:$0xff]
    %v2351 = vld [vmem:[#allocation5 + $0x4418] sm:$0xff]
    %v2352 = vld [vmem:[#allocation5 + $0x4420] sm:$0xff]
    %v2353 = vld [vmem:[#allocation5 + $0x4428] sm:$0xff]
    %v2354 = vld [vmem:[#allocation5 + $0x4430] sm:$0xff]
    %v2355 = vld [vmem:[#allocation5 + $0x4438] sm:$0xff]
    %v2356 = vld [vmem:[#allocation5 + $0x4440] sm:$0xff]
    %v2357 = vld [vmem:[#allocation5 + $0x4448] sm:$0xff]
    %v2358 = vld [vmem:[#allocation5 + $0x4450] sm:$0xff]
    %v2359 = vld [vmem:[#allocation5 + $0x4458] sm:$0xff]
    %v2360 = vld [vmem:[#allocation5 + $0x4460] sm:$0xff]
    %v2361 = vld [vmem:[#allocation5 + $0x4468] sm:$0xff]
    %v2362 = vld [vmem:[#allocation5 + $0x4470] sm:$0xff]
    %v2363 = vld [vmem:[#allocation5 + $0x4478] sm:$0xff]
    %v2364 = vld [vmem:[#allocation5 + $0x4480] sm:$0xff]
    %v2365 = vld [vmem:[#allocation5 + $0x4488] sm:$0xff]
    %v2366 = vld [vmem:[#allocation5 + $0x4490] sm:$0xff]
    %v2367 = vld [vmem:[#allocation5 + $0x4498] sm:$0xff]
    %v2368 = vld [vmem:[#allocation5 + $0x44a0] sm:$0xff]
    %v2369 = vld [vmem:[#allocation5 + $0x44a8] sm:$0xff]
    %v2370 = vld [vmem:[#allocation5 + $0x44b0] sm:$0xff]
    %v2371 = vld [vmem:[#allocation5 + $0x44b8] sm:$0xff]
    %v2372 = vld [vmem:[#allocation5 + $0x44c0] sm:$0xff]
    %v2373 = vld [vmem:[#allocation5 + $0x44c8] sm:$0xff]
    %v2374 = vld [vmem:[#allocation5 + $0x44d0] sm:$0xff]
    %v2375 = vld [vmem:[#allocation5 + $0x44d8] sm:$0xff]
    %v2376 = vld [vmem:[#allocation5 + $0x44e0] sm:$0xff]
    %v2377 = vld [vmem:[#allocation5 + $0x44e8] sm:$0xff]
    %v2378 = vld [vmem:[#allocation5 + $0x44f0] sm:$0xff]
    %v2379 = vld [vmem:[#allocation5 + $0x44f8] sm:$0xff]
    %v2380 = vld [vmem:[#allocation5 + $0x4500] sm:$0xff]
    %v2381 = vld [vmem:[#allocation5 + $0x4508] sm:$0xff]
    %v2382 = vld [vmem:[#allocation5 + $0x4510] sm:$0xff]
    %v2383 = vld [vmem:[#allocation5 + $0x4518] sm:$0xff]
    %v2384 = vld [vmem:[#allocation5 + $0x4520] sm:$0xff]
    %v2385 = vld [vmem:[#allocation5 + $0x4528] sm:$0xff]
    %v2386 = vld [vmem:[#allocation5 + $0x4530] sm:$0xff]
    %v2387 = vld [vmem:[#allocation5 + $0x4538] sm:$0xff]
    %v2388 = vld [vmem:[#allocation5 + $0x4540] sm:$0xff]
    %v2389 = vld [vmem:[#allocation5 + $0x4548] sm:$0xff]
    %v2390 = vld [vmem:[#allocation5 + $0x4550] sm:$0xff]
    %v2391 = vld [vmem:[#allocation5 + $0x4558] sm:$0xff]
    %v2392 = vld [vmem:[#allocation5 + $0x4560] sm:$0xff]
    %v2393 = vld [vmem:[#allocation5 + $0x4568] sm:$0xff]
    %v2394 = vld [vmem:[#allocation5 + $0x4570] sm:$0xff]
    %v2395 = vld [vmem:[#allocation5 + $0x4578] sm:$0xff]
    %v2396 = vld [vmem:[#allocation5 + $0x4580] sm:$0xff]
    %v2397 = vld [vmem:[#allocation5 + $0x4588] sm:$0xff]
    %v2398 = vld [vmem:[#allocation5 + $0x4590] sm:$0xff]
    %v2399 = vld [vmem:[#allocation5 + $0x4598] sm:$0xff]
    %v2400 = vld [vmem:[#allocation5 + $0x45a0] sm:$0xff]
    %v2401 = vld [vmem:[#allocation5 + $0x45a8] sm:$0xff]
    %v2402 = vld [vmem:[#allocation5 + $0x45b0] sm:$0xff]
    %v2403 = vld [vmem:[#allocation5 + $0x45b8] sm:$0xff]
    %v2404 = vld [vmem:[#allocation5 + $0x45c0] sm:$0xff]
    %v2405 = vld [vmem:[#allocation5 + $0x45c8] sm:$0xff]
    %v2406 = vld [vmem:[#allocation5 + $0x45d0] sm:$0xff]
    %v2407 = vld [vmem:[#allocation5 + $0x45d8] sm:$0xff]
    %v2408 = vld [vmem:[#allocation5 + $0x45e0] sm:$0xff]
    %v2409 = vld [vmem:[#allocation5 + $0x45e8] sm:$0xff]
    %v2410 = vld [vmem:[#allocation5 + $0x45f0] sm:$0xff]
    %v2411 = vld [vmem:[#allocation5 + $0x45f8] sm:$0xff]
    %v2412 = vld [vmem:[#allocation5 + $0x4600] sm:$0xff]
    %v2413 = vld [vmem:[#allocation5 + $0x4608] sm:$0xff]
    %v2414 = vld [vmem:[#allocation5 + $0x4610] sm:$0xff]
    %v2415 = vld [vmem:[#allocation5 + $0x4618] sm:$0xff]
    %v2416 = vld [vmem:[#allocation5 + $0x4620] sm:$0xff]
    %v2417 = vld [vmem:[#allocation5 + $0x4628] sm:$0xff]
    %v2418 = vld [vmem:[#allocation5 + $0x4630] sm:$0xff]
    %v2419 = vld [vmem:[#allocation5 + $0x4638] sm:$0xff]
    %v2420 = vld [vmem:[#allocation5 + $0x4640] sm:$0xff]
    %v2421 = vld [vmem:[#allocation5 + $0x4648] sm:$0xff]
    %v2422 = vld [vmem:[#allocation5 + $0x4650] sm:$0xff]
    %v2423 = vld [vmem:[#allocation5 + $0x4658] sm:$0xff]
    %v2424 = vld [vmem:[#allocation5 + $0x4660] sm:$0xff]
    %v2425 = vld [vmem:[#allocation5 + $0x4668] sm:$0xff]
    %v2426 = vld [vmem:[#allocation5 + $0x4670] sm:$0xff]
    %v2427 = vld [vmem:[#allocation5 + $0x4678] sm:$0xff]
    %v2428 = vld [vmem:[#allocation5 + $0x4680] sm:$0xff]
    %v2429 = vld [vmem:[#allocation5 + $0x4688] sm:$0xff]
    %v2430 = vld [vmem:[#allocation5 + $0x4690] sm:$0xff]
    %v2431 = vld [vmem:[#allocation5 + $0x4698] sm:$0xff]
    %v2432 = vld [vmem:[#allocation5 + $0x46a0] sm:$0xff]
    %v2433 = vld [vmem:[#allocation5 + $0x46a8] sm:$0xff]
    %v2434 = vld [vmem:[#allocation5 + $0x46b0] sm:$0xff]
    %v2435 = vld [vmem:[#allocation5 + $0x46b8] sm:$0xff]
    %v2436 = vld [vmem:[#allocation5 + $0x46c0] sm:$0xff]
    %v2437 = vld [vmem:[#allocation5 + $0x46c8] sm:$0xff]
    %v2438 = vld [vmem:[#allocation5 + $0x46d0] sm:$0xff]
    %v2439 = vld [vmem:[#allocation5 + $0x46d8] sm:$0xff]
    %v2440 = vld [vmem:[#allocation5 + $0x46e0] sm:$0xff]
    %v2441 = vld [vmem:[#allocation5 + $0x46e8] sm:$0xff]
    %v2442 = vld [vmem:[#allocation5 + $0x46f0] sm:$0xff]
    %v2443 = vld [vmem:[#allocation5 + $0x46f8] sm:$0xff]
    %v2444 = vld [vmem:[#allocation5 + $0x4700] sm:$0xff]
    %v2445 = vld [vmem:[#allocation5 + $0x4708] sm:$0xff]
    %v2446 = vld [vmem:[#allocation5 + $0x4710] sm:$0xff]
    %v2447 = vld [vmem:[#allocation5 + $0x4718] sm:$0xff]
    %v2448 = vld [vmem:[#allocation5 + $0x4720] sm:$0xff]
    %v2449 = vld [vmem:[#allocation5 + $0x4728] sm:$0xff]
    %v2450 = vld [vmem:[#allocation5 + $0x4730] sm:$0xff]
    %v2451 = vld [vmem:[#allocation5 + $0x4738] sm:$0xff]
    %v2452 = vld [vmem:[#allocation5 + $0x4740] sm:$0xff]
    %v2453 = vld [vmem:[#allocation5 + $0x4748] sm:$0xff]
    %v2454 = vld [vmem:[#allocation5 + $0x4750] sm:$0xff]
    %v2455 = vld [vmem:[#allocation5 + $0x4758] sm:$0xff]
    %v2456 = vld [vmem:[#allocation5 + $0x4760] sm:$0xff]
    %v2457 = vld [vmem:[#allocation5 + $0x4768] sm:$0xff]
    %v2458 = vld [vmem:[#allocation5 + $0x4770] sm:$0xff]
    %v2459 = vld [vmem:[#allocation5 + $0x4778] sm:$0xff]
    %v2460 = vld [vmem:[#allocation5 + $0x4780] sm:$0xff]
    %v2461 = vld [vmem:[#allocation5 + $0x4788] sm:$0xff]
    %v2462 = vld [vmem:[#allocation5 + $0x4790] sm:$0xff]
    %v2463 = vld [vmem:[#allocation5 + $0x4798] sm:$0xff]
    %v2464 = vld [vmem:[#allocation5 + $0x47a0] sm:$0xff]
    %v2465 = vld [vmem:[#allocation5 + $0x47a8] sm:$0xff]
    %v2466 = vld [vmem:[#allocation5 + $0x47b0] sm:$0xff]
    %v2467 = vld [vmem:[#allocation5 + $0x47b8] sm:$0xff]
    %v2468 = vld [vmem:[#allocation5 + $0x47c0] sm:$0xff]
    %v2469 = vld [vmem:[#allocation5 + $0x47c8] sm:$0xff]
    %v2470 = vld [vmem:[#allocation5 + $0x47d0] sm:$0xff]
    %v2471 = vld [vmem:[#allocation5 + $0x47d8] sm:$0xff]
    %v2472 = vld [vmem:[#allocation5 + $0x47e0] sm:$0xff]
    %v2473 = vld [vmem:[#allocation5 + $0x47e8] sm:$0xff]
    %v2474 = vld [vmem:[#allocation5 + $0x47f0] sm:$0xff]
    %v2475 = vld [vmem:[#allocation5 + $0x47f8] sm:$0xff]
    %v2476 = vld [vmem:[#allocation5 + $0x4800] sm:$0xff]
    %v2477 = vld [vmem:[#allocation5 + $0x4808] sm:$0xff]
    %v2478 = vld [vmem:[#allocation5 + $0x4810] sm:$0xff]
    %v2479 = vld [vmem:[#allocation5 + $0x4818] sm:$0xff]
    %v2480 = vld [vmem:[#allocation5 + $0x4820] sm:$0xff]
    %v2481 = vld [vmem:[#allocation5 + $0x4828] sm:$0xff]
    %v2482 = vld [vmem:[#allocation5 + $0x4830] sm:$0xff]
    %v2483 = vld [vmem:[#allocation5 + $0x4838] sm:$0xff]
    %v2484 = vld [vmem:[#allocation5 + $0x4840] sm:$0xff]
    %v2485 = vld [vmem:[#allocation5 + $0x4848] sm:$0xff]
    %v2486 = vld [vmem:[#allocation5 + $0x4850] sm:$0xff]
    %v2487 = vld [vmem:[#allocation5 + $0x4858] sm:$0xff]
    %v2488 = vld [vmem:[#allocation5 + $0x4860] sm:$0xff]
    %v2489 = vld [vmem:[#allocation5 + $0x4868] sm:$0xff]
    %v2490 = vld [vmem:[#allocation5 + $0x4870] sm:$0xff]
    %v2491 = vld [vmem:[#allocation5 + $0x4878] sm:$0xff]
    %v2492 = vld [vmem:[#allocation5 + $0x4880] sm:$0xff]
    %v2493 = vld [vmem:[#allocation5 + $0x4888] sm:$0xff]
    %v2494 = vld [vmem:[#allocation5 + $0x4890] sm:$0xff]
    %v2495 = vld [vmem:[#allocation5 + $0x4898] sm:$0xff]
    %v2496 = vld [vmem:[#allocation5 + $0x48a0] sm:$0xff]
    %v2497 = vld [vmem:[#allocation5 + $0x48a8] sm:$0xff]
    %v2498 = vld [vmem:[#allocation5 + $0x48b0] sm:$0xff]
    %v2499 = vld [vmem:[#allocation5 + $0x48b8] sm:$0xff]
    %v2500 = vld [vmem:[#allocation5 + $0x48c0] sm:$0xff]
    %v2501 = vld [vmem:[#allocation5 + $0x48c8] sm:$0xff]
    %v2502 = vld [vmem:[#allocation5 + $0x48d0] sm:$0xff]
    %v2503 = vld [vmem:[#allocation5 + $0x48d8] sm:$0xff]
    %v2504 = vld [vmem:[#allocation5 + $0x48e0] sm:$0xff]
    %v2505 = vld [vmem:[#allocation5 + $0x48e8] sm:$0xff]
    %v2506 = vld [vmem:[#allocation5 + $0x48f0] sm:$0xff]
    %v2507 = vld [vmem:[#allocation5 + $0x48f8] sm:$0xff]
    %v2508 = vld [vmem:[#allocation5 + $0x4900] sm:$0xff]
    %v2509 = vld [vmem:[#allocation5 + $0x4908] sm:$0xff]
    %v2510 = vld [vmem:[#allocation5 + $0x4910] sm:$0xff]
    %v2511 = vld [vmem:[#allocation5 + $0x4918] sm:$0xff]
    %v2512 = vld [vmem:[#allocation5 + $0x4920] sm:$0xff]
    %v2513 = vld [vmem:[#allocation5 + $0x4928] sm:$0xff]
    %v2514 = vld [vmem:[#allocation5 + $0x4930] sm:$0xff]
    %v2515 = vld [vmem:[#allocation5 + $0x4938] sm:$0xff]
    %v2516 = vld [vmem:[#allocation5 + $0x4940] sm:$0xff]
    %v2517 = vld [vmem:[#allocation5 + $0x4948] sm:$0xff]
    %v2518 = vld [vmem:[#allocation5 + $0x4950] sm:$0xff]
    %v2519 = vld [vmem:[#allocation5 + $0x4958] sm:$0xff]
    %v2520 = vld [vmem:[#allocation5 + $0x4960] sm:$0xff]
    %v2521 = vld [vmem:[#allocation5 + $0x4968] sm:$0xff]
    %v2522 = vld [vmem:[#allocation5 + $0x4970] sm:$0xff]
    %v2523 = vld [vmem:[#allocation5 + $0x4978] sm:$0xff]
    %v2524 = vld [vmem:[#allocation5 + $0x4980] sm:$0xff]
    %v2525 = vld [vmem:[#allocation5 + $0x4988] sm:$0xff]
    %v2526 = vld [vmem:[#allocation5 + $0x4990] sm:$0xff]
    %v2527 = vld [vmem:[#allocation5 + $0x4998] sm:$0xff]
    %v2528 = vld [vmem:[#allocation5 + $0x49a0] sm:$0xff]
    %v2529 = vld [vmem:[#allocation5 + $0x49a8] sm:$0xff]
    %v2530 = vld [vmem:[#allocation5 + $0x49b0] sm:$0xff]
    %v2531 = vld [vmem:[#allocation5 + $0x49b8] sm:$0xff]
    %v2532 = vld [vmem:[#allocation5 + $0x49c0] sm:$0xff]
    %v2533 = vld [vmem:[#allocation5 + $0x49c8] sm:$0xff]
    %v2534 = vld [vmem:[#allocation5 + $0x49d0] sm:$0xff]
    %v2535 = vld [vmem:[#allocation5 + $0x49d8] sm:$0xff]
    %v2536 = vld [vmem:[#allocation5 + $0x49e0] sm:$0xff]
    %v2537 = vld [vmem:[#allocation5 + $0x49e8] sm:$0xff]
    %v2538 = vld [vmem:[#allocation5 + $0x49f0] sm:$0xff]
    %v2539 = vld [vmem:[#allocation5 + $0x49f8] sm:$0xff]
    %v2540 = vld [vmem:[#allocation5 + $0x4a00] sm:$0xff]
    %v2541 = vld [vmem:[#allocation5 + $0x4a08] sm:$0xff]
    %v2542 = vld [vmem:[#allocation5 + $0x4a10] sm:$0xff]
    %v2543 = vld [vmem:[#allocation5 + $0x4a18] sm:$0xff]
    %v2544 = vld [vmem:[#allocation5 + $0x4a20] sm:$0xff]
    %v2545 = vld [vmem:[#allocation5 + $0x4a28] sm:$0xff]
    %v2546 = vld [vmem:[#allocation5 + $0x4a30] sm:$0xff]
    %v2547 = vld [vmem:[#allocation5 + $0x4a38] sm:$0xff]
    %v2548 = vld [vmem:[#allocation5 + $0x4a40] sm:$0xff]
    %v2549 = vld [vmem:[#allocation5 + $0x4a48] sm:$0xff]
    %v2550 = vld [vmem:[#allocation5 + $0x4a50] sm:$0xff]
    %v2551 = vld [vmem:[#allocation5 + $0x4a58] sm:$0xff]
    %v2552 = vld [vmem:[#allocation5 + $0x4a60] sm:$0xff]
    %v2553 = vld [vmem:[#allocation5 + $0x4a68] sm:$0xff]
    %v2554 = vld [vmem:[#allocation5 + $0x4a70] sm:$0xff]
    %v2555 = vld [vmem:[#allocation5 + $0x4a78] sm:$0xff]
    %v2556 = vld [vmem:[#allocation5 + $0x4a80] sm:$0xff]
    %v2557 = vld [vmem:[#allocation5 + $0x4a88] sm:$0xff]
    %v2558 = vld [vmem:[#allocation5 + $0x4a90] sm:$0xff]
    %v2559 = vld [vmem:[#allocation5 + $0x4a98] sm:$0xff]
    %v2560 = vld [vmem:[#allocation5 + $0x4aa0] sm:$0xff]
    %v2561 = vld [vmem:[#allocation5 + $0x4aa8] sm:$0xff]
    %v2562 = vld [vmem:[#allocation5 + $0x4ab0] sm:$0xff]
    %v2563 = vld [vmem:[#allocation5 + $0x4ab8] sm:$0xff]
    %v2564 = vld [vmem:[#allocation5 + $0x4ac0] sm:$0xff]
    %v2565 = vld [vmem:[#allocation5 + $0x4ac8] sm:$0xff]
    %v2566 = vld [vmem:[#allocation5 + $0x4ad0] sm:$0xff]
    %v2567 = vld [vmem:[#allocation5 + $0x4ad8] sm:$0xff]
    %v2568 = vld [vmem:[#allocation5 + $0x4ae0] sm:$0xff]
    %v2569 = vld [vmem:[#allocation5 + $0x4ae8] sm:$0xff]
    %v2570 = vld [vmem:[#allocation5 + $0x4af0] sm:$0xff]
    %v2571 = vld [vmem:[#allocation5 + $0x4af8] sm:$0xff]
    %v2572 = vld [vmem:[#allocation5 + $0x4b00] sm:$0xff]
    %v2573 = vld [vmem:[#allocation5 + $0x4b08] sm:$0xff]
    %v2574 = vld [vmem:[#allocation5 + $0x4b10] sm:$0xff]
    %v2575 = vld [vmem:[#allocation5 + $0x4b18] sm:$0xff]
    %v2576 = vld [vmem:[#allocation5 + $0x4b20] sm:$0xff]
    %v2577 = vld [vmem:[#allocation5 + $0x4b28] sm:$0xff]
    %v2578 = vld [vmem:[#allocation5 + $0x4b30] sm:$0xff]
    %v2579 = vld [vmem:[#allocation5 + $0x4b38] sm:$0xff]
    %v2580 = vld [vmem:[#allocation5 + $0x4b40] sm:$0xff]
    %v2581 = vld [vmem:[#allocation5 + $0x4b48] sm:$0xff]
    %v2582 = vld [vmem:[#allocation5 + $0x4b50] sm:$0xff]
    %v2583 = vld [vmem:[#allocation5 + $0x4b58] sm:$0xff]
    %v2584 = vld [vmem:[#allocation5 + $0x4b60] sm:$0xff]
    %v2585 = vld [vmem:[#allocation5 + $0x4b68] sm:$0xff]
    %v2586 = vld [vmem:[#allocation5 + $0x4b70] sm:$0xff]
    %v2587 = vld [vmem:[#allocation5 + $0x4b78] sm:$0xff]
    %v2588 = vld [vmem:[#allocation5 + $0x4b80] sm:$0xff]
    %v2589 = vld [vmem:[#allocation5 + $0x4b88] sm:$0xff]
    %v2590 = vld [vmem:[#allocation5 + $0x4b90] sm:$0xff]
    %v2591 = vld [vmem:[#allocation5 + $0x4b98] sm:$0xff]
    %v2592 = vld [vmem:[#allocation5 + $0x4ba0] sm:$0xff]
    %v2593 = vld [vmem:[#allocation5 + $0x4ba8] sm:$0xff]
    %v2594 = vld [vmem:[#allocation5 + $0x4bb0] sm:$0xff]
    %v2595 = vld [vmem:[#allocation5 + $0x4bb8] sm:$0xff]
    %v2596 = vld [vmem:[#allocation5 + $0x4bc0] sm:$0xff]
    %v2597 = vld [vmem:[#allocation5 + $0x4bc8] sm:$0xff]
    %v2598 = vld [vmem:[#allocation5 + $0x4bd0] sm:$0xff]
    %v2599 = vld [vmem:[#allocation5 + $0x4bd8] sm:$0xff]
    %v2600 = vld [vmem:[#allocation5 + $0x4be0] sm:$0xff]
    %v2601 = vld [vmem:[#allocation5 + $0x4be8] sm:$0xff]
    %v2602 = vld [vmem:[#allocation5 + $0x4bf0] sm:$0xff]
    %v2603 = vld [vmem:[#allocation5 + $0x4bf8] sm:$0xff]
    %v2604 = vld [vmem:[#allocation5 + $0x4c00] sm:$0xff]
    %v2605 = vld [vmem:[#allocation5 + $0x4c08] sm:$0xff]
    %v2606 = vld [vmem:[#allocation5 + $0x4c10] sm:$0xff]
    %v2607 = vld [vmem:[#allocation5 + $0x4c18] sm:$0xff]
    %v2608 = vld [vmem:[#allocation5 + $0x4c20] sm:$0xff]
    %v2609 = vld [vmem:[#allocation5 + $0x4c28] sm:$0xff]
    %v2610 = vld [vmem:[#allocation5 + $0x4c30] sm:$0xff]
    %v2611 = vld [vmem:[#allocation5 + $0x4c38] sm:$0xff]
    %v2612 = vld [vmem:[#allocation5 + $0x4c40] sm:$0xff]
    %v2613 = vld [vmem:[#allocation5 + $0x4c48] sm:$0xff]
    %v2614 = vld [vmem:[#allocation5 + $0x4c50] sm:$0xff]
    %v2615 = vld [vmem:[#allocation5 + $0x4c58] sm:$0xff]
    %v2616 = vld [vmem:[#allocation5 + $0x4c60] sm:$0xff]
    %v2617 = vld [vmem:[#allocation5 + $0x4c68] sm:$0xff]
    %v2618 = vld [vmem:[#allocation5 + $0x4c70] sm:$0xff]
    %v2619 = vld [vmem:[#allocation5 + $0x4c78] sm:$0xff]
    %v2620 = vld [vmem:[#allocation5 + $0x4c80] sm:$0xff]
    %v2621 = vld [vmem:[#allocation5 + $0x4c88] sm:$0xff]
    %v2622 = vld [vmem:[#allocation5 + $0x4c90] sm:$0xff]
    %v2623 = vld [vmem:[#allocation5 + $0x4c98] sm:$0xff]
    %v2624 = vld [vmem:[#allocation5 + $0x4ca0] sm:$0xff]
    %v2625 = vld [vmem:[#allocation5 + $0x4ca8] sm:$0xff]
    %v2626 = vld [vmem:[#allocation5 + $0x4cb0] sm:$0xff]
    %v2627 = vld [vmem:[#allocation5 + $0x4cb8] sm:$0xff]
    %v2628 = vld [vmem:[#allocation5 + $0x4cc0] sm:$0xff]
    %v2629 = vld [vmem:[#allocation5 + $0x4cc8] sm:$0xff]
    %v2630 = vld [vmem:[#allocation5 + $0x4cd0] sm:$0xff]
    %v2631 = vld [vmem:[#allocation5 + $0x4cd8] sm:$0xff]
    %v2632 = vld [vmem:[#allocation5 + $0x4ce0] sm:$0xff]
    %v2633 = vld [vmem:[#allocation5 + $0x4ce8] sm:$0xff]
    %v2634 = vld [vmem:[#allocation5 + $0x4cf0] sm:$0xff]
    %v2635 = vld [vmem:[#allocation5 + $0x4cf8] sm:$0xff]
    %v2636 = vld [vmem:[#allocation5 + $0x4d00] sm:$0xff]
    %v2637 = vld [vmem:[#allocation5 + $0x4d08] sm:$0xff]
    %v2638 = vld [vmem:[#allocation5 + $0x4d10] sm:$0xff]
    %v2639 = vld [vmem:[#allocation5 + $0x4d18] sm:$0xff]
    %v2640 = vld [vmem:[#allocation5 + $0x4d20] sm:$0xff]
    %v2641 = vld [vmem:[#allocation5 + $0x4d28] sm:$0xff]
    %v2642 = vld [vmem:[#allocation5 + $0x4d30] sm:$0xff]
    %v2643 = vld [vmem:[#allocation5 + $0x4d38] sm:$0xff]
    %v2644 = vld [vmem:[#allocation5 + $0x4d40] sm:$0xff]
    %v2645 = vld [vmem:[#allocation5 + $0x4d48] sm:$0xff]
    %v2646 = vld [vmem:[#allocation5 + $0x4d50] sm:$0xff]
    %v2647 = vld [vmem:[#allocation5 + $0x4d58] sm:$0xff]
    %v2648 = vld [vmem:[#allocation5 + $0x4d60] sm:$0xff]
    %v2649 = vld [vmem:[#allocation5 + $0x4d68] sm:$0xff]
    %v2650 = vld [vmem:[#allocation5 + $0x4d70] sm:$0xff]
    %v2651 = vld [vmem:[#allocation5 + $0x4d78] sm:$0xff]
    %v2652 = vld [vmem:[#allocation5 + $0x4d80] sm:$0xff]
    %v2653 = vld [vmem:[#allocation5 + $0x4d88] sm:$0xff]
    %v2654 = vld [vmem:[#allocation5 + $0x4d90] sm:$0xff]
    %v2655 = vld [vmem:[#allocation5 + $0x4d98] sm:$0xff]
    %v2656 = vld [vmem:[#allocation5 + $0x4da0] sm:$0xff]
    %v2657 = vld [vmem:[#allocation5 + $0x4da8] sm:$0xff]
    %v2658 = vld [vmem:[#allocation5 + $0x4db0] sm:$0xff]
    %v2659 = vld [vmem:[#allocation5 + $0x4db8] sm:$0xff]
    %v2660 = vld [vmem:[#allocation5 + $0x4dc0] sm:$0xff]
    %v2661 = vld [vmem:[#allocation5 + $0x4dc8] sm:$0xff]
    %v2662 = vld [vmem:[#allocation5 + $0x4dd0] sm:$0xff]
    %v2663 = vld [vmem:[#allocation5 + $0x4dd8] sm:$0xff]
    %v2664 = vld [vmem:[#allocation5 + $0x4de0] sm:$0xff]
    %v2665 = vld [vmem:[#allocation5 + $0x4de8] sm:$0xff]
    %v2666 = vld [vmem:[#allocation5 + $0x4df0] sm:$0xff]
    %v2667 = vld [vmem:[#allocation5 + $0x4df8] sm:$0xff]
    %v2668 = vld [vmem:[#allocation5 + $0x4e00] sm:$0xff]
    %v2669 = vld [vmem:[#allocation5 + $0x4e08] sm:$0xff]
    %v2670 = vld [vmem:[#allocation5 + $0x4e10] sm:$0xff]
    %v2671 = vld [vmem:[#allocation5 + $0x4e18] sm:$0xff]
    %v2672 = vld [vmem:[#allocation5 + $0x4e20] sm:$0xff]
    %v2673 = vld [vmem:[#allocation5 + $0x4e28] sm:$0xff]
    %v2674 = vld [vmem:[#allocation5 + $0x4e30] sm:$0xff]
    %v2675 = vld [vmem:[#allocation5 + $0x4e38] sm:$0xff]
    %v2676 = vld [vmem:[#allocation5 + $0x4e40] sm:$0xff]
    %v2677 = vld [vmem:[#allocation5 + $0x4e48] sm:$0xff]
    %v2678 = vld [vmem:[#allocation5 + $0x4e50] sm:$0xff]
    %v2679 = vld [vmem:[#allocation5 + $0x4e58] sm:$0xff]
    %v2680 = vld [vmem:[#allocation5 + $0x4e60] sm:$0xff]
    %v2681 = vld [vmem:[#allocation5 + $0x4e68] sm:$0xff]
    %v2682 = vld [vmem:[#allocation5 + $0x4e70] sm:$0xff]
    %v2683 = vld [vmem:[#allocation5 + $0x4e78] sm:$0xff]
    %v2684 = vld [vmem:[#allocation5 + $0x4e80] sm:$0xff]
    %v2685 = vld [vmem:[#allocation5 + $0x4e88] sm:$0xff]
    %v2686 = vld [vmem:[#allocation5 + $0x4e90] sm:$0xff]
    %v2687 = vld [vmem:[#allocation5 + $0x4e98] sm:$0xff]
    %v2688 = vld [vmem:[#allocation5 + $0x4ea0] sm:$0xff]
    %v2689 = vld [vmem:[#allocation5 + $0x4ea8] sm:$0xff]
    %v2690 = vld [vmem:[#allocation5 + $0x4eb0] sm:$0xff]
    %v2691 = vld [vmem:[#allocation5 + $0x4eb8] sm:$0xff]
    %v2692 = vld [vmem:[#allocation5 + $0x4ec0] sm:$0xff]
    %v2693 = vld [vmem:[#allocation5 + $0x4ec8] sm:$0xff]
    %v2694 = vld [vmem:[#allocation5 + $0x4ed0] sm:$0xff]
    %v2695 = vld [vmem:[#allocation5 + $0x4ed8] sm:$0xff]
    %v2696 = vld [vmem:[#allocation5 + $0x4ee0] sm:$0xff]
    %v2697 = vld [vmem:[#allocation5 + $0x4ee8] sm:$0xff]
    %v2698 = vld [vmem:[#allocation5 + $0x4ef0] sm:$0xff]
    %v2699 = vld [vmem:[#allocation5 + $0x4ef8] sm:$0xff]
    %v2700 = vld [vmem:[#allocation5 + $0x4f00] sm:$0xff]
    %v2701 = vld [vmem:[#allocation5 + $0x4f08] sm:$0xff]
    %v2702 = vld [vmem:[#allocation5 + $0x4f10] sm:$0xff]
    %v2703 = vld [vmem:[#allocation5 + $0x4f18] sm:$0xff]
    %v2704 = vld [vmem:[#allocation5 + $0x4f20] sm:$0xff]
    %v2705 = vld [vmem:[#allocation5 + $0x4f28] sm:$0xff]
    %v2706 = vld [vmem:[#allocation5 + $0x4f30] sm:$0xff]
    %v2707 = vld [vmem:[#allocation5 + $0x4f38] sm:$0xff]
    %v2708 = vld [vmem:[#allocation5 + $0x4f40] sm:$0xff]
    %v2709 = vld [vmem:[#allocation5 + $0x4f48] sm:$0xff]
    %v2710 = vld [vmem:[#allocation5 + $0x4f50] sm:$0xff]
    %v2711 = vld [vmem:[#allocation5 + $0x4f58] sm:$0xff]
    %v2712 = vld [vmem:[#allocation5 + $0x4f60] sm:$0xff]
    %v2713 = vld [vmem:[#allocation5 + $0x4f68] sm:$0xff]
    %v2714 = vld [vmem:[#allocation5 + $0x4f70] sm:$0xff]
    %v2715 = vld [vmem:[#allocation5 + $0x4f78] sm:$0xff]
    %v2716 = vld [vmem:[#allocation5 + $0x4f80] sm:$0xff]
    %v2717 = vld [vmem:[#allocation5 + $0x4f88] sm:$0xff]
    %v2718 = vld [vmem:[#allocation5 + $0x4f90] sm:$0xff]
    %v2719 = vld [vmem:[#allocation5 + $0x4f98] sm:$0xff]
    %v2720 = vld [vmem:[#allocation5 + $0x4fa0] sm:$0xff]
    %v2721 = vld [vmem:[#allocation5 + $0x4fa8] sm:$0xff]
    %v2722 = vld [vmem:[#allocation5 + $0x4fb0] sm:$0xff]
    %v2723 = vld [vmem:[#allocation5 + $0x4fb8] sm:$0xff]
    %v2724 = vld [vmem:[#allocation5 + $0x4fc0] sm:$0xff]
    %v2725 = vld [vmem:[#allocation5 + $0x4fc8] sm:$0xff]
    %v2726 = vld [vmem:[#allocation5 + $0x4fd0] sm:$0xff]
    %v2727 = vld [vmem:[#allocation5 + $0x4fd8] sm:$0xff]
    %v2728 = vld [vmem:[#allocation5 + $0x4fe0] sm:$0xff]
    %v2729 = vld [vmem:[#allocation5 + $0x4fe8] sm:$0xff]
    %v2730 = vld [vmem:[#allocation5 + $0x4ff0] sm:$0xff]
    %v2731 = vld [vmem:[#allocation5 + $0x4ff8] sm:$0xff]
    %v2732 = vld [vmem:[#allocation7] sm:$0x1]
    %v2734 = vlaneseq
    %v2735 = vshrl.u32 %v2734, 7
    %v2736 = vsub.s32 0, %v2735
    %v2737 = vrot.slane %v2732, %v2736
    %v2779 = vcombine.high %v132, %v132
    %v2781 = vunpack.c.l.s4 1983009808
    %v2782 = vunpack.c.0.s8 %v2781
    %v2783 = vlaneseq
    %v2784 = vshrl.u32 %v2783, 7
    %v2785 = vsub.s32 %v2782, %v2784
    %v2786 = vrot.slane %v132, %v2785
    %v2788 = vunpack.c.l.s4 1983009808
    %v2789 = vunpack.c.0.s8 %v2788
    %v2790 = vlaneseq
    %v2791 = vshrl.u32 %v2790, 7
    %v2792 = vsub.s32 %v2789, %v2791
    %v2793 = vrot.slane %v2779, %v2792
    %v2794 = vcombine.high %v2786, %v2786
    %v2795 = vcombine.high %v2793, %v2793
    %v2796 = vcombine.high %v133, %v133
    %v2798 = vunpack.c.l.s4 1983009808
    %v2799 = vunpack.c.0.s8 %v2798
    %v2800 = vlaneseq
    %v2801 = vshrl.u32 %v2800, 7
    %v2802 = vsub.s32 %v2799, %v2801
    %v2803 = vrot.slane %v133, %v2802
    %v2805 = vunpack.c.l.s4 1983009808
    %v2806 = vunpack.c.0.s8 %v2805
    %v2807 = vlaneseq
    %v2808 = vshrl.u32 %v2807, 7
    %v2809 = vsub.s32 %v2806, %v2808
    %v2810 = vrot.slane %v2796, %v2809
    %v2811 = vcombine.high %v2803, %v2803
    %v2812 = vcombine.high %v2810, %v2810
    %v2813 = vcombine.high %v134, %v134
    %v2815 = vunpack.c.l.s4 1983009808
    %v2816 = vunpack.c.0.s8 %v2815
    %v2817 = vlaneseq
    %v2818 = vshrl.u32 %v2817, 7
    %v2819 = vsub.s32 %v2816, %v2818
    %v2820 = vrot.slane %v134, %v2819
    %v2822 = vunpack.c.l.s4 1983009808
    %v2823 = vunpack.c.0.s8 %v2822
    %v2824 = vlaneseq
    %v2825 = vshrl.u32 %v2824, 7
    %v2826 = vsub.s32 %v2823, %v2825
    %v2827 = vrot.slane %v2813, %v2826
    %v2828 = vcombine.high %v2820, %v2820
    %v2829 = vcombine.high %v2827, %v2827
    %v2830 = vcombine.high %v135, %v135
    %v2832 = vunpack.c.l.s4 1983009808
    %v2833 = vunpack.c.0.s8 %v2832
    %v2834 = vlaneseq
    %v2835 = vshrl.u32 %v2834, 7
    %v2836 = vsub.s32 %v2833, %v2835
    %v2837 = vrot.slane %v135, %v2836
    %v2839 = vunpack.c.l.s4 1983009808
    %v2840 = vunpack.c.0.s8 %v2839
    %v2841 = vlaneseq
    %v2842 = vshrl.u32 %v2841, 7
    %v2843 = vsub.s32 %v2840, %v2842
    %v2844 = vrot.slane %v2830, %v2843
    %v2845 = vcombine.high %v2837, %v2837
    %v2846 = vcombine.high %v2844, %v2844
    %v2847 = vcombine.high %v136, %v136
    %v2849 = vunpack.c.l.s4 1983009808
    %v2850 = vunpack.c.0.s8 %v2849
    %v2851 = vlaneseq
    %v2852 = vshrl.u32 %v2851, 7
    %v2853 = vsub.s32 %v2850, %v2852
    %v2854 = vrot.slane %v136, %v2853
    %v2856 = vunpack.c.l.s4 1983009808
    %v2857 = vunpack.c.0.s8 %v2856
    %v2858 = vlaneseq
    %v2859 = vshrl.u32 %v2858, 7
    %v2860 = vsub.s32 %v2857, %v2859
    %v2861 = vrot.slane %v2847, %v2860
    %v2862 = vcombine.high %v2854, %v2854
    %v2863 = vcombine.high %v2861, %v2861
    %v2864 = vcombine.high %v137, %v137
    %v2866 = vunpack.c.l.s4 1983009808
    %v2867 = vunpack.c.0.s8 %v2866
    %v2868 = vlaneseq
    %v2869 = vshrl.u32 %v2868, 7
    %v2870 = vsub.s32 %v2867, %v2869
    %v2871 = vrot.slane %v137, %v2870
    %v2873 = vunpack.c.l.s4 1983009808
    %v2874 = vunpack.c.0.s8 %v2873
    %v2875 = vlaneseq
    %v2876 = vshrl.u32 %v2875, 7
    %v2877 = vsub.s32 %v2874, %v2876
    %v2878 = vrot.slane %v2864, %v2877
    %v2879 = vcombine.high %v2871, %v2871
    %v2880 = vcombine.high %v2878, %v2878
    %v2881 = vcombine.high %v138, %v138
    %v2883 = vunpack.c.l.s4 1983009808
    %v2884 = vunpack.c.0.s8 %v2883
    %v2885 = vlaneseq
    %v2886 = vshrl.u32 %v2885, 7
    %v2887 = vsub.s32 %v2884, %v2886
    %v2888 = vrot.slane %v138, %v2887
    %v2890 = vunpack.c.l.s4 1983009808
    %v2891 = vunpack.c.0.s8 %v2890
    %v2892 = vlaneseq
    %v2893 = vshrl.u32 %v2892, 7
    %v2894 = vsub.s32 %v2891, %v2893
    %v2895 = vrot.slane %v2881, %v2894
    %v2896 = vcombine.high %v2888, %v2888
    %v2897 = vcombine.high %v2895, %v2895
    %v2898 = vcombine.high %v139, %v139
    %v2900 = vunpack.c.l.s4 1983009808
    %v2901 = vunpack.c.0.s8 %v2900
    %v2902 = vlaneseq
    %v2903 = vshrl.u32 %v2902, 7
    %v2904 = vsub.s32 %v2901, %v2903
    %v2905 = vrot.slane %v139, %v2904
    %v2907 = vunpack.c.l.s4 1983009808
    %v2908 = vunpack.c.0.s8 %v2907
    %v2909 = vlaneseq
    %v2910 = vshrl.u32 %v2909, 7
    %v2911 = vsub.s32 %v2908, %v2910
    %v2912 = vrot.slane %v2898, %v2911
    %v2913 = vcombine.high %v2905, %v2905
    %v2914 = vcombine.high %v2912, %v2912
    %v2915 = vcombine.high %v140, %v140
    %v2917 = vunpack.c.l.s4 1983009808
    %v2918 = vunpack.c.0.s8 %v2917
    %v2919 = vlaneseq
    %v2920 = vshrl.u32 %v2919, 7
    %v2921 = vsub.s32 %v2918, %v2920
    %v2922 = vrot.slane %v140, %v2921
    %v2924 = vunpack.c.l.s4 1983009808
    %v2925 = vunpack.c.0.s8 %v2924
    %v2926 = vlaneseq
    %v2927 = vshrl.u32 %v2926, 7
    %v2928 = vsub.s32 %v2925, %v2927
    %v2929 = vrot.slane %v2915, %v2928
    %v2930 = vcombine.high %v2922, %v2922
    %v2931 = vcombine.high %v2929, %v2929
    %v2932 = vcombine.high %v141, %v141
    %v2934 = vunpack.c.l.s4 1983009808
    %v2935 = vunpack.c.0.s8 %v2934
    %v2936 = vlaneseq
    %v2937 = vshrl.u32 %v2936, 7
    %v2938 = vsub.s32 %v2935, %v2937
    %v2939 = vrot.slane %v141, %v2938
    %v2941 = vunpack.c.l.s4 1983009808
    %v2942 = vunpack.c.0.s8 %v2941
    %v2943 = vlaneseq
    %v2944 = vshrl.u32 %v2943, 7
    %v2945 = vsub.s32 %v2942, %v2944
    %v2946 = vrot.slane %v2932, %v2945
    %v2947 = vcombine.high %v2939, %v2939
    %v2948 = vcombine.high %v2946, %v2946
    %v2949 = vcombine.high %v142, %v142
    %v2951 = vunpack.c.l.s4 1983009808
    %v2952 = vunpack.c.0.s8 %v2951
    %v2953 = vlaneseq
    %v2954 = vshrl.u32 %v2953, 7
    %v2955 = vsub.s32 %v2952, %v2954
    %v2956 = vrot.slane %v142, %v2955
    %v2958 = vunpack.c.l.s4 1983009808
    %v2959 = vunpack.c.0.s8 %v2958
    %v2960 = vlaneseq
    %v2961 = vshrl.u32 %v2960, 7
    %v2962 = vsub.s32 %v2959, %v2961
    %v2963 = vrot.slane %v2949, %v2962
    %v2964 = vcombine.high %v2956, %v2956
    %v2965 = vcombine.high %v2963, %v2963
    %v2966 = vcombine.high %v143, %v143
    %v2968 = vunpack.c.l.s4 1983009808
    %v2969 = vunpack.c.0.s8 %v2968
    %v2970 = vlaneseq
    %v2971 = vshrl.u32 %v2970, 7
    %v2972 = vsub.s32 %v2969, %v2971
    %v2973 = vrot.slane %v143, %v2972
    %v2975 = vunpack.c.l.s4 1983009808
    %v2976 = vunpack.c.0.s8 %v2975
    %v2977 = vlaneseq
    %v2978 = vshrl.u32 %v2977, 7
    %v2979 = vsub.s32 %v2976, %v2978
    %v2980 = vrot.slane %v2966, %v2979
    %v2981 = vcombine.high %v2973, %v2973
    %v2982 = vcombine.high %v2980, %v2980
    %v2983 = vcombine.high %v144, %v144
    %v2985 = vunpack.c.l.s4 1983009808
    %v2986 = vunpack.c.0.s8 %v2985
    %v2987 = vlaneseq
    %v2988 = vshrl.u32 %v2987, 7
    %v2989 = vsub.s32 %v2986, %v2988
    %v2990 = vrot.slane %v144, %v2989
    %v2992 = vunpack.c.l.s4 1983009808
    %v2993 = vunpack.c.0.s8 %v2992
    %v2994 = vlaneseq
    %v2995 = vshrl.u32 %v2994, 7
    %v2996 = vsub.s32 %v2993, %v2995
    %v2997 = vrot.slane %v2983, %v2996
    %v2998 = vcombine.high %v2990, %v2990
    %v2999 = vcombine.high %v2997, %v2997
    %v3000 = vcombine.high %v145, %v145
    %v3002 = vunpack.c.l.s4 1983009808
    %v3003 = vunpack.c.0.s8 %v3002
    %v3004 = vlaneseq
    %v3005 = vshrl.u32 %v3004, 7
    %v3006 = vsub.s32 %v3003, %v3005
    %v3007 = vrot.slane %v145, %v3006
    %v3009 = vunpack.c.l.s4 1983009808
    %v3010 = vunpack.c.0.s8 %v3009
    %v3011 = vlaneseq
    %v3012 = vshrl.u32 %v3011, 7
    %v3013 = vsub.s32 %v3010, %v3012
    %v3014 = vrot.slane %v3000, %v3013
    %v3015 = vcombine.high %v3007, %v3007
    %v3016 = vcombine.high %v3014, %v3014
    %v3017 = vcombine.high %v146, %v146
    %v3019 = vunpack.c.l.s4 1983009808
    %v3020 = vunpack.c.0.s8 %v3019
    %v3021 = vlaneseq
    %v3022 = vshrl.u32 %v3021, 7
    %v3023 = vsub.s32 %v3020, %v3022
    %v3024 = vrot.slane %v146, %v3023
    %v3026 = vunpack.c.l.s4 1983009808
    %v3027 = vunpack.c.0.s8 %v3026
    %v3028 = vlaneseq
    %v3029 = vshrl.u32 %v3028, 7
    %v3030 = vsub.s32 %v3027, %v3029
    %v3031 = vrot.slane %v3017, %v3030
    %v3032 = vcombine.high %v3024, %v3024
    %v3033 = vcombine.high %v3031, %v3031
    %v3034 = vcombine.high %v147, %v147
    %v3036 = vunpack.c.l.s4 1983009808
    %v3037 = vunpack.c.0.s8 %v3036
    %v3038 = vlaneseq
    %v3039 = vshrl.u32 %v3038, 7
    %v3040 = vsub.s32 %v3037, %v3039
    %v3041 = vrot.slane %v147, %v3040
    %v3043 = vunpack.c.l.s4 1983009808
    %v3044 = vunpack.c.0.s8 %v3043
    %v3045 = vlaneseq
    %v3046 = vshrl.u32 %v3045, 7
    %v3047 = vsub.s32 %v3044, %v3046
    %v3048 = vrot.slane %v3034, %v3047
    %v3049 = vcombine.high %v3041, %v3041
    %v3050 = vcombine.high %v3048, %v3048
    %v3051 = vcombine.high %v148, %v148
    %v3053 = vunpack.c.l.s4 1983009808
    %v3054 = vunpack.c.0.s8 %v3053
    %v3055 = vlaneseq
    %v3056 = vshrl.u32 %v3055, 7
    %v3057 = vsub.s32 %v3054, %v3056
    %v3058 = vrot.slane %v148, %v3057
    %v3060 = vunpack.c.l.s4 1983009808
    %v3061 = vunpack.c.0.s8 %v3060
    %v3062 = vlaneseq
    %v3063 = vshrl.u32 %v3062, 7
    %v3064 = vsub.s32 %v3061, %v3063
    %v3065 = vrot.slane %v3051, %v3064
    %v3066 = vcombine.high %v3058, %v3058
    %v3067 = vcombine.high %v3065, %v3065
    %v3068 = vcombine.high %v149, %v149
    %v3070 = vunpack.c.l.s4 1983009808
    %v3071 = vunpack.c.0.s8 %v3070
    %v3072 = vlaneseq
    %v3073 = vshrl.u32 %v3072, 7
    %v3074 = vsub.s32 %v3071, %v3073
    %v3075 = vrot.slane %v149, %v3074
    %v3077 = vunpack.c.l.s4 1983009808
    %v3078 = vunpack.c.0.s8 %v3077
    %v3079 = vlaneseq
    %v3080 = vshrl.u32 %v3079, 7
    %v3081 = vsub.s32 %v3078, %v3080
    %v3082 = vrot.slane %v3068, %v3081
    %v3083 = vcombine.high %v3075, %v3075
    %v3084 = vcombine.high %v3082, %v3082
    %v3085 = vcombine.high %v150, %v150
    %v3087 = vunpack.c.l.s4 1983009808
    %v3088 = vunpack.c.0.s8 %v3087
    %v3089 = vlaneseq
    %v3090 = vshrl.u32 %v3089, 7
    %v3091 = vsub.s32 %v3088, %v3090
    %v3092 = vrot.slane %v150, %v3091
    %v3094 = vunpack.c.l.s4 1983009808
    %v3095 = vunpack.c.0.s8 %v3094
    %v3096 = vlaneseq
    %v3097 = vshrl.u32 %v3096, 7
    %v3098 = vsub.s32 %v3095, %v3097
    %v3099 = vrot.slane %v3085, %v3098
    %v3100 = vcombine.high %v3092, %v3092
    %v3101 = vcombine.high %v3099, %v3099
    %v3102 = vcombine.high %v151, %v151
    %v3104 = vunpack.c.l.s4 1983009808
    %v3105 = vunpack.c.0.s8 %v3104
    %v3106 = vlaneseq
    %v3107 = vshrl.u32 %v3106, 7
    %v3108 = vsub.s32 %v3105, %v3107
    %v3109 = vrot.slane %v151, %v3108
    %v3111 = vunpack.c.l.s4 1983009808
    %v3112 = vunpack.c.0.s8 %v3111
    %v3113 = vlaneseq
    %v3114 = vshrl.u32 %v3113, 7
    %v3115 = vsub.s32 %v3112, %v3114
    %v3116 = vrot.slane %v3102, %v3115
    %v3117 = vcombine.high %v3109, %v3109
    %v3118 = vcombine.high %v3116, %v3116
    %v3119 = vcombine.high %v152, %v152
    %v3121 = vunpack.c.l.s4 1983009808
    %v3122 = vunpack.c.0.s8 %v3121
    %v3123 = vlaneseq
    %v3124 = vshrl.u32 %v3123, 7
    %v3125 = vsub.s32 %v3122, %v3124
    %v3126 = vrot.slane %v152, %v3125
    %v3128 = vunpack.c.l.s4 1983009808
    %v3129 = vunpack.c.0.s8 %v3128
    %v3130 = vlaneseq
    %v3131 = vshrl.u32 %v3130, 7
    %v3132 = vsub.s32 %v3129, %v3131
    %v3133 = vrot.slane %v3119, %v3132
    %v3134 = vcombine.high %v3126, %v3126
    %v3135 = vcombine.high %v3133, %v3133
    %v3136 = vcombine.high %v153, %v153
    %v3138 = vunpack.c.l.s4 1983009808
    %v3139 = vunpack.c.0.s8 %v3138
    %v3140 = vlaneseq
    %v3141 = vshrl.u32 %v3140, 7
    %v3142 = vsub.s32 %v3139, %v3141
    %v3143 = vrot.slane %v153, %v3142
    %v3145 = vunpack.c.l.s4 1983009808
    %v3146 = vunpack.c.0.s8 %v3145
    %v3147 = vlaneseq
    %v3148 = vshrl.u32 %v3147, 7
    %v3149 = vsub.s32 %v3146, %v3148
    %v3150 = vrot.slane %v3136, %v3149
    %v3151 = vcombine.high %v3143, %v3143
    %v3152 = vcombine.high %v3150, %v3150
    %v3153 = vcombine.high %v154, %v154
    %v3155 = vunpack.c.l.s4 1983009808
    %v3156 = vunpack.c.0.s8 %v3155
    %v3157 = vlaneseq
    %v3158 = vshrl.u32 %v3157, 7
    %v3159 = vsub.s32 %v3156, %v3158
    %v3160 = vrot.slane %v154, %v3159
    %v3162 = vunpack.c.l.s4 1983009808
    %v3163 = vunpack.c.0.s8 %v3162
    %v3164 = vlaneseq
    %v3165 = vshrl.u32 %v3164, 7
    %v3166 = vsub.s32 %v3163, %v3165
    %v3167 = vrot.slane %v3153, %v3166
    %v3168 = vcombine.high %v3160, %v3160
    %v3169 = vcombine.high %v3167, %v3167
    %v3170 = vcombine.high %v155, %v155
    %v3172 = vunpack.c.l.s4 1983009808
    %v3173 = vunpack.c.0.s8 %v3172
    %v3174 = vlaneseq
    %v3175 = vshrl.u32 %v3174, 7
    %v3176 = vsub.s32 %v3173, %v3175
    %v3177 = vrot.slane %v155, %v3176
    %v3179 = vunpack.c.l.s4 1983009808
    %v3180 = vunpack.c.0.s8 %v3179
    %v3181 = vlaneseq
    %v3182 = vshrl.u32 %v3181, 7
    %v3183 = vsub.s32 %v3180, %v3182
    %v3184 = vrot.slane %v3170, %v3183
    %v3185 = vcombine.high %v3177, %v3177
    %v3186 = vcombine.high %v3184, %v3184
    %v3187 = vcombine.high %v156, %v156
    %v3189 = vunpack.c.l.s4 1983009808
    %v3190 = vunpack.c.0.s8 %v3189
    %v3191 = vlaneseq
    %v3192 = vshrl.u32 %v3191, 7
    %v3193 = vsub.s32 %v3190, %v3192
    %v3194 = vrot.slane %v156, %v3193
    %v3196 = vunpack.c.l.s4 1983009808
    %v3197 = vunpack.c.0.s8 %v3196
    %v3198 = vlaneseq
    %v3199 = vshrl.u32 %v3198, 7
    %v3200 = vsub.s32 %v3197, %v3199
    %v3201 = vrot.slane %v3187, %v3200
    %v3202 = vcombine.high %v3194, %v3194
    %v3203 = vcombine.high %v3201, %v3201
    %v3204 = vcombine.high %v157, %v157
    %v3206 = vunpack.c.l.s4 1983009808
    %v3207 = vunpack.c.0.s8 %v3206
    %v3208 = vlaneseq
    %v3209 = vshrl.u32 %v3208, 7
    %v3210 = vsub.s32 %v3207, %v3209
    %v3211 = vrot.slane %v157, %v3210
    %v3213 = vunpack.c.l.s4 1983009808
    %v3214 = vunpack.c.0.s8 %v3213
    %v3215 = vlaneseq
    %v3216 = vshrl.u32 %v3215, 7
    %v3217 = vsub.s32 %v3214, %v3216
    %v3218 = vrot.slane %v3204, %v3217
    %v3219 = vcombine.high %v3211, %v3211
    %v3220 = vcombine.high %v3218, %v3218
    %v3221 = vcombine.high %v158, %v158
    %v3223 = vunpack.c.l.s4 1983009808
    %v3224 = vunpack.c.0.s8 %v3223
    %v3225 = vlaneseq
    %v3226 = vshrl.u32 %v3225, 7
    %v3227 = vsub.s32 %v3224, %v3226
    %v3228 = vrot.slane %v158, %v3227
    %v3230 = vunpack.c.l.s4 1983009808
    %v3231 = vunpack.c.0.s8 %v3230
    %v3232 = vlaneseq
    %v3233 = vshrl.u32 %v3232, 7
    %v3234 = vsub.s32 %v3231, %v3233
    %v3235 = vrot.slane %v3221, %v3234
    %v3236 = vcombine.high %v3228, %v3228
    %v3237 = vcombine.high %v3235, %v3235
    %v3238 = vcombine.high %v159, %v159
    %v3240 = vunpack.c.l.s4 1983009808
    %v3241 = vunpack.c.0.s8 %v3240
    %v3242 = vlaneseq
    %v3243 = vshrl.u32 %v3242, 7
    %v3244 = vsub.s32 %v3241, %v3243
    %v3245 = vrot.slane %v159, %v3244
    %v3247 = vunpack.c.l.s4 1983009808
    %v3248 = vunpack.c.0.s8 %v3247
    %v3249 = vlaneseq
    %v3250 = vshrl.u32 %v3249, 7
    %v3251 = vsub.s32 %v3248, %v3250
    %v3252 = vrot.slane %v3238, %v3251
    %v3253 = vcombine.high %v3245, %v3245
    %v3254 = vcombine.high %v3252, %v3252
    %v3255 = vcombine.high %v160, %v160
    %v3257 = vunpack.c.l.s4 1983009808
    %v3258 = vunpack.c.0.s8 %v3257
    %v3259 = vlaneseq
    %v3260 = vshrl.u32 %v3259, 7
    %v3261 = vsub.s32 %v3258, %v3260
    %v3262 = vrot.slane %v160, %v3261
    %v3264 = vunpack.c.l.s4 1983009808
    %v3265 = vunpack.c.0.s8 %v3264
    %v3266 = vlaneseq
    %v3267 = vshrl.u32 %v3266, 7
    %v3268 = vsub.s32 %v3265, %v3267
    %v3269 = vrot.slane %v3255, %v3268
    %v3270 = vcombine.high %v3262, %v3262
    %v3271 = vcombine.high %v3269, %v3269
    %v3272 = vcombine.high %v161, %v161
    %v3274 = vunpack.c.l.s4 1983009808
    %v3275 = vunpack.c.0.s8 %v3274
    %v3276 = vlaneseq
    %v3277 = vshrl.u32 %v3276, 7
    %v3278 = vsub.s32 %v3275, %v3277
    %v3279 = vrot.slane %v161, %v3278
    %v3281 = vunpack.c.l.s4 1983009808
    %v3282 = vunpack.c.0.s8 %v3281
    %v3283 = vlaneseq
    %v3284 = vshrl.u32 %v3283, 7
    %v3285 = vsub.s32 %v3282, %v3284
    %v3286 = vrot.slane %v3272, %v3285
    %v3287 = vcombine.high %v3279, %v3279
    %v3288 = vcombine.high %v3286, %v3286
    %v3289 = vcombine.high %v162, %v162
    %v3291 = vunpack.c.l.s4 1983009808
    %v3292 = vunpack.c.0.s8 %v3291
    %v3293 = vlaneseq
    %v3294 = vshrl.u32 %v3293, 7
    %v3295 = vsub.s32 %v3292, %v3294
    %v3296 = vrot.slane %v162, %v3295
    %v3298 = vunpack.c.l.s4 1983009808
    %v3299 = vunpack.c.0.s8 %v3298
    %v3300 = vlaneseq
    %v3301 = vshrl.u32 %v3300, 7
    %v3302 = vsub.s32 %v3299, %v3301
    %v3303 = vrot.slane %v3289, %v3302
    %v3304 = vcombine.high %v3296, %v3296
    %v3305 = vcombine.high %v3303, %v3303
    %v3306 = vcombine.high %v163, %v163
    %v3308 = vunpack.c.l.s4 1983009808
    %v3309 = vunpack.c.0.s8 %v3308
    %v3310 = vlaneseq
    %v3311 = vshrl.u32 %v3310, 7
    %v3312 = vsub.s32 %v3309, %v3311
    %v3313 = vrot.slane %v163, %v3312
    %v3315 = vunpack.c.l.s4 1983009808
    %v3316 = vunpack.c.0.s8 %v3315
    %v3317 = vlaneseq
    %v3318 = vshrl.u32 %v3317, 7
    %v3319 = vsub.s32 %v3316, %v3318
    %v3320 = vrot.slane %v3306, %v3319
    %v3321 = vcombine.high %v3313, %v3313
    %v3322 = vcombine.high %v3320, %v3320
    %v3323 = vcombine.high %v164, %v164
    %v3325 = vunpack.c.l.s4 1983009808
    %v3326 = vunpack.c.0.s8 %v3325
    %v3327 = vlaneseq
    %v3328 = vshrl.u32 %v3327, 7
    %v3329 = vsub.s32 %v3326, %v3328
    %v3330 = vrot.slane %v164, %v3329
    %v3332 = vunpack.c.l.s4 1983009808
    %v3333 = vunpack.c.0.s8 %v3332
    %v3334 = vlaneseq
    %v3335 = vshrl.u32 %v3334, 7
    %v3336 = vsub.s32 %v3333, %v3335
    %v3337 = vrot.slane %v3323, %v3336
    %v3338 = vcombine.high %v3330, %v3330
    %v3339 = vcombine.high %v3337, %v3337
    %v3340 = vcombine.high %v165, %v165
    %v3342 = vunpack.c.l.s4 1983009808
    %v3343 = vunpack.c.0.s8 %v3342
    %v3344 = vlaneseq
    %v3345 = vshrl.u32 %v3344, 7
    %v3346 = vsub.s32 %v3343, %v3345
    %v3347 = vrot.slane %v165, %v3346
    %v3349 = vunpack.c.l.s4 1983009808
    %v3350 = vunpack.c.0.s8 %v3349
    %v3351 = vlaneseq
    %v3352 = vshrl.u32 %v3351, 7
    %v3353 = vsub.s32 %v3350, %v3352
    %v3354 = vrot.slane %v3340, %v3353
    %v3355 = vcombine.high %v3347, %v3347
    %v3356 = vcombine.high %v3354, %v3354
    %v3357 = vcombine.high %v166, %v166
    %v3359 = vunpack.c.l.s4 1983009808
    %v3360 = vunpack.c.0.s8 %v3359
    %v3361 = vlaneseq
    %v3362 = vshrl.u32 %v3361, 7
    %v3363 = vsub.s32 %v3360, %v3362
    %v3364 = vrot.slane %v166, %v3363
    %v3366 = vunpack.c.l.s4 1983009808
    %v3367 = vunpack.c.0.s8 %v3366
    %v3368 = vlaneseq
    %v3369 = vshrl.u32 %v3368, 7
    %v3370 = vsub.s32 %v3367, %v3369
    %v3371 = vrot.slane %v3357, %v3370
    %v3372 = vcombine.high %v3364, %v3364
    %v3373 = vcombine.high %v3371, %v3371
    %v3374 = vcombine.high %v167, %v167
    %v3376 = vunpack.c.l.s4 1983009808
    %v3377 = vunpack.c.0.s8 %v3376
    %v3378 = vlaneseq
    %v3379 = vshrl.u32 %v3378, 7
    %v3380 = vsub.s32 %v3377, %v3379
    %v3381 = vrot.slane %v167, %v3380
    %v3383 = vunpack.c.l.s4 1983009808
    %v3384 = vunpack.c.0.s8 %v3383
    %v3385 = vlaneseq
    %v3386 = vshrl.u32 %v3385, 7
    %v3387 = vsub.s32 %v3384, %v3386
    %v3388 = vrot.slane %v3374, %v3387
    %v3389 = vcombine.high %v3381, %v3381
    %v3390 = vcombine.high %v3388, %v3388
    %v3391 = vcombine.high %v168, %v168
    %v3393 = vunpack.c.l.s4 1983009808
    %v3394 = vunpack.c.0.s8 %v3393
    %v3395 = vlaneseq
    %v3396 = vshrl.u32 %v3395, 7
    %v3397 = vsub.s32 %v3394, %v3396
    %v3398 = vrot.slane %v168, %v3397
    %v3400 = vunpack.c.l.s4 1983009808
    %v3401 = vunpack.c.0.s8 %v3400
    %v3402 = vlaneseq
    %v3403 = vshrl.u32 %v3402, 7
    %v3404 = vsub.s32 %v3401, %v3403
    %v3405 = vrot.slane %v3391, %v3404
    %v3406 = vcombine.high %v3398, %v3398
    %v3407 = vcombine.high %v3405, %v3405
    %v3408 = vcombine.high %v169, %v169
    %v3410 = vunpack.c.l.s4 1983009808
    %v3411 = vunpack.c.0.s8 %v3410
    %v3412 = vlaneseq
    %v3413 = vshrl.u32 %v3412, 7
    %v3414 = vsub.s32 %v3411, %v3413
    %v3415 = vrot.slane %v169, %v3414
    %v3417 = vunpack.c.l.s4 1983009808
    %v3418 = vunpack.c.0.s8 %v3417
    %v3419 = vlaneseq
    %v3420 = vshrl.u32 %v3419, 7
    %v3421 = vsub.s32 %v3418, %v3420
    %v3422 = vrot.slane %v3408, %v3421
    %v3423 = vcombine.high %v3415, %v3415
    %v3424 = vcombine.high %v3422, %v3422
    %v3425 = vcombine.high %v170, %v170
    %v3427 = vunpack.c.l.s4 1983009808
    %v3428 = vunpack.c.0.s8 %v3427
    %v3429 = vlaneseq
    %v3430 = vshrl.u32 %v3429, 7
    %v3431 = vsub.s32 %v3428, %v3430
    %v3432 = vrot.slane %v170, %v3431
    %v3434 = vunpack.c.l.s4 1983009808
    %v3435 = vunpack.c.0.s8 %v3434
    %v3436 = vlaneseq
    %v3437 = vshrl.u32 %v3436, 7
    %v3438 = vsub.s32 %v3435, %v3437
    %v3439 = vrot.slane %v3425, %v3438
    %v3440 = vcombine.high %v3432, %v3432
    %v3441 = vcombine.high %v3439, %v3439
    %v3442 = vcombine.high %v171, %v171
    %v3444 = vunpack.c.l.s4 1983009808
    %v3445 = vunpack.c.0.s8 %v3444
    %v3446 = vlaneseq
    %v3447 = vshrl.u32 %v3446, 7
    %v3448 = vsub.s32 %v3445, %v3447
    %v3449 = vrot.slane %v171, %v3448
    %v3451 = vunpack.c.l.s4 1983009808
    %v3452 = vunpack.c.0.s8 %v3451
    %v3453 = vlaneseq
    %v3454 = vshrl.u32 %v3453, 7
    %v3455 = vsub.s32 %v3452, %v3454
    %v3456 = vrot.slane %v3442, %v3455
    %v3457 = vcombine.high %v3449, %v3449
    %v3458 = vcombine.high %v3456, %v3456
    %3619 = vmatprep.subr.mxu0 0.0
    %3620 = vmatpush1.msra.mxu0 %v172
    %3621 = vmatprep.subr.mxu0 0.0
    %3622 = vmatpush1.msra.mxu0 %v173
    %3623 = vmatprep.subr.mxu0 0.0
    %3624 = vmatpush1.msra.mxu0 %v174
    %3625 = vmatprep.subr.mxu0 0.0
    %3626 = vmatpush1.msra.mxu0 %v175
    %3627 = vmatprep.subr.mxu0 0.0
    %3628 = vmatpush1.msra.mxu0 %v176
    %3629 = vmatprep.subr.mxu0 0.0
    %3630 = vmatpush1.msra.mxu0 %v177
    %3631 = vmatprep.subr.mxu0 0.0
    %3632 = vmatpush1.msra.mxu0 %v178
    %3633 = vmatprep.subr.mxu0 0.0
    %3634 = vmatpush1.msra.mxu0 %v179
    %3635 = vmatprep.subr.mxu0 0.0
    %3636 = vmatpush1.msra.mxu0 %v180
    %3637 = vmatprep.subr.mxu0 0.0
    %3638 = vmatpush1.msra.mxu0 %v181
    %3639 = vmatprep.subr.mxu0 0.0
    %3640 = vmatpush1.msra.mxu0 %v182
    %3641 = vmatprep.subr.mxu0 0.0
    %3642 = vmatpush1.msra.mxu0 %v183
    %3643 = vmatprep.subr.mxu0 0.0
    %3644 = vmatpush1.msra.mxu0 %v184
    %3645 = vmatprep.subr.mxu0 0.0
    %3646 = vmatpush1.msra.mxu0 %v185
    %3647 = vmatprep.subr.mxu0 0.0
    %3648 = vmatpush1.msra.mxu0 %v186
    %3649 = vmatprep.subr.mxu0 0.0
    %3650 = vmatpush1.msra.mxu0 %v187
    %3651 = vmatprep.subr.mxu0 0.0
    %3652 = vmatpush1.msra.mxu0 %v188
    %3653 = vmatprep.subr.mxu0 0.0
    %3654 = vmatpush1.msra.mxu0 %v189
    %3655 = vmatprep.subr.mxu0 0.0
    %3656 = vmatpush1.msra.mxu0 %v190
    %3657 = vmatprep.subr.mxu0 0.0
    %3658 = vmatpush1.msra.mxu0 %v191
    %3659 = vmatprep.subr.mxu0 0.0
    %3660 = vmatpush1.msra.mxu0 %v192
    %3661 = vmatprep.subr.mxu0 0.0
    %3662 = vmatpush1.msra.mxu0 %v193
    %3663 = vmatprep.subr.mxu0 0.0
    %3664 = vmatpush1.msra.mxu0 %v194
    %3665 = vmatprep.subr.mxu0 0.0
    %3666 = vmatpush1.msra.mxu0 %v195
    %3667 = vmatprep.subr.mxu0 0.0
    %3668 = vmatpush1.msra.mxu0 %v196
    %3669 = vmatprep.subr.mxu0 0.0
    %3670 = vmatpush1.msra.mxu0 %v197
    %3671 = vmatprep.subr.mxu0 0.0
    %3672 = vmatpush1.msra.mxu0 %v198
    %3673 = vmatprep.subr.mxu0 0.0
    %3674 = vmatpush1.msra.mxu0 %v199
    %3675 = vmatprep.subr.mxu0 0.0
    %3676 = vmatpush1.msra.mxu0 %v200
    %3677 = vmatprep.subr.mxu0 0.0
    %3678 = vmatpush1.msra.mxu0 %v201
    %3679 = vmatprep.subr.mxu0 0.0
    %3680 = vmatpush1.msra.mxu0 %v202
    %3681 = vmatprep.subr.mxu0 0.0
    %3682 = vmatpush1.msra.mxu0 %v203
    %3683 = vmatprep.mubr.f32.mxu0 %v2794
    %3684 = vmatmul.mubr.f32.gmra.mrb[0].mxu0 %v2786
    %v3685 = vpop.f32.mrb[0].mxu0
    %v3686 = vadd.f32 %v2737, %v3685
    %v3687 = vpop.f32.mrb[0].mxu0
    %3688 = vdwg.mxu0
    %3689 = vmatprep.subr.mxu0 0.0
    %3690 = vmatpush1.msra.mxu0 %v204
    %3691 = vmatprep.subr.mxu0 0.0
    %3692 = vmatpush1.msra.mxu0 %v205
    %3693 = vmatprep.subr.mxu0 0.0
    %3694 = vmatpush1.msra.mxu0 %v206
    %3695 = vmatprep.subr.mxu0 0.0
    %3696 = vmatpush1.msra.mxu0 %v207
    %3697 = vmatprep.subr.mxu0 0.0
    %3698 = vmatpush1.msra.mxu0 %v208
    %3699 = vmatprep.subr.mxu0 0.0
    %3700 = vmatpush1.msra.mxu0 %v209
    %3701 = vmatprep.subr.mxu0 0.0
    %3702 = vmatpush1.msra.mxu0 %v210
    %3703 = vmatprep.subr.mxu0 0.0
    %3704 = vmatpush1.msra.mxu0 %v211
    %3705 = vmatprep.subr.mxu0 0.0
    %3706 = vmatpush1.msra.mxu0 %v212
    %3707 = vmatprep.subr.mxu0 0.0
    %3708 = vmatpush1.msra.mxu0 %v213
    %3709 = vmatprep.subr.mxu0 0.0
    %3710 = vmatpush1.msra.mxu0 %v214
    %3711 = vmatprep.subr.mxu0 0.0
    %3712 = vmatpush1.msra.mxu0 %v215
    %3713 = vmatprep.subr.mxu0 0.0
    %3714 = vmatpush1.msra.mxu0 %v216
    %3715 = vmatprep.subr.mxu0 0.0
    %3716 = vmatpush1.msra.mxu0 %v217
    %3717 = vmatprep.subr.mxu0 0.0
    %3718 = vmatpush1.msra.mxu0 %v218
    %3719 = vmatprep.subr.mxu0 0.0
    %3720 = vmatpush1.msra.mxu0 %v219
    %3721 = vmatprep.subr.mxu0 0.0
    %3722 = vmatpush1.msra.mxu0 %v220
    %3723 = vmatprep.subr.mxu0 0.0
    %3724 = vmatpush1.msra.mxu0 %v221
    %3725 = vmatprep.subr.mxu0 0.0
    %3726 = vmatpush1.msra.mxu0 %v222
    %3727 = vmatprep.subr.mxu0 0.0
    %3728 = vmatpush1.msra.mxu0 %v223
    %3729 = vmatprep.subr.mxu0 0.0
    %3730 = vmatpush1.msra.mxu0 %v224
    %3731 = vmatprep.subr.mxu0 0.0
    %3732 = vmatpush1.msra.mxu0 %v225
    %3733 = vmatprep.subr.mxu0 0.0
    %3734 = vmatpush1.msra.mxu0 %v226
    %3735 = vmatprep.subr.mxu0 0.0
    %3736 = vmatpush1.msra.mxu0 %v227
    %3737 = vmatprep.subr.mxu0 0.0
    %3738 = vmatpush1.msra.mxu0 %v228
    %3739 = vmatprep.subr.mxu0 0.0
    %3740 = vmatpush1.msra.mxu0 %v229
    %3741 = vmatprep.subr.mxu0 0.0
    %3742 = vmatpush1.msra.mxu0 %v230
    %3743 = vmatprep.subr.mxu0 0.0
    %3744 = vmatpush1.msra.mxu0 %v231
    %3745 = vmatprep.subr.mxu0 0.0
    %3746 = vmatpush1.msra.mxu0 %v232
    %3747 = vmatprep.subr.mxu0 0.0
    %3748 = vmatpush1.msra.mxu0 %v233
    %3749 = vmatprep.subr.mxu0 0.0
    %3750 = vmatpush1.msra.mxu0 %v234
    %3751 = vmatprep.subr.mxu0 0.0
    %3752 = vmatpush1.msra.mxu0 %v235
    %3753 = vmatprep.mubr.f32.mxu0 %v2795
    %3754 = vmatmul.mubr.f32.gmra.mrb[0].mxu0 %v2793
    %v3755 = vpop.f32.mrb[0].mxu0
    %v3756 = vadd.f32 %v3686, %v3755
    %v3757 = vpop.f32.mrb[0].mxu0
    %3758 = vdwg.mxu0
    %3759 = vmatprep.subr.mxu0 0.0
    %3760 = vmatpush1.msra.mxu0 %v236
    %3761 = vmatprep.subr.mxu0 0.0
    %3762 = vmatpush1.msra.mxu0 %v237
    %3763 = vmatprep.subr.mxu0 0.0
    %3764 = vmatpush1.msra.mxu0 %v238
    %3765 = vmatprep.subr.mxu0 0.0
    %3766 = vmatpush1.msra.mxu0 %v239
    %3767 = vmatprep.subr.mxu0 0.0
    %3768 = vmatpush1.msra.mxu0 %v240
    %3769 = vmatprep.subr.mxu0 0.0
    %3770 = vmatpush1.msra.mxu0 %v241
    %3771 = vmatprep.subr.mxu0 0.0
    %3772 = vmatpush1.msra.mxu0 %v242
    %3773 = vmatprep.subr.mxu0 0.0
    %3774 = vmatpush1.msra.mxu0 %v243
    %3775 = vmatprep.subr.mxu0 0.0
    %3776 = vmatpush1.msra.mxu0 %v244
    %3777 = vmatprep.subr.mxu0 0.0
    %3778 = vmatpush1.msra.mxu0 %v245
    %3779 = vmatprep.subr.mxu0 0.0
    %3780 = vmatpush1.msra.mxu0 %v246
    %3781 = vmatprep.subr.mxu0 0.0
    %3782 = vmatpush1.msra.mxu0 %v247
    %3783 = vmatprep.subr.mxu0 0.0
    %3784 = vmatpush1.msra.mxu0 %v248
    %3785 = vmatprep.subr.mxu0 0.0
    %3786 = vmatpush1.msra.mxu0 %v249
    %3787 = vmatprep.subr.mxu0 0.0
    %3788 = vmatpush1.msra.mxu0 %v250
    %3789 = vmatprep.subr.mxu0 0.0
    %3790 = vmatpush1.msra.mxu0 %v251
    %3791 = vmatprep.subr.mxu0 0.0
    %3792 = vmatpush1.msra.mxu0 %v252
    %3793 = vmatprep.subr.mxu0 0.0
    %3794 = vmatpush1.msra.mxu0 %v253
    %3795 = vmatprep.subr.mxu0 0.0
    %3796 = vmatpush1.msra.mxu0 %v254
    %3797 = vmatprep.subr.mxu0 0.0
    %3798 = vmatpush1.msra.mxu0 %v255
    %3799 = vmatprep.subr.mxu0 0.0
    %3800 = vmatpush1.msra.mxu0 %v256
    %3801 = vmatprep.subr.mxu0 0.0
    %3802 = vmatpush1.msra.mxu0 %v257
    %3803 = vmatprep.subr.mxu0 0.0
    %3804 = vmatpush1.msra.mxu0 %v258
    %3805 = vmatprep.subr.mxu0 0.0
    %3806 = vmatpush1.msra.mxu0 %v259
    %3807 = vmatprep.subr.mxu0 0.0
    %3808 = vmatpush1.msra.mxu0 %v260
    %3809 = vmatprep.subr.mxu0 0.0
    %3810 = vmatpush1.msra.mxu0 %v261
    %3811 = vmatprep.subr.mxu0 0.0
    %3812 = vmatpush1.msra.mxu0 %v262
    %3813 = vmatprep.subr.mxu0 0.0
    %3814 = vmatpush1.msra.mxu0 %v263
    %3815 = vmatprep.subr.mxu0 0.0
    %3816 = vmatpush1.msra.mxu0 %v264
    %3817 = vmatprep.subr.mxu0 0.0
    %3818 = vmatpush1.msra.mxu0 %v265
    %3819 = vmatprep.subr.mxu0 0.0
    %3820 = vmatpush1.msra.mxu0 %v266
    %3821 = vmatprep.subr.mxu0 0.0
    %3822 = vmatpush1.msra.mxu0 %v267
    %3823 = vmatprep.mubr.f32.mxu0 %v2811
    %3824 = vmatmul.mubr.f32.gmra.mrb[0].mxu0 %v2803
    %v3825 = vpop.f32.mrb[0].mxu0
    %v3826 = vadd.f32 %v3756, %v3825
    %v3827 = vpop.f32.mrb[0].mxu0
    %3828 = vdwg.mxu0
    %3829 = vmatprep.subr.mxu0 0.0
    %3830 = vmatpush1.msra.mxu0 %v268
    %3831 = vmatprep.subr.mxu0 0.0
    %3832 = vmatpush1.msra.mxu0 %v269
    %3833 = vmatprep.subr.mxu0 0.0
    %3834 = vmatpush1.msra.mxu0 %v270
    %3835 = vmatprep.subr.mxu0 0.0
    %3836 = vmatpush1.msra.mxu0 %v271
    %3837 = vmatprep.subr.mxu0 0.0
    %3838 = vmatpush1.msra.mxu0 %v272
    %3839 = vmatprep.subr.mxu0 0.0
    %3840 = vmatpush1.msra.mxu0 %v273
    %3841 = vmatprep.subr.mxu0 0.0
    %3842 = vmatpush1.msra.mxu0 %v274
    %3843 = vmatprep.subr.mxu0 0.0
    %3844 = vmatpush1.msra.mxu0 %v275
    %3845 = vmatprep.subr.mxu0 0.0
    %3846 = vmatpush1.msra.mxu0 %v276
    %3847 = vmatprep.subr.mxu0 0.0
    %3848 = vmatpush1.msra.mxu0 %v277
    %3849 = vmatprep.subr.mxu0 0.0
    %3850 = vmatpush1.msra.mxu0 %v278
    %3851 = vmatprep.subr.mxu0 0.0
    %3852 = vmatpush1.msra.mxu0 %v279
    %3853 = vmatprep.subr.mxu0 0.0
    %3854 = vmatpush1.msra.mxu0 %v280
    %3855 = vmatprep.subr.mxu0 0.0
    %3856 = vmatpush1.msra.mxu0 %v281
    %3857 = vmatprep.subr.mxu0 0.0
    %3858 = vmatpush1.msra.mxu0 %v282
    %3859 = vmatprep.subr.mxu0 0.0
    %3860 = vmatpush1.msra.mxu0 %v283
    %3861 = vmatprep.subr.mxu0 0.0
    %3862 = vmatpush1.msra.mxu0 %v284
    %3863 = vmatprep.subr.mxu0 0.0
    %3864 = vmatpush1.msra.mxu0 %v285
    %3865 = vmatprep.subr.mxu0 0.0
    %3866 = vmatpush1.msra.mxu0 %v286
    %3867 = vmatprep.subr.mxu0 0.0
    %3868 = vmatpush1.msra.mxu0 %v287
    %3869 = vmatprep.subr.mxu0 0.0
    %3870 = vmatpush1.msra.mxu0 %v288
    %3871 = vmatprep.subr.mxu0 0.0
    %3872 = vmatpush1.msra.mxu0 %v289
    %3873 = vmatprep.subr.mxu0 0.0
    %3874 = vmatpush1.msra.mxu0 %v290
    %3875 = vmatprep.subr.mxu0 0.0
    %3876 = vmatpush1.msra.mxu0 %v291
    %3877 = vmatprep.subr.mxu0 0.0
    %3878 = vmatpush1.msra.mxu0 %v292
    %3879 = vmatprep.subr.mxu0 0.0
    %3880 = vmatpush1.msra.mxu0 %v293
    %3881 = vmatprep.subr.mxu0 0.0
    %3882 = vmatpush1.msra.mxu0 %v294
    %3883 = vmatprep.subr.mxu0 0.0
    %3884 = vmatpush1.msra.mxu0 %v295
    %3885 = vmatprep.subr.mxu0 0.0
    %3886 = vmatpush1.msra.mxu0 %v296
    %3887 = vmatprep.subr.mxu0 0.0
    %3888 = vmatpush1.msra.mxu0 %v297
    %3889 = vmatprep.subr.mxu0 0.0
    %3890 = vmatpush1.msra.mxu0 %v298
    %3891 = vmatprep.subr.mxu0 0.0
    %3892 = vmatpush1.msra.mxu0 %v299
    %3893 = vmatprep.mubr.f32.mxu0 %v2812
    %3894 = vmatmul.mubr.f32.gmra.mrb[0].mxu0 %v2810
    %v3895 = vpop.f32.mrb[0].mxu0
    %v3896 = vadd.f32 %v3826, %v3895
    %v3897 = vpop.f32.mrb[0].mxu0
    %3898 = vdwg.mxu0
    %3899 = vmatprep.subr.mxu0 0.0
    %3900 = vmatpush1.msra.mxu0 %v300
    %3901 = vmatprep.subr.mxu0 0.0
    %3902 = vmatpush1.msra.mxu0 %v301
    %3903 = vmatprep.subr.mxu0 0.0
    %3904 = vmatpush1.msra.mxu0 %v302
    %3905 = vmatprep.subr.mxu0 0.0
    %3906 = vmatpush1.msra.mxu0 %v303
    %3907 = vmatprep.subr.mxu0 0.0
    %3908 = vmatpush1.msra.mxu0 %v304
    %3909 = vmatprep.subr.mxu0 0.0
    %3910 = vmatpush1.msra.mxu0 %v305
    %3911 = vmatprep.subr.mxu0 0.0
    %3912 = vmatpush1.msra.mxu0 %v306
    %3913 = vmatprep.subr.mxu0 0.0
    %3914 = vmatpush1.msra.mxu0 %v307
    %3915 = vmatprep.subr.mxu0 0.0
    %3916 = vmatpush1.msra.mxu0 %v308
    %3917 = vmatprep.subr.mxu0 0.0
    %3918 = vmatpush1.msra.mxu0 %v309
    %3919 = vmatprep.subr.mxu0 0.0
    %3920 = vmatpush1.msra.mxu0 %v310
    %3921 = vmatprep.subr.mxu0 0.0
    %3922 = vmatpush1.msra.mxu0 %v311
    %3923 = vmatprep.subr.mxu0 0.0
    %3924 = vmatpush1.msra.mxu0 %v312
    %3925 = vmatprep.subr.mxu0 0.0
    %3926 = vmatpush1.msra.mxu0 %v313
    %3927 = vmatprep.subr.mxu0 0.0
    %3928 = vmatpush1.msra.mxu0 %v314
    %3929 = vmatprep.subr.mxu0 0.0
    %3930 = vmatpush1.msra.mxu0 %v315
    %3931 = vmatprep.subr.mxu0 0.0
    %3932 = vmatpush1.msra.mxu0 %v316
    %3933 = vmatprep.subr.mxu0 0.0
    %3934 = vmatpush1.msra.mxu0 %v317
    %3935 = vmatprep.subr.mxu0 0.0
    %3936 = vmatpush1.msra.mxu0 %v318
    %3937 = vmatprep.subr.mxu0 0.0
    %3938 = vmatpush1.msra.mxu0 %v319
    %3939 = vmatprep.subr.mxu0 0.0
    %3940 = vmatpush1.msra.mxu0 %v320
    %3941 = vmatprep.subr.mxu0 0.0
    %3942 = vmatpush1.msra.mxu0 %v321
    %3943 = vmatprep.subr.mxu0 0.0
    %3944 = vmatpush1.msra.mxu0 %v322
    %3945 = vmatprep.subr.mxu0 0.0
    %3946 = vmatpush1.msra.mxu0 %v323
    %3947 = vmatprep.subr.mxu0 0.0
    %3948 = vmatpush1.msra.mxu0 %v324
    %3949 = vmatprep.subr.mxu0 0.0
    %3950 = vmatpush1.msra.mxu0 %v325
    %3951 = vmatprep.subr.mxu0 0.0
    %3952 = vmatpush1.msra.mxu0 %v326
    %3953 = vmatprep.subr.mxu0 0.0
    %3954 = vmatpush1.msra.mxu0 %v327
    %3955 = vmatprep.subr.mxu0 0.0
    %3956 = vmatpush1.msra.mxu0 %v328
    %3957 = vmatprep.subr.mxu0 0.0
    %3958 = vmatpush1.msra.mxu0 %v329
    %3959 = vmatprep.subr.mxu0 0.0
    %3960 = vmatpush1.msra.mxu0 %v330
    %3961 = vmatprep.subr.mxu0 0.0
    %3962 = vmatpush1.msra.mxu0 %v331
    %3963 = vmatprep.mubr.f32.mxu0 %v2828
    %3964 = vmatmul.mubr.f32.gmra.mrb[0].mxu0 %v2820
    %v3965 = vpop.f32.mrb[0].mxu0
    %v3966 = vadd.f32 %v3896, %v3965
    %v3967 = vpop.f32.mrb[0].mxu0
    %3968 = vdwg.mxu0
    %3969 = vmatprep.subr.mxu0 0.0
    %3970 = vmatpush1.msra.mxu0 %v332
    %3971 = vmatprep.subr.mxu0 0.0
    %3972 = vmatpush1.msra.mxu0 %v333
    %3973 = vmatprep.subr.mxu0 0.0
    %3974 = vmatpush1.msra.mxu0 %v334
    %3975 = vmatprep.subr.mxu0 0.0
    %3976 = vmatpush1.msra.mxu0 %v335
    %3977 = vmatprep.subr.mxu0 0.0
    %3978 = vmatpush1.msra.mxu0 %v336
    %3979 = vmatprep.subr.mxu0 0.0
    %3980 = vmatpush1.msra.mxu0 %v337
    %3981 = vmatprep.subr.mxu0 0.0
    %3982 = vmatpush1.msra.mxu0 %v338
    %3983 = vmatprep.subr.mxu0 0.0
    %3984 = vmatpush1.msra.mxu0 %v339
    %3985 = vmatprep.subr.mxu0 0.0
    %3986 = vmatpush1.msra.mxu0 %v340
    %3987 = vmatprep.subr.mxu0 0.0
    %3988 = vmatpush1.msra.mxu0 %v341
    %3989 = vmatprep.subr.mxu0 0.0
    %3990 = vmatpush1.msra.mxu0 %v342
    %3991 = vmatprep.subr.mxu0 0.0
    %3992 = vmatpush1.msra.mxu0 %v343
    %3993 = vmatprep.subr.mxu0 0.0
    %3994 = vmatpush1.msra.mxu0 %v344
    %3995 = vmatprep.subr.mxu0 0.0
    %3996 = vmatpush1.msra.mxu0 %v345
    %3997 = vmatprep.subr.mxu0 0.0
    %3998 = vmatpush1.msra.mxu0 %v346
    %3999 = vmatprep.subr.mxu0 0.0
    %4000 = vmatpush1.msra.mxu0 %v347
    %4001 = vmatprep.subr.mxu0 0.0
    %4002 = vmatpush1.msra.mxu0 %v348
    %4003 = vmatprep.subr.mxu0 0.0
    %4004 = vmatpush1.msra.mxu0 %v349
    %4005 = vmatprep.subr.mxu0 0.0
    %4006 = vmatpush1.msra.mxu0 %v350
    %4007 = vmatprep.subr.mxu0 0.0
    %4008 = vmatpush1.msra.mxu0 %v351
    %4009 = vmatprep.subr.mxu0 0.0
    %4010 = vmatpush1.msra.mxu0 %v352
    %4011 = vmatprep.subr.mxu0 0.0
    %4012 = vmatpush1.msra.mxu0 %v353
    %4013 = vmatprep.subr.mxu0 0.0
    %4014 = vmatpush1.msra.mxu0 %v354
    %4015 = vmatprep.subr.mxu0 0.0
    %4016 = vmatpush1.msra.mxu0 %v355
    %4017 = vmatprep.subr.mxu0 0.0
    %4018 = vmatpush1.msra.mxu0 %v356
    %4019 = vmatprep.subr.mxu0 0.0
    %4020 = vmatpush1.msra.mxu0 %v357
    %4021 = vmatprep.subr.mxu0 0.0
    %4022 = vmatpush1.msra.mxu0 %v358
    %4023 = vmatprep.subr.mxu0 0.0
    %4024 = vmatpush1.msra.mxu0 %v359
    %4025 = vmatprep.subr.mxu0 0.0
    %4026 = vmatpush1.msra.mxu0 %v360
    %4027 = vmatprep.subr.mxu0 0.0
    %4028 = vmatpush1.msra.mxu0 %v361
    %4029 = vmatprep.subr.mxu0 0.0
    %4030 = vmatpush1.msra.mxu0 %v362
    %4031 = vmatprep.subr.mxu0 0.0
    %4032 = vmatpush1.msra.mxu0 %v363
    %4033 = vmatprep.mubr.f32.mxu0 %v2829
    %4034 = vmatmul.mubr.f32.gmra.mrb[0].mxu0 %v2827
    %v4035 = vpop.f32.mrb[0].mxu0
    %v4036 = vadd.f32 %v3966, %v4035
    %v4037 = vpop.f32.mrb[0].mxu0
    %4038 = vdwg.mxu0
    %4039 = vmatprep.subr.mxu0 0.0
    %4040 = vmatpush1.msra.mxu0 %v364
    %4041 = vmatprep.subr.mxu0 0.0
    %4042 = vmatpush1.msra.mxu0 %v365
    %4043 = vmatprep.subr.mxu0 0.0
    %4044 = vmatpush1.msra.mxu0 %v366
    %4045 = vmatprep.subr.mxu0 0.0
    %4046 = vmatpush1.msra.mxu0 %v367
    %4047 = vmatprep.subr.mxu0 0.0
    %4048 = vmatpush1.msra.mxu0 %v368
    %4049 = vmatprep.subr.mxu0 0.0
    %4050 = vmatpush1.msra.mxu0 %v369
    %4051 = vmatprep.subr.mxu0 0.0
    %4052 = vmatpush1.msra.mxu0 %v370
    %4053 = vmatprep.subr.mxu0 0.0
    %4054 = vmatpush1.msra.mxu0 %v371
    %4055 = vmatprep.subr.mxu0 0.0
    %4056 = vmatpush1.msra.mxu0 %v372
    %4057 = vmatprep.subr.mxu0 0.0
    %4058 = vmatpush1.msra.mxu0 %v373
    %4059 = vmatprep.subr.mxu0 0.0
    %4060 = vmatpush1.msra.mxu0 %v374
    %4061 = vmatprep.subr.mxu0 0.0
    %4062 = vmatpush1.msra.mxu0 %v375
    %4063 = vmatprep.subr.mxu0 0.0
    %4064 = vmatpush1.msra.mxu0 %v376
    %4065 = vmatprep.subr.mxu0 0.0
    %4066 = vmatpush1.msra.mxu0 %v377
    %4067 = vmatprep.subr.mxu0 0.0
    %4068 = vmatpush1.msra.mxu0 %v378
    %4069 = vmatprep.subr.mxu0 0.0
    %4070 = vmatpush1.msra.mxu0 %v379
    %4071 = vmatprep.subr.mxu0 0.0
    %4072 = vmatpush1.msra.mxu0 %v380
    %4073 = vmatprep.subr.mxu0 0.0
    %4074 = vmatpush1.msra.mxu0 %v381
    %4075 = vmatprep.subr.mxu0 0.0
    %4076 = vmatpush1.msra.mxu0 %v382
    %4077 = vmatprep.subr.mxu0 0.0
    %4078 = vmatpush1.msra.mxu0 %v383
    %4079 = vmatprep.subr.mxu0 0.0
    %4080 = vmatpush1.msra.mxu0 %v384
    %4081 = vmatprep.subr.mxu0 0.0
    %4082 = vmatpush1.msra.mxu0 %v385
    %4083 = vmatprep.subr.mxu0 0.0
    %4084 = vmatpush1.msra.mxu0 %v386
    %4085 = vmatprep.subr.mxu0 0.0
    %4086 = vmatpush1.msra.mxu0 %v387
    %4087 = vmatprep.subr.mxu0 0.0
    %4088 = vmatpush1.msra.mxu0 %v388
    %4089 = vmatprep.subr.mxu0 0.0
    %4090 = vmatpush1.msra.mxu0 %v389
    %4091 = vmatprep.subr.mxu0 0.0
    %4092 = vmatpush1.msra.mxu0 %v390
    %4093 = vmatprep.subr.mxu0 0.0
    %4094 = vmatpush1.msra.mxu0 %v391
    %4095 = vmatprep.subr.mxu0 0.0
    %4096 = vmatpush1.msra.mxu0 %v392
    %4097 = vmatprep.subr.mxu0 0.0
    %4098 = vmatpush1.msra.mxu0 %v393
    %4099 = vmatprep.subr.mxu0 0.0
    %4100 = vmatpush1.msra.mxu0 %v394
    %4101 = vmatprep.subr.mxu0 0.0
    %4102 = vmatpush1.msra.mxu0 %v395
    %4103 = vmatprep.mubr.f32.mxu0 %v2845
    %4104 = vmatmul.mubr.f32.gmra.mrb[0].mxu0 %v2837
    %v4105 = vpop.f32.mrb[0].mxu0
    %v4106 = vadd.f32 %v4036, %v4105
    %v4107 = vpop.f32.mrb[0].mxu0
    %4108 = vdwg.mxu0
    %4109 = vmatprep.subr.mxu0 0.0
    %4110 = vmatpush1.msra.mxu0 %v396
    %4111 = vmatprep.subr.mxu0 0.0
    %4112 = vmatpush1.msra.mxu0 %v397
    %4113 = vmatprep.subr.mxu0 0.0
    %4114 = vmatpush1.msra.mxu0 %v398
    %4115 = vmatprep.subr.mxu0 0.0
    %4116 = vmatpush1.msra.mxu0 %v399
    %4117 = vmatprep.subr.mxu0 0.0
    %4118 = vmatpush1.msra.mxu0 %v400
    %4119 = vmatprep.subr.mxu0 0.0
    %4120 = vmatpush1.msra.mxu0 %v401
    %4121 = vmatprep.subr.mxu0 0.0
    %4122 = vmatpush1.msra.mxu0 %v402
    %4123 = vmatprep.subr.mxu0 0.0
    %4124 = vmatpush1.msra.mxu0 %v403
    %4125 = vmatprep.subr.mxu0 0.0
    %4126 = vmatpush1.msra.mxu0 %v404
    %4127 = vmatprep.subr.mxu0 0.0
    %4128 = vmatpush1.msra.mxu0 %v405
    %4129 = vmatprep.subr.mxu0 0.0
    %4130 = vmatpush1.msra.mxu0 %v406
    %4131 = vmatprep.subr.mxu0 0.0
    %4132 = vmatpush1.msra.mxu0 %v407
    %4133 = vmatprep.subr.mxu0 0.0
    %4134 = vmatpush1.msra.mxu0 %v408
    %4135 = vmatprep.subr.mxu0 0.0
    %4136 = vmatpush1.msra.mxu0 %v409
    %4137 = vmatprep.subr.mxu0 0.0
    %4138 = vmatpush1.msra.mxu0 %v410
    %4139 = vmatprep.subr.mxu0 0.0
    %4140 = vmatpush1.msra.mxu0 %v411
    %4141 = vmatprep.subr.mxu0 0.0
    %4142 = vmatpush1.msra.mxu0 %v412
    %4143 = vmatprep.subr.mxu0 0.0
    %4144 = vmatpush1.msra.mxu0 %v413
    %4145 = vmatprep.subr.mxu0 0.0
    %4146 = vmatpush1.msra.mxu0 %v414
    %4147 = vmatprep.subr.mxu0 0.0
    %4148 = vmatpush1.msra.mxu0 %v415
    %4149 = vmatprep.subr.mxu0 0.0
    %4150 = vmatpush1.msra.mxu0 %v416
    %4151 = vmatprep.subr.mxu0 0.0
    %4152 = vmatpush1.msra.mxu0 %v417
    %4153 = vmatprep.subr.mxu0 0.0
    %4154 = vmatpush1.msra.mxu0 %v418
    %4155 = vmatprep.subr.mxu0 0.0
    %4156 = vmatpush1.msra.mxu0 %v419
    %4157 = vmatprep.subr.mxu0 0.0
    %4158 = vmatpush1.msra.mxu0 %v420
    %4159 = vmatprep.subr.mxu0 0.0
    %4160 = vmatpush1.msra.mxu0 %v421
    %4161 = vmatprep.subr.mxu0 0.0
    %4162 = vmatpush1.msra.mxu0 %v422
    %4163 = vmatprep.subr.mxu0 0.0
    %4164 = vmatpush1.msra.mxu0 %v423
    %4165 = vmatprep.subr.mxu0 0.0
    %4166 = vmatpush1.msra.mxu0 %v424
    %4167 = vmatprep.subr.mxu0 0.0
    %4168 = vmatpush1.msra.mxu0 %v425
    %4169 = vmatprep.subr.mxu0 0.0
    %4170 = vmatpush1.msra.mxu0 %v426
    %4171 = vmatprep.subr.mxu0 0.0
    %4172 = vmatpush1.msra.mxu0 %v427
    %4173 = vmatprep.mubr.f32.mxu0 %v2846
    %4174 = vmatmul.mubr.f32.gmra.mrb[0].mxu0 %v2844
    %v4175 = vpop.f32.mrb[0].mxu0
    %v4176 = vadd.f32 %v4106, %v4175
    %v4177 = vpop.f32.mrb[0].mxu0
    %4178 = vdwg.mxu0
    %4179 = vmatprep.subr.mxu0 0.0
    %4180 = vmatpush1.msra.mxu0 %v428
    %4181 = vmatprep.subr.mxu0 0.0
    %4182 = vmatpush1.msra.mxu0 %v429
    %4183 = vmatprep.subr.mxu0 0.0
    %4184 = vmatpush1.msra.mxu0 %v430
    %4185 = vmatprep.subr.mxu0 0.0
    %4186 = vmatpush1.msra.mxu0 %v431
    %4187 = vmatprep.subr.mxu0 0.0
    %4188 = vmatpush1.msra.mxu0 %v432
    %4189 = vmatprep.subr.mxu0 0.0
    %4190 = vmatpush1.msra.mxu0 %v433
    %4191 = vmatprep.subr.mxu0 0.0
    %4192 = vmatpush1.msra.mxu0 %v434
    %4193 = vmatprep.subr.mxu0 0.0
    %4194 = vmatpush1.msra.mxu0 %v435
    %4195 = vmatprep.subr.mxu0 0.0
    %4196 = vmatpush1.msra.mxu0 %v436
    %4197 = vmatprep.subr.mxu0 0.0
    %4198 = vmatpush1.msra.mxu0 %v437
    %4199 = vmatprep.subr.mxu0 0.0
    %4200 = vmatpush1.msra.mxu0 %v438
    %4201 = vmatprep.subr.mxu0 0.0
    %4202 = vmatpush1.msra.mxu0 %v439
    %4203 = vmatprep.subr.mxu0 0.0
    %4204 = vmatpush1.msra.mxu0 %v440
    %4205 = vmatprep.subr.mxu0 0.0
    %4206 = vmatpush1.msra.mxu0 %v441
    %4207 = vmatprep.subr.mxu0 0.0
    %4208 = vmatpush1.msra.mxu0 %v442
    %4209 = vmatprep.subr.mxu0 0.0
    %4210 = vmatpush1.msra.mxu0 %v443
    %4211 = vmatprep.subr.mxu0 0.0
    %4212 = vmatpush1.msra.mxu0 %v444
    %4213 = vmatprep.subr.mxu0 0.0
    %4214 = vmatpush1.msra.mxu0 %v445
    %4215 = vmatprep.subr.mxu0 0.0
    %4216 = vmatpush1.msra.mxu0 %v446
    %4217 = vmatprep.subr.mxu0 0.0
    %4218 = vmatpush1.msra.mxu0 %v447
    %4219 = vmatprep.subr.mxu0 0.0
    %4220 = vmatpush1.msra.mxu0 %v448
    %4221 = vmatprep.subr.mxu0 0.0
    %4222 = vmatpush1.msra.mxu0 %v449
    %4223 = vmatprep.subr.mxu0 0.0
    %4224 = vmatpush1.msra.mxu0 %v450
    %4225 = vmatprep.subr.mxu0 0.0
    %4226 = vmatpush1.msra.mxu0 %v451
    %4227 = vmatprep.subr.mxu0 0.0
    %4228 = vmatpush1.msra.mxu0 %v452
    %4229 = vmatprep.subr.mxu0 0.0
    %4230 = vmatpush1.msra.mxu0 %v453
    %4231 = vmatprep.subr.mxu0 0.0
    %4232 = vmatpush1.msra.mxu0 %v454
    %4233 = vmatprep.subr.mxu0 0.0
    %4234 = vmatpush1.msra.mxu0 %v455
    %4235 = vmatprep.subr.mxu0 0.0
    %4236 = vmatpush1.msra.mxu0 %v456
    %4237 = vmatprep.subr.mxu0 0.0
    %4238 = vmatpush1.msra.mxu0 %v457
    %4239 = vmatprep.subr.mxu0 0.0
    %4240 = vmatpush1.msra.mxu0 %v458
    %4241 = vmatprep.subr.mxu0 0.0
    %4242 = vmatpush1.msra.mxu0 %v459
    %4243 = vmatprep.mubr.f32.mxu0 %v2862
    %4244 = vmatmul.mubr.f32.gmra.mrb[0].mxu0 %v2854
    %v4245 = vpop.f32.mrb[0].mxu0
    %v4246 = vadd.f32 %v4176, %v4245
    %v4247 = vpop.f32.mrb[0].mxu0
    %4248 = vdwg.mxu0
    %4249 = vmatprep.subr.mxu0 0.0
    %4250 = vmatpush1.msra.mxu0 %v460
    %4251 = vmatprep.subr.mxu0 0.0
    %4252 = vmatpush1.msra.mxu0 %v461
    %4253 = vmatprep.subr.mxu0 0.0
    %4254 = vmatpush1.msra.mxu0 %v462
    %4255 = vmatprep.subr.mxu0 0.0
    %4256 = vmatpush1.msra.mxu0 %v463
    %4257 = vmatprep.subr.mxu0 0.0
    %4258 = vmatpush1.msra.mxu0 %v464
    %4259 = vmatprep.subr.mxu0 0.0
    %4260 = vmatpush1.msra.mxu0 %v465
    %4261 = vmatprep.subr.mxu0 0.0
    %4262 = vmatpush1.msra.mxu0 %v466
    %4263 = vmatprep.subr.mxu0 0.0
    %4264 = vmatpush1.msra.mxu0 %v467
    %4265 = vmatprep.subr.mxu0 0.0
    %4266 = vmatpush1.msra.mxu0 %v468
    %4267 = vmatprep.subr.mxu0 0.0
    %4268 = vmatpush1.msra.mxu0 %v469
    %4269 = vmatprep.subr.mxu0 0.0
    %4270 = vmatpush1.msra.mxu0 %v470
    %4271 = vmatprep.subr.mxu0 0.0
    %4272 = vmatpush1.msra.mxu0 %v471
    %4273 = vmatprep.subr.mxu0 0.0
    %4274 = vmatpush1.msra.mxu0 %v472
    %4275 = vmatprep.subr.mxu0 0.0
    %4276 = vmatpush1.msra.mxu0 %v473
    %4277 = vmatprep.subr.mxu0 0.0
    %4278 = vmatpush1.msra.mxu0 %v474
    %4279 = vmatprep.subr.mxu0 0.0
    %4280 = vmatpush1.msra.mxu0 %v475
    %4281 = vmatprep.subr.mxu0 0.0
    %4282 = vmatpush1.msra.mxu0 %v476
    %4283 = vmatprep.subr.mxu0 0.0
    %4284 = vmatpush1.msra.mxu0 %v477
    %4285 = vmatprep.subr.mxu0 0.0
    %4286 = vmatpush1.msra.mxu0 %v478
    %4287 = vmatprep.subr.mxu0 0.0
    %4288 = vmatpush1.msra.mxu0 %v479
    %4289 = vmatprep.subr.mxu0 0.0
    %4290 = vmatpush1.msra.mxu0 %v480
    %4291 = vmatprep.subr.mxu0 0.0
    %4292 = vmatpush1.msra.mxu0 %v481
    %4293 = vmatprep.subr.mxu0 0.0
    %4294 = vmatpush1.msra.mxu0 %v482
    %4295 = vmatprep.subr.mxu0 0.0
    %4296 = vmatpush1.msra.mxu0 %v483
    %4297 = vmatprep.subr.mxu0 0.0
    %4298 = vmatpush1.msra.mxu0 %v484
    %4299 = vmatprep.subr.mxu0 0.0
    %4300 = vmatpush1.msra.mxu0 %v485
    %4301 = vmatprep.subr.mxu0 0.0
    %4302 = vmatpush1.msra.mxu0 %v486
    %4303 = vmatprep.subr.mxu0 0.0
    %4304 = vmatpush1.msra.mxu0 %v487
    %4305 = vmatprep.subr.mxu0 0.0
    %4306 = vmatpush1.msra.mxu0 %v488
    %4307 = vmatprep.subr.mxu0 0.0
    %4308 = vmatpush1.msra.mxu0 %v489
    %4309 = vmatprep.subr.mxu0 0.0
    %4310 = vmatpush1.msra.mxu0 %v490
    %4311 = vmatprep.subr.mxu0 0.0
    %4312 = vmatpush1.msra.mxu0 %v491
    %4313 = vmatprep.mubr.f32.mxu0 %v2863
    %4314 = vmatmul.mubr.f32.gmra.mrb[0].mxu0 %v2861
    %v4315 = vpop.f32.mrb[0].mxu0
    %v4316 = vadd.f32 %v4246, %v4315
    %v4317 = vpop.f32.mrb[0].mxu0
    %4318 = vdwg.mxu0
    %4319 = vmatprep.subr.mxu0 0.0
    %4320 = vmatpush1.msra.mxu0 %v492
    %4321 = vmatprep.subr.mxu0 0.0
    %4322 = vmatpush1.msra.mxu0 %v493
    %4323 = vmatprep.subr.mxu0 0.0
    %4324 = vmatpush1.msra.mxu0 %v494
    %4325 = vmatprep.subr.mxu0 0.0
    %4326 = vmatpush1.msra.mxu0 %v495
    %4327 = vmatprep.subr.mxu0 0.0
    %4328 = vmatpush1.msra.mxu0 %v496
    %4329 = vmatprep.subr.mxu0 0.0
    %4330 = vmatpush1.msra.mxu0 %v497
    %4331 = vmatprep.subr.mxu0 0.0
    %4332 = vmatpush1.msra.mxu0 %v498
    %4333 = vmatprep.subr.mxu0 0.0
    %4334 = vmatpush1.msra.mxu0 %v499
    %4335 = vmatprep.subr.mxu0 0.0
    %4336 = vmatpush1.msra.mxu0 %v500
    %4337 = vmatprep.subr.mxu0 0.0
    %4338 = vmatpush1.msra.mxu0 %v501
    %4339 = vmatprep.subr.mxu0 0.0
    %4340 = vmatpush1.msra.mxu0 %v502
    %4341 = vmatprep.subr.mxu0 0.0
    %4342 = vmatpush1.msra.mxu0 %v503
    %4343 = vmatprep.subr.mxu0 0.0
    %4344 = vmatpush1.msra.mxu0 %v504
    %4345 = vmatprep.subr.mxu0 0.0
    %4346 = vmatpush1.msra.mxu0 %v505
    %4347 = vmatprep.subr.mxu0 0.0
    %4348 = vmatpush1.msra.mxu0 %v506
    %4349 = vmatprep.subr.mxu0 0.0
    %4350 = vmatpush1.msra.mxu0 %v507
    %4351 = vmatprep.subr.mxu0 0.0
    %4352 = vmatpush1.msra.mxu0 %v508
    %4353 = vmatprep.subr.mxu0 0.0
    %4354 = vmatpush1.msra.mxu0 %v509
    %4355 = vmatprep.subr.mxu0 0.0
    %4356 = vmatpush1.msra.mxu0 %v510
    %4357 = vmatprep.subr.mxu0 0.0
    %4358 = vmatpush1.msra.mxu0 %v511
    %4359 = vmatprep.subr.mxu0 0.0
    %4360 = vmatpush1.msra.mxu0 %v512
    %4361 = vmatprep.subr.mxu0 0.0
    %4362 = vmatpush1.msra.mxu0 %v513
    %4363 = vmatprep.subr.mxu0 0.0
    %4364 = vmatpush1.msra.mxu0 %v514
    %4365 = vmatprep.subr.mxu0 0.0
    %4366 = vmatpush1.msra.mxu0 %v515
    %4367 = vmatprep.subr.mxu0 0.0
    %4368 = vmatpush1.msra.mxu0 %v516
    %4369 = vmatprep.subr.mxu0 0.0
    %4370 = vmatpush1.msra.mxu0 %v517
    %4371 = vmatprep.subr.mxu0 0.0
    %4372 = vmatpush1.msra.mxu0 %v518
    %4373 = vmatprep.subr.mxu0 0.0
    %4374 = vmatpush1.msra.mxu0 %v519
    %4375 = vmatprep.subr.mxu0 0.0
    %4376 = vmatpush1.msra.mxu0 %v520
    %4377 = vmatprep.subr.mxu0 0.0
    %4378 = vmatpush1.msra.mxu0 %v521
    %4379 = vmatprep.subr.mxu0 0.0
    %4380 = vmatpush1.msra.mxu0 %v522
    %4381 = vmatprep.subr.mxu0 0.0
    %4382 = vmatpush1.msra.mxu0 %v523
    %4383 = vmatprep.mubr.f32.mxu0 %v2879
    %4384 = vmatmul.mubr.f32.gmra.mrb[0].mxu0 %v2871
    %v4385 = vpop.f32.mrb[0].mxu0
    %v4386 = vadd.f32 %v4316, %v4385
    %v4387 = vpop.f32.mrb[0].mxu0
    %4388 = vdwg.mxu0
    %4389 = vmatprep.subr.mxu0 0.0
    %4390 = vmatpush1.msra.mxu0 %v524
    %4391 = vmatprep.subr.mxu0 0.0
    %4392 = vmatpush1.msra.mxu0 %v525
    %4393 = vmatprep.subr.mxu0 0.0
    %4394 = vmatpush1.msra.mxu0 %v526
    %4395 = vmatprep.subr.mxu0 0.0
    %4396 = vmatpush1.msra.mxu0 %v527
    %4397 = vmatprep.subr.mxu0 0.0
    %4398 = vmatpush1.msra.mxu0 %v528
    %4399 = vmatprep.subr.mxu0 0.0
    %4400 = vmatpush1.msra.mxu0 %v529
    %4401 = vmatprep.subr.mxu0 0.0
    %4402 = vmatpush1.msra.mxu0 %v530
    %4403 = vmatprep.subr.mxu0 0.0
    %4404 = vmatpush1.msra.mxu0 %v531
    %4405 = vmatprep.subr.mxu0 0.0
    %4406 = vmatpush1.msra.mxu0 %v532
    %4407 = vmatprep.subr.mxu0 0.0
    %4408 = vmatpush1.msra.mxu0 %v533
    %4409 = vmatprep.subr.mxu0 0.0
    %4410 = vmatpush1.msra.mxu0 %v534
    %4411 = vmatprep.subr.mxu0 0.0
    %4412 = vmatpush1.msra.mxu0 %v535
    %4413 = vmatprep.subr.mxu0 0.0
    %4414 = vmatpush1.msra.mxu0 %v536
    %4415 = vmatprep.subr.mxu0 0.0
    %4416 = vmatpush1.msra.mxu0 %v537
    %4417 = vmatprep.subr.mxu0 0.0
    %4418 = vmatpush1.msra.mxu0 %v538
    %4419 = vmatprep.subr.mxu0 0.0
    %4420 = vmatpush1.msra.mxu0 %v539
    %4421 = vmatprep.subr.mxu0 0.0
    %4422 = vmatpush1.msra.mxu0 %v540
    %4423 = vmatprep.subr.mxu0 0.0
    %4424 = vmatpush1.msra.mxu0 %v541
    %4425 = vmatprep.subr.mxu0 0.0
    %4426 = vmatpush1.msra.mxu0 %v542
    %4427 = vmatprep.subr.mxu0 0.0
    %4428 = vmatpush1.msra.mxu0 %v543
    %4429 = vmatprep.subr.mxu0 0.0
    %4430 = vmatpush1.msra.mxu0 %v544
    %4431 = vmatprep.subr.mxu0 0.0
    %4432 = vmatpush1.msra.mxu0 %v545
    %4433 = vmatprep.subr.mxu0 0.0
    %4434 = vmatpush1.msra.mxu0 %v546
    %4435 = vmatprep.subr.mxu0 0.0
    %4436 = vmatpush1.msra.mxu0 %v547
    %4437 = vmatprep.subr.mxu0 0.0
    %4438 = vmatpush1.msra.mxu0 %v548
    %4439 = vmatprep.subr.mxu0 0.0
    %4440 = vmatpush1.msra.mxu0 %v549
    %4441 = vmatprep.subr.mxu0 0.0
    %4442 = vmatpush1.msra.mxu0 %v550
    %4443 = vmatprep.subr.mxu0 0.0
    %4444 = vmatpush1.msra.mxu0 %v551
    %4445 = vmatprep.subr.mxu0 0.0
    %4446 = vmatpush1.msra.mxu0 %v552
    %4447 = vmatprep.subr.mxu0 0.0
    %4448 = vmatpush1.msra.mxu0 %v553
    %4449 = vmatprep.subr.mxu0 0.0
    %4450 = vmatpush1.msra.mxu0 %v554
    %4451 = vmatprep.subr.mxu0 0.0
    %4452 = vmatpush1.msra.mxu0 %v555
    %4453 = vmatprep.mubr.f32.mxu0 %v2880
    %4454 = vmatmul.mubr.f32.gmra.mrb[0].mxu0 %v2878
    %v4455 = vpop.f32.mrb[0].mxu0
    %v4456 = vadd.f32 %v4386, %v4455
    %v4457 = vpop.f32.mrb[0].mxu0
    %4458 = vdwg.mxu0
    %4459 = vmatprep.subr.mxu0 0.0
    %4460 = vmatpush1.msra.mxu0 %v556
    %4461 = vmatprep.subr.mxu0 0.0
    %4462 = vmatpush1.msra.mxu0 %v557
    %4463 = vmatprep.subr.mxu0 0.0
    %4464 = vmatpush1.msra.mxu0 %v558
    %4465 = vmatprep.subr.mxu0 0.0
    %4466 = vmatpush1.msra.mxu0 %v559
    %4467 = vmatprep.subr.mxu0 0.0
    %4468 = vmatpush1.msra.mxu0 %v560
    %4469 = vmatprep.subr.mxu0 0.0
    %4470 = vmatpush1.msra.mxu0 %v561
    %4471 = vmatprep.subr.mxu0 0.0
    %4472 = vmatpush1.msra.mxu0 %v562
    %4473 = vmatprep.subr.mxu0 0.0
    %4474 = vmatpush1.msra.mxu0 %v563
    %4475 = vmatprep.subr.mxu0 0.0
    %4476 = vmatpush1.msra.mxu0 %v564
    %4477 = vmatprep.subr.mxu0 0.0
    %4478 = vmatpush1.msra.mxu0 %v565
    %4479 = vmatprep.subr.mxu0 0.0
    %4480 = vmatpush1.msra.mxu0 %v566
    %4481 = vmatprep.subr.mxu0 0.0
    %4482 = vmatpush1.msra.mxu0 %v567
    %4483 = vmatprep.subr.mxu0 0.0
    %4484 = vmatpush1.msra.mxu0 %v568
    %4485 = vmatprep.subr.mxu0 0.0
    %4486 = vmatpush1.msra.mxu0 %v569
    %4487 = vmatprep.subr.mxu0 0.0
    %4488 = vmatpush1.msra.mxu0 %v570
    %4489 = vmatprep.subr.mxu0 0.0
    %4490 = vmatpush1.msra.mxu0 %v571
    %4491 = vmatprep.subr.mxu0 0.0
    %4492 = vmatpush1.msra.mxu0 %v572
    %4493 = vmatprep.subr.mxu0 0.0
    %4494 = vmatpush1.msra.mxu0 %v573
    %4495 = vmatprep.subr.mxu0 0.0
    %4496 = vmatpush1.msra.mxu0 %v574
    %4497 = vmatprep.subr.mxu0 0.0
    %4498 = vmatpush1.msra.mxu0 %v575
    %4499 = vmatprep.subr.mxu0 0.0
    %4500 = vmatpush1.msra.mxu0 %v576
    %4501 = vmatprep.subr.mxu0 0.0
    %4502 = vmatpush1.msra.mxu0 %v577
    %4503 = vmatprep.subr.mxu0 0.0
    %4504 = vmatpush1.msra.mxu0 %v578
    %4505 = vmatprep.subr.mxu0 0.0
    %4506 = vmatpush1.msra.mxu0 %v579
    %4507 = vmatprep.subr.mxu0 0.0
    %4508 = vmatpush1.msra.mxu0 %v580
    %4509 = vmatprep.subr.mxu0 0.0
    %4510 = vmatpush1.msra.mxu0 %v581
    %4511 = vmatprep.subr.mxu0 0.0
    %4512 = vmatpush1.msra.mxu0 %v582
    %4513 = vmatprep.subr.mxu0 0.0
    %4514 = vmatpush1.msra.mxu0 %v583
    %4515 = vmatprep.subr.mxu0 0.0
    %4516 = vmatpush1.msra.mxu0 %v584
    %4517 = vmatprep.subr.mxu0 0.0
    %4518 = vmatpush1.msra.mxu0 %v585
    %4519 = vmatprep.subr.mxu0 0.0
    %4520 = vmatpush1.msra.mxu0 %v586
    %4521 = vmatprep.subr.mxu0 0.0
    %4522 = vmatpush1.msra.mxu0 %v587
    %4523 = vmatprep.mubr.f32.mxu0 %v2896
    %4524 = vmatmul.mubr.f32.gmra.mrb[0].mxu0 %v2888
    %v4525 = vpop.f32.mrb[0].mxu0
    %v4526 = vadd.f32 %v4456, %v4525
    %v4527 = vpop.f32.mrb[0].mxu0
    %4528 = vdwg.mxu0
    %4529 = vmatprep.subr.mxu0 0.0
    %4530 = vmatpush1.msra.mxu0 %v588
    %4531 = vmatprep.subr.mxu0 0.0
    %4532 = vmatpush1.msra.mxu0 %v589
    %4533 = vmatprep.subr.mxu0 0.0
    %4534 = vmatpush1.msra.mxu0 %v590
    %4535 = vmatprep.subr.mxu0 0.0
    %4536 = vmatpush1.msra.mxu0 %v591
    %4537 = vmatprep.subr.mxu0 0.0
    %4538 = vmatpush1.msra.mxu0 %v592
    %4539 = vmatprep.subr.mxu0 0.0
    %4540 = vmatpush1.msra.mxu0 %v593
    %4541 = vmatprep.subr.mxu0 0.0
    %4542 = vmatpush1.msra.mxu0 %v594
    %4543 = vmatprep.subr.mxu0 0.0
    %4544 = vmatpush1.msra.mxu0 %v595
    %4545 = vmatprep.subr.mxu0 0.0
    %4546 = vmatpush1.msra.mxu0 %v596
    %4547 = vmatprep.subr.mxu0 0.0
    %4548 = vmatpush1.msra.mxu0 %v597
    %4549 = vmatprep.subr.mxu0 0.0
    %4550 = vmatpush1.msra.mxu0 %v598
    %4551 = vmatprep.subr.mxu0 0.0
    %4552 = vmatpush1.msra.mxu0 %v599
    %4553 = vmatprep.subr.mxu0 0.0
    %4554 = vmatpush1.msra.mxu0 %v600
    %4555 = vmatprep.subr.mxu0 0.0
    %4556 = vmatpush1.msra.mxu0 %v601
    %4557 = vmatprep.subr.mxu0 0.0
    %4558 = vmatpush1.msra.mxu0 %v602
    %4559 = vmatprep.subr.mxu0 0.0
    %4560 = vmatpush1.msra.mxu0 %v603
    %4561 = vmatprep.subr.mxu0 0.0
    %4562 = vmatpush1.msra.mxu0 %v604
    %4563 = vmatprep.subr.mxu0 0.0
    %4564 = vmatpush1.msra.mxu0 %v605
    %4565 = vmatprep.subr.mxu0 0.0
    %4566 = vmatpush1.msra.mxu0 %v606
    %4567 = vmatprep.subr.mxu0 0.0
    %4568 = vmatpush1.msra.mxu0 %v607
    %4569 = vmatprep.subr.mxu0 0.0
    %4570 = vmatpush1.msra.mxu0 %v608
    %4571 = vmatprep.subr.mxu0 0.0
    %4572 = vmatpush1.msra.mxu0 %v609
    %4573 = vmatprep.subr.mxu0 0.0
    %4574 = vmatpush1.msra.mxu0 %v610
    %4575 = vmatprep.subr.mxu0 0.0
    %4576 = vmatpush1.msra.mxu0 %v611
    %4577 = vmatprep.subr.mxu0 0.0
    %4578 = vmatpush1.msra.mxu0 %v612
    %4579 = vmatprep.subr.mxu0 0.0
    %4580 = vmatpush1.msra.mxu0 %v613
    %4581 = vmatprep.subr.mxu0 0.0
    %4582 = vmatpush1.msra.mxu0 %v614
    %4583 = vmatprep.subr.mxu0 0.0
    %4584 = vmatpush1.msra.mxu0 %v615
    %4585 = vmatprep.subr.mxu0 0.0
    %4586 = vmatpush1.msra.mxu0 %v616
    %4587 = vmatprep.subr.mxu0 0.0
    %4588 = vmatpush1.msra.mxu0 %v617
    %4589 = vmatprep.subr.mxu0 0.0
    %4590 = vmatpush1.msra.mxu0 %v618
    %4591 = vmatprep.subr.mxu0 0.0
    %4592 = vmatpush1.msra.mxu0 %v619
    %4593 = vmatprep.mubr.f32.mxu0 %v2897
    %4594 = vmatmul.mubr.f32.gmra.mrb[0].mxu0 %v2895
    %v4595 = vpop.f32.mrb[0].mxu0
    %v4596 = vadd.f32 %v4526, %v4595
    %v4597 = vpop.f32.mrb[0].mxu0
    %4598 = vdwg.mxu0
    %4599 = vmatprep.subr.mxu0 0.0
    %4600 = vmatpush1.msra.mxu0 %v620
    %4601 = vmatprep.subr.mxu0 0.0
    %4602 = vmatpush1.msra.mxu0 %v621
    %4603 = vmatprep.subr.mxu0 0.0
    %4604 = vmatpush1.msra.mxu0 %v622
    %4605 = vmatprep.subr.mxu0 0.0
    %4606 = vmatpush1.msra.mxu0 %v623
    %4607 = vmatprep.subr.mxu0 0.0
    %4608 = vmatpush1.msra.mxu0 %v624
    %4609 = vmatprep.subr.mxu0 0.0
    %4610 = vmatpush1.msra.mxu0 %v625
    %4611 = vmatprep.subr.mxu0 0.0
    %4612 = vmatpush1.msra.mxu0 %v626
    %4613 = vmatprep.subr.mxu0 0.0
    %4614 = vmatpush1.msra.mxu0 %v627
    %4615 = vmatprep.subr.mxu0 0.0
    %4616 = vmatpush1.msra.mxu0 %v628
    %4617 = vmatprep.subr.mxu0 0.0
    %4618 = vmatpush1.msra.mxu0 %v629
    %4619 = vmatprep.subr.mxu0 0.0
    %4620 = vmatpush1.msra.mxu0 %v630
    %4621 = vmatprep.subr.mxu0 0.0
    %4622 = vmatpush1.msra.mxu0 %v631
    %4623 = vmatprep.subr.mxu0 0.0
    %4624 = vmatpush1.msra.mxu0 %v632
    %4625 = vmatprep.subr.mxu0 0.0
    %4626 = vmatpush1.msra.mxu0 %v633
    %4627 = vmatprep.subr.mxu0 0.0
    %4628 = vmatpush1.msra.mxu0 %v634
    %4629 = vmatprep.subr.mxu0 0.0
    %4630 = vmatpush1.msra.mxu0 %v635
    %4631 = vmatprep.subr.mxu0 0.0
    %4632 = vmatpush1.msra.mxu0 %v636
    %4633 = vmatprep.subr.mxu0 0.0
    %4634 = vmatpush1.msra.mxu0 %v637
    %4635 = vmatprep.subr.mxu0 0.0
    %4636 = vmatpush1.msra.mxu0 %v638
    %4637 = vmatprep.subr.mxu0 0.0
    %4638 = vmatpush1.msra.mxu0 %v639
    %4639 = vmatprep.subr.mxu0 0.0
    %4640 = vmatpush1.msra.mxu0 %v640
    %4641 = vmatprep.subr.mxu0 0.0
    %4642 = vmatpush1.msra.mxu0 %v641
    %4643 = vmatprep.subr.mxu0 0.0
    %4644 = vmatpush1.msra.mxu0 %v642
    %4645 = vmatprep.subr.mxu0 0.0
    %4646 = vmatpush1.msra.mxu0 %v643
    %4647 = vmatprep.subr.mxu0 0.0
    %4648 = vmatpush1.msra.mxu0 %v644
    %4649 = vmatprep.subr.mxu0 0.0
    %4650 = vmatpush1.msra.mxu0 %v645
    %4651 = vmatprep.subr.mxu0 0.0
    %4652 = vmatpush1.msra.mxu0 %v646
    %4653 = vmatprep.subr.mxu0 0.0
    %4654 = vmatpush1.msra.mxu0 %v647
    %4655 = vmatprep.subr.mxu0 0.0
    %4656 = vmatpush1.msra.mxu0 %v648
    %4657 = vmatprep.subr.mxu0 0.0
    %4658 = vmatpush1.msra.mxu0 %v649
    %4659 = vmatprep.subr.mxu0 0.0
    %4660 = vmatpush1.msra.mxu0 %v650
    %4661 = vmatprep.subr.mxu0 0.0
    %4662 = vmatpush1.msra.mxu0 %v651
    %4663 = vmatprep.mubr.f32.mxu0 %v2913
    %4664 = vmatmul.mubr.f32.gmra.mrb[0].mxu0 %v2905
    %v4665 = vpop.f32.mrb[0].mxu0
    %v4666 = vadd.f32 %v4596, %v4665
    %v4667 = vpop.f32.mrb[0].mxu0
    %4668 = vdwg.mxu0
    %4669 = vmatprep.subr.mxu0 0.0
    %4670 = vmatpush1.msra.mxu0 %v652
    %4671 = vmatprep.subr.mxu0 0.0
    %4672 = vmatpush1.msra.mxu0 %v653
    %4673 = vmatprep.subr.mxu0 0.0
    %4674 = vmatpush1.msra.mxu0 %v654
    %4675 = vmatprep.subr.mxu0 0.0
    %4676 = vmatpush1.msra.mxu0 %v655
    %4677 = vmatprep.subr.mxu0 0.0
    %4678 = vmatpush1.msra.mxu0 %v656
    %4679 = vmatprep.subr.mxu0 0.0
    %4680 = vmatpush1.msra.mxu0 %v657
    %4681 = vmatprep.subr.mxu0 0.0
    %4682 = vmatpush1.msra.mxu0 %v658
    %4683 = vmatprep.subr.mxu0 0.0
    %4684 = vmatpush1.msra.mxu0 %v659
    %4685 = vmatprep.subr.mxu0 0.0
    %4686 = vmatpush1.msra.mxu0 %v660
    %4687 = vmatprep.subr.mxu0 0.0
    %4688 = vmatpush1.msra.mxu0 %v661
    %4689 = vmatprep.subr.mxu0 0.0
    %4690 = vmatpush1.msra.mxu0 %v662
    %4691 = vmatprep.subr.mxu0 0.0
    %4692 = vmatpush1.msra.mxu0 %v663
    %4693 = vmatprep.subr.mxu0 0.0
    %4694 = vmatpush1.msra.mxu0 %v664
    %4695 = vmatprep.subr.mxu0 0.0
    %4696 = vmatpush1.msra.mxu0 %v665
    %4697 = vmatprep.subr.mxu0 0.0
    %4698 = vmatpush1.msra.mxu0 %v666
    %4699 = vmatprep.subr.mxu0 0.0
    %4700 = vmatpush1.msra.mxu0 %v667
    %4701 = vmatprep.subr.mxu0 0.0
    %4702 = vmatpush1.msra.mxu0 %v668
    %4703 = vmatprep.subr.mxu0 0.0
    %4704 = vmatpush1.msra.mxu0 %v669
    %4705 = vmatprep.subr.mxu0 0.0
    %4706 = vmatpush1.msra.mxu0 %v670
    %4707 = vmatprep.subr.mxu0 0.0
    %4708 = vmatpush1.msra.mxu0 %v671
    %4709 = vmatprep.subr.mxu0 0.0
    %4710 = vmatpush1.msra.mxu0 %v672
    %4711 = vmatprep.subr.mxu0 0.0
    %4712 = vmatpush1.msra.mxu0 %v673
    %4713 = vmatprep.subr.mxu0 0.0
    %4714 = vmatpush1.msra.mxu0 %v674
    %4715 = vmatprep.subr.mxu0 0.0
    %4716 = vmatpush1.msra.mxu0 %v675
    %4717 = vmatprep.subr.mxu0 0.0
    %4718 = vmatpush1.msra.mxu0 %v676
    %4719 = vmatprep.subr.mxu0 0.0
    %4720 = vmatpush1.msra.mxu0 %v677
    %4721 = vmatprep.subr.mxu0 0.0
    %4722 = vmatpush1.msra.mxu0 %v678
    %4723 = vmatprep.subr.mxu0 0.0
    %4724 = vmatpush1.msra.mxu0 %v679
    %4725 = vmatprep.subr.mxu0 0.0
    %4726 = vmatpush1.msra.mxu0 %v680
    %4727 = vmatprep.subr.mxu0 0.0
    %4728 = vmatpush1.msra.mxu0 %v681
    %4729 = vmatprep.subr.mxu0 0.0
    %4730 = vmatpush1.msra.mxu0 %v682
    %4731 = vmatprep.subr.mxu0 0.0
    %4732 = vmatpush1.msra.mxu0 %v683
    %4733 = vmatprep.mubr.f32.mxu0 %v2914
    %4734 = vmatmul.mubr.f32.gmra.mrb[0].mxu0 %v2912
    %v4735 = vpop.f32.mrb[0].mxu0
    %v4736 = vadd.f32 %v4666, %v4735
    %v4737 = vpop.f32.mrb[0].mxu0
    %4738 = vdwg.mxu0
    %4739 = vmatprep.subr.mxu0 0.0
    %4740 = vmatpush1.msra.mxu0 %v684
    %4741 = vmatprep.subr.mxu0 0.0
    %4742 = vmatpush1.msra.mxu0 %v685
    %4743 = vmatprep.subr.mxu0 0.0
    %4744 = vmatpush1.msra.mxu0 %v686
    %4745 = vmatprep.subr.mxu0 0.0
    %4746 = vmatpush1.msra.mxu0 %v687
    %4747 = vmatprep.subr.mxu0 0.0
    %4748 = vmatpush1.msra.mxu0 %v688
    %4749 = vmatprep.subr.mxu0 0.0
    %4750 = vmatpush1.msra.mxu0 %v689
    %4751 = vmatprep.subr.mxu0 0.0
    %4752 = vmatpush1.msra.mxu0 %v690
    %4753 = vmatprep.subr.mxu0 0.0
    %4754 = vmatpush1.msra.mxu0 %v691
    %4755 = vmatprep.subr.mxu0 0.0
    %4756 = vmatpush1.msra.mxu0 %v692
    %4757 = vmatprep.subr.mxu0 0.0
    %4758 = vmatpush1.msra.mxu0 %v693
    %4759 = vmatprep.subr.mxu0 0.0
    %4760 = vmatpush1.msra.mxu0 %v694
    %4761 = vmatprep.subr.mxu0 0.0
    %4762 = vmatpush1.msra.mxu0 %v695
    %4763 = vmatprep.subr.mxu0 0.0
    %4764 = vmatpush1.msra.mxu0 %v696
    %4765 = vmatprep.subr.mxu0 0.0
    %4766 = vmatpush1.msra.mxu0 %v697
    %4767 = vmatprep.subr.mxu0 0.0
    %4768 = vmatpush1.msra.mxu0 %v698
    %4769 = vmatprep.subr.mxu0 0.0
    %4770 = vmatpush1.msra.mxu0 %v699
    %4771 = vmatprep.subr.mxu0 0.0
    %4772 = vmatpush1.msra.mxu0 %v700
    %4773 = vmatprep.subr.mxu0 0.0
    %4774 = vmatpush1.msra.mxu0 %v701
    %4775 = vmatprep.subr.mxu0 0.0
    %4776 = vmatpush1.msra.mxu0 %v702
    %4777 = vmatprep.subr.mxu0 0.0
    %4778 = vmatpush1.msra.mxu0 %v703
    %4779 = vmatprep.subr.mxu0 0.0
    %4780 = vmatpush1.msra.mxu0 %v704
    %4781 = vmatprep.subr.mxu0 0.0
    %4782 = vmatpush1.msra.mxu0 %v705
    %4783 = vmatprep.subr.mxu0 0.0
    %4784 = vmatpush1.msra.mxu0 %v706
    %4785 = vmatprep.subr.mxu0 0.0
    %4786 = vmatpush1.msra.mxu0 %v707
    %4787 = vmatprep.subr.mxu0 0.0
    %4788 = vmatpush1.msra.mxu0 %v708
    %4789 = vmatprep.subr.mxu0 0.0
    %4790 = vmatpush1.msra.mxu0 %v709
    %4791 = vmatprep.subr.mxu0 0.0
    %4792 = vmatpush1.msra.mxu0 %v710
    %4793 = vmatprep.subr.mxu0 0.0
    %4794 = vmatpush1.msra.mxu0 %v711
    %4795 = vmatprep.subr.mxu0 0.0
    %4796 = vmatpush1.msra.mxu0 %v712
    %4797 = vmatprep.subr.mxu0 0.0
    %4798 = vmatpush1.msra.mxu0 %v713
    %4799 = vmatprep.subr.mxu0 0.0
    %4800 = vmatpush1.msra.mxu0 %v714
    %4801 = vmatprep.subr.mxu0 0.0
    %4802 = vmatpush1.msra.mxu0 %v715
    %4803 = vmatprep.mubr.f32.mxu0 %v2930
    %4804 = vmatmul.mubr.f32.gmra.mrb[0].mxu0 %v2922
    %v4805 = vpop.f32.mrb[0].mxu0
    %v4806 = vadd.f32 %v4736, %v4805
    %v4807 = vpop.f32.mrb[0].mxu0
    %4808 = vdwg.mxu0
    %4809 = vmatprep.subr.mxu0 0.0
    %4810 = vmatpush1.msra.mxu0 %v716
    %4811 = vmatprep.subr.mxu0 0.0
    %4812 = vmatpush1.msra.mxu0 %v717
    %4813 = vmatprep.subr.mxu0 0.0
    %4814 = vmatpush1.msra.mxu0 %v718
    %4815 = vmatprep.subr.mxu0 0.0
    %4816 = vmatpush1.msra.mxu0 %v719
    %4817 = vmatprep.subr.mxu0 0.0
    %4818 = vmatpush1.msra.mxu0 %v720
    %4819 = vmatprep.subr.mxu0 0.0
    %4820 = vmatpush1.msra.mxu0 %v721
    %4821 = vmatprep.subr.mxu0 0.0
    %4822 = vmatpush1.msra.mxu0 %v722
    %4823 = vmatprep.subr.mxu0 0.0
    %4824 = vmatpush1.msra.mxu0 %v723
    %4825 = vmatprep.subr.mxu0 0.0
    %4826 = vmatpush1.msra.mxu0 %v724
    %4827 = vmatprep.subr.mxu0 0.0
    %4828 = vmatpush1.msra.mxu0 %v725
    %4829 = vmatprep.subr.mxu0 0.0
    %4830 = vmatpush1.msra.mxu0 %v726
    %4831 = vmatprep.subr.mxu0 0.0
    %4832 = vmatpush1.msra.mxu0 %v727
    %4833 = vmatprep.subr.mxu0 0.0
    %4834 = vmatpush1.msra.mxu0 %v728
    %4835 = vmatprep.subr.mxu0 0.0
    %4836 = vmatpush1.msra.mxu0 %v729
    %4837 = vmatprep.subr.mxu0 0.0
    %4838 = vmatpush1.msra.mxu0 %v730
    %4839 = vmatprep.subr.mxu0 0.0
    %4840 = vmatpush1.msra.mxu0 %v731
    %4841 = vmatprep.subr.mxu0 0.0
    %4842 = vmatpush1.msra.mxu0 %v732
    %4843 = vmatprep.subr.mxu0 0.0
    %4844 = vmatpush1.msra.mxu0 %v733
    %4845 = vmatprep.subr.mxu0 0.0
    %4846 = vmatpush1.msra.mxu0 %v734
    %4847 = vmatprep.subr.mxu0 0.0
    %4848 = vmatpush1.msra.mxu0 %v735
    %4849 = vmatprep.subr.mxu0 0.0
    %4850 = vmatpush1.msra.mxu0 %v736
    %4851 = vmatprep.subr.mxu0 0.0
    %4852 = vmatpush1.msra.mxu0 %v737
    %4853 = vmatprep.subr.mxu0 0.0
    %4854 = vmatpush1.msra.mxu0 %v738
    %4855 = vmatprep.subr.mxu0 0.0
    %4856 = vmatpush1.msra.mxu0 %v739
    %4857 = vmatprep.subr.mxu0 0.0
    %4858 = vmatpush1.msra.mxu0 %v740
    %4859 = vmatprep.subr.mxu0 0.0
    %4860 = vmatpush1.msra.mxu0 %v741
    %4861 = vmatprep.subr.mxu0 0.0
    %4862 = vmatpush1.msra.mxu0 %v742
    %4863 = vmatprep.subr.mxu0 0.0
    %4864 = vmatpush1.msra.mxu0 %v743
    %4865 = vmatprep.subr.mxu0 0.0
    %4866 = vmatpush1.msra.mxu0 %v744
    %4867 = vmatprep.subr.mxu0 0.0
    %4868 = vmatpush1.msra.mxu0 %v745
    %4869 = vmatprep.subr.mxu0 0.0
    %4870 = vmatpush1.msra.mxu0 %v746
    %4871 = vmatprep.subr.mxu0 0.0
    %4872 = vmatpush1.msra.mxu0 %v747
    %4873 = vmatprep.mubr.f32.mxu0 %v2931
    %4874 = vmatmul.mubr.f32.gmra.mrb[0].mxu0 %v2929
    %v4875 = vpop.f32.mrb[0].mxu0
    %v4876 = vadd.f32 %v4806, %v4875
    %v4877 = vpop.f32.mrb[0].mxu0
    %4878 = vdwg.mxu0
    %4879 = vmatprep.subr.mxu0 0.0
    %4880 = vmatpush1.msra.mxu0 %v748
    %4881 = vmatprep.subr.mxu0 0.0
    %4882 = vmatpush1.msra.mxu0 %v749
    %4883 = vmatprep.subr.mxu0 0.0
    %4884 = vmatpush1.msra.mxu0 %v750
    %4885 = vmatprep.subr.mxu0 0.0
    %4886 = vmatpush1.msra.mxu0 %v751
    %4887 = vmatprep.subr.mxu0 0.0
    %4888 = vmatpush1.msra.mxu0 %v752
    %4889 = vmatprep.subr.mxu0 0.0
    %4890 = vmatpush1.msra.mxu0 %v753
    %4891 = vmatprep.subr.mxu0 0.0
    %4892 = vmatpush1.msra.mxu0 %v754
    %4893 = vmatprep.subr.mxu0 0.0
    %4894 = vmatpush1.msra.mxu0 %v755
    %4895 = vmatprep.subr.mxu0 0.0
    %4896 = vmatpush1.msra.mxu0 %v756
    %4897 = vmatprep.subr.mxu0 0.0
    %4898 = vmatpush1.msra.mxu0 %v757
    %4899 = vmatprep.subr.mxu0 0.0
    %4900 = vmatpush1.msra.mxu0 %v758
    %4901 = vmatprep.subr.mxu0 0.0
    %4902 = vmatpush1.msra.mxu0 %v759
    %4903 = vmatprep.subr.mxu0 0.0
    %4904 = vmatpush1.msra.mxu0 %v760
    %4905 = vmatprep.subr.mxu0 0.0
    %4906 = vmatpush1.msra.mxu0 %v761
    %4907 = vmatprep.subr.mxu0 0.0
    %4908 = vmatpush1.msra.mxu0 %v762
    %4909 = vmatprep.subr.mxu0 0.0
    %4910 = vmatpush1.msra.mxu0 %v763
    %4911 = vmatprep.subr.mxu0 0.0
    %4912 = vmatpush1.msra.mxu0 %v764
    %4913 = vmatprep.subr.mxu0 0.0
    %4914 = vmatpush1.msra.mxu0 %v765
    %4915 = vmatprep.subr.mxu0 0.0
    %4916 = vmatpush1.msra.mxu0 %v766
    %4917 = vmatprep.subr.mxu0 0.0
    %4918 = vmatpush1.msra.mxu0 %v767
    %4919 = vmatprep.subr.mxu0 0.0
    %4920 = vmatpush1.msra.mxu0 %v768
    %4921 = vmatprep.subr.mxu0 0.0
    %4922 = vmatpush1.msra.mxu0 %v769
    %4923 = vmatprep.subr.mxu0 0.0
    %4924 = vmatpush1.msra.mxu0 %v770
    %4925 = vmatprep.subr.mxu0 0.0
    %4926 = vmatpush1.msra.mxu0 %v771
    %4927 = vmatprep.subr.mxu0 0.0
    %4928 = vmatpush1.msra.mxu0 %v772
    %4929 = vmatprep.subr.mxu0 0.0
    %4930 = vmatpush1.msra.mxu0 %v773
    %4931 = vmatprep.subr.mxu0 0.0
    %4932 = vmatpush1.msra.mxu0 %v774
    %4933 = vmatprep.subr.mxu0 0.0
    %4934 = vmatpush1.msra.mxu0 %v775
    %4935 = vmatprep.subr.mxu0 0.0
    %4936 = vmatpush1.msra.mxu0 %v776
    %4937 = vmatprep.subr.mxu0 0.0
    %4938 = vmatpush1.msra.mxu0 %v777
    %4939 = vmatprep.subr.mxu0 0.0
    %4940 = vmatpush1.msra.mxu0 %v778
    %4941 = vmatprep.subr.mxu0 0.0
    %4942 = vmatpush1.msra.mxu0 %v779
    %4943 = vmatprep.mubr.f32.mxu0 %v2947
    %4944 = vmatmul.mubr.f32.gmra.mrb[0].mxu0 %v2939
    %v4945 = vpop.f32.mrb[0].mxu0
    %v4946 = vadd.f32 %v4876, %v4945
    %v4947 = vpop.f32.mrb[0].mxu0
    %4948 = vdwg.mxu0
    %4949 = vmatprep.subr.mxu0 0.0
    %4950 = vmatpush1.msra.mxu0 %v780
    %4951 = vmatprep.subr.mxu0 0.0
    %4952 = vmatpush1.msra.mxu0 %v781
    %4953 = vmatprep.subr.mxu0 0.0
    %4954 = vmatpush1.msra.mxu0 %v782
    %4955 = vmatprep.subr.mxu0 0.0
    %4956 = vmatpush1.msra.mxu0 %v783
    %4957 = vmatprep.subr.mxu0 0.0
    %4958 = vmatpush1.msra.mxu0 %v784
    %4959 = vmatprep.subr.mxu0 0.0
    %4960 = vmatpush1.msra.mxu0 %v785
    %4961 = vmatprep.subr.mxu0 0.0
    %4962 = vmatpush1.msra.mxu0 %v786
    %4963 = vmatprep.subr.mxu0 0.0
    %4964 = vmatpush1.msra.mxu0 %v787
    %4965 = vmatprep.subr.mxu0 0.0
    %4966 = vmatpush1.msra.mxu0 %v788
    %4967 = vmatprep.subr.mxu0 0.0
    %4968 = vmatpush1.msra.mxu0 %v789
    %4969 = vmatprep.subr.mxu0 0.0
    %4970 = vmatpush1.msra.mxu0 %v790
    %4971 = vmatprep.subr.mxu0 0.0
    %4972 = vmatpush1.msra.mxu0 %v791
    %4973 = vmatprep.subr.mxu0 0.0
    %4974 = vmatpush1.msra.mxu0 %v792
    %4975 = vmatprep.subr.mxu0 0.0
    %4976 = vmatpush1.msra.mxu0 %v793
    %4977 = vmatprep.subr.mxu0 0.0
    %4978 = vmatpush1.msra.mxu0 %v794
    %4979 = vmatprep.subr.mxu0 0.0
    %4980 = vmatpush1.msra.mxu0 %v795
    %4981 = vmatprep.subr.mxu0 0.0
    %4982 = vmatpush1.msra.mxu0 %v796
    %4983 = vmatprep.subr.mxu0 0.0
    %4984 = vmatpush1.msra.mxu0 %v797
    %4985 = vmatprep.subr.mxu0 0.0
    %4986 = vmatpush1.msra.mxu0 %v798
    %4987 = vmatprep.subr.mxu0 0.0
    %4988 = vmatpush1.msra.mxu0 %v799
    %4989 = vmatprep.subr.mxu0 0.0
    %4990 = vmatpush1.msra.mxu0 %v800
    %4991 = vmatprep.subr.mxu0 0.0
    %4992 = vmatpush1.msra.mxu0 %v801
    %4993 = vmatprep.subr.mxu0 0.0
    %4994 = vmatpush1.msra.mxu0 %v802
    %4995 = vmatprep.subr.mxu0 0.0
    %4996 = vmatpush1.msra.mxu0 %v803
    %4997 = vmatprep.subr.mxu0 0.0
    %4998 = vmatpush1.msra.mxu0 %v804
    %4999 = vmatprep.subr.mxu0 0.0
    %5000 = vmatpush1.msra.mxu0 %v805
    %5001 = vmatprep.subr.mxu0 0.0
    %5002 = vmatpush1.msra.mxu0 %v806
    %5003 = vmatprep.subr.mxu0 0.0
    %5004 = vmatpush1.msra.mxu0 %v807
    %5005 = vmatprep.subr.mxu0 0.0
    %5006 = vmatpush1.msra.mxu0 %v808
    %5007 = vmatprep.subr.mxu0 0.0
    %5008 = vmatpush1.msra.mxu0 %v809
    %5009 = vmatprep.subr.mxu0 0.0
    %5010 = vmatpush1.msra.mxu0 %v810
    %5011 = vmatprep.subr.mxu0 0.0
    %5012 = vmatpush1.msra.mxu0 %v811
    %5013 = vmatprep.mubr.f32.mxu0 %v2948
    %5014 = vmatmul.mubr.f32.gmra.mrb[0].mxu0 %v2946
    %v5015 = vpop.f32.mrb[0].mxu0
    %v5016 = vadd.f32 %v4946, %v5015
    %v5017 = vpop.f32.mrb[0].mxu0
    %5018 = vdwg.mxu0
    %5019 = vmatprep.subr.mxu0 0.0
    %5020 = vmatpush1.msra.mxu0 %v812
    %5021 = vmatprep.subr.mxu0 0.0
    %5022 = vmatpush1.msra.mxu0 %v813
    %5023 = vmatprep.subr.mxu0 0.0
    %5024 = vmatpush1.msra.mxu0 %v814
    %5025 = vmatprep.subr.mxu0 0.0
    %5026 = vmatpush1.msra.mxu0 %v815
    %5027 = vmatprep.subr.mxu0 0.0
    %5028 = vmatpush1.msra.mxu0 %v816
    %5029 = vmatprep.subr.mxu0 0.0
    %5030 = vmatpush1.msra.mxu0 %v817
    %5031 = vmatprep.subr.mxu0 0.0
    %5032 = vmatpush1.msra.mxu0 %v818
    %5033 = vmatprep.subr.mxu0 0.0
    %5034 = vmatpush1.msra.mxu0 %v819
    %5035 = vmatprep.subr.mxu0 0.0
    %5036 = vmatpush1.msra.mxu0 %v820
    %5037 = vmatprep.subr.mxu0 0.0
    %5038 = vmatpush1.msra.mxu0 %v821
    %5039 = vmatprep.subr.mxu0 0.0
    %5040 = vmatpush1.msra.mxu0 %v822
    %5041 = vmatprep.subr.mxu0 0.0
    %5042 = vmatpush1.msra.mxu0 %v823
    %5043 = vmatprep.subr.mxu0 0.0
    %5044 = vmatpush1.msra.mxu0 %v824
    %5045 = vmatprep.subr.mxu0 0.0
    %5046 = vmatpush1.msra.mxu0 %v825
    %5047 = vmatprep.subr.mxu0 0.0
    %5048 = vmatpush1.msra.mxu0 %v826
    %5049 = vmatprep.subr.mxu0 0.0
    %5050 = vmatpush1.msra.mxu0 %v827
    %5051 = vmatprep.subr.mxu0 0.0
    %5052 = vmatpush1.msra.mxu0 %v828
    %5053 = vmatprep.subr.mxu0 0.0
    %5054 = vmatpush1.msra.mxu0 %v829
    %5055 = vmatprep.subr.mxu0 0.0
    %5056 = vmatpush1.msra.mxu0 %v830
    %5057 = vmatprep.subr.mxu0 0.0
    %5058 = vmatpush1.msra.mxu0 %v831
    %5059 = vmatprep.subr.mxu0 0.0
    %5060 = vmatpush1.msra.mxu0 %v832
    %5061 = vmatprep.subr.mxu0 0.0
    %5062 = vmatpush1.msra.mxu0 %v833
    %5063 = vmatprep.subr.mxu0 0.0
    %5064 = vmatpush1.msra.mxu0 %v834
    %5065 = vmatprep.subr.mxu0 0.0
    %5066 = vmatpush1.msra.mxu0 %v835
    %5067 = vmatprep.subr.mxu0 0.0
    %5068 = vmatpush1.msra.mxu0 %v836
    %5069 = vmatprep.subr.mxu0 0.0
    %5070 = vmatpush1.msra.mxu0 %v837
    %5071 = vmatprep.subr.mxu0 0.0
    %5072 = vmatpush1.msra.mxu0 %v838
    %5073 = vmatprep.subr.mxu0 0.0
    %5074 = vmatpush1.msra.mxu0 %v839
    %5075 = vmatprep.subr.mxu0 0.0
    %5076 = vmatpush1.msra.mxu0 %v840
    %5077 = vmatprep.subr.mxu0 0.0
    %5078 = vmatpush1.msra.mxu0 %v841
    %5079 = vmatprep.subr.mxu0 0.0
    %5080 = vmatpush1.msra.mxu0 %v842
    %5081 = vmatprep.subr.mxu0 0.0
    %5082 = vmatpush1.msra.mxu0 %v843
    %5083 = vmatprep.mubr.f32.mxu0 %v2964
    %5084 = vmatmul.mubr.f32.gmra.mrb[0].mxu0 %v2956
    %v5085 = vpop.f32.mrb[0].mxu0
    %v5086 = vadd.f32 %v5016, %v5085
    %v5087 = vpop.f32.mrb[0].mxu0
    %5088 = vdwg.mxu0
    %5089 = vmatprep.subr.mxu0 0.0
    %5090 = vmatpush1.msra.mxu0 %v844
    %5091 = vmatprep.subr.mxu0 0.0
    %5092 = vmatpush1.msra.mxu0 %v845
    %5093 = vmatprep.subr.mxu0 0.0
    %5094 = vmatpush1.msra.mxu0 %v846
    %5095 = vmatprep.subr.mxu0 0.0
    %5096 = vmatpush1.msra.mxu0 %v847
    %5097 = vmatprep.subr.mxu0 0.0
    %5098 = vmatpush1.msra.mxu0 %v848
    %5099 = vmatprep.subr.mxu0 0.0
    %5100 = vmatpush1.msra.mxu0 %v849
    %5101 = vmatprep.subr.mxu0 0.0
    %5102 = vmatpush1.msra.mxu0 %v850
    %5103 = vmatprep.subr.mxu0 0.0
    %5104 = vmatpush1.msra.mxu0 %v851
    %5105 = vmatprep.subr.mxu0 0.0
    %5106 = vmatpush1.msra.mxu0 %v852
    %5107 = vmatprep.subr.mxu0 0.0
    %5108 = vmatpush1.msra.mxu0 %v853
    %5109 = vmatprep.subr.mxu0 0.0
    %5110 = vmatpush1.msra.mxu0 %v854
    %5111 = vmatprep.subr.mxu0 0.0
    %5112 = vmatpush1.msra.mxu0 %v855
    %5113 = vmatprep.subr.mxu0 0.0
    %5114 = vmatpush1.msra.mxu0 %v856
    %5115 = vmatprep.subr.mxu0 0.0
    %5116 = vmatpush1.msra.mxu0 %v857
    %5117 = vmatprep.subr.mxu0 0.0
    %5118 = vmatpush1.msra.mxu0 %v858
    %5119 = vmatprep.subr.mxu0 0.0
    %5120 = vmatpush1.msra.mxu0 %v859
    %5121 = vmatprep.subr.mxu0 0.0
    %5122 = vmatpush1.msra.mxu0 %v860
    %5123 = vmatprep.subr.mxu0 0.0
    %5124 = vmatpush1.msra.mxu0 %v861
    %5125 = vmatprep.subr.mxu0 0.0
    %5126 = vmatpush1.msra.mxu0 %v862
    %5127 = vmatprep.subr.mxu0 0.0
    %5128 = vmatpush1.msra.mxu0 %v863
    %5129 = vmatprep.subr.mxu0 0.0
    %5130 = vmatpush1.msra.mxu0 %v864
    %5131 = vmatprep.subr.mxu0 0.0
    %5132 = vmatpush1.msra.mxu0 %v865
    %5133 = vmatprep.subr.mxu0 0.0
    %5134 = vmatpush1.msra.mxu0 %v866
    %5135 = vmatprep.subr.mxu0 0.0
    %5136 = vmatpush1.msra.mxu0 %v867
    %5137 = vmatprep.subr.mxu0 0.0
    %5138 = vmatpush1.msra.mxu0 %v868
    %5139 = vmatprep.subr.mxu0 0.0
    %5140 = vmatpush1.msra.mxu0 %v869
    %5141 = vmatprep.subr.mxu0 0.0
    %5142 = vmatpush1.msra.mxu0 %v870
    %5143 = vmatprep.subr.mxu0 0.0
    %5144 = vmatpush1.msra.mxu0 %v871
    %5145 = vmatprep.subr.mxu0 0.0
    %5146 = vmatpush1.msra.mxu0 %v872
    %5147 = vmatprep.subr.mxu0 0.0
    %5148 = vmatpush1.msra.mxu0 %v873
    %5149 = vmatprep.subr.mxu0 0.0
    %5150 = vmatpush1.msra.mxu0 %v874
    %5151 = vmatprep.subr.mxu0 0.0
    %5152 = vmatpush1.msra.mxu0 %v875
    %5153 = vmatprep.mubr.f32.mxu0 %v2965
    %5154 = vmatmul.mubr.f32.gmra.mrb[0].mxu0 %v2963
    %v5155 = vpop.f32.mrb[0].mxu0
    %v5156 = vadd.f32 %v5086, %v5155
    %v5157 = vpop.f32.mrb[0].mxu0
    %5158 = vdwg.mxu0
    %5159 = vmatprep.subr.mxu0 0.0
    %5160 = vmatpush1.msra.mxu0 %v876
    %5161 = vmatprep.subr.mxu0 0.0
    %5162 = vmatpush1.msra.mxu0 %v877
    %5163 = vmatprep.subr.mxu0 0.0
    %5164 = vmatpush1.msra.mxu0 %v878
    %5165 = vmatprep.subr.mxu0 0.0
    %5166 = vmatpush1.msra.mxu0 %v879
    %5167 = vmatprep.subr.mxu0 0.0
    %5168 = vmatpush1.msra.mxu0 %v880
    %5169 = vmatprep.subr.mxu0 0.0
    %5170 = vmatpush1.msra.mxu0 %v881
    %5171 = vmatprep.subr.mxu0 0.0
    %5172 = vmatpush1.msra.mxu0 %v882
    %5173 = vmatprep.subr.mxu0 0.0
    %5174 = vmatpush1.msra.mxu0 %v883
    %5175 = vmatprep.subr.mxu0 0.0
    %5176 = vmatpush1.msra.mxu0 %v884
    %5177 = vmatprep.subr.mxu0 0.0
    %5178 = vmatpush1.msra.mxu0 %v885
    %5179 = vmatprep.subr.mxu0 0.0
    %5180 = vmatpush1.msra.mxu0 %v886
    %5181 = vmatprep.subr.mxu0 0.0
    %5182 = vmatpush1.msra.mxu0 %v887
    %5183 = vmatprep.subr.mxu0 0.0
    %5184 = vmatpush1.msra.mxu0 %v888
    %5185 = vmatprep.subr.mxu0 0.0
    %5186 = vmatpush1.msra.mxu0 %v889
    %5187 = vmatprep.subr.mxu0 0.0
    %5188 = vmatpush1.msra.mxu0 %v890
    %5189 = vmatprep.subr.mxu0 0.0
    %5190 = vmatpush1.msra.mxu0 %v891
    %5191 = vmatprep.subr.mxu0 0.0
    %5192 = vmatpush1.msra.mxu0 %v892
    %5193 = vmatprep.subr.mxu0 0.0
    %5194 = vmatpush1.msra.mxu0 %v893
    %5195 = vmatprep.subr.mxu0 0.0
    %5196 = vmatpush1.msra.mxu0 %v894
    %5197 = vmatprep.subr.mxu0 0.0
    %5198 = vmatpush1.msra.mxu0 %v895
    %5199 = vmatprep.subr.mxu0 0.0
    %5200 = vmatpush1.msra.mxu0 %v896
    %5201 = vmatprep.subr.mxu0 0.0
    %5202 = vmatpush1.msra.mxu0 %v897
    %5203 = vmatprep.subr.mxu0 0.0
    %5204 = vmatpush1.msra.mxu0 %v898
    %5205 = vmatprep.subr.mxu0 0.0
    %5206 = vmatpush1.msra.mxu0 %v899
    %5207 = vmatprep.subr.mxu0 0.0
    %5208 = vmatpush1.msra.mxu0 %v900
    %5209 = vmatprep.subr.mxu0 0.0
    %5210 = vmatpush1.msra.mxu0 %v901
    %5211 = vmatprep.subr.mxu0 0.0
    %5212 = vmatpush1.msra.mxu0 %v902
    %5213 = vmatprep.subr.mxu0 0.0
    %5214 = vmatpush1.msra.mxu0 %v903
    %5215 = vmatprep.subr.mxu0 0.0
    %5216 = vmatpush1.msra.mxu0 %v904
    %5217 = vmatprep.subr.mxu0 0.0
    %5218 = vmatpush1.msra.mxu0 %v905
    %5219 = vmatprep.subr.mxu0 0.0
    %5220 = vmatpush1.msra.mxu0 %v906
    %5221 = vmatprep.subr.mxu0 0.0
    %5222 = vmatpush1.msra.mxu0 %v907
    %5223 = vmatprep.mubr.f32.mxu0 %v2981
    %5224 = vmatmul.mubr.f32.gmra.mrb[0].mxu0 %v2973
    %v5225 = vpop.f32.mrb[0].mxu0
    %v5226 = vadd.f32 %v5156, %v5225
    %v5227 = vpop.f32.mrb[0].mxu0
    %5228 = vdwg.mxu0
    %5229 = vmatprep.subr.mxu0 0.0
    %5230 = vmatpush1.msra.mxu0 %v908
    %5231 = vmatprep.subr.mxu0 0.0
    %5232 = vmatpush1.msra.mxu0 %v909
    %5233 = vmatprep.subr.mxu0 0.0
    %5234 = vmatpush1.msra.mxu0 %v910
    %5235 = vmatprep.subr.mxu0 0.0
    %5236 = vmatpush1.msra.mxu0 %v911
    %5237 = vmatprep.subr.mxu0 0.0
    %5238 = vmatpush1.msra.mxu0 %v912
    %5239 = vmatprep.subr.mxu0 0.0
    %5240 = vmatpush1.msra.mxu0 %v913
    %5241 = vmatprep.subr.mxu0 0.0
    %5242 = vmatpush1.msra.mxu0 %v914
    %5243 = vmatprep.subr.mxu0 0.0
    %5244 = vmatpush1.msra.mxu0 %v915
    %5245 = vmatprep.subr.mxu0 0.0
    %5246 = vmatpush1.msra.mxu0 %v916
    %5247 = vmatprep.subr.mxu0 0.0
    %5248 = vmatpush1.msra.mxu0 %v917
    %5249 = vmatprep.subr.mxu0 0.0
    %5250 = vmatpush1.msra.mxu0 %v918
    %5251 = vmatprep.subr.mxu0 0.0
    %5252 = vmatpush1.msra.mxu0 %v919
    %5253 = vmatprep.subr.mxu0 0.0
    %5254 = vmatpush1.msra.mxu0 %v920
    %5255 = vmatprep.subr.mxu0 0.0
    %5256 = vmatpush1.msra.mxu0 %v921
    %5257 = vmatprep.subr.mxu0 0.0
    %5258 = vmatpush1.msra.mxu0 %v922
    %5259 = vmatprep.subr.mxu0 0.0
    %5260 = vmatpush1.msra.mxu0 %v923
    %5261 = vmatprep.subr.mxu0 0.0
    %5262 = vmatpush1.msra.mxu0 %v924
    %5263 = vmatprep.subr.mxu0 0.0
    %5264 = vmatpush1.msra.mxu0 %v925
    %5265 = vmatprep.subr.mxu0 0.0
    %5266 = vmatpush1.msra.mxu0 %v926
    %5267 = vmatprep.subr.mxu0 0.0
    %5268 = vmatpush1.msra.mxu0 %v927
    %5269 = vmatprep.subr.mxu0 0.0
    %5270 = vmatpush1.msra.mxu0 %v928
    %5271 = vmatprep.subr.mxu0 0.0
    %5272 = vmatpush1.msra.mxu0 %v929
    %5273 = vmatprep.subr.mxu0 0.0
    %5274 = vmatpush1.msra.mxu0 %v930
    %5275 = vmatprep.subr.mxu0 0.0
    %5276 = vmatpush1.msra.mxu0 %v931
    %5277 = vmatprep.subr.mxu0 0.0
    %5278 = vmatpush1.msra.mxu0 %v932
    %5279 = vmatprep.subr.mxu0 0.0
    %5280 = vmatpush1.msra.mxu0 %v933
    %5281 = vmatprep.subr.mxu0 0.0
    %5282 = vmatpush1.msra.mxu0 %v934
    %5283 = vmatprep.subr.mxu0 0.0
    %5284 = vmatpush1.msra.mxu0 %v935
    %5285 = vmatprep.subr.mxu0 0.0
    %5286 = vmatpush1.msra.mxu0 %v936
    %5287 = vmatprep.subr.mxu0 0.0
    %5288 = vmatpush1.msra.mxu0 %v937
    %5289 = vmatprep.subr.mxu0 0.0
    %5290 = vmatpush1.msra.mxu0 %v938
    %5291 = vmatprep.subr.mxu0 0.0
    %5292 = vmatpush1.msra.mxu0 %v939
    %5293 = vmatprep.mubr.f32.mxu0 %v2982
    %5294 = vmatmul.mubr.f32.gmra.mrb[0].mxu0 %v2980
    %v5295 = vpop.f32.mrb[0].mxu0
    %v5296 = vadd.f32 %v5226, %v5295
    %v5297 = vpop.f32.mrb[0].mxu0
    %5298 = vdwg.mxu0
    %5299 = vmatprep.subr.mxu0 0.0
    %5300 = vmatpush1.msra.mxu0 %v940
    %5301 = vmatprep.subr.mxu0 0.0
    %5302 = vmatpush1.msra.mxu0 %v941
    %5303 = vmatprep.subr.mxu0 0.0
    %5304 = vmatpush1.msra.mxu0 %v942
    %5305 = vmatprep.subr.mxu0 0.0
    %5306 = vmatpush1.msra.mxu0 %v943
    %5307 = vmatprep.subr.mxu0 0.0
    %5308 = vmatpush1.msra.mxu0 %v944
    %5309 = vmatprep.subr.mxu0 0.0
    %5310 = vmatpush1.msra.mxu0 %v945
    %5311 = vmatprep.subr.mxu0 0.0
    %5312 = vmatpush1.msra.mxu0 %v946
    %5313 = vmatprep.subr.mxu0 0.0
    %5314 = vmatpush1.msra.mxu0 %v947
    %5315 = vmatprep.subr.mxu0 0.0
    %5316 = vmatpush1.msra.mxu0 %v948
    %5317 = vmatprep.subr.mxu0 0.0
    %5318 = vmatpush1.msra.mxu0 %v949
    %5319 = vmatprep.subr.mxu0 0.0
    %5320 = vmatpush1.msra.mxu0 %v950
    %5321 = vmatprep.subr.mxu0 0.0
    %5322 = vmatpush1.msra.mxu0 %v951
    %5323 = vmatprep.subr.mxu0 0.0
    %5324 = vmatpush1.msra.mxu0 %v952
    %5325 = vmatprep.subr.mxu0 0.0
    %5326 = vmatpush1.msra.mxu0 %v953
    %5327 = vmatprep.subr.mxu0 0.0
    %5328 = vmatpush1.msra.mxu0 %v954
    %5329 = vmatprep.subr.mxu0 0.0
    %5330 = vmatpush1.msra.mxu0 %v955
    %5331 = vmatprep.subr.mxu0 0.0
    %5332 = vmatpush1.msra.mxu0 %v956
    %5333 = vmatprep.subr.mxu0 0.0
    %5334 = vmatpush1.msra.mxu0 %v957
    %5335 = vmatprep.subr.mxu0 0.0
    %5336 = vmatpush1.msra.mxu0 %v958
    %5337 = vmatprep.subr.mxu0 0.0
    %5338 = vmatpush1.msra.mxu0 %v959
    %5339 = vmatprep.subr.mxu0 0.0
    %5340 = vmatpush1.msra.mxu0 %v960
    %5341 = vmatprep.subr.mxu0 0.0
    %5342 = vmatpush1.msra.mxu0 %v961
    %5343 = vmatprep.subr.mxu0 0.0
    %5344 = vmatpush1.msra.mxu0 %v962
    %5345 = vmatprep.subr.mxu0 0.0
    %5346 = vmatpush1.msra.mxu0 %v963
    %5347 = vmatprep.subr.mxu0 0.0
    %5348 = vmatpush1.msra.mxu0 %v964
    %5349 = vmatprep.subr.mxu0 0.0
    %5350 = vmatpush1.msra.mxu0 %v965
    %5351 = vmatprep.subr.mxu0 0.0
    %5352 = vmatpush1.msra.mxu0 %v966
    %5353 = vmatprep.subr.mxu0 0.0
    %5354 = vmatpush1.msra.mxu0 %v967
    %5355 = vmatprep.subr.mxu0 0.0
    %5356 = vmatpush1.msra.mxu0 %v968
    %5357 = vmatprep.subr.mxu0 0.0
    %5358 = vmatpush1.msra.mxu0 %v969
    %5359 = vmatprep.subr.mxu0 0.0
    %5360 = vmatpush1.msra.mxu0 %v970
    %5361 = vmatprep.subr.mxu0 0.0
    %5362 = vmatpush1.msra.mxu0 %v971
    %5363 = vmatprep.mubr.f32.mxu0 %v2998
    %5364 = vmatmul.mubr.f32.gmra.mrb[0].mxu0 %v2990
    %v5365 = vpop.f32.mrb[0].mxu0
    %v5366 = vadd.f32 %v5296, %v5365
    %v5367 = vpop.f32.mrb[0].mxu0
    %5368 = vdwg.mxu0
    %5369 = vmatprep.subr.mxu0 0.0
    %5370 = vmatpush1.msra.mxu0 %v972
    %5371 = vmatprep.subr.mxu0 0.0
    %5372 = vmatpush1.msra.mxu0 %v973
    %5373 = vmatprep.subr.mxu0 0.0
    %5374 = vmatpush1.msra.mxu0 %v974
    %5375 = vmatprep.subr.mxu0 0.0
    %5376 = vmatpush1.msra.mxu0 %v975
    %5377 = vmatprep.subr.mxu0 0.0
    %5378 = vmatpush1.msra.mxu0 %v976
    %5379 = vmatprep.subr.mxu0 0.0
    %5380 = vmatpush1.msra.mxu0 %v977
    %5381 = vmatprep.subr.mxu0 0.0
    %5382 = vmatpush1.msra.mxu0 %v978
    %5383 = vmatprep.subr.mxu0 0.0
    %5384 = vmatpush1.msra.mxu0 %v979
    %5385 = vmatprep.subr.mxu0 0.0
    %5386 = vmatpush1.msra.mxu0 %v980
    %5387 = vmatprep.subr.mxu0 0.0
    %5388 = vmatpush1.msra.mxu0 %v981
    %5389 = vmatprep.subr.mxu0 0.0
    %5390 = vmatpush1.msra.mxu0 %v982
    %5391 = vmatprep.subr.mxu0 0.0
    %5392 = vmatpush1.msra.mxu0 %v983
    %5393 = vmatprep.subr.mxu0 0.0
    %5394 = vmatpush1.msra.mxu0 %v984
    %5395 = vmatprep.subr.mxu0 0.0
    %5396 = vmatpush1.msra.mxu0 %v985
    %5397 = vmatprep.subr.mxu0 0.0
    %5398 = vmatpush1.msra.mxu0 %v986
    %5399 = vmatprep.subr.mxu0 0.0
    %5400 = vmatpush1.msra.mxu0 %v987
    %5401 = vmatprep.subr.mxu0 0.0
    %5402 = vmatpush1.msra.mxu0 %v988
    %5403 = vmatprep.subr.mxu0 0.0
    %5404 = vmatpush1.msra.mxu0 %v989
    %5405 = vmatprep.subr.mxu0 0.0
    %5406 = vmatpush1.msra.mxu0 %v990
    %5407 = vmatprep.subr.mxu0 0.0
    %5408 = vmatpush1.msra.mxu0 %v991
    %5409 = vmatprep.subr.mxu0 0.0
    %5410 = vmatpush1.msra.mxu0 %v992
    %5411 = vmatprep.subr.mxu0 0.0
    %5412 = vmatpush1.msra.mxu0 %v993
    %5413 = vmatprep.subr.mxu0 0.0
    %5414 = vmatpush1.msra.mxu0 %v994
    %5415 = vmatprep.subr.mxu0 0.0
    %5416 = vmatpush1.msra.mxu0 %v995
    %5417 = vmatprep.subr.mxu0 0.0
    %5418 = vmatpush1.msra.mxu0 %v996
    %5419 = vmatprep.subr.mxu0 0.0
    %5420 = vmatpush1.msra.mxu0 %v997
    %5421 = vmatprep.subr.mxu0 0.0
    %5422 = vmatpush1.msra.mxu0 %v998
    %5423 = vmatprep.subr.mxu0 0.0
    %5424 = vmatpush1.msra.mxu0 %v999
    %5425 = vmatprep.subr.mxu0 0.0
    %5426 = vmatpush1.msra.mxu0 %v1000
    %5427 = vmatprep.subr.mxu0 0.0
    %5428 = vmatpush1.msra.mxu0 %v1001
    %5429 = vmatprep.subr.mxu0 0.0
    %5430 = vmatpush1.msra.mxu0 %v1002
    %5431 = vmatprep.subr.mxu0 0.0
    %5432 = vmatpush1.msra.mxu0 %v1003
    %5433 = vmatprep.mubr.f32.mxu0 %v2999
    %5434 = vmatmul.mubr.f32.gmra.mrb[0].mxu0 %v2997
    %v5435 = vpop.f32.mrb[0].mxu0
    %v5436 = vadd.f32 %v5366, %v5435
    %v5437 = vpop.f32.mrb[0].mxu0
    %5438 = vdwg.mxu0
    %5439 = vmatprep.subr.mxu0 0.0
    %5440 = vmatpush1.msra.mxu0 %v1004
    %5441 = vmatprep.subr.mxu0 0.0
    %5442 = vmatpush1.msra.mxu0 %v1005
    %5443 = vmatprep.subr.mxu0 0.0
    %5444 = vmatpush1.msra.mxu0 %v1006
    %5445 = vmatprep.subr.mxu0 0.0
    %5446 = vmatpush1.msra.mxu0 %v1007
    %5447 = vmatprep.subr.mxu0 0.0
    %5448 = vmatpush1.msra.mxu0 %v1008
    %5449 = vmatprep.subr.mxu0 0.0
    %5450 = vmatpush1.msra.mxu0 %v1009
    %5451 = vmatprep.subr.mxu0 0.0
    %5452 = vmatpush1.msra.mxu0 %v1010
    %5453 = vmatprep.subr.mxu0 0.0
    %5454 = vmatpush1.msra.mxu0 %v1011
    %5455 = vmatprep.subr.mxu0 0.0
    %5456 = vmatpush1.msra.mxu0 %v1012
    %5457 = vmatprep.subr.mxu0 0.0
    %5458 = vmatpush1.msra.mxu0 %v1013
    %5459 = vmatprep.subr.mxu0 0.0
    %5460 = vmatpush1.msra.mxu0 %v1014
    %5461 = vmatprep.subr.mxu0 0.0
    %5462 = vmatpush1.msra.mxu0 %v1015
    %5463 = vmatprep.subr.mxu0 0.0
    %5464 = vmatpush1.msra.mxu0 %v1016
    %5465 = vmatprep.subr.mxu0 0.0
    %5466 = vmatpush1.msra.mxu0 %v1017
    %5467 = vmatprep.subr.mxu0 0.0
    %5468 = vmatpush1.msra.mxu0 %v1018
    %5469 = vmatprep.subr.mxu0 0.0
    %5470 = vmatpush1.msra.mxu0 %v1019
    %5471 = vmatprep.subr.mxu0 0.0
    %5472 = vmatpush1.msra.mxu0 %v1020
    %5473 = vmatprep.subr.mxu0 0.0
    %5474 = vmatpush1.msra.mxu0 %v1021
    %5475 = vmatprep.subr.mxu0 0.0
    %5476 = vmatpush1.msra.mxu0 %v1022
    %5477 = vmatprep.subr.mxu0 0.0
    %5478 = vmatpush1.msra.mxu0 %v1023
    %5479 = vmatprep.subr.mxu0 0.0
    %5480 = vmatpush1.msra.mxu0 %v1024
    %5481 = vmatprep.subr.mxu0 0.0
    %5482 = vmatpush1.msra.mxu0 %v1025
    %5483 = vmatprep.subr.mxu0 0.0
    %5484 = vmatpush1.msra.mxu0 %v1026
    %5485 = vmatprep.subr.mxu0 0.0
    %5486 = vmatpush1.msra.mxu0 %v1027
    %5487 = vmatprep.subr.mxu0 0.0
    %5488 = vmatpush1.msra.mxu0 %v1028
    %5489 = vmatprep.subr.mxu0 0.0
    %5490 = vmatpush1.msra.mxu0 %v1029
    %5491 = vmatprep.subr.mxu0 0.0
    %5492 = vmatpush1.msra.mxu0 %v1030
    %5493 = vmatprep.subr.mxu0 0.0
    %5494 = vmatpush1.msra.mxu0 %v1031
    %5495 = vmatprep.subr.mxu0 0.0
    %5496 = vmatpush1.msra.mxu0 %v1032
    %5497 = vmatprep.subr.mxu0 0.0
    %5498 = vmatpush1.msra.mxu0 %v1033
    %5499 = vmatprep.subr.mxu0 0.0
    %5500 = vmatpush1.msra.mxu0 %v1034
    %5501 = vmatprep.subr.mxu0 0.0
    %5502 = vmatpush1.msra.mxu0 %v1035
    %5503 = vmatprep.mubr.f32.mxu0 %v3015
    %5504 = vmatmul.mubr.f32.gmra.mrb[0].mxu0 %v3007
    %v5505 = vpop.f32.mrb[0].mxu0
    %v5506 = vadd.f32 %v5436, %v5505
    %v5507 = vpop.f32.mrb[0].mxu0
    %5508 = vdwg.mxu0
    %5509 = vmatprep.subr.mxu0 0.0
    %5510 = vmatpush1.msra.mxu0 %v1036
    %5511 = vmatprep.subr.mxu0 0.0
    %5512 = vmatpush1.msra.mxu0 %v1037
    %5513 = vmatprep.subr.mxu0 0.0
    %5514 = vmatpush1.msra.mxu0 %v1038
    %5515 = vmatprep.subr.mxu0 0.0
    %5516 = vmatpush1.msra.mxu0 %v1039
    %5517 = vmatprep.subr.mxu0 0.0
    %5518 = vmatpush1.msra.mxu0 %v1040
    %5519 = vmatprep.subr.mxu0 0.0
    %5520 = vmatpush1.msra.mxu0 %v1041
    %5521 = vmatprep.subr.mxu0 0.0
    %5522 = vmatpush1.msra.mxu0 %v1042
    %5523 = vmatprep.subr.mxu0 0.0
    %5524 = vmatpush1.msra.mxu0 %v1043
    %5525 = vmatprep.subr.mxu0 0.0
    %5526 = vmatpush1.msra.mxu0 %v1044
    %5527 = vmatprep.subr.mxu0 0.0
    %5528 = vmatpush1.msra.mxu0 %v1045
    %5529 = vmatprep.subr.mxu0 0.0
    %5530 = vmatpush1.msra.mxu0 %v1046
    %5531 = vmatprep.subr.mxu0 0.0
    %5532 = vmatpush1.msra.mxu0 %v1047
    %5533 = vmatprep.subr.mxu0 0.0
    %5534 = vmatpush1.msra.mxu0 %v1048
    %5535 = vmatprep.subr.mxu0 0.0
    %5536 = vmatpush1.msra.mxu0 %v1049
    %5537 = vmatprep.subr.mxu0 0.0
    %5538 = vmatpush1.msra.mxu0 %v1050
    %5539 = vmatprep.subr.mxu0 0.0
    %5540 = vmatpush1.msra.mxu0 %v1051
    %5541 = vmatprep.subr.mxu0 0.0
    %5542 = vmatpush1.msra.mxu0 %v1052
    %5543 = vmatprep.subr.mxu0 0.0
    %5544 = vmatpush1.msra.mxu0 %v1053
    %5545 = vmatprep.subr.mxu0 0.0
    %5546 = vmatpush1.msra.mxu0 %v1054
    %5547 = vmatprep.subr.mxu0 0.0
    %5548 = vmatpush1.msra.mxu0 %v1055
    %5549 = vmatprep.subr.mxu0 0.0
    %5550 = vmatpush1.msra.mxu0 %v1056
    %5551 = vmatprep.subr.mxu0 0.0
    %5552 = vmatpush1.msra.mxu0 %v1057
    %5553 = vmatprep.subr.mxu0 0.0
    %5554 = vmatpush1.msra.mxu0 %v1058
    %5555 = vmatprep.subr.mxu0 0.0
    %5556 = vmatpush1.msra.mxu0 %v1059
    %5557 = vmatprep.subr.mxu0 0.0
    %5558 = vmatpush1.msra.mxu0 %v1060
    %5559 = vmatprep.subr.mxu0 0.0
    %5560 = vmatpush1.msra.mxu0 %v1061
    %5561 = vmatprep.subr.mxu0 0.0
    %5562 = vmatpush1.msra.mxu0 %v1062
    %5563 = vmatprep.subr.mxu0 0.0
    %5564 = vmatpush1.msra.mxu0 %v1063
    %5565 = vmatprep.subr.mxu0 0.0
    %5566 = vmatpush1.msra.mxu0 %v1064
    %5567 = vmatprep.subr.mxu0 0.0
    %5568 = vmatpush1.msra.mxu0 %v1065
    %5569 = vmatprep.subr.mxu0 0.0
    %5570 = vmatpush1.msra.mxu0 %v1066
    %5571 = vmatprep.subr.mxu0 0.0
    %5572 = vmatpush1.msra.mxu0 %v1067
    %5573 = vmatprep.mubr.f32.mxu0 %v3016
    %5574 = vmatmul.mubr.f32.gmra.mrb[0].mxu0 %v3014
    %v5575 = vpop.f32.mrb[0].mxu0
    %v5576 = vadd.f32 %v5506, %v5575
    %v5577 = vpop.f32.mrb[0].mxu0
    %5578 = vdwg.mxu0
    %5579 = vmatprep.subr.mxu0 0.0
    %5580 = vmatpush1.msra.mxu0 %v1068
    %5581 = vmatprep.subr.mxu0 0.0
    %5582 = vmatpush1.msra.mxu0 %v1069
    %5583 = vmatprep.subr.mxu0 0.0
    %5584 = vmatpush1.msra.mxu0 %v1070
    %5585 = vmatprep.subr.mxu0 0.0
    %5586 = vmatpush1.msra.mxu0 %v1071
    %5587 = vmatprep.subr.mxu0 0.0
    %5588 = vmatpush1.msra.mxu0 %v1072
    %5589 = vmatprep.subr.mxu0 0.0
    %5590 = vmatpush1.msra.mxu0 %v1073
    %5591 = vmatprep.subr.mxu0 0.0
    %5592 = vmatpush1.msra.mxu0 %v1074
    %5593 = vmatprep.subr.mxu0 0.0
    %5594 = vmatpush1.msra.mxu0 %v1075
    %5595 = vmatprep.subr.mxu0 0.0
    %5596 = vmatpush1.msra.mxu0 %v1076
    %5597 = vmatprep.subr.mxu0 0.0
    %5598 = vmatpush1.msra.mxu0 %v1077
    %5599 = vmatprep.subr.mxu0 0.0
    %5600 = vmatpush1.msra.mxu0 %v1078
    %5601 = vmatprep.subr.mxu0 0.0
    %5602 = vmatpush1.msra.mxu0 %v1079
    %5603 = vmatprep.subr.mxu0 0.0
    %5604 = vmatpush1.msra.mxu0 %v1080
    %5605 = vmatprep.subr.mxu0 0.0
    %5606 = vmatpush1.msra.mxu0 %v1081
    %5607 = vmatprep.subr.mxu0 0.0
    %5608 = vmatpush1.msra.mxu0 %v1082
    %5609 = vmatprep.subr.mxu0 0.0
    %5610 = vmatpush1.msra.mxu0 %v1083
    %5611 = vmatprep.subr.mxu0 0.0
    %5612 = vmatpush1.msra.mxu0 %v1084
    %5613 = vmatprep.subr.mxu0 0.0
    %5614 = vmatpush1.msra.mxu0 %v1085
    %5615 = vmatprep.subr.mxu0 0.0
    %5616 = vmatpush1.msra.mxu0 %v1086
    %5617 = vmatprep.subr.mxu0 0.0
    %5618 = vmatpush1.msra.mxu0 %v1087
    %5619 = vmatprep.subr.mxu0 0.0
    %5620 = vmatpush1.msra.mxu0 %v1088
    %5621 = vmatprep.subr.mxu0 0.0
    %5622 = vmatpush1.msra.mxu0 %v1089
    %5623 = vmatprep.subr.mxu0 0.0
    %5624 = vmatpush1.msra.mxu0 %v1090
    %5625 = vmatprep.subr.mxu0 0.0
    %5626 = vmatpush1.msra.mxu0 %v1091
    %5627 = vmatprep.subr.mxu0 0.0
    %5628 = vmatpush1.msra.mxu0 %v1092
    %5629 = vmatprep.subr.mxu0 0.0
    %5630 = vmatpush1.msra.mxu0 %v1093
    %5631 = vmatprep.subr.mxu0 0.0
    %5632 = vmatpush1.msra.mxu0 %v1094
    %5633 = vmatprep.subr.mxu0 0.0
    %5634 = vmatpush1.msra.mxu0 %v1095
    %5635 = vmatprep.subr.mxu0 0.0
    %5636 = vmatpush1.msra.mxu0 %v1096
    %5637 = vmatprep.subr.mxu0 0.0
    %5638 = vmatpush1.msra.mxu0 %v1097
    %5639 = vmatprep.subr.mxu0 0.0
    %5640 = vmatpush1.msra.mxu0 %v1098
    %5641 = vmatprep.subr.mxu0 0.0
    %5642 = vmatpush1.msra.mxu0 %v1099
    %5643 = vmatprep.mubr.f32.mxu0 %v3032
    %5644 = vmatmul.mubr.f32.gmra.mrb[0].mxu0 %v3024
    %v5645 = vpop.f32.mrb[0].mxu0
    %v5646 = vadd.f32 %v5576, %v5645
    %v5647 = vpop.f32.mrb[0].mxu0
    %5648 = vdwg.mxu0
    %5649 = vmatprep.subr.mxu0 0.0
    %5650 = vmatpush1.msra.mxu0 %v1100
    %5651 = vmatprep.subr.mxu0 0.0
    %5652 = vmatpush1.msra.mxu0 %v1101
    %5653 = vmatprep.subr.mxu0 0.0
    %5654 = vmatpush1.msra.mxu0 %v1102
    %5655 = vmatprep.subr.mxu0 0.0
    %5656 = vmatpush1.msra.mxu0 %v1103
    %5657 = vmatprep.subr.mxu0 0.0
    %5658 = vmatpush1.msra.mxu0 %v1104
    %5659 = vmatprep.subr.mxu0 0.0
    %5660 = vmatpush1.msra.mxu0 %v1105
    %5661 = vmatprep.subr.mxu0 0.0
    %5662 = vmatpush1.msra.mxu0 %v1106
    %5663 = vmatprep.subr.mxu0 0.0
    %5664 = vmatpush1.msra.mxu0 %v1107
    %5665 = vmatprep.subr.mxu0 0.0
    %5666 = vmatpush1.msra.mxu0 %v1108
    %5667 = vmatprep.subr.mxu0 0.0
    %5668 = vmatpush1.msra.mxu0 %v1109
    %5669 = vmatprep.subr.mxu0 0.0
    %5670 = vmatpush1.msra.mxu0 %v1110
    %5671 = vmatprep.subr.mxu0 0.0
    %5672 = vmatpush1.msra.mxu0 %v1111
    %5673 = vmatprep.subr.mxu0 0.0
    %5674 = vmatpush1.msra.mxu0 %v1112
    %5675 = vmatprep.subr.mxu0 0.0
    %5676 = vmatpush1.msra.mxu0 %v1113
    %5677 = vmatprep.subr.mxu0 0.0
    %5678 = vmatpush1.msra.mxu0 %v1114
    %5679 = vmatprep.subr.mxu0 0.0
    %5680 = vmatpush1.msra.mxu0 %v1115
    %5681 = vmatprep.subr.mxu0 0.0
    %5682 = vmatpush1.msra.mxu0 %v1116
    %5683 = vmatprep.subr.mxu0 0.0
    %5684 = vmatpush1.msra.mxu0 %v1117
    %5685 = vmatprep.subr.mxu0 0.0
    %5686 = vmatpush1.msra.mxu0 %v1118
    %5687 = vmatprep.subr.mxu0 0.0
    %5688 = vmatpush1.msra.mxu0 %v1119
    %5689 = vmatprep.subr.mxu0 0.0
    %5690 = vmatpush1.msra.mxu0 %v1120
    %5691 = vmatprep.subr.mxu0 0.0
    %5692 = vmatpush1.msra.mxu0 %v1121
    %5693 = vmatprep.subr.mxu0 0.0
    %5694 = vmatpush1.msra.mxu0 %v1122
    %5695 = vmatprep.subr.mxu0 0.0
    %5696 = vmatpush1.msra.mxu0 %v1123
    %5697 = vmatprep.subr.mxu0 0.0
    %5698 = vmatpush1.msra.mxu0 %v1124
    %5699 = vmatprep.subr.mxu0 0.0
    %5700 = vmatpush1.msra.mxu0 %v1125
    %5701 = vmatprep.subr.mxu0 0.0
    %5702 = vmatpush1.msra.mxu0 %v1126
    %5703 = vmatprep.subr.mxu0 0.0
    %5704 = vmatpush1.msra.mxu0 %v1127
    %5705 = vmatprep.subr.mxu0 0.0
    %5706 = vmatpush1.msra.mxu0 %v1128
    %5707 = vmatprep.subr.mxu0 0.0
    %5708 = vmatpush1.msra.mxu0 %v1129
    %5709 = vmatprep.subr.mxu0 0.0
    %5710 = vmatpush1.msra.mxu0 %v1130
    %5711 = vmatprep.subr.mxu0 0.0
    %5712 = vmatpush1.msra.mxu0 %v1131
    %5713 = vmatprep.mubr.f32.mxu0 %v3033
    %5714 = vmatmul.mubr.f32.gmra.mrb[0].mxu0 %v3031
    %v5715 = vpop.f32.mrb[0].mxu0
    %v5716 = vadd.f32 %v5646, %v5715
    %v5717 = vpop.f32.mrb[0].mxu0
    %5718 = vdwg.mxu0
    %5719 = vmatprep.subr.mxu0 0.0
    %5720 = vmatpush1.msra.mxu0 %v1132
    %5721 = vmatprep.subr.mxu0 0.0
    %5722 = vmatpush1.msra.mxu0 %v1133
    %5723 = vmatprep.subr.mxu0 0.0
    %5724 = vmatpush1.msra.mxu0 %v1134
    %5725 = vmatprep.subr.mxu0 0.0
    %5726 = vmatpush1.msra.mxu0 %v1135
    %5727 = vmatprep.subr.mxu0 0.0
    %5728 = vmatpush1.msra.mxu0 %v1136
    %5729 = vmatprep.subr.mxu0 0.0
    %5730 = vmatpush1.msra.mxu0 %v1137
    %5731 = vmatprep.subr.mxu0 0.0
    %5732 = vmatpush1.msra.mxu0 %v1138
    %5733 = vmatprep.subr.mxu0 0.0
    %5734 = vmatpush1.msra.mxu0 %v1139
    %5735 = vmatprep.subr.mxu0 0.0
    %5736 = vmatpush1.msra.mxu0 %v1140
    %5737 = vmatprep.subr.mxu0 0.0
    %5738 = vmatpush1.msra.mxu0 %v1141
    %5739 = vmatprep.subr.mxu0 0.0
    %5740 = vmatpush1.msra.mxu0 %v1142
    %5741 = vmatprep.subr.mxu0 0.0
    %5742 = vmatpush1.msra.mxu0 %v1143
    %5743 = vmatprep.subr.mxu0 0.0
    %5744 = vmatpush1.msra.mxu0 %v1144
    %5745 = vmatprep.subr.mxu0 0.0
    %5746 = vmatpush1.msra.mxu0 %v1145
    %5747 = vmatprep.subr.mxu0 0.0
    %5748 = vmatpush1.msra.mxu0 %v1146
    %5749 = vmatprep.subr.mxu0 0.0
    %5750 = vmatpush1.msra.mxu0 %v1147
    %5751 = vmatprep.subr.mxu0 0.0
    %5752 = vmatpush1.msra.mxu0 %v1148
    %5753 = vmatprep.subr.mxu0 0.0
    %5754 = vmatpush1.msra.mxu0 %v1149
    %5755 = vmatprep.subr.mxu0 0.0
    %5756 = vmatpush1.msra.mxu0 %v1150
    %5757 = vmatprep.subr.mxu0 0.0
    %5758 = vmatpush1.msra.mxu0 %v1151
    %5759 = vmatprep.subr.mxu0 0.0
    %5760 = vmatpush1.msra.mxu0 %v1152
    %5761 = vmatprep.subr.mxu0 0.0
    %5762 = vmatpush1.msra.mxu0 %v1153
    %5763 = vmatprep.subr.mxu0 0.0
    %5764 = vmatpush1.msra.mxu0 %v1154
    %5765 = vmatprep.subr.mxu0 0.0
    %5766 = vmatpush1.msra.mxu0 %v1155
    %5767 = vmatprep.subr.mxu0 0.0
    %5768 = vmatpush1.msra.mxu0 %v1156
    %5769 = vmatprep.subr.mxu0 0.0
    %5770 = vmatpush1.msra.mxu0 %v1157
    %5771 = vmatprep.subr.mxu0 0.0
    %5772 = vmatpush1.msra.mxu0 %v1158
    %5773 = vmatprep.subr.mxu0 0.0
    %5774 = vmatpush1.msra.mxu0 %v1159
    %5775 = vmatprep.subr.mxu0 0.0
    %5776 = vmatpush1.msra.mxu0 %v1160
    %5777 = vmatprep.subr.mxu0 0.0
    %5778 = vmatpush1.msra.mxu0 %v1161
    %5779 = vmatprep.subr.mxu0 0.0
    %5780 = vmatpush1.msra.mxu0 %v1162
    %5781 = vmatprep.subr.mxu0 0.0
    %5782 = vmatpush1.msra.mxu0 %v1163
    %5783 = vmatprep.mubr.f32.mxu0 %v3049
    %5784 = vmatmul.mubr.f32.gmra.mrb[0].mxu0 %v3041
    %v5785 = vpop.f32.mrb[0].mxu0
    %v5786 = vadd.f32 %v5716, %v5785
    %v5787 = vpop.f32.mrb[0].mxu0
    %5788 = vdwg.mxu0
    %5789 = vmatprep.subr.mxu0 0.0
    %5790 = vmatpush1.msra.mxu0 %v1164
    %5791 = vmatprep.subr.mxu0 0.0
    %5792 = vmatpush1.msra.mxu0 %v1165
    %5793 = vmatprep.subr.mxu0 0.0
    %5794 = vmatpush1.msra.mxu0 %v1166
    %5795 = vmatprep.subr.mxu0 0.0
    %5796 = vmatpush1.msra.mxu0 %v1167
    %5797 = vmatprep.subr.mxu0 0.0
    %5798 = vmatpush1.msra.mxu0 %v1168
    %5799 = vmatprep.subr.mxu0 0.0
    %5800 = vmatpush1.msra.mxu0 %v1169
    %5801 = vmatprep.subr.mxu0 0.0
    %5802 = vmatpush1.msra.mxu0 %v1170
    %5803 = vmatprep.subr.mxu0 0.0
    %5804 = vmatpush1.msra.mxu0 %v1171
    %5805 = vmatprep.subr.mxu0 0.0
    %5806 = vmatpush1.msra.mxu0 %v1172
    %5807 = vmatprep.subr.mxu0 0.0
    %5808 = vmatpush1.msra.mxu0 %v1173
    %5809 = vmatprep.subr.mxu0 0.0
    %5810 = vmatpush1.msra.mxu0 %v1174
    %5811 = vmatprep.subr.mxu0 0.0
    %5812 = vmatpush1.msra.mxu0 %v1175
    %5813 = vmatprep.subr.mxu0 0.0
    %5814 = vmatpush1.msra.mxu0 %v1176
    %5815 = vmatprep.subr.mxu0 0.0
    %5816 = vmatpush1.msra.mxu0 %v1177
    %5817 = vmatprep.subr.mxu0 0.0
    %5818 = vmatpush1.msra.mxu0 %v1178
    %5819 = vmatprep.subr.mxu0 0.0
    %5820 = vmatpush1.msra.mxu0 %v1179
    %5821 = vmatprep.subr.mxu0 0.0
    %5822 = vmatpush1.msra.mxu0 %v1180
    %5823 = vmatprep.subr.mxu0 0.0
    %5824 = vmatpush1.msra.mxu0 %v1181
    %5825 = vmatprep.subr.mxu0 0.0
    %5826 = vmatpush1.msra.mxu0 %v1182
    %5827 = vmatprep.subr.mxu0 0.0
    %5828 = vmatpush1.msra.mxu0 %v1183
    %5829 = vmatprep.subr.mxu0 0.0
    %5830 = vmatpush1.msra.mxu0 %v1184
    %5831 = vmatprep.subr.mxu0 0.0
    %5832 = vmatpush1.msra.mxu0 %v1185
    %5833 = vmatprep.subr.mxu0 0.0
    %5834 = vmatpush1.msra.mxu0 %v1186
    %5835 = vmatprep.subr.mxu0 0.0
    %5836 = vmatpush1.msra.mxu0 %v1187
    %5837 = vmatprep.subr.mxu0 0.0
    %5838 = vmatpush1.msra.mxu0 %v1188
    %5839 = vmatprep.subr.mxu0 0.0
    %5840 = vmatpush1.msra.mxu0 %v1189
    %5841 = vmatprep.subr.mxu0 0.0
    %5842 = vmatpush1.msra.mxu0 %v1190
    %5843 = vmatprep.subr.mxu0 0.0
    %5844 = vmatpush1.msra.mxu0 %v1191
    %5845 = vmatprep.subr.mxu0 0.0
    %5846 = vmatpush1.msra.mxu0 %v1192
    %5847 = vmatprep.subr.mxu0 0.0
    %5848 = vmatpush1.msra.mxu0 %v1193
    %5849 = vmatprep.subr.mxu0 0.0
    %5850 = vmatpush1.msra.mxu0 %v1194
    %5851 = vmatprep.subr.mxu0 0.0
    %5852 = vmatpush1.msra.mxu0 %v1195
    %5853 = vmatprep.mubr.f32.mxu0 %v3050
    %5854 = vmatmul.mubr.f32.gmra.mrb[0].mxu0 %v3048
    %v5855 = vpop.f32.mrb[0].mxu0
    %v5856 = vadd.f32 %v5786, %v5855
    %v5857 = vpop.f32.mrb[0].mxu0
    %5858 = vdwg.mxu0
    %5859 = vmatprep.subr.mxu0 0.0
    %5860 = vmatpush1.msra.mxu0 %v1196
    %5861 = vmatprep.subr.mxu0 0.0
    %5862 = vmatpush1.msra.mxu0 %v1197
    %5863 = vmatprep.subr.mxu0 0.0
    %5864 = vmatpush1.msra.mxu0 %v1198
    %5865 = vmatprep.subr.mxu0 0.0
    %5866 = vmatpush1.msra.mxu0 %v1199
    %5867 = vmatprep.subr.mxu0 0.0
    %5868 = vmatpush1.msra.mxu0 %v1200
    %5869 = vmatprep.subr.mxu0 0.0
    %5870 = vmatpush1.msra.mxu0 %v1201
    %5871 = vmatprep.subr.mxu0 0.0
    %5872 = vmatpush1.msra.mxu0 %v1202
    %5873 = vmatprep.subr.mxu0 0.0
    %5874 = vmatpush1.msra.mxu0 %v1203
    %5875 = vmatprep.subr.mxu0 0.0
    %5876 = vmatpush1.msra.mxu0 %v1204
    %5877 = vmatprep.subr.mxu0 0.0
    %5878 = vmatpush1.msra.mxu0 %v1205
    %5879 = vmatprep.subr.mxu0 0.0
    %5880 = vmatpush1.msra.mxu0 %v1206
    %5881 = vmatprep.subr.mxu0 0.0
    %5882 = vmatpush1.msra.mxu0 %v1207
    %5883 = vmatprep.subr.mxu0 0.0
    %5884 = vmatpush1.msra.mxu0 %v1208
    %5885 = vmatprep.subr.mxu0 0.0
    %5886 = vmatpush1.msra.mxu0 %v1209
    %5887 = vmatprep.subr.mxu0 0.0
    %5888 = vmatpush1.msra.mxu0 %v1210
    %5889 = vmatprep.subr.mxu0 0.0
    %5890 = vmatpush1.msra.mxu0 %v1211
    %5891 = vmatprep.subr.mxu0 0.0
    %5892 = vmatpush1.msra.mxu0 %v1212
    %5893 = vmatprep.subr.mxu0 0.0
    %5894 = vmatpush1.msra.mxu0 %v1213
    %5895 = vmatprep.subr.mxu0 0.0
    %5896 = vmatpush1.msra.mxu0 %v1214
    %5897 = vmatprep.subr.mxu0 0.0
    %5898 = vmatpush1.msra.mxu0 %v1215
    %5899 = vmatprep.subr.mxu0 0.0
    %5900 = vmatpush1.msra.mxu0 %v1216
    %5901 = vmatprep.subr.mxu0 0.0
    %5902 = vmatpush1.msra.mxu0 %v1217
    %5903 = vmatprep.subr.mxu0 0.0
    %5904 = vmatpush1.msra.mxu0 %v1218
    %5905 = vmatprep.subr.mxu0 0.0
    %5906 = vmatpush1.msra.mxu0 %v1219
    %5907 = vmatprep.subr.mxu0 0.0
    %5908 = vmatpush1.msra.mxu0 %v1220
    %5909 = vmatprep.subr.mxu0 0.0
    %5910 = vmatpush1.msra.mxu0 %v1221
    %5911 = vmatprep.subr.mxu0 0.0
    %5912 = vmatpush1.msra.mxu0 %v1222
    %5913 = vmatprep.subr.mxu0 0.0
    %5914 = vmatpush1.msra.mxu0 %v1223
    %5915 = vmatprep.subr.mxu0 0.0
    %5916 = vmatpush1.msra.mxu0 %v1224
    %5917 = vmatprep.subr.mxu0 0.0
    %5918 = vmatpush1.msra.mxu0 %v1225
    %5919 = vmatprep.subr.mxu0 0.0
    %5920 = vmatpush1.msra.mxu0 %v1226
    %5921 = vmatprep.subr.mxu0 0.0
    %5922 = vmatpush1.msra.mxu0 %v1227
    %5923 = vmatprep.mubr.f32.mxu0 %v3066
    %5924 = vmatmul.mubr.f32.gmra.mrb[0].mxu0 %v3058
    %v5925 = vpop.f32.mrb[0].mxu0
    %v5926 = vadd.f32 %v5856, %v5925
    %v5927 = vpop.f32.mrb[0].mxu0
    %5928 = vdwg.mxu0
    %5929 = vmatprep.subr.mxu0 0.0
    %5930 = vmatpush1.msra.mxu0 %v1228
    %5931 = vmatprep.subr.mxu0 0.0
    %5932 = vmatpush1.msra.mxu0 %v1229
    %5933 = vmatprep.subr.mxu0 0.0
    %5934 = vmatpush1.msra.mxu0 %v1230
    %5935 = vmatprep.subr.mxu0 0.0
    %5936 = vmatpush1.msra.mxu0 %v1231
    %5937 = vmatprep.subr.mxu0 0.0
    %5938 = vmatpush1.msra.mxu0 %v1232
    %5939 = vmatprep.subr.mxu0 0.0
    %5940 = vmatpush1.msra.mxu0 %v1233
    %5941 = vmatprep.subr.mxu0 0.0
    %5942 = vmatpush1.msra.mxu0 %v1234
    %5943 = vmatprep.subr.mxu0 0.0
    %5944 = vmatpush1.msra.mxu0 %v1235
    %5945 = vmatprep.subr.mxu0 0.0
    %5946 = vmatpush1.msra.mxu0 %v1236
    %5947 = vmatprep.subr.mxu0 0.0
    %5948 = vmatpush1.msra.mxu0 %v1237
    %5949 = vmatprep.subr.mxu0 0.0
    %5950 = vmatpush1.msra.mxu0 %v1238
    %5951 = vmatprep.subr.mxu0 0.0
    %5952 = vmatpush1.msra.mxu0 %v1239
    %5953 = vmatprep.subr.mxu0 0.0
    %5954 = vmatpush1.msra.mxu0 %v1240
    %5955 = vmatprep.subr.mxu0 0.0
    %5956 = vmatpush1.msra.mxu0 %v1241
    %5957 = vmatprep.subr.mxu0 0.0
    %5958 = vmatpush1.msra.mxu0 %v1242
    %5959 = vmatprep.subr.mxu0 0.0
    %5960 = vmatpush1.msra.mxu0 %v1243
    %5961 = vmatprep.subr.mxu0 0.0
    %5962 = vmatpush1.msra.mxu0 %v1244
    %5963 = vmatprep.subr.mxu0 0.0
    %5964 = vmatpush1.msra.mxu0 %v1245
    %5965 = vmatprep.subr.mxu0 0.0
    %5966 = vmatpush1.msra.mxu0 %v1246
    %5967 = vmatprep.subr.mxu0 0.0
    %5968 = vmatpush1.msra.mxu0 %v1247
    %5969 = vmatprep.subr.mxu0 0.0
    %5970 = vmatpush1.msra.mxu0 %v1248
    %5971 = vmatprep.subr.mxu0 0.0
    %5972 = vmatpush1.msra.mxu0 %v1249
    %5973 = vmatprep.subr.mxu0 0.0
    %5974 = vmatpush1.msra.mxu0 %v1250
    %5975 = vmatprep.subr.mxu0 0.0
    %5976 = vmatpush1.msra.mxu0 %v1251
    %5977 = vmatprep.subr.mxu0 0.0
    %5978 = vmatpush1.msra.mxu0 %v1252
    %5979 = vmatprep.subr.mxu0 0.0
    %5980 = vmatpush1.msra.mxu0 %v1253
    %5981 = vmatprep.subr.mxu0 0.0
    %5982 = vmatpush1.msra.mxu0 %v1254
    %5983 = vmatprep.subr.mxu0 0.0
    %5984 = vmatpush1.msra.mxu0 %v1255
    %5985 = vmatprep.subr.mxu0 0.0
    %5986 = vmatpush1.msra.mxu0 %v1256
    %5987 = vmatprep.subr.mxu0 0.0
    %5988 = vmatpush1.msra.mxu0 %v1257
    %5989 = vmatprep.subr.mxu0 0.0
    %5990 = vmatpush1.msra.mxu0 %v1258
    %5991 = vmatprep.subr.mxu0 0.0
    %5992 = vmatpush1.msra.mxu0 %v1259
    %5993 = vmatprep.mubr.f32.mxu0 %v3067
    %5994 = vmatmul.mubr.f32.gmra.mrb[0].mxu0 %v3065
    %v5995 = vpop.f32.mrb[0].mxu0
    %v5996 = vadd.f32 %v5926, %v5995
    %v5997 = vpop.f32.mrb[0].mxu0
    %5998 = vdwg.mxu0
    %5999 = vmatprep.subr.mxu0 0.0
    %6000 = vmatpush1.msra.mxu0 %v1260
    %6001 = vmatprep.subr.mxu0 0.0
    %6002 = vmatpush1.msra.mxu0 %v1261
    %6003 = vmatprep.subr.mxu0 0.0
    %6004 = vmatpush1.msra.mxu0 %v1262
    %6005 = vmatprep.subr.mxu0 0.0
    %6006 = vmatpush1.msra.mxu0 %v1263
    %6007 = vmatprep.subr.mxu0 0.0
    %6008 = vmatpush1.msra.mxu0 %v1264
    %6009 = vmatprep.subr.mxu0 0.0
    %6010 = vmatpush1.msra.mxu0 %v1265
    %6011 = vmatprep.subr.mxu0 0.0
    %6012 = vmatpush1.msra.mxu0 %v1266
    %6013 = vmatprep.subr.mxu0 0.0
    %6014 = vmatpush1.msra.mxu0 %v1267
    %6015 = vmatprep.subr.mxu0 0.0
    %6016 = vmatpush1.msra.mxu0 %v1268
    %6017 = vmatprep.subr.mxu0 0.0
    %6018 = vmatpush1.msra.mxu0 %v1269
    %6019 = vmatprep.subr.mxu0 0.0
    %6020 = vmatpush1.msra.mxu0 %v1270
    %6021 = vmatprep.subr.mxu0 0.0
    %6022 = vmatpush1.msra.mxu0 %v1271
    %6023 = vmatprep.subr.mxu0 0.0
    %6024 = vmatpush1.msra.mxu0 %v1272
    %6025 = vmatprep.subr.mxu0 0.0
    %6026 = vmatpush1.msra.mxu0 %v1273
    %6027 = vmatprep.subr.mxu0 0.0
    %6028 = vmatpush1.msra.mxu0 %v1274
    %6029 = vmatprep.subr.mxu0 0.0
    %6030 = vmatpush1.msra.mxu0 %v1275
    %6031 = vmatprep.subr.mxu0 0.0
    %6032 = vmatpush1.msra.mxu0 %v1276
    %6033 = vmatprep.subr.mxu0 0.0
    %6034 = vmatpush1.msra.mxu0 %v1277
    %6035 = vmatprep.subr.mxu0 0.0
    %6036 = vmatpush1.msra.mxu0 %v1278
    %6037 = vmatprep.subr.mxu0 0.0
    %6038 = vmatpush1.msra.mxu0 %v1279
    %6039 = vmatprep.subr.mxu0 0.0
    %6040 = vmatpush1.msra.mxu0 %v1280
    %6041 = vmatprep.subr.mxu0 0.0
    %6042 = vmatpush1.msra.mxu0 %v1281
    %6043 = vmatprep.subr.mxu0 0.0
    %6044 = vmatpush1.msra.mxu0 %v1282
    %6045 = vmatprep.subr.mxu0 0.0
    %6046 = vmatpush1.msra.mxu0 %v1283
    %6047 = vmatprep.subr.mxu0 0.0
    %6048 = vmatpush1.msra.mxu0 %v1284
    %6049 = vmatprep.subr.mxu0 0.0
    %6050 = vmatpush1.msra.mxu0 %v1285
    %6051 = vmatprep.subr.mxu0 0.0
    %6052 = vmatpush1.msra.mxu0 %v1286
    %6053 = vmatprep.subr.mxu0 0.0
    %6054 = vmatpush1.msra.mxu0 %v1287
    %6055 = vmatprep.subr.mxu0 0.0
    %6056 = vmatpush1.msra.mxu0 %v1288
    %6057 = vmatprep.subr.mxu0 0.0
    %6058 = vmatpush1.msra.mxu0 %v1289
    %6059 = vmatprep.subr.mxu0 0.0
    %6060 = vmatpush1.msra.mxu0 %v1290
    %6061 = vmatprep.subr.mxu0 0.0
    %6062 = vmatpush1.msra.mxu0 %v1291
    %6063 = vmatprep.mubr.f32.mxu0 %v3083
    %6064 = vmatmul.mubr.f32.gmra.mrb[0].mxu0 %v3075
    %v6065 = vpop.f32.mrb[0].mxu0
    %v6066 = vadd.f32 %v5996, %v6065
    %v6067 = vpop.f32.mrb[0].mxu0
    %6068 = vdwg.mxu0
    %6069 = vmatprep.subr.mxu0 0.0
    %6070 = vmatpush1.msra.mxu0 %v1292
    %6071 = vmatprep.subr.mxu0 0.0
    %6072 = vmatpush1.msra.mxu0 %v1293
    %6073 = vmatprep.subr.mxu0 0.0
    %6074 = vmatpush1.msra.mxu0 %v1294
    %6075 = vmatprep.subr.mxu0 0.0
    %6076 = vmatpush1.msra.mxu0 %v1295
    %6077 = vmatprep.subr.mxu0 0.0
    %6078 = vmatpush1.msra.mxu0 %v1296
    %6079 = vmatprep.subr.mxu0 0.0
    %6080 = vmatpush1.msra.mxu0 %v1297
    %6081 = vmatprep.subr.mxu0 0.0
    %6082 = vmatpush1.msra.mxu0 %v1298
    %6083 = vmatprep.subr.mxu0 0.0
    %6084 = vmatpush1.msra.mxu0 %v1299
    %6085 = vmatprep.subr.mxu0 0.0
    %6086 = vmatpush1.msra.mxu0 %v1300
    %6087 = vmatprep.subr.mxu0 0.0
    %6088 = vmatpush1.msra.mxu0 %v1301
    %6089 = vmatprep.subr.mxu0 0.0
    %6090 = vmatpush1.msra.mxu0 %v1302
    %6091 = vmatprep.subr.mxu0 0.0
    %6092 = vmatpush1.msra.mxu0 %v1303
    %6093 = vmatprep.subr.mxu0 0.0
    %6094 = vmatpush1.msra.mxu0 %v1304
    %6095 = vmatprep.subr.mxu0 0.0
    %6096 = vmatpush1.msra.mxu0 %v1305
    %6097 = vmatprep.subr.mxu0 0.0
    %6098 = vmatpush1.msra.mxu0 %v1306
    %6099 = vmatprep.subr.mxu0 0.0
    %6100 = vmatpush1.msra.mxu0 %v1307
    %6101 = vmatprep.subr.mxu0 0.0
    %6102 = vmatpush1.msra.mxu0 %v1308
    %6103 = vmatprep.subr.mxu0 0.0
    %6104 = vmatpush1.msra.mxu0 %v1309
    %6105 = vmatprep.subr.mxu0 0.0
    %6106 = vmatpush1.msra.mxu0 %v1310
    %6107 = vmatprep.subr.mxu0 0.0
    %6108 = vmatpush1.msra.mxu0 %v1311
    %6109 = vmatprep.subr.mxu0 0.0
    %6110 = vmatpush1.msra.mxu0 %v1312
    %6111 = vmatprep.subr.mxu0 0.0
    %6112 = vmatpush1.msra.mxu0 %v1313
    %6113 = vmatprep.subr.mxu0 0.0
    %6114 = vmatpush1.msra.mxu0 %v1314
    %6115 = vmatprep.subr.mxu0 0.0
    %6116 = vmatpush1.msra.mxu0 %v1315
    %6117 = vmatprep.subr.mxu0 0.0
    %6118 = vmatpush1.msra.mxu0 %v1316
    %6119 = vmatprep.subr.mxu0 0.0
    %6120 = vmatpush1.msra.mxu0 %v1317
    %6121 = vmatprep.subr.mxu0 0.0
    %6122 = vmatpush1.msra.mxu0 %v1318
    %6123 = vmatprep.subr.mxu0 0.0
    %6124 = vmatpush1.msra.mxu0 %v1319
    %6125 = vmatprep.subr.mxu0 0.0
    %6126 = vmatpush1.msra.mxu0 %v1320
    %6127 = vmatprep.subr.mxu0 0.0
    %6128 = vmatpush1.msra.mxu0 %v1321
    %6129 = vmatprep.subr.mxu0 0.0
    %6130 = vmatpush1.msra.mxu0 %v1322
    %6131 = vmatprep.subr.mxu0 0.0
    %6132 = vmatpush1.msra.mxu0 %v1323
    %6133 = vmatprep.mubr.f32.mxu0 %v3084
    %6134 = vmatmul.mubr.f32.gmra.mrb[0].mxu0 %v3082
    %v6135 = vpop.f32.mrb[0].mxu0
    %v6136 = vadd.f32 %v6066, %v6135
    %v6137 = vpop.f32.mrb[0].mxu0
    %6138 = vdwg.mxu0
    %6139 = vmatprep.subr.mxu0 0.0
    %6140 = vmatpush1.msra.mxu0 %v1324
    %6141 = vmatprep.subr.mxu0 0.0
    %6142 = vmatpush1.msra.mxu0 %v1325
    %6143 = vmatprep.subr.mxu0 0.0
    %6144 = vmatpush1.msra.mxu0 %v1326
    %6145 = vmatprep.subr.mxu0 0.0
    %6146 = vmatpush1.msra.mxu0 %v1327
    %6147 = vmatprep.subr.mxu0 0.0
    %6148 = vmatpush1.msra.mxu0 %v1328
    %6149 = vmatprep.subr.mxu0 0.0
    %6150 = vmatpush1.msra.mxu0 %v1329
    %6151 = vmatprep.subr.mxu0 0.0
    %6152 = vmatpush1.msra.mxu0 %v1330
    %6153 = vmatprep.subr.mxu0 0.0
    %6154 = vmatpush1.msra.mxu0 %v1331
    %6155 = vmatprep.subr.mxu0 0.0
    %6156 = vmatpush1.msra.mxu0 %v1332
    %6157 = vmatprep.subr.mxu0 0.0
    %6158 = vmatpush1.msra.mxu0 %v1333
    %6159 = vmatprep.subr.mxu0 0.0
    %6160 = vmatpush1.msra.mxu0 %v1334
    %6161 = vmatprep.subr.mxu0 0.0
    %6162 = vmatpush1.msra.mxu0 %v1335
    %6163 = vmatprep.subr.mxu0 0.0
    %6164 = vmatpush1.msra.mxu0 %v1336
    %6165 = vmatprep.subr.mxu0 0.0
    %6166 = vmatpush1.msra.mxu0 %v1337
    %6167 = vmatprep.subr.mxu0 0.0
    %6168 = vmatpush1.msra.mxu0 %v1338
    %6169 = vmatprep.subr.mxu0 0.0
    %6170 = vmatpush1.msra.mxu0 %v1339
    %6171 = vmatprep.subr.mxu0 0.0
    %6172 = vmatpush1.msra.mxu0 %v1340
    %6173 = vmatprep.subr.mxu0 0.0
    %6174 = vmatpush1.msra.mxu0 %v1341
    %6175 = vmatprep.subr.mxu0 0.0
    %6176 = vmatpush1.msra.mxu0 %v1342
    %6177 = vmatprep.subr.mxu0 0.0
    %6178 = vmatpush1.msra.mxu0 %v1343
    %6179 = vmatprep.subr.mxu0 0.0
    %6180 = vmatpush1.msra.mxu0 %v1344
    %6181 = vmatprep.subr.mxu0 0.0
    %6182 = vmatpush1.msra.mxu0 %v1345
    %6183 = vmatprep.subr.mxu0 0.0
    %6184 = vmatpush1.msra.mxu0 %v1346
    %6185 = vmatprep.subr.mxu0 0.0
    %6186 = vmatpush1.msra.mxu0 %v1347
    %6187 = vmatprep.subr.mxu0 0.0
    %6188 = vmatpush1.msra.mxu0 %v1348
    %6189 = vmatprep.subr.mxu0 0.0
    %6190 = vmatpush1.msra.mxu0 %v1349
    %6191 = vmatprep.subr.mxu0 0.0
    %6192 = vmatpush1.msra.mxu0 %v1350
    %6193 = vmatprep.subr.mxu0 0.0
    %6194 = vmatpush1.msra.mxu0 %v1351
    %6195 = vmatprep.subr.mxu0 0.0
    %6196 = vmatpush1.msra.mxu0 %v1352
    %6197 = vmatprep.subr.mxu0 0.0
    %6198 = vmatpush1.msra.mxu0 %v1353
    %6199 = vmatprep.subr.mxu0 0.0
    %6200 = vmatpush1.msra.mxu0 %v1354
    %6201 = vmatprep.subr.mxu0 0.0
    %6202 = vmatpush1.msra.mxu0 %v1355
    %6203 = vmatprep.mubr.f32.mxu0 %v3100
    %6204 = vmatmul.mubr.f32.gmra.mrb[0].mxu0 %v3092
    %v6205 = vpop.f32.mrb[0].mxu0
    %v6206 = vadd.f32 %v6136, %v6205
    %v6207 = vpop.f32.mrb[0].mxu0
    %6208 = vdwg.mxu0
    %6209 = vmatprep.subr.mxu0 0.0
    %6210 = vmatpush1.msra.mxu0 %v1356
    %6211 = vmatprep.subr.mxu0 0.0
    %6212 = vmatpush1.msra.mxu0 %v1357
    %6213 = vmatprep.subr.mxu0 0.0
    %6214 = vmatpush1.msra.mxu0 %v1358
    %6215 = vmatprep.subr.mxu0 0.0
    %6216 = vmatpush1.msra.mxu0 %v1359
    %6217 = vmatprep.subr.mxu0 0.0
    %6218 = vmatpush1.msra.mxu0 %v1360
    %6219 = vmatprep.subr.mxu0 0.0
    %6220 = vmatpush1.msra.mxu0 %v1361
    %6221 = vmatprep.subr.mxu0 0.0
    %6222 = vmatpush1.msra.mxu0 %v1362
    %6223 = vmatprep.subr.mxu0 0.0
    %6224 = vmatpush1.msra.mxu0 %v1363
    %6225 = vmatprep.subr.mxu0 0.0
    %6226 = vmatpush1.msra.mxu0 %v1364
    %6227 = vmatprep.subr.mxu0 0.0
    %6228 = vmatpush1.msra.mxu0 %v1365
    %6229 = vmatprep.subr.mxu0 0.0
    %6230 = vmatpush1.msra.mxu0 %v1366
    %6231 = vmatprep.subr.mxu0 0.0
    %6232 = vmatpush1.msra.mxu0 %v1367
    %6233 = vmatprep.subr.mxu0 0.0
    %6234 = vmatpush1.msra.mxu0 %v1368
    %6235 = vmatprep.subr.mxu0 0.0
    %6236 = vmatpush1.msra.mxu0 %v1369
    %6237 = vmatprep.subr.mxu0 0.0
    %6238 = vmatpush1.msra.mxu0 %v1370
    %6239 = vmatprep.subr.mxu0 0.0
    %6240 = vmatpush1.msra.mxu0 %v1371
    %6241 = vmatprep.subr.mxu0 0.0
    %6242 = vmatpush1.msra.mxu0 %v1372
    %6243 = vmatprep.subr.mxu0 0.0
    %6244 = vmatpush1.msra.mxu0 %v1373
    %6245 = vmatprep.subr.mxu0 0.0
    %6246 = vmatpush1.msra.mxu0 %v1374
    %6247 = vmatprep.subr.mxu0 0.0
    %6248 = vmatpush1.msra.mxu0 %v1375
    %6249 = vmatprep.subr.mxu0 0.0
    %6250 = vmatpush1.msra.mxu0 %v1376
    %6251 = vmatprep.subr.mxu0 0.0
    %6252 = vmatpush1.msra.mxu0 %v1377
    %6253 = vmatprep.subr.mxu0 0.0
    %6254 = vmatpush1.msra.mxu0 %v1378
    %6255 = vmatprep.subr.mxu0 0.0
    %6256 = vmatpush1.msra.mxu0 %v1379
    %6257 = vmatprep.subr.mxu0 0.0
    %6258 = vmatpush1.msra.mxu0 %v1380
    %6259 = vmatprep.subr.mxu0 0.0
    %6260 = vmatpush1.msra.mxu0 %v1381
    %6261 = vmatprep.subr.mxu0 0.0
    %6262 = vmatpush1.msra.mxu0 %v1382
    %6263 = vmatprep.subr.mxu0 0.0
    %6264 = vmatpush1.msra.mxu0 %v1383
    %6265 = vmatprep.subr.mxu0 0.0
    %6266 = vmatpush1.msra.mxu0 %v1384
    %6267 = vmatprep.subr.mxu0 0.0
    %6268 = vmatpush1.msra.mxu0 %v1385
    %6269 = vmatprep.subr.mxu0 0.0
    %6270 = vmatpush1.msra.mxu0 %v1386
    %6271 = vmatprep.subr.mxu0 0.0
    %6272 = vmatpush1.msra.mxu0 %v1387
    %6273 = vmatprep.mubr.f32.mxu0 %v3101
    %6274 = vmatmul.mubr.f32.gmra.mrb[0].mxu0 %v3099
    %v6275 = vpop.f32.mrb[0].mxu0
    %v6276 = vadd.f32 %v6206, %v6275
    %v6277 = vpop.f32.mrb[0].mxu0
    %6278 = vdwg.mxu0
    %6279 = vmatprep.subr.mxu0 0.0
    %6280 = vmatpush1.msra.mxu0 %v1388
    %6281 = vmatprep.subr.mxu0 0.0
    %6282 = vmatpush1.msra.mxu0 %v1389
    %6283 = vmatprep.subr.mxu0 0.0
    %6284 = vmatpush1.msra.mxu0 %v1390
    %6285 = vmatprep.subr.mxu0 0.0
    %6286 = vmatpush1.msra.mxu0 %v1391
    %6287 = vmatprep.subr.mxu0 0.0
    %6288 = vmatpush1.msra.mxu0 %v1392
    %6289 = vmatprep.subr.mxu0 0.0
    %6290 = vmatpush1.msra.mxu0 %v1393
    %6291 = vmatprep.subr.mxu0 0.0
    %6292 = vmatpush1.msra.mxu0 %v1394
    %6293 = vmatprep.subr.mxu0 0.0
    %6294 = vmatpush1.msra.mxu0 %v1395
    %6295 = vmatprep.subr.mxu0 0.0
    %6296 = vmatpush1.msra.mxu0 %v1396
    %6297 = vmatprep.subr.mxu0 0.0
    %6298 = vmatpush1.msra.mxu0 %v1397
    %6299 = vmatprep.subr.mxu0 0.0
    %6300 = vmatpush1.msra.mxu0 %v1398
    %6301 = vmatprep.subr.mxu0 0.0
    %6302 = vmatpush1.msra.mxu0 %v1399
    %6303 = vmatprep.subr.mxu0 0.0
    %6304 = vmatpush1.msra.mxu0 %v1400
    %6305 = vmatprep.subr.mxu0 0.0
    %6306 = vmatpush1.msra.mxu0 %v1401
    %6307 = vmatprep.subr.mxu0 0.0
    %6308 = vmatpush1.msra.mxu0 %v1402
    %6309 = vmatprep.subr.mxu0 0.0
    %6310 = vmatpush1.msra.mxu0 %v1403
    %6311 = vmatprep.subr.mxu0 0.0
    %6312 = vmatpush1.msra.mxu0 %v1404
    %6313 = vmatprep.subr.mxu0 0.0
    %6314 = vmatpush1.msra.mxu0 %v1405
    %6315 = vmatprep.subr.mxu0 0.0
    %6316 = vmatpush1.msra.mxu0 %v1406
    %6317 = vmatprep.subr.mxu0 0.0
    %6318 = vmatpush1.msra.mxu0 %v1407
    %6319 = vmatprep.subr.mxu0 0.0
    %6320 = vmatpush1.msra.mxu0 %v1408
    %6321 = vmatprep.subr.mxu0 0.0
    %6322 = vmatpush1.msra.mxu0 %v1409
    %6323 = vmatprep.subr.mxu0 0.0
    %6324 = vmatpush1.msra.mxu0 %v1410
    %6325 = vmatprep.subr.mxu0 0.0
    %6326 = vmatpush1.msra.mxu0 %v1411
    %6327 = vmatprep.subr.mxu0 0.0
    %6328 = vmatpush1.msra.mxu0 %v1412
    %6329 = vmatprep.subr.mxu0 0.0
    %6330 = vmatpush1.msra.mxu0 %v1413
    %6331 = vmatprep.subr.mxu0 0.0
    %6332 = vmatpush1.msra.mxu0 %v1414
    %6333 = vmatprep.subr.mxu0 0.0
    %6334 = vmatpush1.msra.mxu0 %v1415
    %6335 = vmatprep.subr.mxu0 0.0
    %6336 = vmatpush1.msra.mxu0 %v1416
    %6337 = vmatprep.subr.mxu0 0.0
    %6338 = vmatpush1.msra.mxu0 %v1417
    %6339 = vmatprep.subr.mxu0 0.0
    %6340 = vmatpush1.msra.mxu0 %v1418
    %6341 = vmatprep.subr.mxu0 0.0
    %6342 = vmatpush1.msra.mxu0 %v1419
    %6343 = vmatprep.mubr.f32.mxu0 %v3117
    %6344 = vmatmul.mubr.f32.gmra.mrb[0].mxu0 %v3109
    %v6345 = vpop.f32.mrb[0].mxu0
    %v6346 = vadd.f32 %v6276, %v6345
    %v6347 = vpop.f32.mrb[0].mxu0
    %6348 = vdwg.mxu0
    %6349 = vmatprep.subr.mxu0 0.0
    %6350 = vmatpush1.msra.mxu0 %v1420
    %6351 = vmatprep.subr.mxu0 0.0
    %6352 = vmatpush1.msra.mxu0 %v1421
    %6353 = vmatprep.subr.mxu0 0.0
    %6354 = vmatpush1.msra.mxu0 %v1422
    %6355 = vmatprep.subr.mxu0 0.0
    %6356 = vmatpush1.msra.mxu0 %v1423
    %6357 = vmatprep.subr.mxu0 0.0
    %6358 = vmatpush1.msra.mxu0 %v1424
    %6359 = vmatprep.subr.mxu0 0.0
    %6360 = vmatpush1.msra.mxu0 %v1425
    %6361 = vmatprep.subr.mxu0 0.0
    %6362 = vmatpush1.msra.mxu0 %v1426
    %6363 = vmatprep.subr.mxu0 0.0
    %6364 = vmatpush1.msra.mxu0 %v1427
    %6365 = vmatprep.subr.mxu0 0.0
    %6366 = vmatpush1.msra.mxu0 %v1428
    %6367 = vmatprep.subr.mxu0 0.0
    %6368 = vmatpush1.msra.mxu0 %v1429
    %6369 = vmatprep.subr.mxu0 0.0
    %6370 = vmatpush1.msra.mxu0 %v1430
    %6371 = vmatprep.subr.mxu0 0.0
    %6372 = vmatpush1.msra.mxu0 %v1431
    %6373 = vmatprep.subr.mxu0 0.0
    %6374 = vmatpush1.msra.mxu0 %v1432
    %6375 = vmatprep.subr.mxu0 0.0
    %6376 = vmatpush1.msra.mxu0 %v1433
    %6377 = vmatprep.subr.mxu0 0.0
    %6378 = vmatpush1.msra.mxu0 %v1434
    %6379 = vmatprep.subr.mxu0 0.0
    %6380 = vmatpush1.msra.mxu0 %v1435
    %6381 = vmatprep.subr.mxu0 0.0
    %6382 = vmatpush1.msra.mxu0 %v1436
    %6383 = vmatprep.subr.mxu0 0.0
    %6384 = vmatpush1.msra.mxu0 %v1437
    %6385 = vmatprep.subr.mxu0 0.0
    %6386 = vmatpush1.msra.mxu0 %v1438
    %6387 = vmatprep.subr.mxu0 0.0
    %6388 = vmatpush1.msra.mxu0 %v1439
    %6389 = vmatprep.subr.mxu0 0.0
    %6390 = vmatpush1.msra.mxu0 %v1440
    %6391 = vmatprep.subr.mxu0 0.0
    %6392 = vmatpush1.msra.mxu0 %v1441
    %6393 = vmatprep.subr.mxu0 0.0
    %6394 = vmatpush1.msra.mxu0 %v1442
    %6395 = vmatprep.subr.mxu0 0.0
    %6396 = vmatpush1.msra.mxu0 %v1443
    %6397 = vmatprep.subr.mxu0 0.0
    %6398 = vmatpush1.msra.mxu0 %v1444
    %6399 = vmatprep.subr.mxu0 0.0
    %6400 = vmatpush1.msra.mxu0 %v1445
    %6401 = vmatprep.subr.mxu0 0.0
    %6402 = vmatpush1.msra.mxu0 %v1446
    %6403 = vmatprep.subr.mxu0 0.0
    %6404 = vmatpush1.msra.mxu0 %v1447
    %6405 = vmatprep.subr.mxu0 0.0
    %6406 = vmatpush1.msra.mxu0 %v1448
    %6407 = vmatprep.subr.mxu0 0.0
    %6408 = vmatpush1.msra.mxu0 %v1449
    %6409 = vmatprep.subr.mxu0 0.0
    %6410 = vmatpush1.msra.mxu0 %v1450
    %6411 = vmatprep.subr.mxu0 0.0
    %6412 = vmatpush1.msra.mxu0 %v1451
    %6413 = vmatprep.mubr.f32.mxu0 %v3118
    %6414 = vmatmul.mubr.f32.gmra.mrb[0].mxu0 %v3116
    %v6415 = vpop.f32.mrb[0].mxu0
    %v6416 = vadd.f32 %v6346, %v6415
    %v6417 = vpop.f32.mrb[0].mxu0
    %6418 = vdwg.mxu0
    %6419 = vmatprep.subr.mxu0 0.0
    %6420 = vmatpush1.msra.mxu0 %v1452
    %6421 = vmatprep.subr.mxu0 0.0
    %6422 = vmatpush1.msra.mxu0 %v1453
    %6423 = vmatprep.subr.mxu0 0.0
    %6424 = vmatpush1.msra.mxu0 %v1454
    %6425 = vmatprep.subr.mxu0 0.0
    %6426 = vmatpush1.msra.mxu0 %v1455
    %6427 = vmatprep.subr.mxu0 0.0
    %6428 = vmatpush1.msra.mxu0 %v1456
    %6429 = vmatprep.subr.mxu0 0.0
    %6430 = vmatpush1.msra.mxu0 %v1457
    %6431 = vmatprep.subr.mxu0 0.0
    %6432 = vmatpush1.msra.mxu0 %v1458
    %6433 = vmatprep.subr.mxu0 0.0
    %6434 = vmatpush1.msra.mxu0 %v1459
    %6435 = vmatprep.subr.mxu0 0.0
    %6436 = vmatpush1.msra.mxu0 %v1460
    %6437 = vmatprep.subr.mxu0 0.0
    %6438 = vmatpush1.msra.mxu0 %v1461
    %6439 = vmatprep.subr.mxu0 0.0
    %6440 = vmatpush1.msra.mxu0 %v1462
    %6441 = vmatprep.subr.mxu0 0.0
    %6442 = vmatpush1.msra.mxu0 %v1463
    %6443 = vmatprep.subr.mxu0 0.0
    %6444 = vmatpush1.msra.mxu0 %v1464
    %6445 = vmatprep.subr.mxu0 0.0
    %6446 = vmatpush1.msra.mxu0 %v1465
    %6447 = vmatprep.subr.mxu0 0.0
    %6448 = vmatpush1.msra.mxu0 %v1466
    %6449 = vmatprep.subr.mxu0 0.0
    %6450 = vmatpush1.msra.mxu0 %v1467
    %6451 = vmatprep.subr.mxu0 0.0
    %6452 = vmatpush1.msra.mxu0 %v1468
    %6453 = vmatprep.subr.mxu0 0.0
    %6454 = vmatpush1.msra.mxu0 %v1469
    %6455 = vmatprep.subr.mxu0 0.0
    %6456 = vmatpush1.msra.mxu0 %v1470
    %6457 = vmatprep.subr.mxu0 0.0
    %6458 = vmatpush1.msra.mxu0 %v1471
    %6459 = vmatprep.subr.mxu0 0.0
    %6460 = vmatpush1.msra.mxu0 %v1472
    %6461 = vmatprep.subr.mxu0 0.0
    %6462 = vmatpush1.msra.mxu0 %v1473
    %6463 = vmatprep.subr.mxu0 0.0
    %6464 = vmatpush1.msra.mxu0 %v1474
    %6465 = vmatprep.subr.mxu0 0.0
    %6466 = vmatpush1.msra.mxu0 %v1475
    %6467 = vmatprep.subr.mxu0 0.0
    %6468 = vmatpush1.msra.mxu0 %v1476
    %6469 = vmatprep.subr.mxu0 0.0
    %6470 = vmatpush1.msra.mxu0 %v1477
    %6471 = vmatprep.subr.mxu0 0.0
    %6472 = vmatpush1.msra.mxu0 %v1478
    %6473 = vmatprep.subr.mxu0 0.0
    %6474 = vmatpush1.msra.mxu0 %v1479
    %6475 = vmatprep.subr.mxu0 0.0
    %6476 = vmatpush1.msra.mxu0 %v1480
    %6477 = vmatprep.subr.mxu0 0.0
    %6478 = vmatpush1.msra.mxu0 %v1481
    %6479 = vmatprep.subr.mxu0 0.0
    %6480 = vmatpush1.msra.mxu0 %v1482
    %6481 = vmatprep.subr.mxu0 0.0
    %6482 = vmatpush1.msra.mxu0 %v1483
    %6483 = vmatprep.mubr.f32.mxu0 %v3134
    %6484 = vmatmul.mubr.f32.gmra.mrb[0].mxu0 %v3126
    %v6485 = vpop.f32.mrb[0].mxu0
    %v6486 = vadd.f32 %v6416, %v6485
    %v6487 = vpop.f32.mrb[0].mxu0
    %6488 = vdwg.mxu0
    %6489 = vmatprep.subr.mxu0 0.0
    %6490 = vmatpush1.msra.mxu0 %v1484
    %6491 = vmatprep.subr.mxu0 0.0
    %6492 = vmatpush1.msra.mxu0 %v1485
    %6493 = vmatprep.subr.mxu0 0.0
    %6494 = vmatpush1.msra.mxu0 %v1486
    %6495 = vmatprep.subr.mxu0 0.0
    %6496 = vmatpush1.msra.mxu0 %v1487
    %6497 = vmatprep.subr.mxu0 0.0
    %6498 = vmatpush1.msra.mxu0 %v1488
    %6499 = vmatprep.subr.mxu0 0.0
    %6500 = vmatpush1.msra.mxu0 %v1489
    %6501 = vmatprep.subr.mxu0 0.0
    %6502 = vmatpush1.msra.mxu0 %v1490
    %6503 = vmatprep.subr.mxu0 0.0
    %6504 = vmatpush1.msra.mxu0 %v1491
    %6505 = vmatprep.subr.mxu0 0.0
    %6506 = vmatpush1.msra.mxu0 %v1492
    %6507 = vmatprep.subr.mxu0 0.0
    %6508 = vmatpush1.msra.mxu0 %v1493
    %6509 = vmatprep.subr.mxu0 0.0
    %6510 = vmatpush1.msra.mxu0 %v1494
    %6511 = vmatprep.subr.mxu0 0.0
    %6512 = vmatpush1.msra.mxu0 %v1495
    %6513 = vmatprep.subr.mxu0 0.0
    %6514 = vmatpush1.msra.mxu0 %v1496
    %6515 = vmatprep.subr.mxu0 0.0
    %6516 = vmatpush1.msra.mxu0 %v1497
    %6517 = vmatprep.subr.mxu0 0.0
    %6518 = vmatpush1.msra.mxu0 %v1498
    %6519 = vmatprep.subr.mxu0 0.0
    %6520 = vmatpush1.msra.mxu0 %v1499
    %6521 = vmatprep.subr.mxu0 0.0
    %6522 = vmatpush1.msra.mxu0 %v1500
    %6523 = vmatprep.subr.mxu0 0.0
    %6524 = vmatpush1.msra.mxu0 %v1501
    %6525 = vmatprep.subr.mxu0 0.0
    %6526 = vmatpush1.msra.mxu0 %v1502
    %6527 = vmatprep.subr.mxu0 0.0
    %6528 = vmatpush1.msra.mxu0 %v1503
    %6529 = vmatprep.subr.mxu0 0.0
    %6530 = vmatpush1.msra.mxu0 %v1504
    %6531 = vmatprep.subr.mxu0 0.0
    %6532 = vmatpush1.msra.mxu0 %v1505
    %6533 = vmatprep.subr.mxu0 0.0
    %6534 = vmatpush1.msra.mxu0 %v1506
    %6535 = vmatprep.subr.mxu0 0.0
    %6536 = vmatpush1.msra.mxu0 %v1507
    %6537 = vmatprep.subr.mxu0 0.0
    %6538 = vmatpush1.msra.mxu0 %v1508
    %6539 = vmatprep.subr.mxu0 0.0
    %6540 = vmatpush1.msra.mxu0 %v1509
    %6541 = vmatprep.subr.mxu0 0.0
    %6542 = vmatpush1.msra.mxu0 %v1510
    %6543 = vmatprep.subr.mxu0 0.0
    %6544 = vmatpush1.msra.mxu0 %v1511
    %6545 = vmatprep.subr.mxu0 0.0
    %6546 = vmatpush1.msra.mxu0 %v1512
    %6547 = vmatprep.subr.mxu0 0.0
    %6548 = vmatpush1.msra.mxu0 %v1513
    %6549 = vmatprep.subr.mxu0 0.0
    %6550 = vmatpush1.msra.mxu0 %v1514
    %6551 = vmatprep.subr.mxu0 0.0
    %6552 = vmatpush1.msra.mxu0 %v1515
    %6553 = vmatprep.mubr.f32.mxu0 %v3135
    %6554 = vmatmul.mubr.f32.gmra.mrb[0].mxu0 %v3133
    %v6555 = vpop.f32.mrb[0].mxu0
    %v6556 = vadd.f32 %v6486, %v6555
    %v6557 = vpop.f32.mrb[0].mxu0
    %6558 = vdwg.mxu0
    %6559 = vmatprep.subr.mxu0 0.0
    %6560 = vmatpush1.msra.mxu0 %v1516
    %6561 = vmatprep.subr.mxu0 0.0
    %6562 = vmatpush1.msra.mxu0 %v1517
    %6563 = vmatprep.subr.mxu0 0.0
    %6564 = vmatpush1.msra.mxu0 %v1518
    %6565 = vmatprep.subr.mxu0 0.0
    %6566 = vmatpush1.msra.mxu0 %v1519
    %6567 = vmatprep.subr.mxu0 0.0
    %6568 = vmatpush1.msra.mxu0 %v1520
    %6569 = vmatprep.subr.mxu0 0.0
    %6570 = vmatpush1.msra.mxu0 %v1521
    %6571 = vmatprep.subr.mxu0 0.0
    %6572 = vmatpush1.msra.mxu0 %v1522
    %6573 = vmatprep.subr.mxu0 0.0
    %6574 = vmatpush1.msra.mxu0 %v1523
    %6575 = vmatprep.subr.mxu0 0.0
    %6576 = vmatpush1.msra.mxu0 %v1524
    %6577 = vmatprep.subr.mxu0 0.0
    %6578 = vmatpush1.msra.mxu0 %v1525
    %6579 = vmatprep.subr.mxu0 0.0
    %6580 = vmatpush1.msra.mxu0 %v1526
    %6581 = vmatprep.subr.mxu0 0.0
    %6582 = vmatpush1.msra.mxu0 %v1527
    %6583 = vmatprep.subr.mxu0 0.0
    %6584 = vmatpush1.msra.mxu0 %v1528
    %6585 = vmatprep.subr.mxu0 0.0
    %6586 = vmatpush1.msra.mxu0 %v1529
    %6587 = vmatprep.subr.mxu0 0.0
    %6588 = vmatpush1.msra.mxu0 %v1530
    %6589 = vmatprep.subr.mxu0 0.0
    %6590 = vmatpush1.msra.mxu0 %v1531
    %6591 = vmatprep.subr.mxu0 0.0
    %6592 = vmatpush1.msra.mxu0 %v1532
    %6593 = vmatprep.subr.mxu0 0.0
    %6594 = vmatpush1.msra.mxu0 %v1533
    %6595 = vmatprep.subr.mxu0 0.0
    %6596 = vmatpush1.msra.mxu0 %v1534
    %6597 = vmatprep.subr.mxu0 0.0
    %6598 = vmatpush1.msra.mxu0 %v1535
    %6599 = vmatprep.subr.mxu0 0.0
    %6600 = vmatpush1.msra.mxu0 %v1536
    %6601 = vmatprep.subr.mxu0 0.0
    %6602 = vmatpush1.msra.mxu0 %v1537
    %6603 = vmatprep.subr.mxu0 0.0
    %6604 = vmatpush1.msra.mxu0 %v1538
    %6605 = vmatprep.subr.mxu0 0.0
    %6606 = vmatpush1.msra.mxu0 %v1539
    %6607 = vmatprep.subr.mxu0 0.0
    %6608 = vmatpush1.msra.mxu0 %v1540
    %6609 = vmatprep.subr.mxu0 0.0
    %6610 = vmatpush1.msra.mxu0 %v1541
    %6611 = vmatprep.subr.mxu0 0.0
    %6612 = vmatpush1.msra.mxu0 %v1542
    %6613 = vmatprep.subr.mxu0 0.0
    %6614 = vmatpush1.msra.mxu0 %v1543
    %6615 = vmatprep.subr.mxu0 0.0
    %6616 = vmatpush1.msra.mxu0 %v1544
    %6617 = vmatprep.subr.mxu0 0.0
    %6618 = vmatpush1.msra.mxu0 %v1545
    %6619 = vmatprep.subr.mxu0 0.0
    %6620 = vmatpush1.msra.mxu0 %v1546
    %6621 = vmatprep.subr.mxu0 0.0
    %6622 = vmatpush1.msra.mxu0 %v1547
    %6623 = vmatprep.mubr.f32.mxu0 %v3151
    %6624 = vmatmul.mubr.f32.gmra.mrb[0].mxu0 %v3143
    %v6625 = vpop.f32.mrb[0].mxu0
    %v6626 = vadd.f32 %v6556, %v6625
    %v6627 = vpop.f32.mrb[0].mxu0
    %6628 = vdwg.mxu0
    %6629 = vmatprep.subr.mxu0 0.0
    %6630 = vmatpush1.msra.mxu0 %v1548
    %6631 = vmatprep.subr.mxu0 0.0
    %6632 = vmatpush1.msra.mxu0 %v1549
    %6633 = vmatprep.subr.mxu0 0.0
    %6634 = vmatpush1.msra.mxu0 %v1550
    %6635 = vmatprep.subr.mxu0 0.0
    %6636 = vmatpush1.msra.mxu0 %v1551
    %6637 = vmatprep.subr.mxu0 0.0
    %6638 = vmatpush1.msra.mxu0 %v1552
    %6639 = vmatprep.subr.mxu0 0.0
    %6640 = vmatpush1.msra.mxu0 %v1553
    %6641 = vmatprep.subr.mxu0 0.0
    %6642 = vmatpush1.msra.mxu0 %v1554
    %6643 = vmatprep.subr.mxu0 0.0
    %6644 = vmatpush1.msra.mxu0 %v1555
    %6645 = vmatprep.subr.mxu0 0.0
    %6646 = vmatpush1.msra.mxu0 %v1556
    %6647 = vmatprep.subr.mxu0 0.0
    %6648 = vmatpush1.msra.mxu0 %v1557
    %6649 = vmatprep.subr.mxu0 0.0
    %6650 = vmatpush1.msra.mxu0 %v1558
    %6651 = vmatprep.subr.mxu0 0.0
    %6652 = vmatpush1.msra.mxu0 %v1559
    %6653 = vmatprep.subr.mxu0 0.0
    %6654 = vmatpush1.msra.mxu0 %v1560
    %6655 = vmatprep.subr.mxu0 0.0
    %6656 = vmatpush1.msra.mxu0 %v1561
    %6657 = vmatprep.subr.mxu0 0.0
    %6658 = vmatpush1.msra.mxu0 %v1562
    %6659 = vmatprep.subr.mxu0 0.0
    %6660 = vmatpush1.msra.mxu0 %v1563
    %6661 = vmatprep.subr.mxu0 0.0
    %6662 = vmatpush1.msra.mxu0 %v1564
    %6663 = vmatprep.subr.mxu0 0.0
    %6664 = vmatpush1.msra.mxu0 %v1565
    %6665 = vmatprep.subr.mxu0 0.0
    %6666 = vmatpush1.msra.mxu0 %v1566
    %6667 = vmatprep.subr.mxu0 0.0
    %6668 = vmatpush1.msra.mxu0 %v1567
    %6669 = vmatprep.subr.mxu0 0.0
    %6670 = vmatpush1.msra.mxu0 %v1568
    %6671 = vmatprep.subr.mxu0 0.0
    %6672 = vmatpush1.msra.mxu0 %v1569
    %6673 = vmatprep.subr.mxu0 0.0
    %6674 = vmatpush1.msra.mxu0 %v1570
    %6675 = vmatprep.subr.mxu0 0.0
    %6676 = vmatpush1.msra.mxu0 %v1571
    %6677 = vmatprep.subr.mxu0 0.0
    %6678 = vmatpush1.msra.mxu0 %v1572
    %6679 = vmatprep.subr.mxu0 0.0
    %6680 = vmatpush1.msra.mxu0 %v1573
    %6681 = vmatprep.subr.mxu0 0.0
    %6682 = vmatpush1.msra.mxu0 %v1574
    %6683 = vmatprep.subr.mxu0 0.0
    %6684 = vmatpush1.msra.mxu0 %v1575
    %6685 = vmatprep.subr.mxu0 0.0
    %6686 = vmatpush1.msra.mxu0 %v1576
    %6687 = vmatprep.subr.mxu0 0.0
    %6688 = vmatpush1.msra.mxu0 %v1577
    %6689 = vmatprep.subr.mxu0 0.0
    %6690 = vmatpush1.msra.mxu0 %v1578
    %6691 = vmatprep.subr.mxu0 0.0
    %6692 = vmatpush1.msra.mxu0 %v1579
    %6693 = vmatprep.mubr.f32.mxu0 %v3152
    %6694 = vmatmul.mubr.f32.gmra.mrb[0].mxu0 %v3150
    %v6695 = vpop.f32.mrb[0].mxu0
    %v6696 = vadd.f32 %v6626, %v6695
    %v6697 = vpop.f32.mrb[0].mxu0
    %6698 = vdwg.mxu0
    %6699 = vmatprep.subr.mxu0 0.0
    %6700 = vmatpush1.msra.mxu0 %v1580
    %6701 = vmatprep.subr.mxu0 0.0
    %6702 = vmatpush1.msra.mxu0 %v1581
    %6703 = vmatprep.subr.mxu0 0.0
    %6704 = vmatpush1.msra.mxu0 %v1582
    %6705 = vmatprep.subr.mxu0 0.0
    %6706 = vmatpush1.msra.mxu0 %v1583
    %6707 = vmatprep.subr.mxu0 0.0
    %6708 = vmatpush1.msra.mxu0 %v1584
    %6709 = vmatprep.subr.mxu0 0.0
    %6710 = vmatpush1.msra.mxu0 %v1585
    %6711 = vmatprep.subr.mxu0 0.0
    %6712 = vmatpush1.msra.mxu0 %v1586
    %6713 = vmatprep.subr.mxu0 0.0
    %6714 = vmatpush1.msra.mxu0 %v1587
    %6715 = vmatprep.subr.mxu0 0.0
    %6716 = vmatpush1.msra.mxu0 %v1588
    %6717 = vmatprep.subr.mxu0 0.0
    %6718 = vmatpush1.msra.mxu0 %v1589
    %6719 = vmatprep.subr.mxu0 0.0
    %6720 = vmatpush1.msra.mxu0 %v1590
    %6721 = vmatprep.subr.mxu0 0.0
    %6722 = vmatpush1.msra.mxu0 %v1591
    %6723 = vmatprep.subr.mxu0 0.0
    %6724 = vmatpush1.msra.mxu0 %v1592
    %6725 = vmatprep.subr.mxu0 0.0
    %6726 = vmatpush1.msra.mxu0 %v1593
    %6727 = vmatprep.subr.mxu0 0.0
    %6728 = vmatpush1.msra.mxu0 %v1594
    %6729 = vmatprep.subr.mxu0 0.0
    %6730 = vmatpush1.msra.mxu0 %v1595
    %6731 = vmatprep.subr.mxu0 0.0
    %6732 = vmatpush1.msra.mxu0 %v1596
    %6733 = vmatprep.subr.mxu0 0.0
    %6734 = vmatpush1.msra.mxu0 %v1597
    %6735 = vmatprep.subr.mxu0 0.0
    %6736 = vmatpush1.msra.mxu0 %v1598
    %6737 = vmatprep.subr.mxu0 0.0
    %6738 = vmatpush1.msra.mxu0 %v1599
    %6739 = vmatprep.subr.mxu0 0.0
    %6740 = vmatpush1.msra.mxu0 %v1600
    %6741 = vmatprep.subr.mxu0 0.0
    %6742 = vmatpush1.msra.mxu0 %v1601
    %6743 = vmatprep.subr.mxu0 0.0
    %6744 = vmatpush1.msra.mxu0 %v1602
    %6745 = vmatprep.subr.mxu0 0.0
    %6746 = vmatpush1.msra.mxu0 %v1603
    %6747 = vmatprep.subr.mxu0 0.0
    %6748 = vmatpush1.msra.mxu0 %v1604
    %6749 = vmatprep.subr.mxu0 0.0
    %6750 = vmatpush1.msra.mxu0 %v1605
    %6751 = vmatprep.subr.mxu0 0.0
    %6752 = vmatpush1.msra.mxu0 %v1606
    %6753 = vmatprep.subr.mxu0 0.0
    %6754 = vmatpush1.msra.mxu0 %v1607
    %6755 = vmatprep.subr.mxu0 0.0
    %6756 = vmatpush1.msra.mxu0 %v1608
    %6757 = vmatprep.subr.mxu0 0.0
    %6758 = vmatpush1.msra.mxu0 %v1609
    %6759 = vmatprep.subr.mxu0 0.0
    %6760 = vmatpush1.msra.mxu0 %v1610
    %6761 = vmatprep.subr.mxu0 0.0
    %6762 = vmatpush1.msra.mxu0 %v1611
    %6763 = vmatprep.mubr.f32.mxu0 %v3168
    %6764 = vmatmul.mubr.f32.gmra.mrb[0].mxu0 %v3160
    %v6765 = vpop.f32.mrb[0].mxu0
    %v6766 = vadd.f32 %v6696, %v6765
    %v6767 = vpop.f32.mrb[0].mxu0
    %6768 = vdwg.mxu0
    %6769 = vmatprep.subr.mxu0 0.0
    %6770 = vmatpush1.msra.mxu0 %v1612
    %6771 = vmatprep.subr.mxu0 0.0
    %6772 = vmatpush1.msra.mxu0 %v1613
    %6773 = vmatprep.subr.mxu0 0.0
    %6774 = vmatpush1.msra.mxu0 %v1614
    %6775 = vmatprep.subr.mxu0 0.0
    %6776 = vmatpush1.msra.mxu0 %v1615
    %6777 = vmatprep.subr.mxu0 0.0
    %6778 = vmatpush1.msra.mxu0 %v1616
    %6779 = vmatprep.subr.mxu0 0.0
    %6780 = vmatpush1.msra.mxu0 %v1617
    %6781 = vmatprep.subr.mxu0 0.0
    %6782 = vmatpush1.msra.mxu0 %v1618
    %6783 = vmatprep.subr.mxu0 0.0
    %6784 = vmatpush1.msra.mxu0 %v1619
    %6785 = vmatprep.subr.mxu0 0.0
    %6786 = vmatpush1.msra.mxu0 %v1620
    %6787 = vmatprep.subr.mxu0 0.0
    %6788 = vmatpush1.msra.mxu0 %v1621
    %6789 = vmatprep.subr.mxu0 0.0
    %6790 = vmatpush1.msra.mxu0 %v1622
    %6791 = vmatprep.subr.mxu0 0.0
    %6792 = vmatpush1.msra.mxu0 %v1623
    %6793 = vmatprep.subr.mxu0 0.0
    %6794 = vmatpush1.msra.mxu0 %v1624
    %6795 = vmatprep.subr.mxu0 0.0
    %6796 = vmatpush1.msra.mxu0 %v1625
    %6797 = vmatprep.subr.mxu0 0.0
    %6798 = vmatpush1.msra.mxu0 %v1626
    %6799 = vmatprep.subr.mxu0 0.0
    %6800 = vmatpush1.msra.mxu0 %v1627
    %6801 = vmatprep.subr.mxu0 0.0
    %6802 = vmatpush1.msra.mxu0 %v1628
    %6803 = vmatprep.subr.mxu0 0.0
    %6804 = vmatpush1.msra.mxu0 %v1629
    %6805 = vmatprep.subr.mxu0 0.0
    %6806 = vmatpush1.msra.mxu0 %v1630
    %6807 = vmatprep.subr.mxu0 0.0
    %6808 = vmatpush1.msra.mxu0 %v1631
    %6809 = vmatprep.subr.mxu0 0.0
    %6810 = vmatpush1.msra.mxu0 %v1632
    %6811 = vmatprep.subr.mxu0 0.0
    %6812 = vmatpush1.msra.mxu0 %v1633
    %6813 = vmatprep.subr.mxu0 0.0
    %6814 = vmatpush1.msra.mxu0 %v1634
    %6815 = vmatprep.subr.mxu0 0.0
    %6816 = vmatpush1.msra.mxu0 %v1635
    %6817 = vmatprep.subr.mxu0 0.0
    %6818 = vmatpush1.msra.mxu0 %v1636
    %6819 = vmatprep.subr.mxu0 0.0
    %6820 = vmatpush1.msra.mxu0 %v1637
    %6821 = vmatprep.subr.mxu0 0.0
    %6822 = vmatpush1.msra.mxu0 %v1638
    %6823 = vmatprep.subr.mxu0 0.0
    %6824 = vmatpush1.msra.mxu0 %v1639
    %6825 = vmatprep.subr.mxu0 0.0
    %6826 = vmatpush1.msra.mxu0 %v1640
    %6827 = vmatprep.subr.mxu0 0.0
    %6828 = vmatpush1.msra.mxu0 %v1641
    %6829 = vmatprep.subr.mxu0 0.0
    %6830 = vmatpush1.msra.mxu0 %v1642
    %6831 = vmatprep.subr.mxu0 0.0
    %6832 = vmatpush1.msra.mxu0 %v1643
    %6833 = vmatprep.mubr.f32.mxu0 %v3169
    %6834 = vmatmul.mubr.f32.gmra.mrb[0].mxu0 %v3167
    %v6835 = vpop.f32.mrb[0].mxu0
    %v6836 = vadd.f32 %v6766, %v6835
    %v6837 = vpop.f32.mrb[0].mxu0
    %6838 = vdwg.mxu0
    %6839 = vmatprep.subr.mxu0 0.0
    %6840 = vmatpush1.msra.mxu0 %v1644
    %6841 = vmatprep.subr.mxu0 0.0
    %6842 = vmatpush1.msra.mxu0 %v1645
    %6843 = vmatprep.subr.mxu0 0.0
    %6844 = vmatpush1.msra.mxu0 %v1646
    %6845 = vmatprep.subr.mxu0 0.0
    %6846 = vmatpush1.msra.mxu0 %v1647
    %6847 = vmatprep.subr.mxu0 0.0
    %6848 = vmatpush1.msra.mxu0 %v1648
    %6849 = vmatprep.subr.mxu0 0.0
    %6850 = vmatpush1.msra.mxu0 %v1649
    %6851 = vmatprep.subr.mxu0 0.0
    %6852 = vmatpush1.msra.mxu0 %v1650
    %6853 = vmatprep.subr.mxu0 0.0
    %6854 = vmatpush1.msra.mxu0 %v1651
    %6855 = vmatprep.subr.mxu0 0.0
    %6856 = vmatpush1.msra.mxu0 %v1652
    %6857 = vmatprep.subr.mxu0 0.0
    %6858 = vmatpush1.msra.mxu0 %v1653
    %6859 = vmatprep.subr.mxu0 0.0
    %6860 = vmatpush1.msra.mxu0 %v1654
    %6861 = vmatprep.subr.mxu0 0.0
    %6862 = vmatpush1.msra.mxu0 %v1655
    %6863 = vmatprep.subr.mxu0 0.0
    %6864 = vmatpush1.msra.mxu0 %v1656
    %6865 = vmatprep.subr.mxu0 0.0
    %6866 = vmatpush1.msra.mxu0 %v1657
    %6867 = vmatprep.subr.mxu0 0.0
    %6868 = vmatpush1.msra.mxu0 %v1658
    %6869 = vmatprep.subr.mxu0 0.0
    %6870 = vmatpush1.msra.mxu0 %v1659
    %6871 = vmatprep.subr.mxu0 0.0
    %6872 = vmatpush1.msra.mxu0 %v1660
    %6873 = vmatprep.subr.mxu0 0.0
    %6874 = vmatpush1.msra.mxu0 %v1661
    %6875 = vmatprep.subr.mxu0 0.0
    %6876 = vmatpush1.msra.mxu0 %v1662
    %6877 = vmatprep.subr.mxu0 0.0
    %6878 = vmatpush1.msra.mxu0 %v1663
    %6879 = vmatprep.subr.mxu0 0.0
    %6880 = vmatpush1.msra.mxu0 %v1664
    %6881 = vmatprep.subr.mxu0 0.0
    %6882 = vmatpush1.msra.mxu0 %v1665
    %6883 = vmatprep.subr.mxu0 0.0
    %6884 = vmatpush1.msra.mxu0 %v1666
    %6885 = vmatprep.subr.mxu0 0.0
    %6886 = vmatpush1.msra.mxu0 %v1667
    %6887 = vmatprep.subr.mxu0 0.0
    %6888 = vmatpush1.msra.mxu0 %v1668
    %6889 = vmatprep.subr.mxu0 0.0
    %6890 = vmatpush1.msra.mxu0 %v1669
    %6891 = vmatprep.subr.mxu0 0.0
    %6892 = vmatpush1.msra.mxu0 %v1670
    %6893 = vmatprep.subr.mxu0 0.0
    %6894 = vmatpush1.msra.mxu0 %v1671
    %6895 = vmatprep.subr.mxu0 0.0
    %6896 = vmatpush1.msra.mxu0 %v1672
    %6897 = vmatprep.subr.mxu0 0.0
    %6898 = vmatpush1.msra.mxu0 %v1673
    %6899 = vmatprep.subr.mxu0 0.0
    %6900 = vmatpush1.msra.mxu0 %v1674
    %6901 = vmatprep.subr.mxu0 0.0
    %6902 = vmatpush1.msra.mxu0 %v1675
    %6903 = vmatprep.mubr.f32.mxu0 %v3185
    %6904 = vmatmul.mubr.f32.gmra.mrb[0].mxu0 %v3177
    %v6905 = vpop.f32.mrb[0].mxu0
    %v6906 = vadd.f32 %v6836, %v6905
    %v6907 = vpop.f32.mrb[0].mxu0
    %6908 = vdwg.mxu0
    %6909 = vmatprep.subr.mxu0 0.0
    %6910 = vmatpush1.msra.mxu0 %v1676
    %6911 = vmatprep.subr.mxu0 0.0
    %6912 = vmatpush1.msra.mxu0 %v1677
    %6913 = vmatprep.subr.mxu0 0.0
    %6914 = vmatpush1.msra.mxu0 %v1678
    %6915 = vmatprep.subr.mxu0 0.0
    %6916 = vmatpush1.msra.mxu0 %v1679
    %6917 = vmatprep.subr.mxu0 0.0
    %6918 = vmatpush1.msra.mxu0 %v1680
    %6919 = vmatprep.subr.mxu0 0.0
    %6920 = vmatpush1.msra.mxu0 %v1681
    %6921 = vmatprep.subr.mxu0 0.0
    %6922 = vmatpush1.msra.mxu0 %v1682
    %6923 = vmatprep.subr.mxu0 0.0
    %6924 = vmatpush1.msra.mxu0 %v1683
    %6925 = vmatprep.subr.mxu0 0.0
    %6926 = vmatpush1.msra.mxu0 %v1684
    %6927 = vmatprep.subr.mxu0 0.0
    %6928 = vmatpush1.msra.mxu0 %v1685
    %6929 = vmatprep.subr.mxu0 0.0
    %6930 = vmatpush1.msra.mxu0 %v1686
    %6931 = vmatprep.subr.mxu0 0.0
    %6932 = vmatpush1.msra.mxu0 %v1687
    %6933 = vmatprep.subr.mxu0 0.0
    %6934 = vmatpush1.msra.mxu0 %v1688
    %6935 = vmatprep.subr.mxu0 0.0
    %6936 = vmatpush1.msra.mxu0 %v1689
    %6937 = vmatprep.subr.mxu0 0.0
    %6938 = vmatpush1.msra.mxu0 %v1690
    %6939 = vmatprep.subr.mxu0 0.0
    %6940 = vmatpush1.msra.mxu0 %v1691
    %6941 = vmatprep.subr.mxu0 0.0
    %6942 = vmatpush1.msra.mxu0 %v1692
    %6943 = vmatprep.subr.mxu0 0.0
    %6944 = vmatpush1.msra.mxu0 %v1693
    %6945 = vmatprep.subr.mxu0 0.0
    %6946 = vmatpush1.msra.mxu0 %v1694
    %6947 = vmatprep.subr.mxu0 0.0
    %6948 = vmatpush1.msra.mxu0 %v1695
    %6949 = vmatprep.subr.mxu0 0.0
    %6950 = vmatpush1.msra.mxu0 %v1696
    %6951 = vmatprep.subr.mxu0 0.0
    %6952 = vmatpush1.msra.mxu0 %v1697
    %6953 = vmatprep.subr.mxu0 0.0
    %6954 = vmatpush1.msra.mxu0 %v1698
    %6955 = vmatprep.subr.mxu0 0.0
    %6956 = vmatpush1.msra.mxu0 %v1699
    %6957 = vmatprep.subr.mxu0 0.0
    %6958 = vmatpush1.msra.mxu0 %v1700
    %6959 = vmatprep.subr.mxu0 0.0
    %6960 = vmatpush1.msra.mxu0 %v1701
    %6961 = vmatprep.subr.mxu0 0.0
    %6962 = vmatpush1.msra.mxu0 %v1702
    %6963 = vmatprep.subr.mxu0 0.0
    %6964 = vmatpush1.msra.mxu0 %v1703
    %6965 = vmatprep.subr.mxu0 0.0
    %6966 = vmatpush1.msra.mxu0 %v1704
    %6967 = vmatprep.subr.mxu0 0.0
    %6968 = vmatpush1.msra.mxu0 %v1705
    %6969 = vmatprep.subr.mxu0 0.0
    %6970 = vmatpush1.msra.mxu0 %v1706
    %6971 = vmatprep.subr.mxu0 0.0
    %6972 = vmatpush1.msra.mxu0 %v1707
    %6973 = vmatprep.mubr.f32.mxu0 %v3186
    %6974 = vmatmul.mubr.f32.gmra.mrb[0].mxu0 %v3184
    %v6975 = vpop.f32.mrb[0].mxu0
    %v6976 = vadd.f32 %v6906, %v6975
    %v6977 = vpop.f32.mrb[0].mxu0
    %6978 = vdwg.mxu0
    %6979 = vmatprep.subr.mxu0 0.0
    %6980 = vmatpush1.msra.mxu0 %v1708
    %6981 = vmatprep.subr.mxu0 0.0
    %6982 = vmatpush1.msra.mxu0 %v1709
    %6983 = vmatprep.subr.mxu0 0.0
    %6984 = vmatpush1.msra.mxu0 %v1710
    %6985 = vmatprep.subr.mxu0 0.0
    %6986 = vmatpush1.msra.mxu0 %v1711
    %6987 = vmatprep.subr.mxu0 0.0
    %6988 = vmatpush1.msra.mxu0 %v1712
    %6989 = vmatprep.subr.mxu0 0.0
    %6990 = vmatpush1.msra.mxu0 %v1713
    %6991 = vmatprep.subr.mxu0 0.0
    %6992 = vmatpush1.msra.mxu0 %v1714
    %6993 = vmatprep.subr.mxu0 0.0
    %6994 = vmatpush1.msra.mxu0 %v1715
    %6995 = vmatprep.subr.mxu0 0.0
    %6996 = vmatpush1.msra.mxu0 %v1716
    %6997 = vmatprep.subr.mxu0 0.0
    %6998 = vmatpush1.msra.mxu0 %v1717
    %6999 = vmatprep.subr.mxu0 0.0
    %7000 = vmatpush1.msra.mxu0 %v1718
    %7001 = vmatprep.subr.mxu0 0.0
    %7002 = vmatpush1.msra.mxu0 %v1719
    %7003 = vmatprep.subr.mxu0 0.0
    %7004 = vmatpush1.msra.mxu0 %v1720
    %7005 = vmatprep.subr.mxu0 0.0
    %7006 = vmatpush1.msra.mxu0 %v1721
    %7007 = vmatprep.subr.mxu0 0.0
    %7008 = vmatpush1.msra.mxu0 %v1722
    %7009 = vmatprep.subr.mxu0 0.0
    %7010 = vmatpush1.msra.mxu0 %v1723
    %7011 = vmatprep.subr.mxu0 0.0
    %7012 = vmatpush1.msra.mxu0 %v1724
    %7013 = vmatprep.subr.mxu0 0.0
    %7014 = vmatpush1.msra.mxu0 %v1725
    %7015 = vmatprep.subr.mxu0 0.0
    %7016 = vmatpush1.msra.mxu0 %v1726
    %7017 = vmatprep.subr.mxu0 0.0
    %7018 = vmatpush1.msra.mxu0 %v1727
    %7019 = vmatprep.subr.mxu0 0.0
    %7020 = vmatpush1.msra.mxu0 %v1728
    %7021 = vmatprep.subr.mxu0 0.0
    %7022 = vmatpush1.msra.mxu0 %v1729
    %7023 = vmatprep.subr.mxu0 0.0
    %7024 = vmatpush1.msra.mxu0 %v1730
    %7025 = vmatprep.subr.mxu0 0.0
    %7026 = vmatpush1.msra.mxu0 %v1731
    %7027 = vmatprep.subr.mxu0 0.0
    %7028 = vmatpush1.msra.mxu0 %v1732
    %7029 = vmatprep.subr.mxu0 0.0
    %7030 = vmatpush1.msra.mxu0 %v1733
    %7031 = vmatprep.subr.mxu0 0.0
    %7032 = vmatpush1.msra.mxu0 %v1734
    %7033 = vmatprep.subr.mxu0 0.0
    %7034 = vmatpush1.msra.mxu0 %v1735
    %7035 = vmatprep.subr.mxu0 0.0
    %7036 = vmatpush1.msra.mxu0 %v1736
    %7037 = vmatprep.subr.mxu0 0.0
    %7038 = vmatpush1.msra.mxu0 %v1737
    %7039 = vmatprep.subr.mxu0 0.0
    %7040 = vmatpush1.msra.mxu0 %v1738
    %7041 = vmatprep.subr.mxu0 0.0
    %7042 = vmatpush1.msra.mxu0 %v1739
    %7043 = vmatprep.mubr.f32.mxu0 %v3202
    %7044 = vmatmul.mubr.f32.gmra.mrb[0].mxu0 %v3194
    %v7045 = vpop.f32.mrb[0].mxu0
    %v7046 = vadd.f32 %v6976, %v7045
    %v7047 = vpop.f32.mrb[0].mxu0
    %7048 = vdwg.mxu0
    %7049 = vmatprep.subr.mxu0 0.0
    %7050 = vmatpush1.msra.mxu0 %v1740
    %7051 = vmatprep.subr.mxu0 0.0
    %7052 = vmatpush1.msra.mxu0 %v1741
    %7053 = vmatprep.subr.mxu0 0.0
    %7054 = vmatpush1.msra.mxu0 %v1742
    %7055 = vmatprep.subr.mxu0 0.0
    %7056 = vmatpush1.msra.mxu0 %v1743
    %7057 = vmatprep.subr.mxu0 0.0
    %7058 = vmatpush1.msra.mxu0 %v1744
    %7059 = vmatprep.subr.mxu0 0.0
    %7060 = vmatpush1.msra.mxu0 %v1745
    %7061 = vmatprep.subr.mxu0 0.0
    %7062 = vmatpush1.msra.mxu0 %v1746
    %7063 = vmatprep.subr.mxu0 0.0
    %7064 = vmatpush1.msra.mxu0 %v1747
    %7065 = vmatprep.subr.mxu0 0.0
    %7066 = vmatpush1.msra.mxu0 %v1748
    %7067 = vmatprep.subr.mxu0 0.0
    %7068 = vmatpush1.msra.mxu0 %v1749
    %7069 = vmatprep.subr.mxu0 0.0
    %7070 = vmatpush1.msra.mxu0 %v1750
    %7071 = vmatprep.subr.mxu0 0.0
    %7072 = vmatpush1.msra.mxu0 %v1751
    %7073 = vmatprep.subr.mxu0 0.0
    %7074 = vmatpush1.msra.mxu0 %v1752
    %7075 = vmatprep.subr.mxu0 0.0
    %7076 = vmatpush1.msra.mxu0 %v1753
    %7077 = vmatprep.subr.mxu0 0.0
    %7078 = vmatpush1.msra.mxu0 %v1754
    %7079 = vmatprep.subr.mxu0 0.0
    %7080 = vmatpush1.msra.mxu0 %v1755
    %7081 = vmatprep.subr.mxu0 0.0
    %7082 = vmatpush1.msra.mxu0 %v1756
    %7083 = vmatprep.subr.mxu0 0.0
    %7084 = vmatpush1.msra.mxu0 %v1757
    %7085 = vmatprep.subr.mxu0 0.0
    %7086 = vmatpush1.msra.mxu0 %v1758
    %7087 = vmatprep.subr.mxu0 0.0
    %7088 = vmatpush1.msra.mxu0 %v1759
    %7089 = vmatprep.subr.mxu0 0.0
    %7090 = vmatpush1.msra.mxu0 %v1760
    %7091 = vmatprep.subr.mxu0 0.0
    %7092 = vmatpush1.msra.mxu0 %v1761
    %7093 = vmatprep.subr.mxu0 0.0
    %7094 = vmatpush1.msra.mxu0 %v1762
    %7095 = vmatprep.subr.mxu0 0.0
    %7096 = vmatpush1.msra.mxu0 %v1763
    %7097 = vmatprep.subr.mxu0 0.0
    %7098 = vmatpush1.msra.mxu0 %v1764
    %7099 = vmatprep.subr.mxu0 0.0
    %7100 = vmatpush1.msra.mxu0 %v1765
    %7101 = vmatprep.subr.mxu0 0.0
    %7102 = vmatpush1.msra.mxu0 %v1766
    %7103 = vmatprep.subr.mxu0 0.0
    %7104 = vmatpush1.msra.mxu0 %v1767
    %7105 = vmatprep.subr.mxu0 0.0
    %7106 = vmatpush1.msra.mxu0 %v1768
    %7107 = vmatprep.subr.mxu0 0.0
    %7108 = vmatpush1.msra.mxu0 %v1769
    %7109 = vmatprep.subr.mxu0 0.0
    %7110 = vmatpush1.msra.mxu0 %v1770
    %7111 = vmatprep.subr.mxu0 0.0
    %7112 = vmatpush1.msra.mxu0 %v1771
    %7113 = vmatprep.mubr.f32.mxu0 %v3203
    %7114 = vmatmul.mubr.f32.gmra.mrb[0].mxu0 %v3201
    %v7115 = vpop.f32.mrb[0].mxu0
    %v7116 = vadd.f32 %v7046, %v7115
    %v7117 = vpop.f32.mrb[0].mxu0
    %7118 = vdwg.mxu0
    %7119 = vmatprep.subr.mxu0 0.0
    %7120 = vmatpush1.msra.mxu0 %v1772
    %7121 = vmatprep.subr.mxu0 0.0
    %7122 = vmatpush1.msra.mxu0 %v1773
    %7123 = vmatprep.subr.mxu0 0.0
    %7124 = vmatpush1.msra.mxu0 %v1774
    %7125 = vmatprep.subr.mxu0 0.0
    %7126 = vmatpush1.msra.mxu0 %v1775
    %7127 = vmatprep.subr.mxu0 0.0
    %7128 = vmatpush1.msra.mxu0 %v1776
    %7129 = vmatprep.subr.mxu0 0.0
    %7130 = vmatpush1.msra.mxu0 %v1777
    %7131 = vmatprep.subr.mxu0 0.0
    %7132 = vmatpush1.msra.mxu0 %v1778
    %7133 = vmatprep.subr.mxu0 0.0
    %7134 = vmatpush1.msra.mxu0 %v1779
    %7135 = vmatprep.subr.mxu0 0.0
    %7136 = vmatpush1.msra.mxu0 %v1780
    %7137 = vmatprep.subr.mxu0 0.0
    %7138 = vmatpush1.msra.mxu0 %v1781
    %7139 = vmatprep.subr.mxu0 0.0
    %7140 = vmatpush1.msra.mxu0 %v1782
    %7141 = vmatprep.subr.mxu0 0.0
    %7142 = vmatpush1.msra.mxu0 %v1783
    %7143 = vmatprep.subr.mxu0 0.0
    %7144 = vmatpush1.msra.mxu0 %v1784
    %7145 = vmatprep.subr.mxu0 0.0
    %7146 = vmatpush1.msra.mxu0 %v1785
    %7147 = vmatprep.subr.mxu0 0.0
    %7148 = vmatpush1.msra.mxu0 %v1786
    %7149 = vmatprep.subr.mxu0 0.0
    %7150 = vmatpush1.msra.mxu0 %v1787
    %7151 = vmatprep.subr.mxu0 0.0
    %7152 = vmatpush1.msra.mxu0 %v1788
    %7153 = vmatprep.subr.mxu0 0.0
    %7154 = vmatpush1.msra.mxu0 %v1789
    %7155 = vmatprep.subr.mxu0 0.0
    %7156 = vmatpush1.msra.mxu0 %v1790
    %7157 = vmatprep.subr.mxu0 0.0
    %7158 = vmatpush1.msra.mxu0 %v1791
    %7159 = vmatprep.subr.mxu0 0.0
    %7160 = vmatpush1.msra.mxu0 %v1792
    %7161 = vmatprep.subr.mxu0 0.0
    %7162 = vmatpush1.msra.mxu0 %v1793
    %7163 = vmatprep.subr.mxu0 0.0
    %7164 = vmatpush1.msra.mxu0 %v1794
    %7165 = vmatprep.subr.mxu0 0.0
    %7166 = vmatpush1.msra.mxu0 %v1795
    %7167 = vmatprep.subr.mxu0 0.0
    %7168 = vmatpush1.msra.mxu0 %v1796
    %7169 = vmatprep.subr.mxu0 0.0
    %7170 = vmatpush1.msra.mxu0 %v1797
    %7171 = vmatprep.subr.mxu0 0.0
    %7172 = vmatpush1.msra.mxu0 %v1798
    %7173 = vmatprep.subr.mxu0 0.0
    %7174 = vmatpush1.msra.mxu0 %v1799
    %7175 = vmatprep.subr.mxu0 0.0
    %7176 = vmatpush1.msra.mxu0 %v1800
    %7177 = vmatprep.subr.mxu0 0.0
    %7178 = vmatpush1.msra.mxu0 %v1801
    %7179 = vmatprep.subr.mxu0 0.0
    %7180 = vmatpush1.msra.mxu0 %v1802
    %7181 = vmatprep.subr.mxu0 0.0
    %7182 = vmatpush1.msra.mxu0 %v1803
    %7183 = vmatprep.mubr.f32.mxu0 %v3219
    %7184 = vmatmul.mubr.f32.gmra.mrb[0].mxu0 %v3211
    %v7185 = vpop.f32.mrb[0].mxu0
    %v7186 = vadd.f32 %v7116, %v7185
    %v7187 = vpop.f32.mrb[0].mxu0
    %7188 = vdwg.mxu0
    %7189 = vmatprep.subr.mxu0 0.0
    %7190 = vmatpush1.msra.mxu0 %v1804
    %7191 = vmatprep.subr.mxu0 0.0
    %7192 = vmatpush1.msra.mxu0 %v1805
    %7193 = vmatprep.subr.mxu0 0.0
    %7194 = vmatpush1.msra.mxu0 %v1806
    %7195 = vmatprep.subr.mxu0 0.0
    %7196 = vmatpush1.msra.mxu0 %v1807
    %7197 = vmatprep.subr.mxu0 0.0
    %7198 = vmatpush1.msra.mxu0 %v1808
    %7199 = vmatprep.subr.mxu0 0.0
    %7200 = vmatpush1.msra.mxu0 %v1809
    %7201 = vmatprep.subr.mxu0 0.0
    %7202 = vmatpush1.msra.mxu0 %v1810
    %7203 = vmatprep.subr.mxu0 0.0
    %7204 = vmatpush1.msra.mxu0 %v1811
    %7205 = vmatprep.subr.mxu0 0.0
    %7206 = vmatpush1.msra.mxu0 %v1812
    %7207 = vmatprep.subr.mxu0 0.0
    %7208 = vmatpush1.msra.mxu0 %v1813
    %7209 = vmatprep.subr.mxu0 0.0
    %7210 = vmatpush1.msra.mxu0 %v1814
    %7211 = vmatprep.subr.mxu0 0.0
    %7212 = vmatpush1.msra.mxu0 %v1815
    %7213 = vmatprep.subr.mxu0 0.0
    %7214 = vmatpush1.msra.mxu0 %v1816
    %7215 = vmatprep.subr.mxu0 0.0
    %7216 = vmatpush1.msra.mxu0 %v1817
    %7217 = vmatprep.subr.mxu0 0.0
    %7218 = vmatpush1.msra.mxu0 %v1818
    %7219 = vmatprep.subr.mxu0 0.0
    %7220 = vmatpush1.msra.mxu0 %v1819
    %7221 = vmatprep.subr.mxu0 0.0
    %7222 = vmatpush1.msra.mxu0 %v1820
    %7223 = vmatprep.subr.mxu0 0.0
    %7224 = vmatpush1.msra.mxu0 %v1821
    %7225 = vmatprep.subr.mxu0 0.0
    %7226 = vmatpush1.msra.mxu0 %v1822
    %7227 = vmatprep.subr.mxu0 0.0
    %7228 = vmatpush1.msra.mxu0 %v1823
    %7229 = vmatprep.subr.mxu0 0.0
    %7230 = vmatpush1.msra.mxu0 %v1824
    %7231 = vmatprep.subr.mxu0 0.0
    %7232 = vmatpush1.msra.mxu0 %v1825
    %7233 = vmatprep.subr.mxu0 0.0
    %7234 = vmatpush1.msra.mxu0 %v1826
    %7235 = vmatprep.subr.mxu0 0.0
    %7236 = vmatpush1.msra.mxu0 %v1827
    %7237 = vmatprep.subr.mxu0 0.0
    %7238 = vmatpush1.msra.mxu0 %v1828
    %7239 = vmatprep.subr.mxu0 0.0
    %7240 = vmatpush1.msra.mxu0 %v1829
    %7241 = vmatprep.subr.mxu0 0.0
    %7242 = vmatpush1.msra.mxu0 %v1830
    %7243 = vmatprep.subr.mxu0 0.0
    %7244 = vmatpush1.msra.mxu0 %v1831
    %7245 = vmatprep.subr.mxu0 0.0
    %7246 = vmatpush1.msra.mxu0 %v1832
    %7247 = vmatprep.subr.mxu0 0.0
    %7248 = vmatpush1.msra.mxu0 %v1833
    %7249 = vmatprep.subr.mxu0 0.0
    %7250 = vmatpush1.msra.mxu0 %v1834
    %7251 = vmatprep.subr.mxu0 0.0
    %7252 = vmatpush1.msra.mxu0 %v1835
    %7253 = vmatprep.mubr.f32.mxu0 %v3220
    %7254 = vmatmul.mubr.f32.gmra.mrb[0].mxu0 %v3218
    %v7255 = vpop.f32.mrb[0].mxu0
    %v7256 = vadd.f32 %v7186, %v7255
    %v7257 = vpop.f32.mrb[0].mxu0
    %7258 = vdwg.mxu0
    %7259 = vmatprep.subr.mxu0 0.0
    %7260 = vmatpush1.msra.mxu0 %v1836
    %7261 = vmatprep.subr.mxu0 0.0
    %7262 = vmatpush1.msra.mxu0 %v1837
    %7263 = vmatprep.subr.mxu0 0.0
    %7264 = vmatpush1.msra.mxu0 %v1838
    %7265 = vmatprep.subr.mxu0 0.0
    %7266 = vmatpush1.msra.mxu0 %v1839
    %7267 = vmatprep.subr.mxu0 0.0
    %7268 = vmatpush1.msra.mxu0 %v1840
    %7269 = vmatprep.subr.mxu0 0.0
    %7270 = vmatpush1.msra.mxu0 %v1841
    %7271 = vmatprep.subr.mxu0 0.0
    %7272 = vmatpush1.msra.mxu0 %v1842
    %7273 = vmatprep.subr.mxu0 0.0
    %7274 = vmatpush1.msra.mxu0 %v1843
    %7275 = vmatprep.subr.mxu0 0.0
    %7276 = vmatpush1.msra.mxu0 %v1844
    %7277 = vmatprep.subr.mxu0 0.0
    %7278 = vmatpush1.msra.mxu0 %v1845
    %7279 = vmatprep.subr.mxu0 0.0
    %7280 = vmatpush1.msra.mxu0 %v1846
    %7281 = vmatprep.subr.mxu0 0.0
    %7282 = vmatpush1.msra.mxu0 %v1847
    %7283 = vmatprep.subr.mxu0 0.0
    %7284 = vmatpush1.msra.mxu0 %v1848
    %7285 = vmatprep.subr.mxu0 0.0
    %7286 = vmatpush1.msra.mxu0 %v1849
    %7287 = vmatprep.subr.mxu0 0.0
    %7288 = vmatpush1.msra.mxu0 %v1850
    %7289 = vmatprep.subr.mxu0 0.0
    %7290 = vmatpush1.msra.mxu0 %v1851
    %7291 = vmatprep.subr.mxu0 0.0
    %7292 = vmatpush1.msra.mxu0 %v1852
    %7293 = vmatprep.subr.mxu0 0.0
    %7294 = vmatpush1.msra.mxu0 %v1853
    %7295 = vmatprep.subr.mxu0 0.0
    %7296 = vmatpush1.msra.mxu0 %v1854
    %7297 = vmatprep.subr.mxu0 0.0
    %7298 = vmatpush1.msra.mxu0 %v1855
    %7299 = vmatprep.subr.mxu0 0.0
    %7300 = vmatpush1.msra.mxu0 %v1856
    %7301 = vmatprep.subr.mxu0 0.0
    %7302 = vmatpush1.msra.mxu0 %v1857
    %7303 = vmatprep.subr.mxu0 0.0
    %7304 = vmatpush1.msra.mxu0 %v1858
    %7305 = vmatprep.subr.mxu0 0.0
    %7306 = vmatpush1.msra.mxu0 %v1859
    %7307 = vmatprep.subr.mxu0 0.0
    %7308 = vmatpush1.msra.mxu0 %v1860
    %7309 = vmatprep.subr.mxu0 0.0
    %7310 = vmatpush1.msra.mxu0 %v1861
    %7311 = vmatprep.subr.mxu0 0.0
    %7312 = vmatpush1.msra.mxu0 %v1862
    %7313 = vmatprep.subr.mxu0 0.0
    %7314 = vmatpush1.msra.mxu0 %v1863
    %7315 = vmatprep.subr.mxu0 0.0
    %7316 = vmatpush1.msra.mxu0 %v1864
    %7317 = vmatprep.subr.mxu0 0.0
    %7318 = vmatpush1.msra.mxu0 %v1865
    %7319 = vmatprep.subr.mxu0 0.0
    %7320 = vmatpush1.msra.mxu0 %v1866
    %7321 = vmatprep.subr.mxu0 0.0
    %7322 = vmatpush1.msra.mxu0 %v1867
    %7323 = vmatprep.mubr.f32.mxu0 %v3236
    %7324 = vmatmul.mubr.f32.gmra.mrb[0].mxu0 %v3228
    %v7325 = vpop.f32.mrb[0].mxu0
    %v7326 = vadd.f32 %v7256, %v7325
    %v7327 = vpop.f32.mrb[0].mxu0
    %7328 = vdwg.mxu0
    %7329 = vmatprep.subr.mxu0 0.0
    %7330 = vmatpush1.msra.mxu0 %v1868
    %7331 = vmatprep.subr.mxu0 0.0
    %7332 = vmatpush1.msra.mxu0 %v1869
    %7333 = vmatprep.subr.mxu0 0.0
    %7334 = vmatpush1.msra.mxu0 %v1870
    %7335 = vmatprep.subr.mxu0 0.0
    %7336 = vmatpush1.msra.mxu0 %v1871
    %7337 = vmatprep.subr.mxu0 0.0
    %7338 = vmatpush1.msra.mxu0 %v1872
    %7339 = vmatprep.subr.mxu0 0.0
    %7340 = vmatpush1.msra.mxu0 %v1873
    %7341 = vmatprep.subr.mxu0 0.0
    %7342 = vmatpush1.msra.mxu0 %v1874
    %7343 = vmatprep.subr.mxu0 0.0
    %7344 = vmatpush1.msra.mxu0 %v1875
    %7345 = vmatprep.subr.mxu0 0.0
    %7346 = vmatpush1.msra.mxu0 %v1876
    %7347 = vmatprep.subr.mxu0 0.0
    %7348 = vmatpush1.msra.mxu0 %v1877
    %7349 = vmatprep.subr.mxu0 0.0
    %7350 = vmatpush1.msra.mxu0 %v1878
    %7351 = vmatprep.subr.mxu0 0.0
    %7352 = vmatpush1.msra.mxu0 %v1879
    %7353 = vmatprep.subr.mxu0 0.0
    %7354 = vmatpush1.msra.mxu0 %v1880
    %7355 = vmatprep.subr.mxu0 0.0
    %7356 = vmatpush1.msra.mxu0 %v1881
    %7357 = vmatprep.subr.mxu0 0.0
    %7358 = vmatpush1.msra.mxu0 %v1882
    %7359 = vmatprep.subr.mxu0 0.0
    %7360 = vmatpush1.msra.mxu0 %v1883
    %7361 = vmatprep.subr.mxu0 0.0
    %7362 = vmatpush1.msra.mxu0 %v1884
    %7363 = vmatprep.subr.mxu0 0.0
    %7364 = vmatpush1.msra.mxu0 %v1885
    %7365 = vmatprep.subr.mxu0 0.0
    %7366 = vmatpush1.msra.mxu0 %v1886
    %7367 = vmatprep.subr.mxu0 0.0
    %7368 = vmatpush1.msra.mxu0 %v1887
    %7369 = vmatprep.subr.mxu0 0.0
    %7370 = vmatpush1.msra.mxu0 %v1888
    %7371 = vmatprep.subr.mxu0 0.0
    %7372 = vmatpush1.msra.mxu0 %v1889
    %7373 = vmatprep.subr.mxu0 0.0
    %7374 = vmatpush1.msra.mxu0 %v1890
    %7375 = vmatprep.subr.mxu0 0.0
    %7376 = vmatpush1.msra.mxu0 %v1891
    %7377 = vmatprep.subr.mxu0 0.0
    %7378 = vmatpush1.msra.mxu0 %v1892
    %7379 = vmatprep.subr.mxu0 0.0
    %7380 = vmatpush1.msra.mxu0 %v1893
    %7381 = vmatprep.subr.mxu0 0.0
    %7382 = vmatpush1.msra.mxu0 %v1894
    %7383 = vmatprep.subr.mxu0 0.0
    %7384 = vmatpush1.msra.mxu0 %v1895
    %7385 = vmatprep.subr.mxu0 0.0
    %7386 = vmatpush1.msra.mxu0 %v1896
    %7387 = vmatprep.subr.mxu0 0.0
    %7388 = vmatpush1.msra.mxu0 %v1897
    %7389 = vmatprep.subr.mxu0 0.0
    %7390 = vmatpush1.msra.mxu0 %v1898
    %7391 = vmatprep.subr.mxu0 0.0
    %7392 = vmatpush1.msra.mxu0 %v1899
    %7393 = vmatprep.mubr.f32.mxu0 %v3237
    %7394 = vmatmul.mubr.f32.gmra.mrb[0].mxu0 %v3235
    %v7395 = vpop.f32.mrb[0].mxu0
    %v7396 = vadd.f32 %v7326, %v7395
    %v7397 = vpop.f32.mrb[0].mxu0
    %7398 = vdwg.mxu0
    %7399 = vmatprep.subr.mxu0 0.0
    %7400 = vmatpush1.msra.mxu0 %v1900
    %7401 = vmatprep.subr.mxu0 0.0
    %7402 = vmatpush1.msra.mxu0 %v1901
    %7403 = vmatprep.subr.mxu0 0.0
    %7404 = vmatpush1.msra.mxu0 %v1902
    %7405 = vmatprep.subr.mxu0 0.0
    %7406 = vmatpush1.msra.mxu0 %v1903
    %7407 = vmatprep.subr.mxu0 0.0
    %7408 = vmatpush1.msra.mxu0 %v1904
    %7409 = vmatprep.subr.mxu0 0.0
    %7410 = vmatpush1.msra.mxu0 %v1905
    %7411 = vmatprep.subr.mxu0 0.0
    %7412 = vmatpush1.msra.mxu0 %v1906
    %7413 = vmatprep.subr.mxu0 0.0
    %7414 = vmatpush1.msra.mxu0 %v1907
    %7415 = vmatprep.subr.mxu0 0.0
    %7416 = vmatpush1.msra.mxu0 %v1908
    %7417 = vmatprep.subr.mxu0 0.0
    %7418 = vmatpush1.msra.mxu0 %v1909
    %7419 = vmatprep.subr.mxu0 0.0
    %7420 = vmatpush1.msra.mxu0 %v1910
    %7421 = vmatprep.subr.mxu0 0.0
    %7422 = vmatpush1.msra.mxu0 %v1911
    %7423 = vmatprep.subr.mxu0 0.0
    %7424 = vmatpush1.msra.mxu0 %v1912
    %7425 = vmatprep.subr.mxu0 0.0
    %7426 = vmatpush1.msra.mxu0 %v1913
    %7427 = vmatprep.subr.mxu0 0.0
    %7428 = vmatpush1.msra.mxu0 %v1914
    %7429 = vmatprep.subr.mxu0 0.0
    %7430 = vmatpush1.msra.mxu0 %v1915
    %7431 = vmatprep.subr.mxu0 0.0
    %7432 = vmatpush1.msra.mxu0 %v1916
    %7433 = vmatprep.subr.mxu0 0.0
    %7434 = vmatpush1.msra.mxu0 %v1917
    %7435 = vmatprep.subr.mxu0 0.0
    %7436 = vmatpush1.msra.mxu0 %v1918
    %7437 = vmatprep.subr.mxu0 0.0
    %7438 = vmatpush1.msra.mxu0 %v1919
    %7439 = vmatprep.subr.mxu0 0.0
    %7440 = vmatpush1.msra.mxu0 %v1920
    %7441 = vmatprep.subr.mxu0 0.0
    %7442 = vmatpush1.msra.mxu0 %v1921
    %7443 = vmatprep.subr.mxu0 0.0
    %7444 = vmatpush1.msra.mxu0 %v1922
    %7445 = vmatprep.subr.mxu0 0.0
    %7446 = vmatpush1.msra.mxu0 %v1923
    %7447 = vmatprep.subr.mxu0 0.0
    %7448 = vmatpush1.msra.mxu0 %v1924
    %7449 = vmatprep.subr.mxu0 0.0
    %7450 = vmatpush1.msra.mxu0 %v1925
    %7451 = vmatprep.subr.mxu0 0.0
    %7452 = vmatpush1.msra.mxu0 %v1926
    %7453 = vmatprep.subr.mxu0 0.0
    %7454 = vmatpush1.msra.mxu0 %v1927
    %7455 = vmatprep.subr.mxu0 0.0
    %7456 = vmatpush1.msra.mxu0 %v1928
    %7457 = vmatprep.subr.mxu0 0.0
    %7458 = vmatpush1.msra.mxu0 %v1929
    %7459 = vmatprep.subr.mxu0 0.0
    %7460 = vmatpush1.msra.mxu0 %v1930
    %7461 = vmatprep.subr.mxu0 0.0
    %7462 = vmatpush1.msra.mxu0 %v1931
    %7463 = vmatprep.mubr.f32.mxu0 %v3253
    %7464 = vmatmul.mubr.f32.gmra.mrb[0].mxu0 %v3245
    %v7465 = vpop.f32.mrb[0].mxu0
    %v7466 = vadd.f32 %v7396, %v7465
    %v7467 = vpop.f32.mrb[0].mxu0
    %7468 = vdwg.mxu0
    %7469 = vmatprep.subr.mxu0 0.0
    %7470 = vmatpush1.msra.mxu0 %v1932
    %7471 = vmatprep.subr.mxu0 0.0
    %7472 = vmatpush1.msra.mxu0 %v1933
    %7473 = vmatprep.subr.mxu0 0.0
    %7474 = vmatpush1.msra.mxu0 %v1934
    %7475 = vmatprep.subr.mxu0 0.0
    %7476 = vmatpush1.msra.mxu0 %v1935
    %7477 = vmatprep.subr.mxu0 0.0
    %7478 = vmatpush1.msra.mxu0 %v1936
    %7479 = vmatprep.subr.mxu0 0.0
    %7480 = vmatpush1.msra.mxu0 %v1937
    %7481 = vmatprep.subr.mxu0 0.0
    %7482 = vmatpush1.msra.mxu0 %v1938
    %7483 = vmatprep.subr.mxu0 0.0
    %7484 = vmatpush1.msra.mxu0 %v1939
    %7485 = vmatprep.subr.mxu0 0.0
    %7486 = vmatpush1.msra.mxu0 %v1940
    %7487 = vmatprep.subr.mxu0 0.0
    %7488 = vmatpush1.msra.mxu0 %v1941
    %7489 = vmatprep.subr.mxu0 0.0
    %7490 = vmatpush1.msra.mxu0 %v1942
    %7491 = vmatprep.subr.mxu0 0.0
    %7492 = vmatpush1.msra.mxu0 %v1943
    %7493 = vmatprep.subr.mxu0 0.0
    %7494 = vmatpush1.msra.mxu0 %v1944
    %7495 = vmatprep.subr.mxu0 0.0
    %7496 = vmatpush1.msra.mxu0 %v1945
    %7497 = vmatprep.subr.mxu0 0.0
    %7498 = vmatpush1.msra.mxu0 %v1946
    %7499 = vmatprep.subr.mxu0 0.0
    %7500 = vmatpush1.msra.mxu0 %v1947
    %7501 = vmatprep.subr.mxu0 0.0
    %7502 = vmatpush1.msra.mxu0 %v1948
    %7503 = vmatprep.subr.mxu0 0.0
    %7504 = vmatpush1.msra.mxu0 %v1949
    %7505 = vmatprep.subr.mxu0 0.0
    %7506 = vmatpush1.msra.mxu0 %v1950
    %7507 = vmatprep.subr.mxu0 0.0
    %7508 = vmatpush1.msra.mxu0 %v1951
    %7509 = vmatprep.subr.mxu0 0.0
    %7510 = vmatpush1.msra.mxu0 %v1952
    %7511 = vmatprep.subr.mxu0 0.0
    %7512 = vmatpush1.msra.mxu0 %v1953
    %7513 = vmatprep.subr.mxu0 0.0
    %7514 = vmatpush1.msra.mxu0 %v1954
    %7515 = vmatprep.subr.mxu0 0.0
    %7516 = vmatpush1.msra.mxu0 %v1955
    %7517 = vmatprep.subr.mxu0 0.0
    %7518 = vmatpush1.msra.mxu0 %v1956
    %7519 = vmatprep.subr.mxu0 0.0
    %7520 = vmatpush1.msra.mxu0 %v1957
    %7521 = vmatprep.subr.mxu0 0.0
    %7522 = vmatpush1.msra.mxu0 %v1958
    %7523 = vmatprep.subr.mxu0 0.0
    %7524 = vmatpush1.msra.mxu0 %v1959
    %7525 = vmatprep.subr.mxu0 0.0
    %7526 = vmatpush1.msra.mxu0 %v1960
    %7527 = vmatprep.subr.mxu0 0.0
    %7528 = vmatpush1.msra.mxu0 %v1961
    %7529 = vmatprep.subr.mxu0 0.0
    %7530 = vmatpush1.msra.mxu0 %v1962
    %7531 = vmatprep.subr.mxu0 0.0
    %7532 = vmatpush1.msra.mxu0 %v1963
    %7533 = vmatprep.mubr.f32.mxu0 %v3254
    %7534 = vmatmul.mubr.f32.gmra.mrb[0].mxu0 %v3252
    %v7535 = vpop.f32.mrb[0].mxu0
    %v7536 = vadd.f32 %v7466, %v7535
    %v7537 = vpop.f32.mrb[0].mxu0
    %7538 = vdwg.mxu0
    %7539 = vmatprep.subr.mxu0 0.0
    %7540 = vmatpush1.msra.mxu0 %v1964
    %7541 = vmatprep.subr.mxu0 0.0
    %7542 = vmatpush1.msra.mxu0 %v1965
    %7543 = vmatprep.subr.mxu0 0.0
    %7544 = vmatpush1.msra.mxu0 %v1966
    %7545 = vmatprep.subr.mxu0 0.0
    %7546 = vmatpush1.msra.mxu0 %v1967
    %7547 = vmatprep.subr.mxu0 0.0
    %7548 = vmatpush1.msra.mxu0 %v1968
    %7549 = vmatprep.subr.mxu0 0.0
    %7550 = vmatpush1.msra.mxu0 %v1969
    %7551 = vmatprep.subr.mxu0 0.0
    %7552 = vmatpush1.msra.mxu0 %v1970
    %7553 = vmatprep.subr.mxu0 0.0
    %7554 = vmatpush1.msra.mxu0 %v1971
    %7555 = vmatprep.subr.mxu0 0.0
    %7556 = vmatpush1.msra.mxu0 %v1972
    %7557 = vmatprep.subr.mxu0 0.0
    %7558 = vmatpush1.msra.mxu0 %v1973
    %7559 = vmatprep.subr.mxu0 0.0
    %7560 = vmatpush1.msra.mxu0 %v1974
    %7561 = vmatprep.subr.mxu0 0.0
    %7562 = vmatpush1.msra.mxu0 %v1975
    %7563 = vmatprep.subr.mxu0 0.0
    %7564 = vmatpush1.msra.mxu0 %v1976
    %7565 = vmatprep.subr.mxu0 0.0
    %7566 = vmatpush1.msra.mxu0 %v1977
    %7567 = vmatprep.subr.mxu0 0.0
    %7568 = vmatpush1.msra.mxu0 %v1978
    %7569 = vmatprep.subr.mxu0 0.0
    %7570 = vmatpush1.msra.mxu0 %v1979
    %7571 = vmatprep.subr.mxu0 0.0
    %7572 = vmatpush1.msra.mxu0 %v1980
    %7573 = vmatprep.subr.mxu0 0.0
    %7574 = vmatpush1.msra.mxu0 %v1981
    %7575 = vmatprep.subr.mxu0 0.0
    %7576 = vmatpush1.msra.mxu0 %v1982
    %7577 = vmatprep.subr.mxu0 0.0
    %7578 = vmatpush1.msra.mxu0 %v1983
    %7579 = vmatprep.subr.mxu0 0.0
    %7580 = vmatpush1.msra.mxu0 %v1984
    %7581 = vmatprep.subr.mxu0 0.0
    %7582 = vmatpush1.msra.mxu0 %v1985
    %7583 = vmatprep.subr.mxu0 0.0
    %7584 = vmatpush1.msra.mxu0 %v1986
    %7585 = vmatprep.subr.mxu0 0.0
    %7586 = vmatpush1.msra.mxu0 %v1987
    %7587 = vmatprep.subr.mxu0 0.0
    %7588 = vmatpush1.msra.mxu0 %v1988
    %7589 = vmatprep.subr.mxu0 0.0
    %7590 = vmatpush1.msra.mxu0 %v1989
    %7591 = vmatprep.subr.mxu0 0.0
    %7592 = vmatpush1.msra.mxu0 %v1990
    %7593 = vmatprep.subr.mxu0 0.0
    %7594 = vmatpush1.msra.mxu0 %v1991
    %7595 = vmatprep.subr.mxu0 0.0
    %7596 = vmatpush1.msra.mxu0 %v1992
    %7597 = vmatprep.subr.mxu0 0.0
    %7598 = vmatpush1.msra.mxu0 %v1993
    %7599 = vmatprep.subr.mxu0 0.0
    %7600 = vmatpush1.msra.mxu0 %v1994
    %7601 = vmatprep.subr.mxu0 0.0
    %7602 = vmatpush1.msra.mxu0 %v1995
    %7603 = vmatprep.mubr.f32.mxu0 %v3270
    %7604 = vmatmul.mubr.f32.gmra.mrb[0].mxu0 %v3262
    %v7605 = vpop.f32.mrb[0].mxu0
    %v7606 = vadd.f32 %v7536, %v7605
    %v7607 = vpop.f32.mrb[0].mxu0
    %7608 = vdwg.mxu0
    %7609 = vmatprep.subr.mxu0 0.0
    %7610 = vmatpush1.msra.mxu0 %v1996
    %7611 = vmatprep.subr.mxu0 0.0
    %7612 = vmatpush1.msra.mxu0 %v1997
    %7613 = vmatprep.subr.mxu0 0.0
    %7614 = vmatpush1.msra.mxu0 %v1998
    %7615 = vmatprep.subr.mxu0 0.0
    %7616 = vmatpush1.msra.mxu0 %v1999
    %7617 = vmatprep.subr.mxu0 0.0
    %7618 = vmatpush1.msra.mxu0 %v2000
    %7619 = vmatprep.subr.mxu0 0.0
    %7620 = vmatpush1.msra.mxu0 %v2001
    %7621 = vmatprep.subr.mxu0 0.0
    %7622 = vmatpush1.msra.mxu0 %v2002
    %7623 = vmatprep.subr.mxu0 0.0
    %7624 = vmatpush1.msra.mxu0 %v2003
    %7625 = vmatprep.subr.mxu0 0.0
    %7626 = vmatpush1.msra.mxu0 %v2004
    %7627 = vmatprep.subr.mxu0 0.0
    %7628 = vmatpush1.msra.mxu0 %v2005
    %7629 = vmatprep.subr.mxu0 0.0
    %7630 = vmatpush1.msra.mxu0 %v2006
    %7631 = vmatprep.subr.mxu0 0.0
    %7632 = vmatpush1.msra.mxu0 %v2007
    %7633 = vmatprep.subr.mxu0 0.0
    %7634 = vmatpush1.msra.mxu0 %v2008
    %7635 = vmatprep.subr.mxu0 0.0
    %7636 = vmatpush1.msra.mxu0 %v2009
    %7637 = vmatprep.subr.mxu0 0.0
    %7638 = vmatpush1.msra.mxu0 %v2010
    %7639 = vmatprep.subr.mxu0 0.0
    %7640 = vmatpush1.msra.mxu0 %v2011
    %7641 = vmatprep.subr.mxu0 0.0
    %7642 = vmatpush1.msra.mxu0 %v2012
    %7643 = vmatprep.subr.mxu0 0.0
    %7644 = vmatpush1.msra.mxu0 %v2013
    %7645 = vmatprep.subr.mxu0 0.0
    %7646 = vmatpush1.msra.mxu0 %v2014
    %7647 = vmatprep.subr.mxu0 0.0
    %7648 = vmatpush1.msra.mxu0 %v2015
    %7649 = vmatprep.subr.mxu0 0.0
    %7650 = vmatpush1.msra.mxu0 %v2016
    %7651 = vmatprep.subr.mxu0 0.0
    %7652 = vmatpush1.msra.mxu0 %v2017
    %7653 = vmatprep.subr.mxu0 0.0
    %7654 = vmatpush1.msra.mxu0 %v2018
    %7655 = vmatprep.subr.mxu0 0.0
    %7656 = vmatpush1.msra.mxu0 %v2019
    %7657 = vmatprep.subr.mxu0 0.0
    %7658 = vmatpush1.msra.mxu0 %v2020
    %7659 = vmatprep.subr.mxu0 0.0
    %7660 = vmatpush1.msra.mxu0 %v2021
    %7661 = vmatprep.subr.mxu0 0.0
    %7662 = vmatpush1.msra.mxu0 %v2022
    %7663 = vmatprep.subr.mxu0 0.0
    %7664 = vmatpush1.msra.mxu0 %v2023
    %7665 = vmatprep.subr.mxu0 0.0
    %7666 = vmatpush1.msra.mxu0 %v2024
    %7667 = vmatprep.subr.mxu0 0.0
    %7668 = vmatpush1.msra.mxu0 %v2025
    %7669 = vmatprep.subr.mxu0 0.0
    %7670 = vmatpush1.msra.mxu0 %v2026
    %7671 = vmatprep.subr.mxu0 0.0
    %7672 = vmatpush1.msra.mxu0 %v2027
    %7673 = vmatprep.mubr.f32.mxu0 %v3271
    %7674 = vmatmul.mubr.f32.gmra.mrb[0].mxu0 %v3269
    %v7675 = vpop.f32.mrb[0].mxu0
    %v7676 = vadd.f32 %v7606, %v7675
    %v7677 = vpop.f32.mrb[0].mxu0
    %7678 = vdwg.mxu0
    %7679 = vmatprep.subr.mxu0 0.0
    %7680 = vmatpush1.msra.mxu0 %v2028
    %7681 = vmatprep.subr.mxu0 0.0
    %7682 = vmatpush1.msra.mxu0 %v2029
    %7683 = vmatprep.subr.mxu0 0.0
    %7684 = vmatpush1.msra.mxu0 %v2030
    %7685 = vmatprep.subr.mxu0 0.0
    %7686 = vmatpush1.msra.mxu0 %v2031
    %7687 = vmatprep.subr.mxu0 0.0
    %7688 = vmatpush1.msra.mxu0 %v2032
    %7689 = vmatprep.subr.mxu0 0.0
    %7690 = vmatpush1.msra.mxu0 %v2033
    %7691 = vmatprep.subr.mxu0 0.0
    %7692 = vmatpush1.msra.mxu0 %v2034
    %7693 = vmatprep.subr.mxu0 0.0
    %7694 = vmatpush1.msra.mxu0 %v2035
    %7695 = vmatprep.subr.mxu0 0.0
    %7696 = vmatpush1.msra.mxu0 %v2036
    %7697 = vmatprep.subr.mxu0 0.0
    %7698 = vmatpush1.msra.mxu0 %v2037
    %7699 = vmatprep.subr.mxu0 0.0
    %7700 = vmatpush1.msra.mxu0 %v2038
    %7701 = vmatprep.subr.mxu0 0.0
    %7702 = vmatpush1.msra.mxu0 %v2039
    %7703 = vmatprep.subr.mxu0 0.0
    %7704 = vmatpush1.msra.mxu0 %v2040
    %7705 = vmatprep.subr.mxu0 0.0
    %7706 = vmatpush1.msra.mxu0 %v2041
    %7707 = vmatprep.subr.mxu0 0.0
    %7708 = vmatpush1.msra.mxu0 %v2042
    %7709 = vmatprep.subr.mxu0 0.0
    %7710 = vmatpush1.msra.mxu0 %v2043
    %7711 = vmatprep.subr.mxu0 0.0
    %7712 = vmatpush1.msra.mxu0 %v2044
    %7713 = vmatprep.subr.mxu0 0.0
    %7714 = vmatpush1.msra.mxu0 %v2045
    %7715 = vmatprep.subr.mxu0 0.0
    %7716 = vmatpush1.msra.mxu0 %v2046
    %7717 = vmatprep.subr.mxu0 0.0
    %7718 = vmatpush1.msra.mxu0 %v2047
    %7719 = vmatprep.subr.mxu0 0.0
    %7720 = vmatpush1.msra.mxu0 %v2048
    %7721 = vmatprep.subr.mxu0 0.0
    %7722 = vmatpush1.msra.mxu0 %v2049
    %7723 = vmatprep.subr.mxu0 0.0
    %7724 = vmatpush1.msra.mxu0 %v2050
    %7725 = vmatprep.subr.mxu0 0.0
    %7726 = vmatpush1.msra.mxu0 %v2051
    %7727 = vmatprep.subr.mxu0 0.0
    %7728 = vmatpush1.msra.mxu0 %v2052
    %7729 = vmatprep.subr.mxu0 0.0
    %7730 = vmatpush1.msra.mxu0 %v2053
    %7731 = vmatprep.subr.mxu0 0.0
    %7732 = vmatpush1.msra.mxu0 %v2054
    %7733 = vmatprep.subr.mxu0 0.0
    %7734 = vmatpush1.msra.mxu0 %v2055
    %7735 = vmatprep.subr.mxu0 0.0
    %7736 = vmatpush1.msra.mxu0 %v2056
    %7737 = vmatprep.subr.mxu0 0.0
    %7738 = vmatpush1.msra.mxu0 %v2057
    %7739 = vmatprep.subr.mxu0 0.0
    %7740 = vmatpush1.msra.mxu0 %v2058
    %7741 = vmatprep.subr.mxu0 0.0
    %7742 = vmatpush1.msra.mxu0 %v2059
    %7743 = vmatprep.mubr.f32.mxu0 %v3287
    %7744 = vmatmul.mubr.f32.gmra.mrb[0].mxu0 %v3279
    %v7745 = vpop.f32.mrb[0].mxu0
    %v7746 = vadd.f32 %v7676, %v7745
    %v7747 = vpop.f32.mrb[0].mxu0
    %7748 = vdwg.mxu0
    %7749 = vmatprep.subr.mxu0 0.0
    %7750 = vmatpush1.msra.mxu0 %v2060
    %7751 = vmatprep.subr.mxu0 0.0
    %7752 = vmatpush1.msra.mxu0 %v2061
    %7753 = vmatprep.subr.mxu0 0.0
    %7754 = vmatpush1.msra.mxu0 %v2062
    %7755 = vmatprep.subr.mxu0 0.0
    %7756 = vmatpush1.msra.mxu0 %v2063
    %7757 = vmatprep.subr.mxu0 0.0
    %7758 = vmatpush1.msra.mxu0 %v2064
    %7759 = vmatprep.subr.mxu0 0.0
    %7760 = vmatpush1.msra.mxu0 %v2065
    %7761 = vmatprep.subr.mxu0 0.0
    %7762 = vmatpush1.msra.mxu0 %v2066
    %7763 = vmatprep.subr.mxu0 0.0
    %7764 = vmatpush1.msra.mxu0 %v2067
    %7765 = vmatprep.subr.mxu0 0.0
    %7766 = vmatpush1.msra.mxu0 %v2068
    %7767 = vmatprep.subr.mxu0 0.0
    %7768 = vmatpush1.msra.mxu0 %v2069
    %7769 = vmatprep.subr.mxu0 0.0
    %7770 = vmatpush1.msra.mxu0 %v2070
    %7771 = vmatprep.subr.mxu0 0.0
    %7772 = vmatpush1.msra.mxu0 %v2071
    %7773 = vmatprep.subr.mxu0 0.0
    %7774 = vmatpush1.msra.mxu0 %v2072
    %7775 = vmatprep.subr.mxu0 0.0
    %7776 = vmatpush1.msra.mxu0 %v2073
    %7777 = vmatprep.subr.mxu0 0.0
    %7778 = vmatpush1.msra.mxu0 %v2074
    %7779 = vmatprep.subr.mxu0 0.0
    %7780 = vmatpush1.msra.mxu0 %v2075
    %7781 = vmatprep.subr.mxu0 0.0
    %7782 = vmatpush1.msra.mxu0 %v2076
    %7783 = vmatprep.subr.mxu0 0.0
    %7784 = vmatpush1.msra.mxu0 %v2077
    %7785 = vmatprep.subr.mxu0 0.0
    %7786 = vmatpush1.msra.mxu0 %v2078
    %7787 = vmatprep.subr.mxu0 0.0
    %7788 = vmatpush1.msra.mxu0 %v2079
    %7789 = vmatprep.subr.mxu0 0.0
    %7790 = vmatpush1.msra.mxu0 %v2080
    %7791 = vmatprep.subr.mxu0 0.0
    %7792 = vmatpush1.msra.mxu0 %v2081
    %7793 = vmatprep.subr.mxu0 0.0
    %7794 = vmatpush1.msra.mxu0 %v2082
    %7795 = vmatprep.subr.mxu0 0.0
    %7796 = vmatpush1.msra.mxu0 %v2083
    %7797 = vmatprep.subr.mxu0 0.0
    %7798 = vmatpush1.msra.mxu0 %v2084
    %7799 = vmatprep.subr.mxu0 0.0
    %7800 = vmatpush1.msra.mxu0 %v2085
    %7801 = vmatprep.subr.mxu0 0.0
    %7802 = vmatpush1.msra.mxu0 %v2086
    %7803 = vmatprep.subr.mxu0 0.0
    %7804 = vmatpush1.msra.mxu0 %v2087
    %7805 = vmatprep.subr.mxu0 0.0
    %7806 = vmatpush1.msra.mxu0 %v2088
    %7807 = vmatprep.subr.mxu0 0.0
    %7808 = vmatpush1.msra.mxu0 %v2089
    %7809 = vmatprep.subr.mxu0 0.0
    %7810 = vmatpush1.msra.mxu0 %v2090
    %7811 = vmatprep.subr.mxu0 0.0
    %7812 = vmatpush1.msra.mxu0 %v2091
    %7813 = vmatprep.mubr.f32.mxu0 %v3288
    %7814 = vmatmul.mubr.f32.gmra.mrb[0].mxu0 %v3286
    %v7815 = vpop.f32.mrb[0].mxu0
    %v7816 = vadd.f32 %v7746, %v7815
    %v7817 = vpop.f32.mrb[0].mxu0
    %7818 = vdwg.mxu0
    %7819 = vmatprep.subr.mxu0 0.0
    %7820 = vmatpush1.msra.mxu0 %v2092
    %7821 = vmatprep.subr.mxu0 0.0
    %7822 = vmatpush1.msra.mxu0 %v2093
    %7823 = vmatprep.subr.mxu0 0.0
    %7824 = vmatpush1.msra.mxu0 %v2094
    %7825 = vmatprep.subr.mxu0 0.0
    %7826 = vmatpush1.msra.mxu0 %v2095
    %7827 = vmatprep.subr.mxu0 0.0
    %7828 = vmatpush1.msra.mxu0 %v2096
    %7829 = vmatprep.subr.mxu0 0.0
    %7830 = vmatpush1.msra.mxu0 %v2097
    %7831 = vmatprep.subr.mxu0 0.0
    %7832 = vmatpush1.msra.mxu0 %v2098
    %7833 = vmatprep.subr.mxu0 0.0
    %7834 = vmatpush1.msra.mxu0 %v2099
    %7835 = vmatprep.subr.mxu0 0.0
    %7836 = vmatpush1.msra.mxu0 %v2100
    %7837 = vmatprep.subr.mxu0 0.0
    %7838 = vmatpush1.msra.mxu0 %v2101
    %7839 = vmatprep.subr.mxu0 0.0
    %7840 = vmatpush1.msra.mxu0 %v2102
    %7841 = vmatprep.subr.mxu0 0.0
    %7842 = vmatpush1.msra.mxu0 %v2103
    %7843 = vmatprep.subr.mxu0 0.0
    %7844 = vmatpush1.msra.mxu0 %v2104
    %7845 = vmatprep.subr.mxu0 0.0
    %7846 = vmatpush1.msra.mxu0 %v2105
    %7847 = vmatprep.subr.mxu0 0.0
    %7848 = vmatpush1.msra.mxu0 %v2106
    %7849 = vmatprep.subr.mxu0 0.0
    %7850 = vmatpush1.msra.mxu0 %v2107
    %7851 = vmatprep.subr.mxu0 0.0
    %7852 = vmatpush1.msra.mxu0 %v2108
    %7853 = vmatprep.subr.mxu0 0.0
    %7854 = vmatpush1.msra.mxu0 %v2109
    %7855 = vmatprep.subr.mxu0 0.0
    %7856 = vmatpush1.msra.mxu0 %v2110
    %7857 = vmatprep.subr.mxu0 0.0
    %7858 = vmatpush1.msra.mxu0 %v2111
    %7859 = vmatprep.subr.mxu0 0.0
    %7860 = vmatpush1.msra.mxu0 %v2112
    %7861 = vmatprep.subr.mxu0 0.0
    %7862 = vmatpush1.msra.mxu0 %v2113
    %7863 = vmatprep.subr.mxu0 0.0
    %7864 = vmatpush1.msra.mxu0 %v2114
    %7865 = vmatprep.subr.mxu0 0.0
    %7866 = vmatpush1.msra.mxu0 %v2115
    %7867 = vmatprep.subr.mxu0 0.0
    %7868 = vmatpush1.msra.mxu0 %v2116
    %7869 = vmatprep.subr.mxu0 0.0
    %7870 = vmatpush1.msra.mxu0 %v2117
    %7871 = vmatprep.subr.mxu0 0.0
    %7872 = vmatpush1.msra.mxu0 %v2118
    %7873 = vmatprep.subr.mxu0 0.0
    %7874 = vmatpush1.msra.mxu0 %v2119
    %7875 = vmatprep.subr.mxu0 0.0
    %7876 = vmatpush1.msra.mxu0 %v2120
    %7877 = vmatprep.subr.mxu0 0.0
    %7878 = vmatpush1.msra.mxu0 %v2121
    %7879 = vmatprep.subr.mxu0 0.0
    %7880 = vmatpush1.msra.mxu0 %v2122
    %7881 = vmatprep.subr.mxu0 0.0
    %7882 = vmatpush1.msra.mxu0 %v2123
    %7883 = vmatprep.mubr.f32.mxu0 %v3304
    %7884 = vmatmul.mubr.f32.gmra.mrb[0].mxu0 %v3296
    %v7885 = vpop.f32.mrb[0].mxu0
    %v7886 = vadd.f32 %v7816, %v7885
    %v7887 = vpop.f32.mrb[0].mxu0
    %7888 = vdwg.mxu0
    %7889 = vmatprep.subr.mxu0 0.0
    %7890 = vmatpush1.msra.mxu0 %v2124
    %7891 = vmatprep.subr.mxu0 0.0
    %7892 = vmatpush1.msra.mxu0 %v2125
    %7893 = vmatprep.subr.mxu0 0.0
    %7894 = vmatpush1.msra.mxu0 %v2126
    %7895 = vmatprep.subr.mxu0 0.0
    %7896 = vmatpush1.msra.mxu0 %v2127
    %7897 = vmatprep.subr.mxu0 0.0
    %7898 = vmatpush1.msra.mxu0 %v2128
    %7899 = vmatprep.subr.mxu0 0.0
    %7900 = vmatpush1.msra.mxu0 %v2129
    %7901 = vmatprep.subr.mxu0 0.0
    %7902 = vmatpush1.msra.mxu0 %v2130
    %7903 = vmatprep.subr.mxu0 0.0
    %7904 = vmatpush1.msra.mxu0 %v2131
    %7905 = vmatprep.subr.mxu0 0.0
    %7906 = vmatpush1.msra.mxu0 %v2132
    %7907 = vmatprep.subr.mxu0 0.0
    %7908 = vmatpush1.msra.mxu0 %v2133
    %7909 = vmatprep.subr.mxu0 0.0
    %7910 = vmatpush1.msra.mxu0 %v2134
    %7911 = vmatprep.subr.mxu0 0.0
    %7912 = vmatpush1.msra.mxu0 %v2135
    %7913 = vmatprep.subr.mxu0 0.0
    %7914 = vmatpush1.msra.mxu0 %v2136
    %7915 = vmatprep.subr.mxu0 0.0
    %7916 = vmatpush1.msra.mxu0 %v2137
    %7917 = vmatprep.subr.mxu0 0.0
    %7918 = vmatpush1.msra.mxu0 %v2138
    %7919 = vmatprep.subr.mxu0 0.0
    %7920 = vmatpush1.msra.mxu0 %v2139
    %7921 = vmatprep.subr.mxu0 0.0
    %7922 = vmatpush1.msra.mxu0 %v2140
    %7923 = vmatprep.subr.mxu0 0.0
    %7924 = vmatpush1.msra.mxu0 %v2141
    %7925 = vmatprep.subr.mxu0 0.0
    %7926 = vmatpush1.msra.mxu0 %v2142
    %7927 = vmatprep.subr.mxu0 0.0
    %7928 = vmatpush1.msra.mxu0 %v2143
    %7929 = vmatprep.subr.mxu0 0.0
    %7930 = vmatpush1.msra.mxu0 %v2144
    %7931 = vmatprep.subr.mxu0 0.0
    %7932 = vmatpush1.msra.mxu0 %v2145
    %7933 = vmatprep.subr.mxu0 0.0
    %7934 = vmatpush1.msra.mxu0 %v2146
    %7935 = vmatprep.subr.mxu0 0.0
    %7936 = vmatpush1.msra.mxu0 %v2147
    %7937 = vmatprep.subr.mxu0 0.0
    %7938 = vmatpush1.msra.mxu0 %v2148
    %7939 = vmatprep.subr.mxu0 0.0
    %7940 = vmatpush1.msra.mxu0 %v2149
    %7941 = vmatprep.subr.mxu0 0.0
    %7942 = vmatpush1.msra.mxu0 %v2150
    %7943 = vmatprep.subr.mxu0 0.0
    %7944 = vmatpush1.msra.mxu0 %v2151
    %7945 = vmatprep.subr.mxu0 0.0
    %7946 = vmatpush1.msra.mxu0 %v2152
    %7947 = vmatprep.subr.mxu0 0.0
    %7948 = vmatpush1.msra.mxu0 %v2153
    %7949 = vmatprep.subr.mxu0 0.0
    %7950 = vmatpush1.msra.mxu0 %v2154
    %7951 = vmatprep.subr.mxu0 0.0
    %7952 = vmatpush1.msra.mxu0 %v2155
    %7953 = vmatprep.mubr.f32.mxu0 %v3305
    %7954 = vmatmul.mubr.f32.gmra.mrb[0].mxu0 %v3303
    %v7955 = vpop.f32.mrb[0].mxu0
    %v7956 = vadd.f32 %v7886, %v7955
    %v7957 = vpop.f32.mrb[0].mxu0
    %7958 = vdwg.mxu0
    %7959 = vmatprep.subr.mxu0 0.0
    %7960 = vmatpush1.msra.mxu0 %v2156
    %7961 = vmatprep.subr.mxu0 0.0
    %7962 = vmatpush1.msra.mxu0 %v2157
    %7963 = vmatprep.subr.mxu0 0.0
    %7964 = vmatpush1.msra.mxu0 %v2158
    %7965 = vmatprep.subr.mxu0 0.0
    %7966 = vmatpush1.msra.mxu0 %v2159
    %7967 = vmatprep.subr.mxu0 0.0
    %7968 = vmatpush1.msra.mxu0 %v2160
    %7969 = vmatprep.subr.mxu0 0.0
    %7970 = vmatpush1.msra.mxu0 %v2161
    %7971 = vmatprep.subr.mxu0 0.0
    %7972 = vmatpush1.msra.mxu0 %v2162
    %7973 = vmatprep.subr.mxu0 0.0
    %7974 = vmatpush1.msra.mxu0 %v2163
    %7975 = vmatprep.subr.mxu0 0.0
    %7976 = vmatpush1.msra.mxu0 %v2164
    %7977 = vmatprep.subr.mxu0 0.0
    %7978 = vmatpush1.msra.mxu0 %v2165
    %7979 = vmatprep.subr.mxu0 0.0
    %7980 = vmatpush1.msra.mxu0 %v2166
    %7981 = vmatprep.subr.mxu0 0.0
    %7982 = vmatpush1.msra.mxu0 %v2167
    %7983 = vmatprep.subr.mxu0 0.0
    %7984 = vmatpush1.msra.mxu0 %v2168
    %7985 = vmatprep.subr.mxu0 0.0
    %7986 = vmatpush1.msra.mxu0 %v2169
    %7987 = vmatprep.subr.mxu0 0.0
    %7988 = vmatpush1.msra.mxu0 %v2170
    %7989 = vmatprep.subr.mxu0 0.0
    %7990 = vmatpush1.msra.mxu0 %v2171
    %7991 = vmatprep.subr.mxu0 0.0
    %7992 = vmatpush1.msra.mxu0 %v2172
    %7993 = vmatprep.subr.mxu0 0.0
    %7994 = vmatpush1.msra.mxu0 %v2173
    %7995 = vmatprep.subr.mxu0 0.0
    %7996 = vmatpush1.msra.mxu0 %v2174
    %7997 = vmatprep.subr.mxu0 0.0
    %7998 = vmatpush1.msra.mxu0 %v2175
    %7999 = vmatprep.subr.mxu0 0.0
    %8000 = vmatpush1.msra.mxu0 %v2176
    %8001 = vmatprep.subr.mxu0 0.0
    %8002 = vmatpush1.msra.mxu0 %v2177
    %8003 = vmatprep.subr.mxu0 0.0
    %8004 = vmatpush1.msra.mxu0 %v2178
    %8005 = vmatprep.subr.mxu0 0.0
    %8006 = vmatpush1.msra.mxu0 %v2179
    %8007 = vmatprep.subr.mxu0 0.0
    %8008 = vmatpush1.msra.mxu0 %v2180
    %8009 = vmatprep.subr.mxu0 0.0
    %8010 = vmatpush1.msra.mxu0 %v2181
    %8011 = vmatprep.subr.mxu0 0.0
    %8012 = vmatpush1.msra.mxu0 %v2182
    %8013 = vmatprep.subr.mxu0 0.0
    %8014 = vmatpush1.msra.mxu0 %v2183
    %8015 = vmatprep.subr.mxu0 0.0
    %8016 = vmatpush1.msra.mxu0 %v2184
    %8017 = vmatprep.subr.mxu0 0.0
    %8018 = vmatpush1.msra.mxu0 %v2185
    %8019 = vmatprep.subr.mxu0 0.0
    %8020 = vmatpush1.msra.mxu0 %v2186
    %8021 = vmatprep.subr.mxu0 0.0
    %8022 = vmatpush1.msra.mxu0 %v2187
    %8023 = vmatprep.mubr.f32.mxu0 %v3321
    %8024 = vmatmul.mubr.f32.gmra.mrb[0].mxu0 %v3313
    %v8025 = vpop.f32.mrb[0].mxu0
    %v8026 = vadd.f32 %v7956, %v8025
    %v8027 = vpop.f32.mrb[0].mxu0
    %8028 = vdwg.mxu0
    %8029 = vmatprep.subr.mxu0 0.0
    %8030 = vmatpush1.msra.mxu0 %v2188
    %8031 = vmatprep.subr.mxu0 0.0
    %8032 = vmatpush1.msra.mxu0 %v2189
    %8033 = vmatprep.subr.mxu0 0.0
    %8034 = vmatpush1.msra.mxu0 %v2190
    %8035 = vmatprep.subr.mxu0 0.0
    %8036 = vmatpush1.msra.mxu0 %v2191
    %8037 = vmatprep.subr.mxu0 0.0
    %8038 = vmatpush1.msra.mxu0 %v2192
    %8039 = vmatprep.subr.mxu0 0.0
    %8040 = vmatpush1.msra.mxu0 %v2193
    %8041 = vmatprep.subr.mxu0 0.0
    %8042 = vmatpush1.msra.mxu0 %v2194
    %8043 = vmatprep.subr.mxu0 0.0
    %8044 = vmatpush1.msra.mxu0 %v2195
    %8045 = vmatprep.subr.mxu0 0.0
    %8046 = vmatpush1.msra.mxu0 %v2196
    %8047 = vmatprep.subr.mxu0 0.0
    %8048 = vmatpush1.msra.mxu0 %v2197
    %8049 = vmatprep.subr.mxu0 0.0
    %8050 = vmatpush1.msra.mxu0 %v2198
    %8051 = vmatprep.subr.mxu0 0.0
    %8052 = vmatpush1.msra.mxu0 %v2199
    %8053 = vmatprep.subr.mxu0 0.0
    %8054 = vmatpush1.msra.mxu0 %v2200
    %8055 = vmatprep.subr.mxu0 0.0
    %8056 = vmatpush1.msra.mxu0 %v2201
    %8057 = vmatprep.subr.mxu0 0.0
    %8058 = vmatpush1.msra.mxu0 %v2202
    %8059 = vmatprep.subr.mxu0 0.0
    %8060 = vmatpush1.msra.mxu0 %v2203
    %8061 = vmatprep.subr.mxu0 0.0
    %8062 = vmatpush1.msra.mxu0 %v2204
    %8063 = vmatprep.subr.mxu0 0.0
    %8064 = vmatpush1.msra.mxu0 %v2205
    %8065 = vmatprep.subr.mxu0 0.0
    %8066 = vmatpush1.msra.mxu0 %v2206
    %8067 = vmatprep.subr.mxu0 0.0
    %8068 = vmatpush1.msra.mxu0 %v2207
    %8069 = vmatprep.subr.mxu0 0.0
    %8070 = vmatpush1.msra.mxu0 %v2208
    %8071 = vmatprep.subr.mxu0 0.0
    %8072 = vmatpush1.msra.mxu0 %v2209
    %8073 = vmatprep.subr.mxu0 0.0
    %8074 = vmatpush1.msra.mxu0 %v2210
    %8075 = vmatprep.subr.mxu0 0.0
    %8076 = vmatpush1.msra.mxu0 %v2211
    %8077 = vmatprep.subr.mxu0 0.0
    %8078 = vmatpush1.msra.mxu0 %v2212
    %8079 = vmatprep.subr.mxu0 0.0
    %8080 = vmatpush1.msra.mxu0 %v2213
    %8081 = vmatprep.subr.mxu0 0.0
    %8082 = vmatpush1.msra.mxu0 %v2214
    %8083 = vmatprep.subr.mxu0 0.0
    %8084 = vmatpush1.msra.mxu0 %v2215
    %8085 = vmatprep.subr.mxu0 0.0
    %8086 = vmatpush1.msra.mxu0 %v2216
    %8087 = vmatprep.subr.mxu0 0.0
    %8088 = vmatpush1.msra.mxu0 %v2217
    %8089 = vmatprep.subr.mxu0 0.0
    %8090 = vmatpush1.msra.mxu0 %v2218
    %8091 = vmatprep.subr.mxu0 0.0
    %8092 = vmatpush1.msra.mxu0 %v2219
    %8093 = vmatprep.mubr.f32.mxu0 %v3322
    %8094 = vmatmul.mubr.f32.gmra.mrb[0].mxu0 %v3320
    %v8095 = vpop.f32.mrb[0].mxu0
    %v8096 = vadd.f32 %v8026, %v8095
    %v8097 = vpop.f32.mrb[0].mxu0
    %8098 = vdwg.mxu0
    %8099 = vmatprep.subr.mxu0 0.0
    %8100 = vmatpush1.msra.mxu0 %v2220
    %8101 = vmatprep.subr.mxu0 0.0
    %8102 = vmatpush1.msra.mxu0 %v2221
    %8103 = vmatprep.subr.mxu0 0.0
    %8104 = vmatpush1.msra.mxu0 %v2222
    %8105 = vmatprep.subr.mxu0 0.0
    %8106 = vmatpush1.msra.mxu0 %v2223
    %8107 = vmatprep.subr.mxu0 0.0
    %8108 = vmatpush1.msra.mxu0 %v2224
    %8109 = vmatprep.subr.mxu0 0.0
    %8110 = vmatpush1.msra.mxu0 %v2225
    %8111 = vmatprep.subr.mxu0 0.0
    %8112 = vmatpush1.msra.mxu0 %v2226
    %8113 = vmatprep.subr.mxu0 0.0
    %8114 = vmatpush1.msra.mxu0 %v2227
    %8115 = vmatprep.subr.mxu0 0.0
    %8116 = vmatpush1.msra.mxu0 %v2228
    %8117 = vmatprep.subr.mxu0 0.0
    %8118 = vmatpush1.msra.mxu0 %v2229
    %8119 = vmatprep.subr.mxu0 0.0
    %8120 = vmatpush1.msra.mxu0 %v2230
    %8121 = vmatprep.subr.mxu0 0.0
    %8122 = vmatpush1.msra.mxu0 %v2231
    %8123 = vmatprep.subr.mxu0 0.0
    %8124 = vmatpush1.msra.mxu0 %v2232
    %8125 = vmatprep.subr.mxu0 0.0
    %8126 = vmatpush1.msra.mxu0 %v2233
    %8127 = vmatprep.subr.mxu0 0.0
    %8128 = vmatpush1.msra.mxu0 %v2234
    %8129 = vmatprep.subr.mxu0 0.0
    %8130 = vmatpush1.msra.mxu0 %v2235
    %8131 = vmatprep.subr.mxu0 0.0
    %8132 = vmatpush1.msra.mxu0 %v2236
    %8133 = vmatprep.subr.mxu0 0.0
    %8134 = vmatpush1.msra.mxu0 %v2237
    %8135 = vmatprep.subr.mxu0 0.0
    %8136 = vmatpush1.msra.mxu0 %v2238
    %8137 = vmatprep.subr.mxu0 0.0
    %8138 = vmatpush1.msra.mxu0 %v2239
    %8139 = vmatprep.subr.mxu0 0.0
    %8140 = vmatpush1.msra.mxu0 %v2240
    %8141 = vmatprep.subr.mxu0 0.0
    %8142 = vmatpush1.msra.mxu0 %v2241
    %8143 = vmatprep.subr.mxu0 0.0
    %8144 = vmatpush1.msra.mxu0 %v2242
    %8145 = vmatprep.subr.mxu0 0.0
    %8146 = vmatpush1.msra.mxu0 %v2243
    %8147 = vmatprep.subr.mxu0 0.0
    %8148 = vmatpush1.msra.mxu0 %v2244
    %8149 = vmatprep.subr.mxu0 0.0
    %8150 = vmatpush1.msra.mxu0 %v2245
    %8151 = vmatprep.subr.mxu0 0.0
    %8152 = vmatpush1.msra.mxu0 %v2246
    %8153 = vmatprep.subr.mxu0 0.0
    %8154 = vmatpush1.msra.mxu0 %v2247
    %8155 = vmatprep.subr.mxu0 0.0
    %8156 = vmatpush1.msra.mxu0 %v2248
    %8157 = vmatprep.subr.mxu0 0.0
    %8158 = vmatpush1.msra.mxu0 %v2249
    %8159 = vmatprep.subr.mxu0 0.0
    %8160 = vmatpush1.msra.mxu0 %v2250
    %8161 = vmatprep.subr.mxu0 0.0
    %8162 = vmatpush1.msra.mxu0 %v2251
    %8163 = vmatprep.mubr.f32.mxu0 %v3338
    %8164 = vmatmul.mubr.f32.gmra.mrb[0].mxu0 %v3330
    %v8165 = vpop.f32.mrb[0].mxu0
    %v8166 = vadd.f32 %v8096, %v8165
    %v8167 = vpop.f32.mrb[0].mxu0
    %8168 = vdwg.mxu0
    %8169 = vmatprep.subr.mxu0 0.0
    %8170 = vmatpush1.msra.mxu0 %v2252
    %8171 = vmatprep.subr.mxu0 0.0
    %8172 = vmatpush1.msra.mxu0 %v2253
    %8173 = vmatprep.subr.mxu0 0.0
    %8174 = vmatpush1.msra.mxu0 %v2254
    %8175 = vmatprep.subr.mxu0 0.0
    %8176 = vmatpush1.msra.mxu0 %v2255
    %8177 = vmatprep.subr.mxu0 0.0
    %8178 = vmatpush1.msra.mxu0 %v2256
    %8179 = vmatprep.subr.mxu0 0.0
    %8180 = vmatpush1.msra.mxu0 %v2257
    %8181 = vmatprep.subr.mxu0 0.0
    %8182 = vmatpush1.msra.mxu0 %v2258
    %8183 = vmatprep.subr.mxu0 0.0
    %8184 = vmatpush1.msra.mxu0 %v2259
    %8185 = vmatprep.subr.mxu0 0.0
    %8186 = vmatpush1.msra.mxu0 %v2260
    %8187 = vmatprep.subr.mxu0 0.0
    %8188 = vmatpush1.msra.mxu0 %v2261
    %8189 = vmatprep.subr.mxu0 0.0
    %8190 = vmatpush1.msra.mxu0 %v2262
    %8191 = vmatprep.subr.mxu0 0.0
    %8192 = vmatpush1.msra.mxu0 %v2263
    %8193 = vmatprep.subr.mxu0 0.0
    %8194 = vmatpush1.msra.mxu0 %v2264
    %8195 = vmatprep.subr.mxu0 0.0
    %8196 = vmatpush1.msra.mxu0 %v2265
    %8197 = vmatprep.subr.mxu0 0.0
    %8198 = vmatpush1.msra.mxu0 %v2266
    %8199 = vmatprep.subr.mxu0 0.0
    %8200 = vmatpush1.msra.mxu0 %v2267
    %8201 = vmatprep.subr.mxu0 0.0
    %8202 = vmatpush1.msra.mxu0 %v2268
    %8203 = vmatprep.subr.mxu0 0.0
    %8204 = vmatpush1.msra.mxu0 %v2269
    %8205 = vmatprep.subr.mxu0 0.0
    %8206 = vmatpush1.msra.mxu0 %v2270
    %8207 = vmatprep.subr.mxu0 0.0
    %8208 = vmatpush1.msra.mxu0 %v2271
    %8209 = vmatprep.subr.mxu0 0.0
    %8210 = vmatpush1.msra.mxu0 %v2272
    %8211 = vmatprep.subr.mxu0 0.0
    %8212 = vmatpush1.msra.mxu0 %v2273
    %8213 = vmatprep.subr.mxu0 0.0
    %8214 = vmatpush1.msra.mxu0 %v2274
    %8215 = vmatprep.subr.mxu0 0.0
    %8216 = vmatpush1.msra.mxu0 %v2275
    %8217 = vmatprep.subr.mxu0 0.0
    %8218 = vmatpush1.msra.mxu0 %v2276
    %8219 = vmatprep.subr.mxu0 0.0
    %8220 = vmatpush1.msra.mxu0 %v2277
    %8221 = vmatprep.subr.mxu0 0.0
    %8222 = vmatpush1.msra.mxu0 %v2278
    %8223 = vmatprep.subr.mxu0 0.0
    %8224 = vmatpush1.msra.mxu0 %v2279
    %8225 = vmatprep.subr.mxu0 0.0
    %8226 = vmatpush1.msra.mxu0 %v2280
    %8227 = vmatprep.subr.mxu0 0.0
    %8228 = vmatpush1.msra.mxu0 %v2281
    %8229 = vmatprep.subr.mxu0 0.0
    %8230 = vmatpush1.msra.mxu0 %v2282
    %8231 = vmatprep.subr.mxu0 0.0
    %8232 = vmatpush1.msra.mxu0 %v2283
    %8233 = vmatprep.mubr.f32.mxu0 %v3339
    %8234 = vmatmul.mubr.f32.gmra.mrb[0].mxu0 %v3337
    %v8235 = vpop.f32.mrb[0].mxu0
    %v8236 = vadd.f32 %v8166, %v8235
    %v8237 = vpop.f32.mrb[0].mxu0
    %8238 = vdwg.mxu0
    %8239 = vmatprep.subr.mxu0 0.0
    %8240 = vmatpush1.msra.mxu0 %v2284
    %8241 = vmatprep.subr.mxu0 0.0
    %8242 = vmatpush1.msra.mxu0 %v2285
    %8243 = vmatprep.subr.mxu0 0.0
    %8244 = vmatpush1.msra.mxu0 %v2286
    %8245 = vmatprep.subr.mxu0 0.0
    %8246 = vmatpush1.msra.mxu0 %v2287
    %8247 = vmatprep.subr.mxu0 0.0
    %8248 = vmatpush1.msra.mxu0 %v2288
    %8249 = vmatprep.subr.mxu0 0.0
    %8250 = vmatpush1.msra.mxu0 %v2289
    %8251 = vmatprep.subr.mxu0 0.0
    %8252 = vmatpush1.msra.mxu0 %v2290
    %8253 = vmatprep.subr.mxu0 0.0
    %8254 = vmatpush1.msra.mxu0 %v2291
    %8255 = vmatprep.subr.mxu0 0.0
    %8256 = vmatpush1.msra.mxu0 %v2292
    %8257 = vmatprep.subr.mxu0 0.0
    %8258 = vmatpush1.msra.mxu0 %v2293
    %8259 = vmatprep.subr.mxu0 0.0
    %8260 = vmatpush1.msra.mxu0 %v2294
    %8261 = vmatprep.subr.mxu0 0.0
    %8262 = vmatpush1.msra.mxu0 %v2295
    %8263 = vmatprep.subr.mxu0 0.0
    %8264 = vmatpush1.msra.mxu0 %v2296
    %8265 = vmatprep.subr.mxu0 0.0
    %8266 = vmatpush1.msra.mxu0 %v2297
    %8267 = vmatprep.subr.mxu0 0.0
    %8268 = vmatpush1.msra.mxu0 %v2298
    %8269 = vmatprep.subr.mxu0 0.0
    %8270 = vmatpush1.msra.mxu0 %v2299
    %8271 = vmatprep.subr.mxu0 0.0
    %8272 = vmatpush1.msra.mxu0 %v2300
    %8273 = vmatprep.subr.mxu0 0.0
    %8274 = vmatpush1.msra.mxu0 %v2301
    %8275 = vmatprep.subr.mxu0 0.0
    %8276 = vmatpush1.msra.mxu0 %v2302
    %8277 = vmatprep.subr.mxu0 0.0
    %8278 = vmatpush1.msra.mxu0 %v2303
    %8279 = vmatprep.subr.mxu0 0.0
    %8280 = vmatpush1.msra.mxu0 %v2304
    %8281 = vmatprep.subr.mxu0 0.0
    %8282 = vmatpush1.msra.mxu0 %v2305
    %8283 = vmatprep.subr.mxu0 0.0
    %8284 = vmatpush1.msra.mxu0 %v2306
    %8285 = vmatprep.subr.mxu0 0.0
    %8286 = vmatpush1.msra.mxu0 %v2307
    %8287 = vmatprep.subr.mxu0 0.0
    %8288 = vmatpush1.msra.mxu0 %v2308
    %8289 = vmatprep.subr.mxu0 0.0
    %8290 = vmatpush1.msra.mxu0 %v2309
    %8291 = vmatprep.subr.mxu0 0.0
    %8292 = vmatpush1.msra.mxu0 %v2310
    %8293 = vmatprep.subr.mxu0 0.0
    %8294 = vmatpush1.msra.mxu0 %v2311
    %8295 = vmatprep.subr.mxu0 0.0
    %8296 = vmatpush1.msra.mxu0 %v2312
    %8297 = vmatprep.subr.mxu0 0.0
    %8298 = vmatpush1.msra.mxu0 %v2313
    %8299 = vmatprep.subr.mxu0 0.0
    %8300 = vmatpush1.msra.mxu0 %v2314
    %8301 = vmatprep.subr.mxu0 0.0
    %8302 = vmatpush1.msra.mxu0 %v2315
    %8303 = vmatprep.mubr.f32.mxu0 %v3355
    %8304 = vmatmul.mubr.f32.gmra.mrb[0].mxu0 %v3347
    %v8305 = vpop.f32.mrb[0].mxu0
    %v8306 = vadd.f32 %v8236, %v8305
    %v8307 = vpop.f32.mrb[0].mxu0
    %8308 = vdwg.mxu0
    %8309 = vmatprep.subr.mxu0 0.0
    %8310 = vmatpush1.msra.mxu0 %v2316
    %8311 = vmatprep.subr.mxu0 0.0
    %8312 = vmatpush1.msra.mxu0 %v2317
    %8313 = vmatprep.subr.mxu0 0.0
    %8314 = vmatpush1.msra.mxu0 %v2318
    %8315 = vmatprep.subr.mxu0 0.0
    %8316 = vmatpush1.msra.mxu0 %v2319
    %8317 = vmatprep.subr.mxu0 0.0
    %8318 = vmatpush1.msra.mxu0 %v2320
    %8319 = vmatprep.subr.mxu0 0.0
    %8320 = vmatpush1.msra.mxu0 %v2321
    %8321 = vmatprep.subr.mxu0 0.0
    %8322 = vmatpush1.msra.mxu0 %v2322
    %8323 = vmatprep.subr.mxu0 0.0
    %8324 = vmatpush1.msra.mxu0 %v2323
    %8325 = vmatprep.subr.mxu0 0.0
    %8326 = vmatpush1.msra.mxu0 %v2324
    %8327 = vmatprep.subr.mxu0 0.0
    %8328 = vmatpush1.msra.mxu0 %v2325
    %8329 = vmatprep.subr.mxu0 0.0
    %8330 = vmatpush1.msra.mxu0 %v2326
    %8331 = vmatprep.subr.mxu0 0.0
    %8332 = vmatpush1.msra.mxu0 %v2327
    %8333 = vmatprep.subr.mxu0 0.0
    %8334 = vmatpush1.msra.mxu0 %v2328
    %8335 = vmatprep.subr.mxu0 0.0
    %8336 = vmatpush1.msra.mxu0 %v2329
    %8337 = vmatprep.subr.mxu0 0.0
    %8338 = vmatpush1.msra.mxu0 %v2330
    %8339 = vmatprep.subr.mxu0 0.0
    %8340 = vmatpush1.msra.mxu0 %v2331
    %8341 = vmatprep.subr.mxu0 0.0
    %8342 = vmatpush1.msra.mxu0 %v2332
    %8343 = vmatprep.subr.mxu0 0.0
    %8344 = vmatpush1.msra.mxu0 %v2333
    %8345 = vmatprep.subr.mxu0 0.0
    %8346 = vmatpush1.msra.mxu0 %v2334
    %8347 = vmatprep.subr.mxu0 0.0
    %8348 = vmatpush1.msra.mxu0 %v2335
    %8349 = vmatprep.subr.mxu0 0.0
    %8350 = vmatpush1.msra.mxu0 %v2336
    %8351 = vmatprep.subr.mxu0 0.0
    %8352 = vmatpush1.msra.mxu0 %v2337
    %8353 = vmatprep.subr.mxu0 0.0
    %8354 = vmatpush1.msra.mxu0 %v2338
    %8355 = vmatprep.subr.mxu0 0.0
    %8356 = vmatpush1.msra.mxu0 %v2339
    %8357 = vmatprep.subr.mxu0 0.0
    %8358 = vmatpush1.msra.mxu0 %v2340
    %8359 = vmatprep.subr.mxu0 0.0
    %8360 = vmatpush1.msra.mxu0 %v2341
    %8361 = vmatprep.subr.mxu0 0.0
    %8362 = vmatpush1.msra.mxu0 %v2342
    %8363 = vmatprep.subr.mxu0 0.0
    %8364 = vmatpush1.msra.mxu0 %v2343
    %8365 = vmatprep.subr.mxu0 0.0
    %8366 = vmatpush1.msra.mxu0 %v2344
    %8367 = vmatprep.subr.mxu0 0.0
    %8368 = vmatpush1.msra.mxu0 %v2345
    %8369 = vmatprep.subr.mxu0 0.0
    %8370 = vmatpush1.msra.mxu0 %v2346
    %8371 = vmatprep.subr.mxu0 0.0
    %8372 = vmatpush1.msra.mxu0 %v2347
    %8373 = vmatprep.mubr.f32.mxu0 %v3356
    %8374 = vmatmul.mubr.f32.gmra.mrb[0].mxu0 %v3354
    %v8375 = vpop.f32.mrb[0].mxu0
    %v8376 = vadd.f32 %v8306, %v8375
    %v8377 = vpop.f32.mrb[0].mxu0
    %8378 = vdwg.mxu0
    %8379 = vmatprep.subr.mxu0 0.0
    %8380 = vmatpush1.msra.mxu0 %v2348
    %8381 = vmatprep.subr.mxu0 0.0
    %8382 = vmatpush1.msra.mxu0 %v2349
    %8383 = vmatprep.subr.mxu0 0.0
    %8384 = vmatpush1.msra.mxu0 %v2350
    %8385 = vmatprep.subr.mxu0 0.0
    %8386 = vmatpush1.msra.mxu0 %v2351
    %8387 = vmatprep.subr.mxu0 0.0
    %8388 = vmatpush1.msra.mxu0 %v2352
    %8389 = vmatprep.subr.mxu0 0.0
    %8390 = vmatpush1.msra.mxu0 %v2353
    %8391 = vmatprep.subr.mxu0 0.0
    %8392 = vmatpush1.msra.mxu0 %v2354
    %8393 = vmatprep.subr.mxu0 0.0
    %8394 = vmatpush1.msra.mxu0 %v2355
    %8395 = vmatprep.subr.mxu0 0.0
    %8396 = vmatpush1.msra.mxu0 %v2356
    %8397 = vmatprep.subr.mxu0 0.0
    %8398 = vmatpush1.msra.mxu0 %v2357
    %8399 = vmatprep.subr.mxu0 0.0
    %8400 = vmatpush1.msra.mxu0 %v2358
    %8401 = vmatprep.subr.mxu0 0.0
    %8402 = vmatpush1.msra.mxu0 %v2359
    %8403 = vmatprep.subr.mxu0 0.0
    %8404 = vmatpush1.msra.mxu0 %v2360
    %8405 = vmatprep.subr.mxu0 0.0
    %8406 = vmatpush1.msra.mxu0 %v2361
    %8407 = vmatprep.subr.mxu0 0.0
    %8408 = vmatpush1.msra.mxu0 %v2362
    %8409 = vmatprep.subr.mxu0 0.0
    %8410 = vmatpush1.msra.mxu0 %v2363
    %8411 = vmatprep.subr.mxu0 0.0
    %8412 = vmatpush1.msra.mxu0 %v2364
    %8413 = vmatprep.subr.mxu0 0.0
    %8414 = vmatpush1.msra.mxu0 %v2365
    %8415 = vmatprep.subr.mxu0 0.0
    %8416 = vmatpush1.msra.mxu0 %v2366
    %8417 = vmatprep.subr.mxu0 0.0
    %8418 = vmatpush1.msra.mxu0 %v2367
    %8419 = vmatprep.subr.mxu0 0.0
    %8420 = vmatpush1.msra.mxu0 %v2368
    %8421 = vmatprep.subr.mxu0 0.0
    %8422 = vmatpush1.msra.mxu0 %v2369
    %8423 = vmatprep.subr.mxu0 0.0
    %8424 = vmatpush1.msra.mxu0 %v2370
    %8425 = vmatprep.subr.mxu0 0.0
    %8426 = vmatpush1.msra.mxu0 %v2371
    %8427 = vmatprep.subr.mxu0 0.0
    %8428 = vmatpush1.msra.mxu0 %v2372
    %8429 = vmatprep.subr.mxu0 0.0
    %8430 = vmatpush1.msra.mxu0 %v2373
    %8431 = vmatprep.subr.mxu0 0.0
    %8432 = vmatpush1.msra.mxu0 %v2374
    %8433 = vmatprep.subr.mxu0 0.0
    %8434 = vmatpush1.msra.mxu0 %v2375
    %8435 = vmatprep.subr.mxu0 0.0
    %8436 = vmatpush1.msra.mxu0 %v2376
    %8437 = vmatprep.subr.mxu0 0.0
    %8438 = vmatpush1.msra.mxu0 %v2377
    %8439 = vmatprep.subr.mxu0 0.0
    %8440 = vmatpush1.msra.mxu0 %v2378
    %8441 = vmatprep.subr.mxu0 0.0
    %8442 = vmatpush1.msra.mxu0 %v2379
    %8443 = vmatprep.mubr.f32.mxu0 %v3372
    %8444 = vmatmul.mubr.f32.gmra.mrb[0].mxu0 %v3364
    %v8445 = vpop.f32.mrb[0].mxu0
    %v8446 = vadd.f32 %v8376, %v8445
    %v8447 = vpop.f32.mrb[0].mxu0
    %8448 = vdwg.mxu0
    %8449 = vmatprep.subr.mxu0 0.0
    %8450 = vmatpush1.msra.mxu0 %v2380
    %8451 = vmatprep.subr.mxu0 0.0
    %8452 = vmatpush1.msra.mxu0 %v2381
    %8453 = vmatprep.subr.mxu0 0.0
    %8454 = vmatpush1.msra.mxu0 %v2382
    %8455 = vmatprep.subr.mxu0 0.0
    %8456 = vmatpush1.msra.mxu0 %v2383
    %8457 = vmatprep.subr.mxu0 0.0
    %8458 = vmatpush1.msra.mxu0 %v2384
    %8459 = vmatprep.subr.mxu0 0.0
    %8460 = vmatpush1.msra.mxu0 %v2385
    %8461 = vmatprep.subr.mxu0 0.0
    %8462 = vmatpush1.msra.mxu0 %v2386
    %8463 = vmatprep.subr.mxu0 0.0
    %8464 = vmatpush1.msra.mxu0 %v2387
    %8465 = vmatprep.subr.mxu0 0.0
    %8466 = vmatpush1.msra.mxu0 %v2388
    %8467 = vmatprep.subr.mxu0 0.0
    %8468 = vmatpush1.msra.mxu0 %v2389
    %8469 = vmatprep.subr.mxu0 0.0
    %8470 = vmatpush1.msra.mxu0 %v2390
    %8471 = vmatprep.subr.mxu0 0.0
    %8472 = vmatpush1.msra.mxu0 %v2391
    %8473 = vmatprep.subr.mxu0 0.0
    %8474 = vmatpush1.msra.mxu0 %v2392
    %8475 = vmatprep.subr.mxu0 0.0
    %8476 = vmatpush1.msra.mxu0 %v2393
    %8477 = vmatprep.subr.mxu0 0.0
    %8478 = vmatpush1.msra.mxu0 %v2394
    %8479 = vmatprep.subr.mxu0 0.0
    %8480 = vmatpush1.msra.mxu0 %v2395
    %8481 = vmatprep.subr.mxu0 0.0
    %8482 = vmatpush1.msra.mxu0 %v2396
    %8483 = vmatprep.subr.mxu0 0.0
    %8484 = vmatpush1.msra.mxu0 %v2397
    %8485 = vmatprep.subr.mxu0 0.0
    %8486 = vmatpush1.msra.mxu0 %v2398
    %8487 = vmatprep.subr.mxu0 0.0
    %8488 = vmatpush1.msra.mxu0 %v2399
    %8489 = vmatprep.subr.mxu0 0.0
    %8490 = vmatpush1.msra.mxu0 %v2400
    %8491 = vmatprep.subr.mxu0 0.0
    %8492 = vmatpush1.msra.mxu0 %v2401
    %8493 = vmatprep.subr.mxu0 0.0
    %8494 = vmatpush1.msra.mxu0 %v2402
    %8495 = vmatprep.subr.mxu0 0.0
    %8496 = vmatpush1.msra.mxu0 %v2403
    %8497 = vmatprep.subr.mxu0 0.0
    %8498 = vmatpush1.msra.mxu0 %v2404
    %8499 = vmatprep.subr.mxu0 0.0
    %8500 = vmatpush1.msra.mxu0 %v2405
    %8501 = vmatprep.subr.mxu0 0.0
    %8502 = vmatpush1.msra.mxu0 %v2406
    %8503 = vmatprep.subr.mxu0 0.0
    %8504 = vmatpush1.msra.mxu0 %v2407
    %8505 = vmatprep.subr.mxu0 0.0
    %8506 = vmatpush1.msra.mxu0 %v2408
    %8507 = vmatprep.subr.mxu0 0.0
    %8508 = vmatpush1.msra.mxu0 %v2409
    %8509 = vmatprep.subr.mxu0 0.0
    %8510 = vmatpush1.msra.mxu0 %v2410
    %8511 = vmatprep.subr.mxu0 0.0
    %8512 = vmatpush1.msra.mxu0 %v2411
    %8513 = vmatprep.mubr.f32.mxu0 %v3373
    %8514 = vmatmul.mubr.f32.gmra.mrb[0].mxu0 %v3371
    %v8515 = vpop.f32.mrb[0].mxu0
    %v8516 = vadd.f32 %v8446, %v8515
    %v8517 = vpop.f32.mrb[0].mxu0
    %8518 = vdwg.mxu0
    %8519 = vmatprep.subr.mxu0 0.0
    %8520 = vmatpush1.msra.mxu0 %v2412
    %8521 = vmatprep.subr.mxu0 0.0
    %8522 = vmatpush1.msra.mxu0 %v2413
    %8523 = vmatprep.subr.mxu0 0.0
    %8524 = vmatpush1.msra.mxu0 %v2414
    %8525 = vmatprep.subr.mxu0 0.0
    %8526 = vmatpush1.msra.mxu0 %v2415
    %8527 = vmatprep.subr.mxu0 0.0
    %8528 = vmatpush1.msra.mxu0 %v2416
    %8529 = vmatprep.subr.mxu0 0.0
    %8530 = vmatpush1.msra.mxu0 %v2417
    %8531 = vmatprep.subr.mxu0 0.0
    %8532 = vmatpush1.msra.mxu0 %v2418
    %8533 = vmatprep.subr.mxu0 0.0
    %8534 = vmatpush1.msra.mxu0 %v2419
    %8535 = vmatprep.subr.mxu0 0.0
    %8536 = vmatpush1.msra.mxu0 %v2420
    %8537 = vmatprep.subr.mxu0 0.0
    %8538 = vmatpush1.msra.mxu0 %v2421
    %8539 = vmatprep.subr.mxu0 0.0
    %8540 = vmatpush1.msra.mxu0 %v2422
    %8541 = vmatprep.subr.mxu0 0.0
    %8542 = vmatpush1.msra.mxu0 %v2423
    %8543 = vmatprep.subr.mxu0 0.0
    %8544 = vmatpush1.msra.mxu0 %v2424
    %8545 = vmatprep.subr.mxu0 0.0
    %8546 = vmatpush1.msra.mxu0 %v2425
    %8547 = vmatprep.subr.mxu0 0.0
    %8548 = vmatpush1.msra.mxu0 %v2426
    %8549 = vmatprep.subr.mxu0 0.0
    %8550 = vmatpush1.msra.mxu0 %v2427
    %8551 = vmatprep.subr.mxu0 0.0
    %8552 = vmatpush1.msra.mxu0 %v2428
    %8553 = vmatprep.subr.mxu0 0.0
    %8554 = vmatpush1.msra.mxu0 %v2429
    %8555 = vmatprep.subr.mxu0 0.0
    %8556 = vmatpush1.msra.mxu0 %v2430
    %8557 = vmatprep.subr.mxu0 0.0
    %8558 = vmatpush1.msra.mxu0 %v2431
    %8559 = vmatprep.subr.mxu0 0.0
    %8560 = vmatpush1.msra.mxu0 %v2432
    %8561 = vmatprep.subr.mxu0 0.0
    %8562 = vmatpush1.msra.mxu0 %v2433
    %8563 = vmatprep.subr.mxu0 0.0
    %8564 = vmatpush1.msra.mxu0 %v2434
    %8565 = vmatprep.subr.mxu0 0.0
    %8566 = vmatpush1.msra.mxu0 %v2435
    %8567 = vmatprep.subr.mxu0 0.0
    %8568 = vmatpush1.msra.mxu0 %v2436
    %8569 = vmatprep.subr.mxu0 0.0
    %8570 = vmatpush1.msra.mxu0 %v2437
    %8571 = vmatprep.subr.mxu0 0.0
    %8572 = vmatpush1.msra.mxu0 %v2438
    %8573 = vmatprep.subr.mxu0 0.0
    %8574 = vmatpush1.msra.mxu0 %v2439
    %8575 = vmatprep.subr.mxu0 0.0
    %8576 = vmatpush1.msra.mxu0 %v2440
    %8577 = vmatprep.subr.mxu0 0.0
    %8578 = vmatpush1.msra.mxu0 %v2441
    %8579 = vmatprep.subr.mxu0 0.0
    %8580 = vmatpush1.msra.mxu0 %v2442
    %8581 = vmatprep.subr.mxu0 0.0
    %8582 = vmatpush1.msra.mxu0 %v2443
    %8583 = vmatprep.mubr.f32.mxu0 %v3389
    %8584 = vmatmul.mubr.f32.gmra.mrb[0].mxu0 %v3381
    %v8585 = vpop.f32.mrb[0].mxu0
    %v8586 = vadd.f32 %v8516, %v8585
    %v8587 = vpop.f32.mrb[0].mxu0
    %8588 = vdwg.mxu0
    %8589 = vmatprep.subr.mxu0 0.0
    %8590 = vmatpush1.msra.mxu0 %v2444
    %8591 = vmatprep.subr.mxu0 0.0
    %8592 = vmatpush1.msra.mxu0 %v2445
    %8593 = vmatprep.subr.mxu0 0.0
    %8594 = vmatpush1.msra.mxu0 %v2446
    %8595 = vmatprep.subr.mxu0 0.0
    %8596 = vmatpush1.msra.mxu0 %v2447
    %8597 = vmatprep.subr.mxu0 0.0
    %8598 = vmatpush1.msra.mxu0 %v2448
    %8599 = vmatprep.subr.mxu0 0.0
    %8600 = vmatpush1.msra.mxu0 %v2449
    %8601 = vmatprep.subr.mxu0 0.0
    %8602 = vmatpush1.msra.mxu0 %v2450
    %8603 = vmatprep.subr.mxu0 0.0
    %8604 = vmatpush1.msra.mxu0 %v2451
    %8605 = vmatprep.subr.mxu0 0.0
    %8606 = vmatpush1.msra.mxu0 %v2452
    %8607 = vmatprep.subr.mxu0 0.0
    %8608 = vmatpush1.msra.mxu0 %v2453
    %8609 = vmatprep.subr.mxu0 0.0
    %8610 = vmatpush1.msra.mxu0 %v2454
    %8611 = vmatprep.subr.mxu0 0.0
    %8612 = vmatpush1.msra.mxu0 %v2455
    %8613 = vmatprep.subr.mxu0 0.0
    %8614 = vmatpush1.msra.mxu0 %v2456
    %8615 = vmatprep.subr.mxu0 0.0
    %8616 = vmatpush1.msra.mxu0 %v2457
    %8617 = vmatprep.subr.mxu0 0.0
    %8618 = vmatpush1.msra.mxu0 %v2458
    %8619 = vmatprep.subr.mxu0 0.0
    %8620 = vmatpush1.msra.mxu0 %v2459
    %8621 = vmatprep.subr.mxu0 0.0
    %8622 = vmatpush1.msra.mxu0 %v2460
    %8623 = vmatprep.subr.mxu0 0.0
    %8624 = vmatpush1.msra.mxu0 %v2461
    %8625 = vmatprep.subr.mxu0 0.0
    %8626 = vmatpush1.msra.mxu0 %v2462
    %8627 = vmatprep.subr.mxu0 0.0
    %8628 = vmatpush1.msra.mxu0 %v2463
    %8629 = vmatprep.subr.mxu0 0.0
    %8630 = vmatpush1.msra.mxu0 %v2464
    %8631 = vmatprep.subr.mxu0 0.0
    %8632 = vmatpush1.msra.mxu0 %v2465
    %8633 = vmatprep.subr.mxu0 0.0
    %8634 = vmatpush1.msra.mxu0 %v2466
    %8635 = vmatprep.subr.mxu0 0.0
    %8636 = vmatpush1.msra.mxu0 %v2467
    %8637 = vmatprep.subr.mxu0 0.0
    %8638 = vmatpush1.msra.mxu0 %v2468
    %8639 = vmatprep.subr.mxu0 0.0
    %8640 = vmatpush1.msra.mxu0 %v2469
    %8641 = vmatprep.subr.mxu0 0.0
    %8642 = vmatpush1.msra.mxu0 %v2470
    %8643 = vmatprep.subr.mxu0 0.0
    %8644 = vmatpush1.msra.mxu0 %v2471
    %8645 = vmatprep.subr.mxu0 0.0
    %8646 = vmatpush1.msra.mxu0 %v2472
    %8647 = vmatprep.subr.mxu0 0.0
    %8648 = vmatpush1.msra.mxu0 %v2473
    %8649 = vmatprep.subr.mxu0 0.0
    %8650 = vmatpush1.msra.mxu0 %v2474
    %8651 = vmatprep.subr.mxu0 0.0
    %8652 = vmatpush1.msra.mxu0 %v2475
    %8653 = vmatprep.mubr.f32.mxu0 %v3390
    %8654 = vmatmul.mubr.f32.gmra.mrb[0].mxu0 %v3388
    %v8655 = vpop.f32.mrb[0].mxu0
    %v8656 = vadd.f32 %v8586, %v8655
    %v8657 = vpop.f32.mrb[0].mxu0
    %8658 = vdwg.mxu0
    %8659 = vmatprep.subr.mxu0 0.0
    %8660 = vmatpush1.msra.mxu0 %v2476
    %8661 = vmatprep.subr.mxu0 0.0
    %8662 = vmatpush1.msra.mxu0 %v2477
    %8663 = vmatprep.subr.mxu0 0.0
    %8664 = vmatpush1.msra.mxu0 %v2478
    %8665 = vmatprep.subr.mxu0 0.0
    %8666 = vmatpush1.msra.mxu0 %v2479
    %8667 = vmatprep.subr.mxu0 0.0
    %8668 = vmatpush1.msra.mxu0 %v2480
    %8669 = vmatprep.subr.mxu0 0.0
    %8670 = vmatpush1.msra.mxu0 %v2481
    %8671 = vmatprep.subr.mxu0 0.0
    %8672 = vmatpush1.msra.mxu0 %v2482
    %8673 = vmatprep.subr.mxu0 0.0
    %8674 = vmatpush1.msra.mxu0 %v2483
    %8675 = vmatprep.subr.mxu0 0.0
    %8676 = vmatpush1.msra.mxu0 %v2484
    %8677 = vmatprep.subr.mxu0 0.0
    %8678 = vmatpush1.msra.mxu0 %v2485
    %8679 = vmatprep.subr.mxu0 0.0
    %8680 = vmatpush1.msra.mxu0 %v2486
    %8681 = vmatprep.subr.mxu0 0.0
    %8682 = vmatpush1.msra.mxu0 %v2487
    %8683 = vmatprep.subr.mxu0 0.0
    %8684 = vmatpush1.msra.mxu0 %v2488
    %8685 = vmatprep.subr.mxu0 0.0
    %8686 = vmatpush1.msra.mxu0 %v2489
    %8687 = vmatprep.subr.mxu0 0.0
    %8688 = vmatpush1.msra.mxu0 %v2490
    %8689 = vmatprep.subr.mxu0 0.0
    %8690 = vmatpush1.msra.mxu0 %v2491
    %8691 = vmatprep.subr.mxu0 0.0
    %8692 = vmatpush1.msra.mxu0 %v2492
    %8693 = vmatprep.subr.mxu0 0.0
    %8694 = vmatpush1.msra.mxu0 %v2493
    %8695 = vmatprep.subr.mxu0 0.0
    %8696 = vmatpush1.msra.mxu0 %v2494
    %8697 = vmatprep.subr.mxu0 0.0
    %8698 = vmatpush1.msra.mxu0 %v2495
    %8699 = vmatprep.subr.mxu0 0.0
    %8700 = vmatpush1.msra.mxu0 %v2496
    %8701 = vmatprep.subr.mxu0 0.0
    %8702 = vmatpush1.msra.mxu0 %v2497
    %8703 = vmatprep.subr.mxu0 0.0
    %8704 = vmatpush1.msra.mxu0 %v2498
    %8705 = vmatprep.subr.mxu0 0.0
    %8706 = vmatpush1.msra.mxu0 %v2499
    %8707 = vmatprep.subr.mxu0 0.0
    %8708 = vmatpush1.msra.mxu0 %v2500
    %8709 = vmatprep.subr.mxu0 0.0
    %8710 = vmatpush1.msra.mxu0 %v2501
    %8711 = vmatprep.subr.mxu0 0.0
    %8712 = vmatpush1.msra.mxu0 %v2502
    %8713 = vmatprep.subr.mxu0 0.0
    %8714 = vmatpush1.msra.mxu0 %v2503
    %8715 = vmatprep.subr.mxu0 0.0
    %8716 = vmatpush1.msra.mxu0 %v2504
    %8717 = vmatprep.subr.mxu0 0.0
    %8718 = vmatpush1.msra.mxu0 %v2505
    %8719 = vmatprep.subr.mxu0 0.0
    %8720 = vmatpush1.msra.mxu0 %v2506
    %8721 = vmatprep.subr.mxu0 0.0
    %8722 = vmatpush1.msra.mxu0 %v2507
    %8723 = vmatprep.mubr.f32.mxu0 %v3406
    %8724 = vmatmul.mubr.f32.gmra.mrb[0].mxu0 %v3398
    %v8725 = vpop.f32.mrb[0].mxu0
    %v8726 = vadd.f32 %v8656, %v8725
    %v8727 = vpop.f32.mrb[0].mxu0
    %8728 = vdwg.mxu0
    %8729 = vmatprep.subr.mxu0 0.0
    %8730 = vmatpush1.msra.mxu0 %v2508
    %8731 = vmatprep.subr.mxu0 0.0
    %8732 = vmatpush1.msra.mxu0 %v2509
    %8733 = vmatprep.subr.mxu0 0.0
    %8734 = vmatpush1.msra.mxu0 %v2510
    %8735 = vmatprep.subr.mxu0 0.0
    %8736 = vmatpush1.msra.mxu0 %v2511
    %8737 = vmatprep.subr.mxu0 0.0
    %8738 = vmatpush1.msra.mxu0 %v2512
    %8739 = vmatprep.subr.mxu0 0.0
    %8740 = vmatpush1.msra.mxu0 %v2513
    %8741 = vmatprep.subr.mxu0 0.0
    %8742 = vmatpush1.msra.mxu0 %v2514
    %8743 = vmatprep.subr.mxu0 0.0
    %8744 = vmatpush1.msra.mxu0 %v2515
    %8745 = vmatprep.subr.mxu0 0.0
    %8746 = vmatpush1.msra.mxu0 %v2516
    %8747 = vmatprep.subr.mxu0 0.0
    %8748 = vmatpush1.msra.mxu0 %v2517
    %8749 = vmatprep.subr.mxu0 0.0
    %8750 = vmatpush1.msra.mxu0 %v2518
    %8751 = vmatprep.subr.mxu0 0.0
    %8752 = vmatpush1.msra.mxu0 %v2519
    %8753 = vmatprep.subr.mxu0 0.0
    %8754 = vmatpush1.msra.mxu0 %v2520
    %8755 = vmatprep.subr.mxu0 0.0
    %8756 = vmatpush1.msra.mxu0 %v2521
    %8757 = vmatprep.subr.mxu0 0.0
    %8758 = vmatpush1.msra.mxu0 %v2522
    %8759 = vmatprep.subr.mxu0 0.0
    %8760 = vmatpush1.msra.mxu0 %v2523
    %8761 = vmatprep.subr.mxu0 0.0
    %8762 = vmatpush1.msra.mxu0 %v2524
    %8763 = vmatprep.subr.mxu0 0.0
    %8764 = vmatpush1.msra.mxu0 %v2525
    %8765 = vmatprep.subr.mxu0 0.0
    %8766 = vmatpush1.msra.mxu0 %v2526
    %8767 = vmatprep.subr.mxu0 0.0
    %8768 = vmatpush1.msra.mxu0 %v2527
    %8769 = vmatprep.subr.mxu0 0.0
    %8770 = vmatpush1.msra.mxu0 %v2528
    %8771 = vmatprep.subr.mxu0 0.0
    %8772 = vmatpush1.msra.mxu0 %v2529
    %8773 = vmatprep.subr.mxu0 0.0
    %8774 = vmatpush1.msra.mxu0 %v2530
    %8775 = vmatprep.subr.mxu0 0.0
    %8776 = vmatpush1.msra.mxu0 %v2531
    %8777 = vmatprep.subr.mxu0 0.0
    %8778 = vmatpush1.msra.mxu0 %v2532
    %8779 = vmatprep.subr.mxu0 0.0
    %8780 = vmatpush1.msra.mxu0 %v2533
    %8781 = vmatprep.subr.mxu0 0.0
    %8782 = vmatpush1.msra.mxu0 %v2534
    %8783 = vmatprep.subr.mxu0 0.0
    %8784 = vmatpush1.msra.mxu0 %v2535
    %8785 = vmatprep.subr.mxu0 0.0
    %8786 = vmatpush1.msra.mxu0 %v2536
    %8787 = vmatprep.subr.mxu0 0.0
    %8788 = vmatpush1.msra.mxu0 %v2537
    %8789 = vmatprep.subr.mxu0 0.0
    %8790 = vmatpush1.msra.mxu0 %v2538
    %8791 = vmatprep.subr.mxu0 0.0
    %8792 = vmatpush1.msra.mxu0 %v2539
    %8793 = vmatprep.mubr.f32.mxu0 %v3407
    %8794 = vmatmul.mubr.f32.gmra.mrb[0].mxu0 %v3405
    %v8795 = vpop.f32.mrb[0].mxu0
    %v8796 = vadd.f32 %v8726, %v8795
    %v8797 = vpop.f32.mrb[0].mxu0
    %8798 = vdwg.mxu0
    %8799 = vmatprep.subr.mxu0 0.0
    %8800 = vmatpush1.msra.mxu0 %v2540
    %8801 = vmatprep.subr.mxu0 0.0
    %8802 = vmatpush1.msra.mxu0 %v2541
    %8803 = vmatprep.subr.mxu0 0.0
    %8804 = vmatpush1.msra.mxu0 %v2542
    %8805 = vmatprep.subr.mxu0 0.0
    %8806 = vmatpush1.msra.mxu0 %v2543
    %8807 = vmatprep.subr.mxu0 0.0
    %8808 = vmatpush1.msra.mxu0 %v2544
    %8809 = vmatprep.subr.mxu0 0.0
    %8810 = vmatpush1.msra.mxu0 %v2545
    %8811 = vmatprep.subr.mxu0 0.0
    %8812 = vmatpush1.msra.mxu0 %v2546
    %8813 = vmatprep.subr.mxu0 0.0
    %8814 = vmatpush1.msra.mxu0 %v2547
    %8815 = vmatprep.subr.mxu0 0.0
    %8816 = vmatpush1.msra.mxu0 %v2548
    %8817 = vmatprep.subr.mxu0 0.0
    %8818 = vmatpush1.msra.mxu0 %v2549
    %8819 = vmatprep.subr.mxu0 0.0
    %8820 = vmatpush1.msra.mxu0 %v2550
    %8821 = vmatprep.subr.mxu0 0.0
    %8822 = vmatpush1.msra.mxu0 %v2551
    %8823 = vmatprep.subr.mxu0 0.0
    %8824 = vmatpush1.msra.mxu0 %v2552
    %8825 = vmatprep.subr.mxu0 0.0
    %8826 = vmatpush1.msra.mxu0 %v2553
    %8827 = vmatprep.subr.mxu0 0.0
    %8828 = vmatpush1.msra.mxu0 %v2554
    %8829 = vmatprep.subr.mxu0 0.0
    %8830 = vmatpush1.msra.mxu0 %v2555
    %8831 = vmatprep.subr.mxu0 0.0
    %8832 = vmatpush1.msra.mxu0 %v2556
    %8833 = vmatprep.subr.mxu0 0.0
    %8834 = vmatpush1.msra.mxu0 %v2557
    %8835 = vmatprep.subr.mxu0 0.0
    %8836 = vmatpush1.msra.mxu0 %v2558
    %8837 = vmatprep.subr.mxu0 0.0
    %8838 = vmatpush1.msra.mxu0 %v2559
    %8839 = vmatprep.subr.mxu0 0.0
    %8840 = vmatpush1.msra.mxu0 %v2560
    %8841 = vmatprep.subr.mxu0 0.0
    %8842 = vmatpush1.msra.mxu0 %v2561
    %8843 = vmatprep.subr.mxu0 0.0
    %8844 = vmatpush1.msra.mxu0 %v2562
    %8845 = vmatprep.subr.mxu0 0.0
    %8846 = vmatpush1.msra.mxu0 %v2563
    %8847 = vmatprep.subr.mxu0 0.0
    %8848 = vmatpush1.msra.mxu0 %v2564
    %8849 = vmatprep.subr.mxu0 0.0
    %8850 = vmatpush1.msra.mxu0 %v2565
    %8851 = vmatprep.subr.mxu0 0.0
    %8852 = vmatpush1.msra.mxu0 %v2566
    %8853 = vmatprep.subr.mxu0 0.0
    %8854 = vmatpush1.msra.mxu0 %v2567
    %8855 = vmatprep.subr.mxu0 0.0
    %8856 = vmatpush1.msra.mxu0 %v2568
    %8857 = vmatprep.subr.mxu0 0.0
    %8858 = vmatpush1.msra.mxu0 %v2569
    %8859 = vmatprep.subr.mxu0 0.0
    %8860 = vmatpush1.msra.mxu0 %v2570
    %8861 = vmatprep.subr.mxu0 0.0
    %8862 = vmatpush1.msra.mxu0 %v2571
    %8863 = vmatprep.mubr.f32.mxu0 %v3423
    %8864 = vmatmul.mubr.f32.gmra.mrb[0].mxu0 %v3415
    %v8865 = vpop.f32.mrb[0].mxu0
    %v8866 = vadd.f32 %v8796, %v8865
    %v8867 = vpop.f32.mrb[0].mxu0
    %8868 = vdwg.mxu0
    %8869 = vmatprep.subr.mxu0 0.0
    %8870 = vmatpush1.msra.mxu0 %v2572
    %8871 = vmatprep.subr.mxu0 0.0
    %8872 = vmatpush1.msra.mxu0 %v2573
    %8873 = vmatprep.subr.mxu0 0.0
    %8874 = vmatpush1.msra.mxu0 %v2574
    %8875 = vmatprep.subr.mxu0 0.0
    %8876 = vmatpush1.msra.mxu0 %v2575
    %8877 = vmatprep.subr.mxu0 0.0
    %8878 = vmatpush1.msra.mxu0 %v2576
    %8879 = vmatprep.subr.mxu0 0.0
    %8880 = vmatpush1.msra.mxu0 %v2577
    %8881 = vmatprep.subr.mxu0 0.0
    %8882 = vmatpush1.msra.mxu0 %v2578
    %8883 = vmatprep.subr.mxu0 0.0
    %8884 = vmatpush1.msra.mxu0 %v2579
    %8885 = vmatprep.subr.mxu0 0.0
    %8886 = vmatpush1.msra.mxu0 %v2580
    %8887 = vmatprep.subr.mxu0 0.0
    %8888 = vmatpush1.msra.mxu0 %v2581
    %8889 = vmatprep.subr.mxu0 0.0
    %8890 = vmatpush1.msra.mxu0 %v2582
    %8891 = vmatprep.subr.mxu0 0.0
    %8892 = vmatpush1.msra.mxu0 %v2583
    %8893 = vmatprep.subr.mxu0 0.0
    %8894 = vmatpush1.msra.mxu0 %v2584
    %8895 = vmatprep.subr.mxu0 0.0
    %8896 = vmatpush1.msra.mxu0 %v2585
    %8897 = vmatprep.subr.mxu0 0.0
    %8898 = vmatpush1.msra.mxu0 %v2586
    %8899 = vmatprep.subr.mxu0 0.0
    %8900 = vmatpush1.msra.mxu0 %v2587
    %8901 = vmatprep.subr.mxu0 0.0
    %8902 = vmatpush1.msra.mxu0 %v2588
    %8903 = vmatprep.subr.mxu0 0.0
    %8904 = vmatpush1.msra.mxu0 %v2589
    %8905 = vmatprep.subr.mxu0 0.0
    %8906 = vmatpush1.msra.mxu0 %v2590
    %8907 = vmatprep.subr.mxu0 0.0
    %8908 = vmatpush1.msra.mxu0 %v2591
    %8909 = vmatprep.subr.mxu0 0.0
    %8910 = vmatpush1.msra.mxu0 %v2592
    %8911 = vmatprep.subr.mxu0 0.0
    %8912 = vmatpush1.msra.mxu0 %v2593
    %8913 = vmatprep.subr.mxu0 0.0
    %8914 = vmatpush1.msra.mxu0 %v2594
    %8915 = vmatprep.subr.mxu0 0.0
    %8916 = vmatpush1.msra.mxu0 %v2595
    %8917 = vmatprep.subr.mxu0 0.0
    %8918 = vmatpush1.msra.mxu0 %v2596
    %8919 = vmatprep.subr.mxu0 0.0
    %8920 = vmatpush1.msra.mxu0 %v2597
    %8921 = vmatprep.subr.mxu0 0.0
    %8922 = vmatpush1.msra.mxu0 %v2598
    %8923 = vmatprep.subr.mxu0 0.0
    %8924 = vmatpush1.msra.mxu0 %v2599
    %8925 = vmatprep.subr.mxu0 0.0
    %8926 = vmatpush1.msra.mxu0 %v2600
    %8927 = vmatprep.subr.mxu0 0.0
    %8928 = vmatpush1.msra.mxu0 %v2601
    %8929 = vmatprep.subr.mxu0 0.0
    %8930 = vmatpush1.msra.mxu0 %v2602
    %8931 = vmatprep.subr.mxu0 0.0
    %8932 = vmatpush1.msra.mxu0 %v2603
    %8933 = vmatprep.mubr.f32.mxu0 %v3424
    %8934 = vmatmul.mubr.f32.gmra.mrb[0].mxu0 %v3422
    %v8935 = vpop.f32.mrb[0].mxu0
    %v8936 = vadd.f32 %v8866, %v8935
    %v8937 = vpop.f32.mrb[0].mxu0
    %8938 = vdwg.mxu0
    %8939 = vmatprep.subr.mxu0 0.0
    %8940 = vmatpush1.msra.mxu0 %v2604
    %8941 = vmatprep.subr.mxu0 0.0
    %8942 = vmatpush1.msra.mxu0 %v2605
    %8943 = vmatprep.subr.mxu0 0.0
    %8944 = vmatpush1.msra.mxu0 %v2606
    %8945 = vmatprep.subr.mxu0 0.0
    %8946 = vmatpush1.msra.mxu0 %v2607
    %8947 = vmatprep.subr.mxu0 0.0
    %8948 = vmatpush1.msra.mxu0 %v2608
    %8949 = vmatprep.subr.mxu0 0.0
    %8950 = vmatpush1.msra.mxu0 %v2609
    %8951 = vmatprep.subr.mxu0 0.0
    %8952 = vmatpush1.msra.mxu0 %v2610
    %8953 = vmatprep.subr.mxu0 0.0
    %8954 = vmatpush1.msra.mxu0 %v2611
    %8955 = vmatprep.subr.mxu0 0.0
    %8956 = vmatpush1.msra.mxu0 %v2612
    %8957 = vmatprep.subr.mxu0 0.0
    %8958 = vmatpush1.msra.mxu0 %v2613
    %8959 = vmatprep.subr.mxu0 0.0
    %8960 = vmatpush1.msra.mxu0 %v2614
    %8961 = vmatprep.subr.mxu0 0.0
    %8962 = vmatpush1.msra.mxu0 %v2615
    %8963 = vmatprep.subr.mxu0 0.0
    %8964 = vmatpush1.msra.mxu0 %v2616
    %8965 = vmatprep.subr.mxu0 0.0
    %8966 = vmatpush1.msra.mxu0 %v2617
    %8967 = vmatprep.subr.mxu0 0.0
    %8968 = vmatpush1.msra.mxu0 %v2618
    %8969 = vmatprep.subr.mxu0 0.0
    %8970 = vmatpush1.msra.mxu0 %v2619
    %8971 = vmatprep.subr.mxu0 0.0
    %8972 = vmatpush1.msra.mxu0 %v2620
    %8973 = vmatprep.subr.mxu0 0.0
    %8974 = vmatpush1.msra.mxu0 %v2621
    %8975 = vmatprep.subr.mxu0 0.0
    %8976 = vmatpush1.msra.mxu0 %v2622
    %8977 = vmatprep.subr.mxu0 0.0
    %8978 = vmatpush1.msra.mxu0 %v2623
    %8979 = vmatprep.subr.mxu0 0.0
    %8980 = vmatpush1.msra.mxu0 %v2624
    %8981 = vmatprep.subr.mxu0 0.0
    %8982 = vmatpush1.msra.mxu0 %v2625
    %8983 = vmatprep.subr.mxu0 0.0
    %8984 = vmatpush1.msra.mxu0 %v2626
    %8985 = vmatprep.subr.mxu0 0.0
    %8986 = vmatpush1.msra.mxu0 %v2627
    %8987 = vmatprep.subr.mxu0 0.0
    %8988 = vmatpush1.msra.mxu0 %v2628
    %8989 = vmatprep.subr.mxu0 0.0
    %8990 = vmatpush1.msra.mxu0 %v2629
    %8991 = vmatprep.subr.mxu0 0.0
    %8992 = vmatpush1.msra.mxu0 %v2630
    %8993 = vmatprep.subr.mxu0 0.0
    %8994 = vmatpush1.msra.mxu0 %v2631
    %8995 = vmatprep.subr.mxu0 0.0
    %8996 = vmatpush1.msra.mxu0 %v2632
    %8997 = vmatprep.subr.mxu0 0.0
    %8998 = vmatpush1.msra.mxu0 %v2633
    %8999 = vmatprep.subr.mxu0 0.0
    %9000 = vmatpush1.msra.mxu0 %v2634
    %9001 = vmatprep.subr.mxu0 0.0
    %9002 = vmatpush1.msra.mxu0 %v2635
    %9003 = vmatprep.mubr.f32.mxu0 %v3440
    %9004 = vmatmul.mubr.f32.gmra.mrb[0].mxu0 %v3432
    %v9005 = vpop.f32.mrb[0].mxu0
    %v9006 = vadd.f32 %v8936, %v9005
    %v9007 = vpop.f32.mrb[0].mxu0
    %9008 = vdwg.mxu0
    %9009 = vmatprep.subr.mxu0 0.0
    %9010 = vmatpush1.msra.mxu0 %v2636
    %9011 = vmatprep.subr.mxu0 0.0
    %9012 = vmatpush1.msra.mxu0 %v2637
    %9013 = vmatprep.subr.mxu0 0.0
    %9014 = vmatpush1.msra.mxu0 %v2638
    %9015 = vmatprep.subr.mxu0 0.0
    %9016 = vmatpush1.msra.mxu0 %v2639
    %9017 = vmatprep.subr.mxu0 0.0
    %9018 = vmatpush1.msra.mxu0 %v2640
    %9019 = vmatprep.subr.mxu0 0.0
    %9020 = vmatpush1.msra.mxu0 %v2641
    %9021 = vmatprep.subr.mxu0 0.0
    %9022 = vmatpush1.msra.mxu0 %v2642
    %9023 = vmatprep.subr.mxu0 0.0
    %9024 = vmatpush1.msra.mxu0 %v2643
    %9025 = vmatprep.subr.mxu0 0.0
    %9026 = vmatpush1.msra.mxu0 %v2644
    %9027 = vmatprep.subr.mxu0 0.0
    %9028 = vmatpush1.msra.mxu0 %v2645
    %9029 = vmatprep.subr.mxu0 0.0
    %9030 = vmatpush1.msra.mxu0 %v2646
    %9031 = vmatprep.subr.mxu0 0.0
    %9032 = vmatpush1.msra.mxu0 %v2647
    %9033 = vmatprep.subr.mxu0 0.0
    %9034 = vmatpush1.msra.mxu0 %v2648
    %9035 = vmatprep.subr.mxu0 0.0
    %9036 = vmatpush1.msra.mxu0 %v2649
    %9037 = vmatprep.subr.mxu0 0.0
    %9038 = vmatpush1.msra.mxu0 %v2650
    %9039 = vmatprep.subr.mxu0 0.0
    %9040 = vmatpush1.msra.mxu0 %v2651
    %9041 = vmatprep.subr.mxu0 0.0
    %9042 = vmatpush1.msra.mxu0 %v2652
    %9043 = vmatprep.subr.mxu0 0.0
    %9044 = vmatpush1.msra.mxu0 %v2653
    %9045 = vmatprep.subr.mxu0 0.0
    %9046 = vmatpush1.msra.mxu0 %v2654
    %9047 = vmatprep.subr.mxu0 0.0
    %9048 = vmatpush1.msra.mxu0 %v2655
    %9049 = vmatprep.subr.mxu0 0.0
    %9050 = vmatpush1.msra.mxu0 %v2656
    %9051 = vmatprep.subr.mxu0 0.0
    %9052 = vmatpush1.msra.mxu0 %v2657
    %9053 = vmatprep.subr.mxu0 0.0
    %9054 = vmatpush1.msra.mxu0 %v2658
    %9055 = vmatprep.subr.mxu0 0.0
    %9056 = vmatpush1.msra.mxu0 %v2659
    %9057 = vmatprep.subr.mxu0 0.0
    %9058 = vmatpush1.msra.mxu0 %v2660
    %9059 = vmatprep.subr.mxu0 0.0
    %9060 = vmatpush1.msra.mxu0 %v2661
    %9061 = vmatprep.subr.mxu0 0.0
    %9062 = vmatpush1.msra.mxu0 %v2662
    %9063 = vmatprep.subr.mxu0 0.0
    %9064 = vmatpush1.msra.mxu0 %v2663
    %9065 = vmatprep.subr.mxu0 0.0
    %9066 = vmatpush1.msra.mxu0 %v2664
    %9067 = vmatprep.subr.mxu0 0.0
    %9068 = vmatpush1.msra.mxu0 %v2665
    %9069 = vmatprep.subr.mxu0 0.0
    %9070 = vmatpush1.msra.mxu0 %v2666
    %9071 = vmatprep.subr.mxu0 0.0
    %9072 = vmatpush1.msra.mxu0 %v2667
    %9073 = vmatprep.mubr.f32.mxu0 %v3441
    %9074 = vmatmul.mubr.f32.gmra.mrb[0].mxu0 %v3439
    %v9075 = vpop.f32.mrb[0].mxu0
    %v9076 = vadd.f32 %v9006, %v9075
    %v9077 = vpop.f32.mrb[0].mxu0
    %9078 = vdwg.mxu0
    %9079 = vmatprep.subr.mxu0 0.0
    %9080 = vmatpush1.msra.mxu0 %v2668
    %9081 = vmatprep.subr.mxu0 0.0
    %9082 = vmatpush1.msra.mxu0 %v2669
    %9083 = vmatprep.subr.mxu0 0.0
    %9084 = vmatpush1.msra.mxu0 %v2670
    %9085 = vmatprep.subr.mxu0 0.0
    %9086 = vmatpush1.msra.mxu0 %v2671
    %9087 = vmatprep.subr.mxu0 0.0
    %9088 = vmatpush1.msra.mxu0 %v2672
    %9089 = vmatprep.subr.mxu0 0.0
    %9090 = vmatpush1.msra.mxu0 %v2673
    %9091 = vmatprep.subr.mxu0 0.0
    %9092 = vmatpush1.msra.mxu0 %v2674
    %9093 = vmatprep.subr.mxu0 0.0
    %9094 = vmatpush1.msra.mxu0 %v2675
    %9095 = vmatprep.subr.mxu0 0.0
    %9096 = vmatpush1.msra.mxu0 %v2676
    %9097 = vmatprep.subr.mxu0 0.0
    %9098 = vmatpush1.msra.mxu0 %v2677
    %9099 = vmatprep.subr.mxu0 0.0
    %9100 = vmatpush1.msra.mxu0 %v2678
    %9101 = vmatprep.subr.mxu0 0.0
    %9102 = vmatpush1.msra.mxu0 %v2679
    %9103 = vmatprep.subr.mxu0 0.0
    %9104 = vmatpush1.msra.mxu0 %v2680
    %9105 = vmatprep.subr.mxu0 0.0
    %9106 = vmatpush1.msra.mxu0 %v2681
    %9107 = vmatprep.subr.mxu0 0.0
    %9108 = vmatpush1.msra.mxu0 %v2682
    %9109 = vmatprep.subr.mxu0 0.0
    %9110 = vmatpush1.msra.mxu0 %v2683
    %9111 = vmatprep.subr.mxu0 0.0
    %9112 = vmatpush1.msra.mxu0 %v2684
    %9113 = vmatprep.subr.mxu0 0.0
    %9114 = vmatpush1.msra.mxu0 %v2685
    %9115 = vmatprep.subr.mxu0 0.0
    %9116 = vmatpush1.msra.mxu0 %v2686
    %9117 = vmatprep.subr.mxu0 0.0
    %9118 = vmatpush1.msra.mxu0 %v2687
    %9119 = vmatprep.subr.mxu0 0.0
    %9120 = vmatpush1.msra.mxu0 %v2688
    %9121 = vmatprep.subr.mxu0 0.0
    %9122 = vmatpush1.msra.mxu0 %v2689
    %9123 = vmatprep.subr.mxu0 0.0
    %9124 = vmatpush1.msra.mxu0 %v2690
    %9125 = vmatprep.subr.mxu0 0.0
    %9126 = vmatpush1.msra.mxu0 %v2691
    %9127 = vmatprep.subr.mxu0 0.0
    %9128 = vmatpush1.msra.mxu0 %v2692
    %9129 = vmatprep.subr.mxu0 0.0
    %9130 = vmatpush1.msra.mxu0 %v2693
    %9131 = vmatprep.subr.mxu0 0.0
    %9132 = vmatpush1.msra.mxu0 %v2694
    %9133 = vmatprep.subr.mxu0 0.0
    %9134 = vmatpush1.msra.mxu0 %v2695
    %9135 = vmatprep.subr.mxu0 0.0
    %9136 = vmatpush1.msra.mxu0 %v2696
    %9137 = vmatprep.subr.mxu0 0.0
    %9138 = vmatpush1.msra.mxu0 %v2697
    %9139 = vmatprep.subr.mxu0 0.0
    %9140 = vmatpush1.msra.mxu0 %v2698
    %9141 = vmatprep.subr.mxu0 0.0
    %9142 = vmatpush1.msra.mxu0 %v2699
    %9143 = vmatprep.mubr.f32.mxu0 %v3457
    %9144 = vmatmul.mubr.f32.gmra.mrb[0].mxu0 %v3449
    %v9145 = vpop.f32.mrb[0].mxu0
    %v9146 = vadd.f32 %v9076, %v9145
    %v9147 = vpop.f32.mrb[0].mxu0
    %9148 = vdwg.mxu0
    %9149 = vmatprep.subr.mxu0 0.0
    %9150 = vmatpush1.msra.mxu0 %v2700
    %9151 = vmatprep.subr.mxu0 0.0
    %9152 = vmatpush1.msra.mxu0 %v2701
    %9153 = vmatprep.subr.mxu0 0.0
    %9154 = vmatpush1.msra.mxu0 %v2702
    %9155 = vmatprep.subr.mxu0 0.0
    %9156 = vmatpush1.msra.mxu0 %v2703
    %9157 = vmatprep.subr.mxu0 0.0
    %9158 = vmatpush1.msra.mxu0 %v2704
    %9159 = vmatprep.subr.mxu0 0.0
    %9160 = vmatpush1.msra.mxu0 %v2705
    %9161 = vmatprep.subr.mxu0 0.0
    %9162 = vmatpush1.msra.mxu0 %v2706
    %9163 = vmatprep.subr.mxu0 0.0
    %9164 = vmatpush1.msra.mxu0 %v2707
    %9165 = vmatprep.subr.mxu0 0.0
    %9166 = vmatpush1.msra.mxu0 %v2708
    %9167 = vmatprep.subr.mxu0 0.0
    %9168 = vmatpush1.msra.mxu0 %v2709
    %9169 = vmatprep.subr.mxu0 0.0
    %9170 = vmatpush1.msra.mxu0 %v2710
    %9171 = vmatprep.subr.mxu0 0.0
    %9172 = vmatpush1.msra.mxu0 %v2711
    %9173 = vmatprep.subr.mxu0 0.0
    %9174 = vmatpush1.msra.mxu0 %v2712
    %9175 = vmatprep.subr.mxu0 0.0
    %9176 = vmatpush1.msra.mxu0 %v2713
    %9177 = vmatprep.subr.mxu0 0.0
    %9178 = vmatpush1.msra.mxu0 %v2714
    %9179 = vmatprep.subr.mxu0 0.0
    %9180 = vmatpush1.msra.mxu0 %v2715
    %9181 = vmatprep.subr.mxu0 0.0
    %9182 = vmatpush1.msra.mxu0 %v2716
    %9183 = vmatprep.subr.mxu0 0.0
    %9184 = vmatpush1.msra.mxu0 %v2717
    %9185 = vmatprep.subr.mxu0 0.0
    %9186 = vmatpush1.msra.mxu0 %v2718
    %9187 = vmatprep.subr.mxu0 0.0
    %9188 = vmatpush1.msra.mxu0 %v2719
    %9189 = vmatprep.subr.mxu0 0.0
    %9190 = vmatpush1.msra.mxu0 %v2720
    %9191 = vmatprep.subr.mxu0 0.0
    %9192 = vmatpush1.msra.mxu0 %v2721
    %9193 = vmatprep.subr.mxu0 0.0
    %9194 = vmatpush1.msra.mxu0 %v2722
    %9195 = vmatprep.subr.mxu0 0.0
    %9196 = vmatpush1.msra.mxu0 %v2723
    %9197 = vmatprep.subr.mxu0 0.0
    %9198 = vmatpush1.msra.mxu0 %v2724
    %9199 = vmatprep.subr.mxu0 0.0
    %9200 = vmatpush1.msra.mxu0 %v2725
    %9201 = vmatprep.subr.mxu0 0.0
    %9202 = vmatpush1.msra.mxu0 %v2726
    %9203 = vmatprep.subr.mxu0 0.0
    %9204 = vmatpush1.msra.mxu0 %v2727
    %9205 = vmatprep.subr.mxu0 0.0
    %9206 = vmatpush1.msra.mxu0 %v2728
    %9207 = vmatprep.subr.mxu0 0.0
    %9208 = vmatpush1.msra.mxu0 %v2729
    %9209 = vmatprep.subr.mxu0 0.0
    %9210 = vmatpush1.msra.mxu0 %v2730
    %9211 = vmatprep.subr.mxu0 0.0
    %9212 = vmatpush1.msra.mxu0 %v2731
    %9213 = vmatprep.mubr.f32.mxu0 %v3458
    %9214 = vmatmul.mubr.f32.gmra.mrb[0].mxu0 %v3456
    %v9215 = vpop.f32.mrb[0].mxu0
    %v9216 = vadd.f32 %v9146, %v9215
    %v9217 = vpop.f32.mrb[0].mxu0
    %9218 = vdwg.mxu0
    %9219 = vst [vmem:[#allocation8] sm:$0x3] %v9216
    // Predicated region
    $region26: #{tpu_custom_call.1} parent=1 // pred_check
      _
    $region27: #{tpu_custom_call.1} parent=1 // pred_check_branch
      %9221 = sbr.rel (0) target = $region29
    $region28: #{tpu_custom_call.1} parent=1 // pred_region
      %s9223 = ssub.s32 32, 32
      %9224 = vsyncadd [#allocation4], %s9223
      %s9226 = sshll.u32 [#allocation8], 4
      %s9227 = int_to_ptr.vmem [resolvable:$true] %s9226
      %9229 = dma.vmem_to_hbm [thread:$0]  %s9227, 32, %s3, [#allocation4]
    $region29: #{tpu_custom_call.1} parent=1 // pred_fallthru
      _
    // Predicated region
    $region30: #{tpu_custom_call.1} parent=1 // pred_check
      _
    $region31: #{tpu_custom_call.1} parent=1 // pred_check_branch
      %9231 = sbr.rel (0) target = $region33
    $region32: #{tpu_custom_call.1} parent=1 // pred_region
      %9232 = dma.done [#allocation4], 32
    $region33: #{tpu_custom_call.1} parent=1 // pred_fallthru
      _
    %9233 = vsyncpa [#allocation3], 1
    %9234 = vsyncpa [#allocation6], 1
    %9235 = vsyncpa [#allocation4], 1

</llo_original>
